<compile_context>
chip_gen: v5e
topology: v5e:2x2
jax: 0.10.0
libtpu: 0.0.40
codegen_flags: <defaults>
</compile_context>

<pallas_src>
import numpy as np
import jax
import jax.numpy as jnp
from jax.experimental import pallas as pl
from jax.experimental.pallas import tpu as pltpu


# --------------------------------------------------------------------------
# Pallas kernel: one EGNN layer per grid step (+ gated embedding_in/out)
# --------------------------------------------------------------------------
def egnn_kernel(h_in_ref, rc_oh_ref, row_t_ref, radial_ref,
                win_ref, bin_ref, wout_ref, bout_ref,
                we1r_ref, we1c_ref, we1rad_ref, be1_ref, we2_ref, be2_ref,
                wn1h_ref, wn1a_ref, bn1_ref, wn2_ref, bn2_ref,
                hout_ref,
                h_sc, hab_sc):
    f32 = jnp.float32
    bf16 = jnp.bfloat16
    N = h_sc.shape[0]

    def dot(a, b):
        return jnp.dot(a, b, preferred_element_type=f32)

    def silu(v):
        return v * jax.nn.sigmoid(v)

    i = pl.program_id(0)

    # embedding_in: only on the first grid step; h then lives in VMEM scratch.
    @pl.when(i == 0)
    def _():
        h_sc[...] = dot(h_in_ref[...], win_ref[...]) + bin_ref[...]

    h = h_sc[...]                                               # [N, H] f32

    # --- edge model: edge_mlp(cat([h[row], h[col], radial])) ---
    # project-then-gather: H x H projections on N rows, written straight into a
    # bf16 [2N, H] scratch; then one fused [E,2N] @ [2N,H] bf16 matmul gathers
    # both h[row]@W_r and h[col]@W_c contributions.
    hab_sc[:N, :] = dot(h, we1r_ref[...]).astype(bf16)
    hab_sc[N:, :] = dot(h, we1c_ref[...]).astype(bf16)
    m = (dot(rc_oh_ref[...], hab_sc[...])
         + radial_ref[...] * we1rad_ref[...] + be1_ref[...])    # [E, H] f32
    m = silu(m)
    m = silu(dot(m, we2_ref[...]) + be2_ref[...]).astype(bf16)  # edge_feat [E,H] bf16

    # --- node model: h + node_mlp(cat([h, segment_sum(edge_feat, row)])) ---
    # scatter-add == [N,E] @ [E,H] against the pre-transposed row one-hot:
    # no transpose, no discarded output rows, long K contraction on the MXU.
    agg = dot(row_t_ref[...], m)                                # [N, H] f32
    n = silu(dot(h, wn1h_ref[...]) + dot(agg, wn1a_ref[...]) + bn1_ref[...])
    n = dot(n, wn2_ref[...]) + bn2_ref[...]
    h_sc[...] = h + n                                           # residual, f32

    # embedding_out: only on the last grid step (output block stays resident).
    @pl.when(i == pl.num_programs(0) - 1)
    def _():
        hout_ref[...] = dot(h_sc[...], wout_ref[...]) + bout_ref[...]


# --------------------------------------------------------------------------
# Wrapper (glue: one-hot construction, radial precompute, weight splits, specs)
# --------------------------------------------------------------------------
def egnn_forward(h, x, edge_index, params):
    N, in_dim = h.shape
    H = params["win"].shape[-1]
    out_dim = params["wout"].shape[-1]
    L = params["we1"].shape[0]
    row, col = edge_index[0], edge_index[1]
    E = int(row.shape[0])
    bf16 = jnp.bfloat16

    # Gather operator: [E, 2N] = [row_onehot | col_onehot], bf16 ({0,1} exact).
    row_oh = jax.nn.one_hot(row, N, dtype=bf16)
    col_oh = jax.nn.one_hot(col, N, dtype=bf16)
    rc_oh = jnp.concatenate([row_oh, col_oh], axis=1)           # [E, 2N]
    # Scatter operator, pre-transposed (row only): [N, E] bf16.
    row_oh_t = (jnp.arange(N)[:, None] == row[None, :]).astype(bf16)

    # coord2radial is loop-invariant when use_vel=False -> precompute once here.
    cdiff = x[row] - x[col]
    radial = jnp.sum(cdiff * cdiff, axis=-1, keepdims=True).astype(jnp.float32)

    # Split stacked weight slabs into tile-aligned pieces (no in-kernel slicing).
    we1 = params["we1"]                                         # [L, 2H+1, H]
    we1_row, we1_col = we1[:, :H, :], we1[:, H:2 * H, :]
    we1_rad = we1[:, 2 * H:2 * H + 1, :]                        # [L, 1, H]
    wn1 = params["wn1"]                                         # [L, 2H, H]
    wn1_h, wn1_agg = wn1[:, :H, :], wn1[:, H:, :]

    inputs = (h, rc_oh, row_oh_t, radial,
              params["win"], params["bin"], params["wout"], params["bout"],
              we1_row, we1_col, we1_rad, params["be1"],
              params["we2"], params["be2"],
              wn1_h, wn1_agg, params["bn1"], params["wn2"], params["bn2"])

    def inv(shape):                 # loop-invariant input: full, resident block
        return pl.BlockSpec(shape, lambda i, _n=len(shape): (0,) * _n)

    def per_layer(shape):           # [L, a, b] slab -> per-layer [a, b] block
        return pl.BlockSpec((None,) + shape, lambda i: (i, 0, 0))

    in_specs = [
        inv((N, in_dim)),           # h (input features)
        inv((E, 2 * N)),            # rc_oh (gather)
        inv((N, E)),                # row_oh_t (scatter)
        inv((E, 1)),                # radial
        inv((in_dim, H)), inv((1, H)),          # embedding_in
        inv((H, out_dim)), inv((1, out_dim)),   # embedding_out
        per_layer((H, H)),          # we1_row
        per_layer((H, H)),          # we1_col
        per_layer((1, H)),          # we1_rad
        per_layer((1, H)),          # be1
        per_layer((H, H)),          # we2
        per_layer((1, H)),          # be2
        per_layer((H, H)),          # wn1_h
        per_layer((H, H)),          # wn1_agg
        per_layer((1, H)),          # bn1
        per_layer((H, H)),          # wn2
        per_layer((1, H)),          # bn2
    ]
    out_spec = pl.BlockSpec((N, out_dim), lambda i: (0, 0))

    # Advisory cost estimate for the XLA scheduler.
    flops_layer = 2 * (2 * N * H * H            # hA, hB projections
                       + E * 2 * N * H          # fused gather matmul
                       + E * H * H              # edge_mlp second layer
                       + N * E * H              # scatter-add matmul
                       + 2 * N * H * H          # node_mlp first layer
                       + N * H * H)             # node_mlp second layer
    flops = 2 * (N * in_dim * H + N * H * out_dim) + L * flops_layer
    transcend = L * (2 * E * H + N * H)         # sigmoid evaluations
    bytes_acc = (rc_oh.size * 2 + row_oh_t.size * 2 + radial.size * 4
                 + h.size * 4 + N * out_dim * 4
                 + sum(int(np.prod(p.shape)) for p in params.values()) * 4)

    h_pred = pl.pallas_call(
        egnn_kernel,
        out_shape=jax.ShapeDtypeStruct((N, out_dim), jnp.float32),
        grid=(L,),
        in_specs=in_specs,
        out_specs=out_spec,
        scratch_shapes=[pltpu.VMEM((N, H), jnp.float32),        # residual stream h
                        pltpu.VMEM((2 * N, H), jnp.bfloat16)],  # fused [hA; hB]
        compiler_params=pltpu.CompilerParams(
            dimension_semantics=("arbitrary",)),
        cost_estimate=pl.CostEstimate(flops=flops,
                                      transcendentals=transcend,
                                      bytes_accessed=bytes_acc),
    )(*inputs)
    # x_pred == x : coordinates are not updated when use_vel=False
    return h_pred, x


# --------------------------------------------------------------------------
# Pure-JAX reference (mirrors the PyTorch forward semantics, full f32)
# --------------------------------------------------------------------------
def egnn_reference(h, x, edge_index, params):
    def silu(v):
        return v * jax.nn.sigmoid(v)

    row, col = edge_index[0], edge_index[1]
    N = h.shape[0]
    h = h @ params["win"] + params["bin"]
    cdiff = x[row] - x[col]
    radial = jnp.sum(cdiff ** 2, axis=-1, keepdims=True)
    L = params["we1"].shape[0]
    for i in range(L):
        hr, hc = h[row], h[col]
        m = silu(jnp.concatenate([hr, hc, radial], -1) @ params["we1"][i]
                 + params["be1"][i])
        m = silu(m @ params["we2"][i] + params["be2"][i])       # edge_feat
        agg = jnp.zeros((N, m.shape[-1]), m.dtype).at[row].add(m)
        n = silu(jnp.concatenate([h, agg], -1) @ params["wn1"][i]
                 + params["bn1"][i])
        n = n @ params["wn2"][i] + params["bn2"][i]
        h = h + n
    return h @ params["wout"] + params["bout"], x


# --------------------------------------------------------------------------
# Deterministic parameter init (PyTorch nn.Linear style: U(-1/sqrt(fan_in), ...))
# --------------------------------------------------------------------------
def init_linear(key, fan_in, fan_out):
    kw, kb = jax.random.split(key)
    bound = 1.0 / np.sqrt(fan_in)
    w = jax.random.uniform(kw, (fan_in, fan_out), jnp.float32, -bound, bound)
    b = jax.random.uniform(kb, (1, fan_out), jnp.float32, -bound, bound)
    return w, b


def make_params(key, in_node_dim, hidden, out_node_dim, n_layers):
    keys = jax.random.split(key, 2 + 4 * n_layers)
    win, bin_ = init_linear(keys[0], in_node_dim, hidden)
    wout, bout = init_linear(keys[1], hidden, out_node_dim)
    we1, be1, we2, be2, wn1, bn1, wn2, bn2 = [], [], [], [], [], [], [], []
    for i in range(n_layers):
        k0, k1, k2, k3 = keys[2 + 4 * i: 2 + 4 * (i + 1)]
        w, b = init_linear(k0, 2 * hidden + 1, hidden); we1.append(w); be1.append(b)
        w, b = init_linear(k1, hidden, hidden);         we2.append(w); be2.append(b)
        w, b = init_linear(k2, 2 * hidden, hidden);     wn1.append(w); bn1.append(b)
        w, b = init_linear(k3, hidden, hidden);         wn2.append(w); bn2.append(b)
    stack = lambda xs: jnp.stack(xs, axis=0)
    return dict(win=win, bin=bin_, wout=wout, bout=bout,
                we1=stack(we1), be1=stack(be1), we2=stack(we2), be2=stack(be2),
                wn1=stack(wn1), bn1=stack(bn1), wn2=stack(wn2), bn2=stack(bn2))


if __name__ == "__main__":
    # Small synthetic graph: N nodes, fully-connected (no self loops).
    # H / out_dim = 128 so activations and the output store are lane-dense.
    N = 32
    IN_NODE_DIM = 16
    HIDDEN = 128
    OUT_NODE_DIM = 128
    N_LAYERS = 4

    idx = np.arange(N)
    rr, cc = np.meshgrid(idx, idx, indexing="ij")
    mask = rr != cc
    edge_index = jnp.asarray(np.stack([rr[mask], cc[mask]], axis=0),
                             dtype=jnp.int32)                   # [2, E], E = 992

    key = jax.random.PRNGKey(0)
    k_h, k_x, k_p = jax.random.split(key, 3)
    h = jax.random.normal(k_h, (N, IN_NODE_DIM), jnp.float32)
    x = jax.random.normal(k_x, (N, 3), jnp.float32)
    params = make_params(k_p, IN_NODE_DIM, HIDDEN, OUT_NODE_DIM, N_LAYERS)

    fwd = jax.jit(egnn_forward)
    h_pred, x_pred = fwd(h, x, edge_index, params)
    jax.block_until_ready(h_pred)
    jax.block_until_ready(x_pred)

    # Sanity check against a pure-f32 JAX reference of the same math.
    # Tolerance sized for bf16 MXU operands on the gather/scatter matmuls.
    h_ref, x_ref = egnn_reference(h, x, edge_index, params)
    np.testing.assert_allclose(np.asarray(h_pred), np.asarray(h_ref),
                               rtol=3e-2, atol=3e-2)
    np.testing.assert_allclose(np.asarray(x_pred), np.asarray(x_ref),
                               rtol=1e-6, atol=1e-6)

    print("KERNEL_OK")
</pallas_src>

<mosaic_0001>
module attributes {stable_mosaic.version = 11 : i64} {
  func.func @egnn_kernel(%arg0: i32, %arg1: memref<32x16xf32, #tpu.memory_space<vmem>>, %arg2: memref<992x64xbf16, #tpu.memory_space<vmem>>, %arg3: memref<32x992xbf16, #tpu.memory_space<vmem>>, %arg4: memref<992x1xf32, #tpu.memory_space<vmem>>, %arg5: memref<16x128xf32, #tpu.memory_space<vmem>>, %arg6: memref<1x128xf32, #tpu.memory_space<vmem>>, %arg7: memref<128x128xf32, #tpu.memory_space<vmem>>, %arg8: memref<1x128xf32, #tpu.memory_space<vmem>>, %arg9: memref<1x128x128xf32, #tpu.memory_space<vmem>>, %arg10: memref<1x128x128xf32, #tpu.memory_space<vmem>>, %arg11: memref<1x1x128xf32, #tpu.memory_space<vmem>>, %arg12: memref<1x1x128xf32, #tpu.memory_space<vmem>>, %arg13: memref<1x128x128xf32, #tpu.memory_space<vmem>>, %arg14: memref<1x1x128xf32, #tpu.memory_space<vmem>>, %arg15: memref<1x128x128xf32, #tpu.memory_space<vmem>>, %arg16: memref<1x128x128xf32, #tpu.memory_space<vmem>>, %arg17: memref<1x1x128xf32, #tpu.memory_space<vmem>>, %arg18: memref<1x128x128xf32, #tpu.memory_space<vmem>>, %arg19: memref<1x1x128xf32, #tpu.memory_space<vmem>>, %arg20: memref<32x128xf32, #tpu.memory_space<vmem>>, %arg21: memref<32x128xf32, #tpu.memory_space<vmem>>, %arg22: memref<64x128xbf16, #tpu.memory_space<vmem>>) attributes {dimension_semantics = [#tpu.dimension_semantics<arbitrary>], iteration_bounds = array<i64: 4>, scalar_prefetch = 0 : i64, scratch_operands = 2 : i64, tpu.core_type = #tpu.core_type<tc>, window_params = [{pipeline_mode = #tpu.pipeline_mode<synchronous>, transform_indices = @transform_0, window_bounds = array<i64: 32, 16>}, {pipeline_mode = #tpu.pipeline_mode<synchronous>, transform_indices = @transform_1, window_bounds = array<i64: 992, 64>}, {pipeline_mode = #tpu.pipeline_mode<synchronous>, transform_indices = @transform_2, window_bounds = array<i64: 32, 992>}, {pipeline_mode = #tpu.pipeline_mode<synchronous>, transform_indices = @transform_3, window_bounds = array<i64: 992, 1>}, {pipeline_mode = #tpu.pipeline_mode<synchronous>, transform_indices = @transform_4, window_bounds = array<i64: 16, 128>}, {pipeline_mode = #tpu.pipeline_mode<synchronous>, transform_indices = @transform_5, window_bounds = array<i64: 1, 128>}, {pipeline_mode = #tpu.pipeline_mode<synchronous>, transform_indices = @transform_6, window_bounds = array<i64: 128, 128>}, {pipeline_mode = #tpu.pipeline_mode<synchronous>, transform_indices = @transform_7, window_bounds = array<i64: 1, 128>}, {transform_indices = @transform_8, window_bounds = array<i64: 1, 128, 128>}, {transform_indices = @transform_9, window_bounds = array<i64: 1, 128, 128>}, {transform_indices = @transform_10, window_bounds = array<i64: 1, 1, 128>}, {transform_indices = @transform_11, window_bounds = array<i64: 1, 1, 128>}, {transform_indices = @transform_12, window_bounds = array<i64: 1, 128, 128>}, {transform_indices = @transform_13, window_bounds = array<i64: 1, 1, 128>}, {transform_indices = @transform_14, window_bounds = array<i64: 1, 128, 128>}, {transform_indices = @transform_15, window_bounds = array<i64: 1, 128, 128>}, {transform_indices = @transform_16, window_bounds = array<i64: 1, 1, 128>}, {transform_indices = @transform_17, window_bounds = array<i64: 1, 128, 128>}, {transform_indices = @transform_18, window_bounds = array<i64: 1, 1, 128>}, {pipeline_mode = #tpu.pipeline_mode<synchronous>, transform_indices = @transform_19, window_bounds = array<i64: 32, 128>}]} {
    %c0_i32 = arith.constant 0 : i32
    %0 = arith.cmpi eq, %arg0, %c0_i32 : i32
    %1 = arith.extui %0 : i1 to i32
    %c0_i32_0 = arith.constant 0 : i32
    %2 = arith.cmpi ne, %1, %c0_i32_0 : i32
    scf.if %2 {
      %c0_59 = arith.constant 0 : index
      %c0_60 = arith.constant 0 : index
      %79 = vector.load %arg1[%c0_59, %c0_60] : memref<32x16xf32, #tpu.memory_space<vmem>>, vector<32x16xf32>
      %c0_61 = arith.constant 0 : index
      %c0_62 = arith.constant 0 : index
      %80 = vector.load %arg5[%c0_61, %c0_62] : memref<16x128xf32, #tpu.memory_space<vmem>>, vector<16x128xf32>
      %cst_63 = arith.constant dense<0.000000e+00> : vector<32x128xf32>
      %81 = tpu.matmul %79, %80, %cst_63 {dimension_numbers = #tpu.dot_dimension_numbers<[1], [0], [0], [1], [0, 0, 1, 1], [], []>} : vector<32x16xf32>, vector<16x128xf32>, vector<32x128xf32> -> vector<32x128xf32>
      %c0_64 = arith.constant 0 : index
      %c0_65 = arith.constant 0 : index
      %82 = vector.load %arg6[%c0_64, %c0_65] : memref<1x128xf32, #tpu.memory_space<vmem>>, vector<1x128xf32>
      %83 = vector.broadcast %82 : vector<1x128xf32> to vector<32x128xf32>
      %84 = arith.addf %81, %83 : vector<32x128xf32>
      %c0_66 = arith.constant 0 : index
      %c0_67 = arith.constant 0 : index
      %85 = vector.load %arg21[%c0_66, %c0_67] : memref<32x128xf32, #tpu.memory_space<vmem>>, vector<32x128xf32>
      tpu.vector_store %arg21[%c0_66, %c0_67], %84 {strides = array<i32>} : memref<32x128xf32, #tpu.memory_space<vmem>>, vector<32x128xf32>,
    } else {
    }
    %c0 = arith.constant 0 : index
    %c0_1 = arith.constant 0 : index
    %3 = vector.load %arg21[%c0, %c0_1] : memref<32x128xf32, #tpu.memory_space<vmem>>, vector<32x128xf32>
    %c0_2 = arith.constant 0 : index
    %c0_3 = arith.constant 0 : index
    %c0_4 = arith.constant 0 : index
    %4 = vector.load %arg9[%c0_2, %c0_3, %c0_4] : memref<1x128x128xf32, #tpu.memory_space<vmem>>, vector<1x128x128xf32>
    %5 = vector.shape_cast %4 : vector<1x128x128xf32> to vector<128x128xf32>
    %cst = arith.constant dense<0.000000e+00> : vector<32x128xf32>
    %6 = tpu.matmul %3, %5, %cst {dimension_numbers = #tpu.dot_dimension_numbers<[1], [0], [0], [1], [0, 0, 1, 1], [], []>} : vector<32x128xf32>, vector<128x128xf32>, vector<32x128xf32> -> vector<32x128xf32>
    %7 = arith.truncf %6 : vector<32x128xf32> to vector<32x128xbf16>
    %c0_5 = arith.constant 0 : index
    %c0_6 = arith.constant 0 : index
    %8 = vector.load %arg22[%c0_5, %c0_6] : memref<64x128xbf16, #tpu.memory_space<vmem>>, vector<32x128xbf16>
    tpu.vector_store %arg22[%c0_5, %c0_6], %7 {strides = array<i32>} : memref<64x128xbf16, #tpu.memory_space<vmem>>, vector<32x128xbf16>,
    %c0_7 = arith.constant 0 : index
    %c0_8 = arith.constant 0 : index
    %c0_9 = arith.constant 0 : index
    %9 = vector.load %arg10[%c0_7, %c0_8, %c0_9] : memref<1x128x128xf32, #tpu.memory_space<vmem>>, vector<1x128x128xf32>
    %10 = vector.shape_cast %9 : vector<1x128x128xf32> to vector<128x128xf32>
    %cst_10 = arith.constant dense<0.000000e+00> : vector<32x128xf32>
    %11 = tpu.matmul %3, %10, %cst_10 {dimension_numbers = #tpu.dot_dimension_numbers<[1], [0], [0], [1], [0, 0, 1, 1], [], []>} : vector<32x128xf32>, vector<128x128xf32>, vector<32x128xf32> -> vector<32x128xf32>
    %12 = arith.truncf %11 : vector<32x128xf32> to vector<32x128xbf16>
    %c32 = arith.constant 32 : index
    %c0_11 = arith.constant 0 : index
    %13 = vector.load %arg22[%c32, %c0_11] : memref<64x128xbf16, #tpu.memory_space<vmem>>, vector<32x128xbf16>
    tpu.vector_store %arg22[%c32, %c0_11], %12 {strides = array<i32>} : memref<64x128xbf16, #tpu.memory_space<vmem>>, vector<32x128xbf16>,
    %c0_12 = arith.constant 0 : index
    %c0_13 = arith.constant 0 : index
    %14 = vector.load %arg2[%c0_12, %c0_13] : memref<992x64xbf16, #tpu.memory_space<vmem>>, vector<992x64xbf16>
    %c0_14 = arith.constant 0 : index
    %c0_15 = arith.constant 0 : index
    %15 = vector.load %arg22[%c0_14, %c0_15] : memref<64x128xbf16, #tpu.memory_space<vmem>>, vector<64x128xbf16>
    %cst_16 = arith.constant dense<0.000000e+00> : vector<992x128xf32>
    %16 = tpu.matmul %14, %15, %cst_16 {dimension_numbers = #tpu.dot_dimension_numbers<[1], [0], [0], [1], [0, 0, 1, 1], [], []>} : vector<992x64xbf16>, vector<64x128xbf16>, vector<992x128xf32> -> vector<992x128xf32>
    %c0_17 = arith.constant 0 : index
    %c0_18 = arith.constant 0 : index
    %17 = vector.load %arg4[%c0_17, %c0_18] : memref<992x1xf32, #tpu.memory_space<vmem>>, vector<992x1xf32>
    %c0_19 = arith.constant 0 : index
    %c0_20 = arith.constant 0 : index
    %c0_21 = arith.constant 0 : index
    %18 = vector.load %arg11[%c0_19, %c0_20, %c0_21] : memref<1x1x128xf32, #tpu.memory_space<vmem>>, vector<1x1x128xf32>
    %19 = vector.shape_cast %18 : vector<1x1x128xf32> to vector<1x128xf32>
    %20 = vector.broadcast %17 : vector<992x1xf32> to vector<992x128xf32>
    %21 = vector.broadcast %19 : vector<1x128xf32> to vector<992x128xf32>
    %22 = arith.mulf %20, %21 : vector<992x128xf32>
    %23 = arith.addf %16, %22 : vector<992x128xf32>
    %c0_22 = arith.constant 0 : index
    %c0_23 = arith.constant 0 : index
    %c0_24 = arith.constant 0 : index
    %24 = vector.load %arg12[%c0_22, %c0_23, %c0_24] : memref<1x1x128xf32, #tpu.memory_space<vmem>>, vector<1x1x128xf32>
    %25 = vector.shape_cast %24 : vector<1x1x128xf32> to vector<1x128xf32>
    %26 = vector.broadcast %25 : vector<1x128xf32> to vector<992x128xf32>
    %27 = arith.addf %23, %26 : vector<992x128xf32>
    %28 = arith.negf %27 : vector<992x128xf32>
    %29 = math.exp %28 : vector<992x128xf32>
    %cst_25 = arith.constant 1.000000e+00 : f32
    %30 = vector.broadcast %cst_25 : f32 to vector<992x128xf32>
    %31 = arith.addf %30, %29 : vector<992x128xf32>
    %32 = arith.divf %30, %31 : vector<992x128xf32>
    %33 = arith.mulf %27, %32 : vector<992x128xf32>
    %c0_26 = arith.constant 0 : index
    %c0_27 = arith.constant 0 : index
    %c0_28 = arith.constant 0 : index
    %34 = vector.load %arg13[%c0_26, %c0_27, %c0_28] : memref<1x128x128xf32, #tpu.memory_space<vmem>>, vector<1x128x128xf32>
    %35 = vector.shape_cast %34 : vector<1x128x128xf32> to vector<128x128xf32>
    %cst_29 = arith.constant dense<0.000000e+00> : vector<992x128xf32>
    %36 = tpu.matmul %33, %35, %cst_29 {dimension_numbers = #tpu.dot_dimension_numbers<[1], [0], [0], [1], [0, 0, 1, 1], [], []>} : vector<992x128xf32>, vector<128x128xf32>, vector<992x128xf32> -> vector<992x128xf32>
    %c0_30 = arith.constant 0 : index
    %c0_31 = arith.constant 0 : index
    %c0_32 = arith.constant 0 : index
    %37 = vector.load %arg14[%c0_30, %c0_31, %c0_32] : memref<1x1x128xf32, #tpu.memory_space<vmem>>, vector<1x1x128xf32>
    %38 = vector.shape_cast %37 : vector<1x1x128xf32> to vector<1x128xf32>
    %39 = vector.broadcast %38 : vector<1x128xf32> to vector<992x128xf32>
    %40 = arith.addf %36, %39 : vector<992x128xf32>
    %41 = arith.negf %40 : vector<992x128xf32>
    %42 = math.exp %41 : vector<992x128xf32>
    %cst_33 = arith.constant 1.000000e+00 : f32
    %43 = vector.broadcast %cst_33 : f32 to vector<992x128xf32>
    %44 = arith.addf %43, %42 : vector<992x128xf32>
    %45 = arith.divf %43, %44 : vector<992x128xf32>
    %46 = arith.mulf %40, %45 : vector<992x128xf32>
    %47 = arith.truncf %46 : vector<992x128xf32> to vector<992x128xbf16>
    %c0_34 = arith.constant 0 : index
    %c0_35 = arith.constant 0 : index
    %48 = vector.load %arg3[%c0_34, %c0_35] : memref<32x992xbf16, #tpu.memory_space<vmem>>, vector<32x992xbf16>
    %cst_36 = arith.constant dense<0.000000e+00> : vector<32x128xf32>
    %49 = tpu.matmul %48, %47, %cst_36 {dimension_numbers = #tpu.dot_dimension_numbers<[1], [0], [0], [1], [0, 0, 1, 1], [], []>} : vector<32x992xbf16>, vector<992x128xbf16>, vector<32x128xf32> -> vector<32x128xf32>
    %c0_37 = arith.constant 0 : index
    %c0_38 = arith.constant 0 : index
    %c0_39 = arith.constant 0 : index
    %50 = vector.load %arg15[%c0_37, %c0_38, %c0_39] : memref<1x128x128xf32, #tpu.memory_space<vmem>>, vector<1x128x128xf32>
    %51 = vector.shape_cast %50 : vector<1x128x128xf32> to vector<128x128xf32>
    %cst_40 = arith.constant dense<0.000000e+00> : vector<32x128xf32>
    %52 = tpu.matmul %3, %51, %cst_40 {dimension_numbers = #tpu.dot_dimension_numbers<[1], [0], [0], [1], [0, 0, 1, 1], [], []>} : vector<32x128xf32>, vector<128x128xf32>, vector<32x128xf32> -> vector<32x128xf32>
    %c0_41 = arith.constant 0 : index
    %c0_42 = arith.constant 0 : index
    %c0_43 = arith.constant 0 : index
    %53 = vector.load %arg16[%c0_41, %c0_42, %c0_43] : memref<1x128x128xf32, #tpu.memory_space<vmem>>, vector<1x128x128xf32>
    %54 = vector.shape_cast %53 : vector<1x128x128xf32> to vector<128x128xf32>
    %cst_44 = arith.constant dense<0.000000e+00> : vector<32x128xf32>
    %55 = tpu.matmul %49, %54, %cst_44 {dimension_numbers = #tpu.dot_dimension_numbers<[1], [0], [0], [1], [0, 0, 1, 1], [], []>} : vector<32x128xf32>, vector<128x128xf32>, vector<32x128xf32> -> vector<32x128xf32>
    %56 = arith.addf %52, %55 : vector<32x128xf32>
    %c0_45 = arith.constant 0 : index
    %c0_46 = arith.constant 0 : index
    %c0_47 = arith.constant 0 : index
    %57 = vector.load %arg17[%c0_45, %c0_46, %c0_47] : memref<1x1x128xf32, #tpu.memory_space<vmem>>, vector<1x1x128xf32>
    %58 = vector.shape_cast %57 : vector<1x1x128xf32> to vector<1x128xf32>
    %59 = vector.broadcast %58 : vector<1x128xf32> to vector<32x128xf32>
    %60 = arith.addf %56, %59 : vector<32x128xf32>
    %61 = arith.negf %60 : vector<32x128xf32>
    %62 = math.exp %61 : vector<32x128xf32>
    %cst_48 = arith.constant 1.000000e+00 : f32
    %63 = vector.broadcast %cst_48 : f32 to vector<32x128xf32>
    %64 = arith.addf %63, %62 : vector<32x128xf32>
    %65 = arith.divf %63, %64 : vector<32x128xf32>
    %66 = arith.mulf %60, %65 : vector<32x128xf32>
    %c0_49 = arith.constant 0 : index
    %c0_50 = arith.constant 0 : index
    %c0_51 = arith.constant 0 : index
    %67 = vector.load %arg18[%c0_49, %c0_50, %c0_51] : memref<1x128x128xf32, #tpu.memory_space<vmem>>, vector<1x128x128xf32>
    %68 = vector.shape_cast %67 : vector<1x128x128xf32> to vector<128x128xf32>
    %cst_52 = arith.constant dense<0.000000e+00> : vector<32x128xf32>
    %69 = tpu.matmul %66, %68, %cst_52 {dimension_numbers = #tpu.dot_dimension_numbers<[1], [0], [0], [1], [0, 0, 1, 1], [], []>} : vector<32x128xf32>, vector<128x128xf32>, vector<32x128xf32> -> vector<32x128xf32>
    %c0_53 = arith.constant 0 : index
    %c0_54 = arith.constant 0 : index
    %c0_55 = arith.constant 0 : index
    %70 = vector.load %arg19[%c0_53, %c0_54, %c0_55] : memref<1x1x128xf32, #tpu.memory_space<vmem>>, vector<1x1x128xf32>
    %71 = vector.shape_cast %70 : vector<1x1x128xf32> to vector<1x128xf32>
    %72 = vector.broadcast %71 : vector<1x128xf32> to vector<32x128xf32>
    %73 = arith.addf %69, %72 : vector<32x128xf32>
    %74 = arith.addf %3, %73 : vector<32x128xf32>
    %c0_56 = arith.constant 0 : index
    %c0_57 = arith.constant 0 : index
    %75 = vector.load %arg21[%c0_56, %c0_57] : memref<32x128xf32, #tpu.memory_space<vmem>>, vector<32x128xf32>
    tpu.vector_store %arg21[%c0_56, %c0_57], %74 {strides = array<i32>} : memref<32x128xf32, #tpu.memory_space<vmem>>, vector<32x128xf32>,
    %c3_i32 = arith.constant 3 : i32
    %76 = arith.cmpi eq, %arg0, %c3_i32 : i32
    %77 = arith.extui %76 : i1 to i32
    %c0_i32_58 = arith.constant 0 : i32
    %78 = arith.cmpi ne, %77, %c0_i32_58 : i32
    scf.if %78 {
      %c0_59 = arith.constant 0 : index
      %c0_60 = arith.constant 0 : index
      %79 = vector.load %arg21[%c0_59, %c0_60] : memref<32x128xf32, #tpu.memory_space<vmem>>, vector<32x128xf32>
      %c0_61 = arith.constant 0 : index
      %c0_62 = arith.constant 0 : index
      %80 = vector.load %arg7[%c0_61, %c0_62] : memref<128x128xf32, #tpu.memory_space<vmem>>, vector<128x128xf32>
      %cst_63 = arith.constant dense<0.000000e+00> : vector<32x128xf32>
      %81 = tpu.matmul %79, %80, %cst_63 {dimension_numbers = #tpu.dot_dimension_numbers<[1], [0], [0], [1], [0, 0, 1, 1], [], []>} : vector<32x128xf32>, vector<128x128xf32>, vector<32x128xf32> -> vector<32x128xf32>
      %c0_64 = arith.constant 0 : index
      %c0_65 = arith.constant 0 : index
      %82 = vector.load %arg8[%c0_64, %c0_65] : memref<1x128xf32, #tpu.memory_space<vmem>>, vector<1x128xf32>
      %83 = vector.broadcast %82 : vector<1x128xf32> to vector<32x128xf32>
      %84 = arith.addf %81, %83 : vector<32x128xf32>
      %c0_66 = arith.constant 0 : index
      %c0_67 = arith.constant 0 : index
      %85 = vector.load %arg20[%c0_66, %c0_67] : memref<32x128xf32, #tpu.memory_space<vmem>>, vector<32x128xf32>
      tpu.vector_store %arg20[%c0_66, %c0_67], %84 {strides = array<i32>} : memref<32x128xf32, #tpu.memory_space<vmem>>, vector<32x128xf32>,
    } else {
    }
    return
  }
  func.func @transform_0(%arg0: i32) -> (i32, i32) {
    %c0_i32 = arith.constant 0 : i32
    %c0_i32_0 = arith.constant 0 : i32
    %c0_i32_1 = arith.constant 0 : i32
    return %c0_i32, %c0_i32_0 : i32, i32
  }
  func.func @transform_1(%arg0: i32) -> (i32, i32) {
    %c0_i32 = arith.constant 0 : i32
    %c0_i32_0 = arith.constant 0 : i32
    %c0_i32_1 = arith.constant 0 : i32
    return %c0_i32, %c0_i32_0 : i32, i32
  }
  func.func @transform_2(%arg0: i32) -> (i32, i32) {
    %c0_i32 = arith.constant 0 : i32
    %c0_i32_0 = arith.constant 0 : i32
    %c0_i32_1 = arith.constant 0 : i32
    return %c0_i32, %c0_i32_0 : i32, i32
  }
  func.func @transform_3(%arg0: i32) -> (i32, i32) {
    %c0_i32 = arith.constant 0 : i32
    %c0_i32_0 = arith.constant 0 : i32
    %c0_i32_1 = arith.constant 0 : i32
    return %c0_i32, %c0_i32_0 : i32, i32
  }
  func.func @transform_4(%arg0: i32) -> (i32, i32) {
    %c0_i32 = arith.constant 0 : i32
    %c0_i32_0 = arith.constant 0 : i32
    %c0_i32_1 = arith.constant 0 : i32
    return %c0_i32, %c0_i32_0 : i32, i32
  }
  func.func @transform_5(%arg0: i32) -> (i32, i32) {
    %c0_i32 = arith.constant 0 : i32
    %c0_i32_0 = arith.constant 0 : i32
    %c0_i32_1 = arith.constant 0 : i32
    return %c0_i32, %c0_i32_0 : i32, i32
  }
  func.func @transform_6(%arg0: i32) -> (i32, i32) {
    %c0_i32 = arith.constant 0 : i32
    %c0_i32_0 = arith.constant 0 : i32
    %c0_i32_1 = arith.constant 0 : i32
    return %c0_i32, %c0_i32_0 : i32, i32
  }
  func.func @transform_7(%arg0: i32) -> (i32, i32) {
    %c0_i32 = arith.constant 0 : i32
    %c0_i32_0 = arith.constant 0 : i32
    %c0_i32_1 = arith.constant 0 : i32
    return %c0_i32, %c0_i32_0 : i32, i32
  }
  func.func @transform_8(%arg0: i32) -> (i32, i32, i32) {
    %c0_i32 = arith.constant 0 : i32
    %c0_i32_0 = arith.constant 0 : i32
    %c0_i32_1 = arith.constant 0 : i32
    return %arg0, %c0_i32, %c0_i32_0 : i32, i32, i32
  }
  func.func @transform_9(%arg0: i32) -> (i32, i32, i32) {
    %c0_i32 = arith.constant 0 : i32
    %c0_i32_0 = arith.constant 0 : i32
    %c0_i32_1 = arith.constant 0 : i32
    return %arg0, %c0_i32, %c0_i32_0 : i32, i32, i32
  }
  func.func @transform_10(%arg0: i32) -> (i32, i32, i32) {
    %c0_i32 = arith.constant 0 : i32
    %c0_i32_0 = arith.constant 0 : i32
    %c0_i32_1 = arith.constant 0 : i32
    return %arg0, %c0_i32, %c0_i32_0 : i32, i32, i32
  }
  func.func @transform_11(%arg0: i32) -> (i32, i32, i32) {
    %c0_i32 = arith.constant 0 : i32
    %c0_i32_0 = arith.constant 0 : i32
    %c0_i32_1 = arith.constant 0 : i32
    return %arg0, %c0_i32, %c0_i32_0 : i32, i32, i32
  }
  func.func @transform_12(%arg0: i32) -> (i32, i32, i32) {
    %c0_i32 = arith.constant 0 : i32
    %c0_i32_0 = arith.constant 0 : i32
    %c0_i32_1 = arith.constant 0 : i32
    return %arg0, %c0_i32, %c0_i32_0 : i32, i32, i32
  }
  func.func @transform_13(%arg0: i32) -> (i32, i32, i32) {
    %c0_i32 = arith.constant 0 : i32
    %c0_i32_0 = arith.constant 0 : i32
    %c0_i32_1 = arith.constant 0 : i32
    return %arg0, %c0_i32, %c0_i32_0 : i32, i32, i32
  }
  func.func @transform_14(%arg0: i32) -> (i32, i32, i32) {
    %c0_i32 = arith.constant 0 : i32
    %c0_i32_0 = arith.constant 0 : i32
    %c0_i32_1 = arith.constant 0 : i32
    return %arg0, %c0_i32, %c0_i32_0 : i32, i32, i32
  }
  func.func @transform_15(%arg0: i32) -> (i32, i32, i32) {
    %c0_i32 = arith.constant 0 : i32
    %c0_i32_0 = arith.constant 0 : i32
    %c0_i32_1 = arith.constant 0 : i32
    return %arg0, %c0_i32, %c0_i32_0 : i32, i32, i32
  }
  func.func @transform_16(%arg0: i32) -> (i32, i32, i32) {
    %c0_i32 = arith.constant 0 : i32
    %c0_i32_0 = arith.constant 0 : i32
    %c0_i32_1 = arith.constant 0 : i32
    return %arg0, %c0_i32, %c0_i32_0 : i32, i32, i32
  }
  func.func @transform_17(%arg0: i32) -> (i32, i32, i32) {
    %c0_i32 = arith.constant 0 : i32
    %c0_i32_0 = arith.constant 0 : i32
    %c0_i32_1 = arith.constant 0 : i32
    return %arg0, %c0_i32, %c0_i32_0 : i32, i32, i32
  }
  func.func @transform_18(%arg0: i32) -> (i32, i32, i32) {
    %c0_i32 = arith.constant 0 : i32
    %c0_i32_0 = arith.constant 0 : i32
    %c0_i32_1 = arith.constant 0 : i32
    return %arg0, %c0_i32, %c0_i32_0 : i32, i32, i32
  }
  func.func @transform_19(%arg0: i32) -> (i32, i32) {
    %c0_i32 = arith.constant 0 : i32
    %c0_i32_0 = arith.constant 0 : i32
    %c0_i32_1 = arith.constant 0 : i32
    return %c0_i32, %c0_i32_0 : i32, i32
  }
}

</mosaic_0001>

<llo_original>
// kernel: egnn_forward.1
$region0: #{egnn_forward.1}
  #allocation0 [shape = 'u32[]', space=smem, size = 0x4, offset = 0x4, fixed_abs, tag = 'smem constant byte address 0x4 - core index']
  #allocation1 [shape = 'u32[72,128]{1,0:T(1,128)}', space=vmem, size = 0x9000, scoped, tag = 'internal scratch']
  #allocation2 [shape = 'f32[32,128]{1,0:T(8,128)}', space=vmem, size = 0x4000, scoped, tag = 'scratch operand']
  #allocation3 [shape = 'bf16[64,128]{1,0:T(8,128)(2,1)}', space=vmem, size = 0x4000, scoped, tag = 'scratch operand']
  %s0 = inlined_call_operand.vmem [shape: f32[32,16], index: 0, kind: input, shape index: {}]
  %s1 = inlined_call_operand.vmem [shape: bf16[992,64], index: 1, kind: input, shape index: {}]
  %s2 = inlined_call_operand.vmem [shape: bf16[32,992], index: 2, kind: input, shape index: {}]
  %s3 = inlined_call_operand.vmem [shape: f32[992,1], index: 3, kind: input, shape index: {}]
  %s4 = inlined_call_operand.vmem [shape: f32[16,128], index: 4, kind: input, shape index: {}]
  %s5 = inlined_call_operand.vmem [shape: f32[1,128], index: 5, kind: input, shape index: {}]
  %s6 = inlined_call_operand.vmem [shape: f32[128,128], index: 6, kind: input, shape index: {}]
  %s7 = inlined_call_operand.vmem [shape: f32[1,128], index: 7, kind: input, shape index: {}]
  %s8 = inlined_call_operand.vmem [shape: f32[4,128,128], index: 8, kind: input, shape index: {}]
  %s9 = inlined_call_operand.vmem [shape: f32[4,128,128], index: 9, kind: input, shape index: {}]
  %s10 = inlined_call_operand.vmem [shape: f32[4,1,128], index: 10, kind: input, shape index: {}]
  %s11 = inlined_call_operand.vmem [shape: f32[4,1,128], index: 11, kind: input, shape index: {}]
  %s12 = inlined_call_operand.vmem [shape: f32[4,128,128], index: 12, kind: input, shape index: {}]
  %s13 = inlined_call_operand.vmem [shape: f32[4,1,128], index: 13, kind: input, shape index: {}]
  %s14 = inlined_call_operand.vmem [shape: f32[4,128,128], index: 14, kind: input, shape index: {}]
  %s15 = inlined_call_operand.vmem [shape: f32[4,128,128], index: 15, kind: input, shape index: {}]
  %s16 = inlined_call_operand.vmem [shape: f32[4,1,128], index: 16, kind: input, shape index: {}]
  %s17 = inlined_call_operand.vmem [shape: f32[4,128,128], index: 17, kind: input, shape index: {}]
  %s18 = inlined_call_operand.vmem [shape: f32[4,1,128], index: 18, kind: input, shape index: {}]
  %s19 = inlined_call_operand.hbm [shape: f32[32,128], index: 19, kind: output, shape index: {}]
  %s20 = sld [smem:[#allocation0]]
  $region117: #{egnn_forward.1} parent=0
    _
  %s22 = ssub.s32 1, %s20
  %s23 = scalar_select 0, %s22, %s20
  $region1: #{egnn_forward.1} parent=0
    #allocation4 [shape = 'u8[16384]{0}', space=vmem, size = 0x4000, scoped, tag = 'output window, operand 0, single buffered']
    #allocation5 [shape = 's32[2]{0}', space=sflag, size = 0x8, scoped, tag = 'scoped memory for egnn_forward.1']
    %24 = vsyncpa [#allocation5], 0
    loop: start=0, step=1, limit=6
    $region2: #{egnn_forward.1} parent=1 // loop_pre_header
      _
    $region3: #{egnn_forward.1} parent=1 // loop_header
      %s26 = sphi 0, %s30
      %p27 = scmp.ge.s32.totalorder %s26, 6
      %s34 = sphi 0, %s34
      %s36 = sphi 0, %s34
      %s37 = sphi 0, %s36
      %s51 = sphi 0, %s37
      %s55 = sphi 0, %s55
      %s57 = sphi 0, %s55
      %s58 = sphi 0, %s57
      %s72 = sphi 0, %s58
      %s76 = sphi 0, %s76
      %s78 = sphi 0, %s76
      %s79 = sphi 0, %s78
      %s93 = sphi 0, %s79
      %s97 = sphi 0, %s97
      %s99 = sphi 0, %s97
      %s100 = sphi 0, %s99
      %s114 = sphi 0, %s100
      %s118 = sphi 0, %s118
      %s120 = sphi 0, %s118
      %s121 = sphi 0, %s120
      %s135 = sphi 0, %s121
      %s139 = sphi 0, %s139
      %s141 = sphi 0, %s139
      %s142 = sphi 0, %s141
      %s156 = sphi 0, %s142
      %s160 = sphi 0, %s160
      %s162 = sphi 0, %s160
      %s163 = sphi 0, %s162
      %s177 = sphi 0, %s163
      %s181 = sphi 0, %s181
      %s183 = sphi 0, %s181
      %s184 = sphi 0, %s183
      %s198 = sphi 0, %s184
      %s204 = sphi 0, %s206
      %s207 = sphi 0, %s204
      %s208 = sphi 0, %s207
      %s224 = sphi 0, %s208
      %s230 = sphi 0, %s232
      %s233 = sphi 0, %s230
      %s234 = sphi 0, %s233
      %s250 = sphi 0, %s234
      %s256 = sphi 0, %s258
      %s259 = sphi 0, %s256
      %s260 = sphi 0, %s259
      %s276 = sphi 0, %s260
      %s282 = sphi 0, %s284
      %s285 = sphi 0, %s282
      %s286 = sphi 0, %s285
      %s302 = sphi 0, %s286
      %s308 = sphi 0, %s310
      %s311 = sphi 0, %s308
      %s312 = sphi 0, %s311
      %s328 = sphi 0, %s312
      %s334 = sphi 0, %s336
      %s337 = sphi 0, %s334
      %s338 = sphi 0, %s337
      %s354 = sphi 0, %s338
      %s360 = sphi 0, %s362
      %s363 = sphi 0, %s360
      %s364 = sphi 0, %s363
      %s380 = sphi 0, %s364
      %s386 = sphi 0, %s388
      %s389 = sphi 0, %s386
      %s390 = sphi 0, %s389
      %s406 = sphi 0, %s390
      %s412 = sphi 0, %s414
      %s415 = sphi 0, %s412
      %s416 = sphi 0, %s415
      %s432 = sphi 0, %s416
      %s438 = sphi 0, %s440
      %s441 = sphi 0, %s438
      %s442 = sphi 0, %s441
      %s458 = sphi 0, %s442
      %s464 = sphi 0, %s466
      %s467 = sphi 0, %s464
      %s468 = sphi 0, %s467
      %s484 = sphi 0, %s468
      %s488 = sphi 0, %s488
      %s490 = sphi 0, %s488
      %s491 = sphi 0, %s490
      %s505 = sphi 0, %s491
    $region4: #{egnn_forward.1} parent=1 // loop_header_branch
      %29 = sbr.rel (%p27) target = $region8
    $region5: #{egnn_forward.1} parent=1 // loop_body
      %s31 = ssub.s32 %s26, 1
      %s32 = ssub.s32 %s26, 2
      %s33 = sadd.s32 %s26, 1
      %s35 = sadd.s32 %s34, 1
      %p38 = scmp.eq.s32.totalorder %s26, 3
      %p39 = scmp.ne.s32.totalorder %s34, %s36
      %p40 = scmp.eq.s32.totalorder %s26, 0
      %p41 = por %p39, %p40
      %p42 = scmp.ne.s32.totalorder %s34, %s36
      %p43 = scmp.eq.s32.totalorder %s31, 3
      %p44 = por %p42, %p43
      %p45 = scmp.ne.s32.totalorder %s36, %s37
      %p46 = scmp.eq.s32.totalorder %s31, 0
      %p47 = por %p45, %p46
      %p48 = scmp.ne.s32.totalorder %s36, %s37
      %p49 = scmp.eq.s32.totalorder %s32, 3
      %p50 = por %p48, %p49
      %p52 = scmp.ne.s32.totalorder %s37, %s51
      %p53 = scmp.eq.s32.totalorder %s32, 0
      %p54 = por %p52, %p53
      %s56 = sadd.s32 %s55, 1
      %p59 = scmp.eq.s32.totalorder %s26, 3
      %p60 = scmp.ne.s32.totalorder %s55, %s57
      %p61 = scmp.eq.s32.totalorder %s26, 0
      %p62 = por %p60, %p61
      %p63 = scmp.ne.s32.totalorder %s55, %s57
      %p64 = scmp.eq.s32.totalorder %s31, 3
      %p65 = por %p63, %p64
      %p66 = scmp.ne.s32.totalorder %s57, %s58
      %p67 = scmp.eq.s32.totalorder %s31, 0
      %p68 = por %p66, %p67
      %p69 = scmp.ne.s32.totalorder %s57, %s58
      %p70 = scmp.eq.s32.totalorder %s32, 3
      %p71 = por %p69, %p70
      %p73 = scmp.ne.s32.totalorder %s58, %s72
      %p74 = scmp.eq.s32.totalorder %s32, 0
      %p75 = por %p73, %p74
      %s77 = sadd.s32 %s76, 1
      %p80 = scmp.eq.s32.totalorder %s26, 3
      %p81 = scmp.ne.s32.totalorder %s76, %s78
      %p82 = scmp.eq.s32.totalorder %s26, 0
      %p83 = por %p81, %p82
      %p84 = scmp.ne.s32.totalorder %s76, %s78
      %p85 = scmp.eq.s32.totalorder %s31, 3
      %p86 = por %p84, %p85
      %p87 = scmp.ne.s32.totalorder %s78, %s79
      %p88 = scmp.eq.s32.totalorder %s31, 0
      %p89 = por %p87, %p88
      %p90 = scmp.ne.s32.totalorder %s78, %s79
      %p91 = scmp.eq.s32.totalorder %s32, 3
      %p92 = por %p90, %p91
      %p94 = scmp.ne.s32.totalorder %s79, %s93
      %p95 = scmp.eq.s32.totalorder %s32, 0
      %p96 = por %p94, %p95
      %s98 = sadd.s32 %s97, 1
      %p101 = scmp.eq.s32.totalorder %s26, 3
      %p102 = scmp.ne.s32.totalorder %s97, %s99
      %p103 = scmp.eq.s32.totalorder %s26, 0
      %p104 = por %p102, %p103
      %p105 = scmp.ne.s32.totalorder %s97, %s99
      %p106 = scmp.eq.s32.totalorder %s31, 3
      %p107 = por %p105, %p106
      %p108 = scmp.ne.s32.totalorder %s99, %s100
      %p109 = scmp.eq.s32.totalorder %s31, 0
      %p110 = por %p108, %p109
      %p111 = scmp.ne.s32.totalorder %s99, %s100
      %p112 = scmp.eq.s32.totalorder %s32, 3
      %p113 = por %p111, %p112
      %p115 = scmp.ne.s32.totalorder %s100, %s114
      %p116 = scmp.eq.s32.totalorder %s32, 0
      %p117 = por %p115, %p116
      %s119 = sadd.s32 %s118, 1
      %p122 = scmp.eq.s32.totalorder %s26, 3
      %p123 = scmp.ne.s32.totalorder %s118, %s120
      %p124 = scmp.eq.s32.totalorder %s26, 0
      %p125 = por %p123, %p124
      %p126 = scmp.ne.s32.totalorder %s118, %s120
      %p127 = scmp.eq.s32.totalorder %s31, 3
      %p128 = por %p126, %p127
      %p129 = scmp.ne.s32.totalorder %s120, %s121
      %p130 = scmp.eq.s32.totalorder %s31, 0
      %p131 = por %p129, %p130
      %p132 = scmp.ne.s32.totalorder %s120, %s121
      %p133 = scmp.eq.s32.totalorder %s32, 3
      %p134 = por %p132, %p133
      %p136 = scmp.ne.s32.totalorder %s121, %s135
      %p137 = scmp.eq.s32.totalorder %s32, 0
      %p138 = por %p136, %p137
      %s140 = sadd.s32 %s139, 1
      %p143 = scmp.eq.s32.totalorder %s26, 3
      %p144 = scmp.ne.s32.totalorder %s139, %s141
      %p145 = scmp.eq.s32.totalorder %s26, 0
      %p146 = por %p144, %p145
      %p147 = scmp.ne.s32.totalorder %s139, %s141
      %p148 = scmp.eq.s32.totalorder %s31, 3
      %p149 = por %p147, %p148
      %p150 = scmp.ne.s32.totalorder %s141, %s142
      %p151 = scmp.eq.s32.totalorder %s31, 0
      %p152 = por %p150, %p151
      %p153 = scmp.ne.s32.totalorder %s141, %s142
      %p154 = scmp.eq.s32.totalorder %s32, 3
      %p155 = por %p153, %p154
      %p157 = scmp.ne.s32.totalorder %s142, %s156
      %p158 = scmp.eq.s32.totalorder %s32, 0
      %p159 = por %p157, %p158
      %s161 = sadd.s32 %s160, 1
      %p164 = scmp.eq.s32.totalorder %s26, 3
      %p165 = scmp.ne.s32.totalorder %s160, %s162
      %p166 = scmp.eq.s32.totalorder %s26, 0
      %p167 = por %p165, %p166
      %p168 = scmp.ne.s32.totalorder %s160, %s162
      %p169 = scmp.eq.s32.totalorder %s31, 3
      %p170 = por %p168, %p169
      %p171 = scmp.ne.s32.totalorder %s162, %s163
      %p172 = scmp.eq.s32.totalorder %s31, 0
      %p173 = por %p171, %p172
      %p174 = scmp.ne.s32.totalorder %s162, %s163
      %p175 = scmp.eq.s32.totalorder %s32, 3
      %p176 = por %p174, %p175
      %p178 = scmp.ne.s32.totalorder %s163, %s177
      %p179 = scmp.eq.s32.totalorder %s32, 0
      %p180 = por %p178, %p179
      %s182 = sadd.s32 %s181, 1
      %p185 = scmp.eq.s32.totalorder %s26, 3
      %p186 = scmp.ne.s32.totalorder %s181, %s183
      %p187 = scmp.eq.s32.totalorder %s26, 0
      %p188 = por %p186, %p187
      %p189 = scmp.ne.s32.totalorder %s181, %s183
      %p190 = scmp.eq.s32.totalorder %s31, 3
      %p191 = por %p189, %p190
      %p192 = scmp.ne.s32.totalorder %s183, %s184
      %p193 = scmp.eq.s32.totalorder %s31, 0
      %p194 = por %p192, %p193
      %p195 = scmp.ne.s32.totalorder %s183, %s184
      %p196 = scmp.eq.s32.totalorder %s32, 3
      %p197 = por %p195, %p196
      %p199 = scmp.ne.s32.totalorder %s184, %s198
      %p200 = scmp.eq.s32.totalorder %s32, 0
      %p201 = por %p199, %p200
      %s202 = ssub.s32 %s26, %s33
      %p203 = scmp.eq.s32.totalorder %s202, 0
      %s205 = sadd.s32 %s204, 1
      %s206 = scalar_select %p203, %s204, %s205
      %p209 = pneg %p203
      %p210 = scmp.eq.s32.totalorder %s26, 3
      %p211 = por %p209, %p210
      %p212 = scmp.ne.s32.totalorder %s204, %s207
      %p213 = scmp.eq.s32.totalorder %s26, 0
      %p214 = por %p212, %p213
      %p215 = scmp.ne.s32.totalorder %s204, %s207
      %p216 = scmp.eq.s32.totalorder %s31, 3
      %p217 = por %p215, %p216
      %p218 = scmp.ne.s32.totalorder %s207, %s208
      %p219 = scmp.eq.s32.totalorder %s31, 0
      %p220 = por %p218, %p219
      %p221 = scmp.ne.s32.totalorder %s207, %s208
      %p222 = scmp.eq.s32.totalorder %s32, 3
      %p223 = por %p221, %p222
      %p225 = scmp.ne.s32.totalorder %s208, %s224
      %p226 = scmp.eq.s32.totalorder %s32, 0
      %p227 = por %p225, %p226
      %s228 = ssub.s32 %s26, %s33
      %p229 = scmp.eq.s32.totalorder %s228, 0
      %s231 = sadd.s32 %s230, 1
      %s232 = scalar_select %p229, %s230, %s231
      %p235 = pneg %p229
      %p236 = scmp.eq.s32.totalorder %s26, 3
      %p237 = por %p235, %p236
      %p238 = scmp.ne.s32.totalorder %s230, %s233
      %p239 = scmp.eq.s32.totalorder %s26, 0
      %p240 = por %p238, %p239
      %p241 = scmp.ne.s32.totalorder %s230, %s233
      %p242 = scmp.eq.s32.totalorder %s31, 3
      %p243 = por %p241, %p242
      %p244 = scmp.ne.s32.totalorder %s233, %s234
      %p245 = scmp.eq.s32.totalorder %s31, 0
      %p246 = por %p244, %p245
      %p247 = scmp.ne.s32.totalorder %s233, %s234
      %p248 = scmp.eq.s32.totalorder %s32, 3
      %p249 = por %p247, %p248
      %p251 = scmp.ne.s32.totalorder %s234, %s250
      %p252 = scmp.eq.s32.totalorder %s32, 0
      %p253 = por %p251, %p252
      %s254 = ssub.s32 %s26, %s33
      %p255 = scmp.eq.s32.totalorder %s254, 0
      %s257 = sadd.s32 %s256, 1
      %s258 = scalar_select %p255, %s256, %s257
      %p261 = pneg %p255
      %p262 = scmp.eq.s32.totalorder %s26, 3
      %p263 = por %p261, %p262
      %p264 = scmp.ne.s32.totalorder %s256, %s259
      %p265 = scmp.eq.s32.totalorder %s26, 0
      %p266 = por %p264, %p265
      %p267 = scmp.ne.s32.totalorder %s256, %s259
      %p268 = scmp.eq.s32.totalorder %s31, 3
      %p269 = por %p267, %p268
      %p270 = scmp.ne.s32.totalorder %s259, %s260
      %p271 = scmp.eq.s32.totalorder %s31, 0
      %p272 = por %p270, %p271
      %p273 = scmp.ne.s32.totalorder %s259, %s260
      %p274 = scmp.eq.s32.totalorder %s32, 3
      %p275 = por %p273, %p274
      %p277 = scmp.ne.s32.totalorder %s260, %s276
      %p278 = scmp.eq.s32.totalorder %s32, 0
      %p279 = por %p277, %p278
      %s280 = ssub.s32 %s26, %s33
      %p281 = scmp.eq.s32.totalorder %s280, 0
      %s283 = sadd.s32 %s282, 1
      %s284 = scalar_select %p281, %s282, %s283
      %p287 = pneg %p281
      %p288 = scmp.eq.s32.totalorder %s26, 3
      %p289 = por %p287, %p288
      %p290 = scmp.ne.s32.totalorder %s282, %s285
      %p291 = scmp.eq.s32.totalorder %s26, 0
      %p292 = por %p290, %p291
      %p293 = scmp.ne.s32.totalorder %s282, %s285
      %p294 = scmp.eq.s32.totalorder %s31, 3
      %p295 = por %p293, %p294
      %p296 = scmp.ne.s32.totalorder %s285, %s286
      %p297 = scmp.eq.s32.totalorder %s31, 0
      %p298 = por %p296, %p297
      %p299 = scmp.ne.s32.totalorder %s285, %s286
      %p300 = scmp.eq.s32.totalorder %s32, 3
      %p301 = por %p299, %p300
      %p303 = scmp.ne.s32.totalorder %s286, %s302
      %p304 = scmp.eq.s32.totalorder %s32, 0
      %p305 = por %p303, %p304
      %s306 = ssub.s32 %s26, %s33
      %p307 = scmp.eq.s32.totalorder %s306, 0
      %s309 = sadd.s32 %s308, 1
      %s310 = scalar_select %p307, %s308, %s309
      %p313 = pneg %p307
      %p314 = scmp.eq.s32.totalorder %s26, 3
      %p315 = por %p313, %p314
      %p316 = scmp.ne.s32.totalorder %s308, %s311
      %p317 = scmp.eq.s32.totalorder %s26, 0
      %p318 = por %p316, %p317
      %p319 = scmp.ne.s32.totalorder %s308, %s311
      %p320 = scmp.eq.s32.totalorder %s31, 3
      %p321 = por %p319, %p320
      %p322 = scmp.ne.s32.totalorder %s311, %s312
      %p323 = scmp.eq.s32.totalorder %s31, 0
      %p324 = por %p322, %p323
      %p325 = scmp.ne.s32.totalorder %s311, %s312
      %p326 = scmp.eq.s32.totalorder %s32, 3
      %p327 = por %p325, %p326
      %p329 = scmp.ne.s32.totalorder %s312, %s328
      %p330 = scmp.eq.s32.totalorder %s32, 0
      %p331 = por %p329, %p330
      %s332 = ssub.s32 %s26, %s33
      %p333 = scmp.eq.s32.totalorder %s332, 0
      %s335 = sadd.s32 %s334, 1
      %s336 = scalar_select %p333, %s334, %s335
      %p339 = pneg %p333
      %p340 = scmp.eq.s32.totalorder %s26, 3
      %p341 = por %p339, %p340
      %p342 = scmp.ne.s32.totalorder %s334, %s337
      %p343 = scmp.eq.s32.totalorder %s26, 0
      %p344 = por %p342, %p343
      %p345 = scmp.ne.s32.totalorder %s334, %s337
      %p346 = scmp.eq.s32.totalorder %s31, 3
      %p347 = por %p345, %p346
      %p348 = scmp.ne.s32.totalorder %s337, %s338
      %p349 = scmp.eq.s32.totalorder %s31, 0
      %p350 = por %p348, %p349
      %p351 = scmp.ne.s32.totalorder %s337, %s338
      %p352 = scmp.eq.s32.totalorder %s32, 3
      %p353 = por %p351, %p352
      %p355 = scmp.ne.s32.totalorder %s338, %s354
      %p356 = scmp.eq.s32.totalorder %s32, 0
      %p357 = por %p355, %p356
      %s358 = ssub.s32 %s26, %s33
      %p359 = scmp.eq.s32.totalorder %s358, 0
      %s361 = sadd.s32 %s360, 1
      %s362 = scalar_select %p359, %s360, %s361
      %p365 = pneg %p359
      %p366 = scmp.eq.s32.totalorder %s26, 3
      %p367 = por %p365, %p366
      %p368 = scmp.ne.s32.totalorder %s360, %s363
      %p369 = scmp.eq.s32.totalorder %s26, 0
      %p370 = por %p368, %p369
      %p371 = scmp.ne.s32.totalorder %s360, %s363
      %p372 = scmp.eq.s32.totalorder %s31, 3
      %p373 = por %p371, %p372
      %p374 = scmp.ne.s32.totalorder %s363, %s364
      %p375 = scmp.eq.s32.totalorder %s31, 0
      %p376 = por %p374, %p375
      %p377 = scmp.ne.s32.totalorder %s363, %s364
      %p378 = scmp.eq.s32.totalorder %s32, 3
      %p379 = por %p377, %p378
      %p381 = scmp.ne.s32.totalorder %s364, %s380
      %p382 = scmp.eq.s32.totalorder %s32, 0
      %p383 = por %p381, %p382
      %s384 = ssub.s32 %s26, %s33
      %p385 = scmp.eq.s32.totalorder %s384, 0
      %s387 = sadd.s32 %s386, 1
      %s388 = scalar_select %p385, %s386, %s387
      %p391 = pneg %p385
      %p392 = scmp.eq.s32.totalorder %s26, 3
      %p393 = por %p391, %p392
      %p394 = scmp.ne.s32.totalorder %s386, %s389
      %p395 = scmp.eq.s32.totalorder %s26, 0
      %p396 = por %p394, %p395
      %p397 = scmp.ne.s32.totalorder %s386, %s389
      %p398 = scmp.eq.s32.totalorder %s31, 3
      %p399 = por %p397, %p398
      %p400 = scmp.ne.s32.totalorder %s389, %s390
      %p401 = scmp.eq.s32.totalorder %s31, 0
      %p402 = por %p400, %p401
      %p403 = scmp.ne.s32.totalorder %s389, %s390
      %p404 = scmp.eq.s32.totalorder %s32, 3
      %p405 = por %p403, %p404
      %p407 = scmp.ne.s32.totalorder %s390, %s406
      %p408 = scmp.eq.s32.totalorder %s32, 0
      %p409 = por %p407, %p408
      %s410 = ssub.s32 %s26, %s33
      %p411 = scmp.eq.s32.totalorder %s410, 0
      %s413 = sadd.s32 %s412, 1
      %s414 = scalar_select %p411, %s412, %s413
      %p417 = pneg %p411
      %p418 = scmp.eq.s32.totalorder %s26, 3
      %p419 = por %p417, %p418
      %p420 = scmp.ne.s32.totalorder %s412, %s415
      %p421 = scmp.eq.s32.totalorder %s26, 0
      %p422 = por %p420, %p421
      %p423 = scmp.ne.s32.totalorder %s412, %s415
      %p424 = scmp.eq.s32.totalorder %s31, 3
      %p425 = por %p423, %p424
      %p426 = scmp.ne.s32.totalorder %s415, %s416
      %p427 = scmp.eq.s32.totalorder %s31, 0
      %p428 = por %p426, %p427
      %p429 = scmp.ne.s32.totalorder %s415, %s416
      %p430 = scmp.eq.s32.totalorder %s32, 3
      %p431 = por %p429, %p430
      %p433 = scmp.ne.s32.totalorder %s416, %s432
      %p434 = scmp.eq.s32.totalorder %s32, 0
      %p435 = por %p433, %p434
      %s436 = ssub.s32 %s26, %s33
      %p437 = scmp.eq.s32.totalorder %s436, 0
      %s439 = sadd.s32 %s438, 1
      %s440 = scalar_select %p437, %s438, %s439
      %p443 = pneg %p437
      %p444 = scmp.eq.s32.totalorder %s26, 3
      %p445 = por %p443, %p444
      %p446 = scmp.ne.s32.totalorder %s438, %s441
      %p447 = scmp.eq.s32.totalorder %s26, 0
      %p448 = por %p446, %p447
      %p449 = scmp.ne.s32.totalorder %s438, %s441
      %p450 = scmp.eq.s32.totalorder %s31, 3
      %p451 = por %p449, %p450
      %p452 = scmp.ne.s32.totalorder %s441, %s442
      %p453 = scmp.eq.s32.totalorder %s31, 0
      %p454 = por %p452, %p453
      %p455 = scmp.ne.s32.totalorder %s441, %s442
      %p456 = scmp.eq.s32.totalorder %s32, 3
      %p457 = por %p455, %p456
      %p459 = scmp.ne.s32.totalorder %s442, %s458
      %p460 = scmp.eq.s32.totalorder %s32, 0
      %p461 = por %p459, %p460
      %s462 = ssub.s32 %s26, %s33
      %p463 = scmp.eq.s32.totalorder %s462, 0
      %s465 = sadd.s32 %s464, 1
      %s466 = scalar_select %p463, %s464, %s465
      %p469 = pneg %p463
      %p470 = scmp.eq.s32.totalorder %s26, 3
      %p471 = por %p469, %p470
      %p472 = scmp.ne.s32.totalorder %s464, %s467
      %p473 = scmp.eq.s32.totalorder %s26, 0
      %p474 = por %p472, %p473
      %p475 = scmp.ne.s32.totalorder %s464, %s467
      %p476 = scmp.eq.s32.totalorder %s31, 3
      %p477 = por %p475, %p476
      %p478 = scmp.ne.s32.totalorder %s467, %s468
      %p479 = scmp.eq.s32.totalorder %s31, 0
      %p480 = por %p478, %p479
      %p481 = scmp.ne.s32.totalorder %s467, %s468
      %p482 = scmp.eq.s32.totalorder %s32, 3
      %p483 = por %p481, %p482
      %p485 = scmp.ne.s32.totalorder %s468, %s484
      %p486 = scmp.eq.s32.totalorder %s32, 0
      %p487 = por %p485, %p486
      %s489 = sadd.s32 %s488, 1
      %p492 = scmp.eq.s32.totalorder %s26, 3
      %p493 = scmp.ne.s32.totalorder %s488, %s490
      %p494 = scmp.eq.s32.totalorder %s26, 0
      %p495 = por %p493, %p494
      %p496 = scmp.ne.s32.totalorder %s488, %s490
      %p497 = scmp.eq.s32.totalorder %s31, 3
      %p498 = por %p496, %p497
      %p499 = scmp.ne.s32.totalorder %s490, %s491
      %p500 = scmp.eq.s32.totalorder %s31, 0
      %p501 = por %p499, %p500
      %p502 = scmp.ne.s32.totalorder %s490, %s491
      %p503 = scmp.eq.s32.totalorder %s32, 3
      %p504 = por %p502, %p503
      %p506 = scmp.ne.s32.totalorder %s491, %s505
      %p507 = scmp.eq.s32.totalorder %s32, 0
      %p508 = por %p506, %p507
      %p509 = scmp.le.s32.totalorder 1, %s26
      %p510 = scmp.lt.s32.totalorder %s26, 5
      %p511 = pnand %p509, %p510
      %p512 = pneg %p511
      // Predicated region
      $region9: #{egnn_forward.1} parent=5 // pred_check
        _
      $region10: #{egnn_forward.1} parent=5 // pred_check_branch
        %514 = sbr.rel (%p511) target = $region12
      $region11: #{egnn_forward.1} parent=5 // pred_region
        %s515 = ssub.s32 %s26, 1
        // Predicated region
        $region13: #{egnn_forward.1} parent=11 // pred_check
          %p516 = pneg %p47
        $region14: #{egnn_forward.1} parent=11 // pred_check_branch
          %518 = sbr.rel (%p516) target = $region16
        $region15: #{egnn_forward.1} parent=11 // pred_region
          _
        $region16: #{egnn_forward.1} parent=11 // pred_fallthru
          _
        // Predicated region
        $region17: #{egnn_forward.1} parent=11 // pred_check
          %p519 = pneg %p68
        $region18: #{egnn_forward.1} parent=11 // pred_check_branch
          %521 = sbr.rel (%p519) target = $region20
        $region19: #{egnn_forward.1} parent=11 // pred_region
          _
        $region20: #{egnn_forward.1} parent=11 // pred_fallthru
          _
        // Predicated region
        $region21: #{egnn_forward.1} parent=11 // pred_check
          %p522 = pneg %p89
        $region22: #{egnn_forward.1} parent=11 // pred_check_branch
          %524 = sbr.rel (%p522) target = $region24
        $region23: #{egnn_forward.1} parent=11 // pred_region
          _
        $region24: #{egnn_forward.1} parent=11 // pred_fallthru
          _
        // Predicated region
        $region25: #{egnn_forward.1} parent=11 // pred_check
          %p525 = pneg %p110
        $region26: #{egnn_forward.1} parent=11 // pred_check_branch
          %527 = sbr.rel (%p525) target = $region28
        $region27: #{egnn_forward.1} parent=11 // pred_region
          _
        $region28: #{egnn_forward.1} parent=11 // pred_fallthru
          _
        // Predicated region
        $region29: #{egnn_forward.1} parent=11 // pred_check
          %p528 = pneg %p131
        $region30: #{egnn_forward.1} parent=11 // pred_check_branch
          %530 = sbr.rel (%p528) target = $region32
        $region31: #{egnn_forward.1} parent=11 // pred_region
          _
        $region32: #{egnn_forward.1} parent=11 // pred_fallthru
          _
        // Predicated region
        $region33: #{egnn_forward.1} parent=11 // pred_check
          %p531 = pneg %p152
        $region34: #{egnn_forward.1} parent=11 // pred_check_branch
          %533 = sbr.rel (%p531) target = $region36
        $region35: #{egnn_forward.1} parent=11 // pred_region
          _
        $region36: #{egnn_forward.1} parent=11 // pred_fallthru
          _
        // Predicated region
        $region37: #{egnn_forward.1} parent=11 // pred_check
          %p534 = pneg %p173
        $region38: #{egnn_forward.1} parent=11 // pred_check_branch
          %536 = sbr.rel (%p534) target = $region40
        $region39: #{egnn_forward.1} parent=11 // pred_region
          _
        $region40: #{egnn_forward.1} parent=11 // pred_fallthru
          _
        // Predicated region
        $region41: #{egnn_forward.1} parent=11 // pred_check
          %p537 = pneg %p194
        $region42: #{egnn_forward.1} parent=11 // pred_check_branch
          %539 = sbr.rel (%p537) target = $region44
        $region43: #{egnn_forward.1} parent=11 // pred_region
          _
        $region44: #{egnn_forward.1} parent=11 // pred_fallthru
          _
      $region12: #{egnn_forward.1} parent=5 // pred_fallthru
        _
      %p540 = scmp.lt.s32.totalorder %s26, 4
      // Predicated region
      $region45: #{egnn_forward.1} parent=5 // pred_check
        %p541 = pneg %p540
      $region46: #{egnn_forward.1} parent=5 // pred_check_branch
        %543 = sbr.rel (%p541) target = $region48
      $region47: #{egnn_forward.1} parent=5 // pred_region
        // Predicated region
        $region49: #{egnn_forward.1} parent=47 // pred_check
          %p544 = pneg %p214
        $region50: #{egnn_forward.1} parent=47 // pred_check_branch
          %546 = sbr.rel (%p544) target = $region52
        $region51: #{egnn_forward.1} parent=47 // pred_region
          %p547 = scmp.lt.s32.totalorder %s26, 3
          %s548 = scalar_select %p547, %s26, 3
          %s549 = smul.addr %s548, 16
          %s550 = smul.addr %s549, 8
          %s551 = scalar_lea.vmem %s8, %s550
        $region52: #{egnn_forward.1} parent=47 // pred_fallthru
          _
        // Predicated region
        $region53: #{egnn_forward.1} parent=47 // pred_check
          %p552 = pneg %p240
        $region54: #{egnn_forward.1} parent=47 // pred_check_branch
          %554 = sbr.rel (%p552) target = $region56
        $region55: #{egnn_forward.1} parent=47 // pred_region
          %p555 = scmp.lt.s32.totalorder %s26, 3
          %s556 = scalar_select %p555, %s26, 3
          %s557 = smul.addr %s556, 16
          %s558 = smul.addr %s557, 8
          %s559 = scalar_lea.vmem %s9, %s558
        $region56: #{egnn_forward.1} parent=47 // pred_fallthru
          _
        // Predicated region
        $region57: #{egnn_forward.1} parent=47 // pred_check
          %p560 = pneg %p266
        $region58: #{egnn_forward.1} parent=47 // pred_check_branch
          %562 = sbr.rel (%p560) target = $region60
        $region59: #{egnn_forward.1} parent=47 // pred_region
          %p563 = scmp.lt.s32.totalorder %s26, 3
          %s564 = scalar_select %p563, %s26, 3
          %s565 = scalar_lea.vmem %s10, %s564
        $region60: #{egnn_forward.1} parent=47 // pred_fallthru
          _
        // Predicated region
        $region61: #{egnn_forward.1} parent=47 // pred_check
          %p566 = pneg %p292
        $region62: #{egnn_forward.1} parent=47 // pred_check_branch
          %568 = sbr.rel (%p566) target = $region64
        $region63: #{egnn_forward.1} parent=47 // pred_region
          %p569 = scmp.lt.s32.totalorder %s26, 3
          %s570 = scalar_select %p569, %s26, 3
          %s571 = scalar_lea.vmem %s11, %s570
        $region64: #{egnn_forward.1} parent=47 // pred_fallthru
          _
        // Predicated region
        $region65: #{egnn_forward.1} parent=47 // pred_check
          %p572 = pneg %p318
        $region66: #{egnn_forward.1} parent=47 // pred_check_branch
          %574 = sbr.rel (%p572) target = $region68
        $region67: #{egnn_forward.1} parent=47 // pred_region
          %p575 = scmp.lt.s32.totalorder %s26, 3
          %s576 = scalar_select %p575, %s26, 3
          %s577 = smul.addr %s576, 16
          %s578 = smul.addr %s577, 8
          %s579 = scalar_lea.vmem %s12, %s578
        $region68: #{egnn_forward.1} parent=47 // pred_fallthru
          _
        // Predicated region
        $region69: #{egnn_forward.1} parent=47 // pred_check
          %p580 = pneg %p344
        $region70: #{egnn_forward.1} parent=47 // pred_check_branch
          %582 = sbr.rel (%p580) target = $region72
        $region71: #{egnn_forward.1} parent=47 // pred_region
          %p583 = scmp.lt.s32.totalorder %s26, 3
          %s584 = scalar_select %p583, %s26, 3
          %s585 = scalar_lea.vmem %s13, %s584
        $region72: #{egnn_forward.1} parent=47 // pred_fallthru
          _
        // Predicated region
        $region73: #{egnn_forward.1} parent=47 // pred_check
          %p586 = pneg %p370
        $region74: #{egnn_forward.1} parent=47 // pred_check_branch
          %588 = sbr.rel (%p586) target = $region76
        $region75: #{egnn_forward.1} parent=47 // pred_region
          %p589 = scmp.lt.s32.totalorder %s26, 3
          %s590 = scalar_select %p589, %s26, 3
          %s591 = smul.addr %s590, 16
          %s592 = smul.addr %s591, 8
          %s593 = scalar_lea.vmem %s14, %s592
        $region76: #{egnn_forward.1} parent=47 // pred_fallthru
          _
        // Predicated region
        $region77: #{egnn_forward.1} parent=47 // pred_check
          %p594 = pneg %p396
        $region78: #{egnn_forward.1} parent=47 // pred_check_branch
          %596 = sbr.rel (%p594) target = $region80
        $region79: #{egnn_forward.1} parent=47 // pred_region
          %p597 = scmp.lt.s32.totalorder %s26, 3
          %s598 = scalar_select %p597, %s26, 3
          %s599 = smul.addr %s598, 16
          %s600 = smul.addr %s599, 8
          %s601 = scalar_lea.vmem %s15, %s600
        $region80: #{egnn_forward.1} parent=47 // pred_fallthru
          _
        // Predicated region
        $region81: #{egnn_forward.1} parent=47 // pred_check
          %p602 = pneg %p422
        $region82: #{egnn_forward.1} parent=47 // pred_check_branch
          %604 = sbr.rel (%p602) target = $region84
        $region83: #{egnn_forward.1} parent=47 // pred_region
          %p605 = scmp.lt.s32.totalorder %s26, 3
          %s606 = scalar_select %p605, %s26, 3
          %s607 = scalar_lea.vmem %s16, %s606
        $region84: #{egnn_forward.1} parent=47 // pred_fallthru
          _
        // Predicated region
        $region85: #{egnn_forward.1} parent=47 // pred_check
          %p608 = pneg %p448
        $region86: #{egnn_forward.1} parent=47 // pred_check_branch
          %610 = sbr.rel (%p608) target = $region88
        $region87: #{egnn_forward.1} parent=47 // pred_region
          %p611 = scmp.lt.s32.totalorder %s26, 3
          %s612 = scalar_select %p611, %s26, 3
          %s613 = smul.addr %s612, 16
          %s614 = smul.addr %s613, 8
          %s615 = scalar_lea.vmem %s17, %s614
        $region88: #{egnn_forward.1} parent=47 // pred_fallthru
          _
        // Predicated region
        $region89: #{egnn_forward.1} parent=47 // pred_check
          %p616 = pneg %p474
        $region90: #{egnn_forward.1} parent=47 // pred_check_branch
          %618 = sbr.rel (%p616) target = $region92
        $region91: #{egnn_forward.1} parent=47 // pred_region
          %p619 = scmp.lt.s32.totalorder %s26, 3
          %s620 = scalar_select %p619, %s26, 3
          %s621 = scalar_lea.vmem %s18, %s620
        $region92: #{egnn_forward.1} parent=47 // pred_fallthru
          _
      $region48: #{egnn_forward.1} parent=5 // pred_fallthru
        _
      %p622 = scmp.le.s32.totalorder 1, %s26
      %p623 = scmp.lt.s32.totalorder %s26, 5
      %p624 = pnand %p622, %p623
      %p625 = pneg %p624
      // Predicated region
      $region93: #{egnn_forward.1} parent=5 // pred_check
        _
      $region94: #{egnn_forward.1} parent=5 // pred_check_branch
        %627 = sbr.rel (%p624) target = $region96
      $region95: #{egnn_forward.1} parent=5 // pred_region
        %s628 = ssub.s32 %s26, 1
        %p629 = pneg %p47
        %p630 = pneg %p44
        %p631 = pneg %p68
        %p632 = pneg %p65
        %p633 = pneg %p89
        %p634 = pneg %p86
        %p635 = pneg %p110
        %p636 = pneg %p107
        %p637 = pneg %p131
        %p638 = pneg %p128
        %p639 = pneg %p152
        %p640 = pneg %p149
        %p641 = pneg %p173
        %p642 = pneg %p170
        %p643 = pneg %p194
        %p644 = pneg %p191
        %p645 = scmp.lt.s32.totalorder %s31, 3
        %s646 = scalar_select %p645, %s31, 3
        %s647 = smul.addr %s646, 16
        %s648 = smul.addr %s647, 8
        %s649 = scalar_lea.vmem %s8, %s648
        %p650 = pneg %p220
        %p651 = pneg %p217
        %p652 = scmp.lt.s32.totalorder %s31, 3
        %s653 = scalar_select %p652, %s31, 3
        %s654 = smul.addr %s653, 16
        %s655 = smul.addr %s654, 8
        %s656 = scalar_lea.vmem %s9, %s655
        %p657 = pneg %p246
        %p658 = pneg %p243
        %p659 = scmp.lt.s32.totalorder %s31, 3
        %s660 = scalar_select %p659, %s31, 3
        %s661 = scalar_lea.vmem %s10, %s660
        %p662 = pneg %p272
        %p663 = pneg %p269
        %p664 = scmp.lt.s32.totalorder %s31, 3
        %s665 = scalar_select %p664, %s31, 3
        %s666 = scalar_lea.vmem %s11, %s665
        %p667 = pneg %p298
        %p668 = pneg %p295
        %p669 = scmp.lt.s32.totalorder %s31, 3
        %s670 = scalar_select %p669, %s31, 3
        %s671 = smul.addr %s670, 16
        %s672 = smul.addr %s671, 8
        %s673 = scalar_lea.vmem %s12, %s672
        %p674 = pneg %p324
        %p675 = pneg %p321
        %p676 = scmp.lt.s32.totalorder %s31, 3
        %s677 = scalar_select %p676, %s31, 3
        %s678 = scalar_lea.vmem %s13, %s677
        %p679 = pneg %p350
        %p680 = pneg %p347
        %p681 = scmp.lt.s32.totalorder %s31, 3
        %s682 = scalar_select %p681, %s31, 3
        %s683 = smul.addr %s682, 16
        %s684 = smul.addr %s683, 8
        %s685 = scalar_lea.vmem %s14, %s684
        %p686 = pneg %p376
        %p687 = pneg %p373
        %p688 = scmp.lt.s32.totalorder %s31, 3
        %s689 = scalar_select %p688, %s31, 3
        %s690 = smul.addr %s689, 16
        %s691 = smul.addr %s690, 8
        %s692 = scalar_lea.vmem %s15, %s691
        %p693 = pneg %p402
        %p694 = pneg %p399
        %p695 = scmp.lt.s32.totalorder %s31, 3
        %s696 = scalar_select %p695, %s31, 3
        %s697 = scalar_lea.vmem %s16, %s696
        %p698 = pneg %p428
        %p699 = pneg %p425
        %p700 = scmp.lt.s32.totalorder %s31, 3
        %s701 = scalar_select %p700, %s31, 3
        %s702 = smul.addr %s701, 16
        %s703 = smul.addr %s702, 8
        %s704 = scalar_lea.vmem %s17, %s703
        %p705 = pneg %p454
        %p706 = pneg %p451
        %p707 = scmp.lt.s32.totalorder %s31, 3
        %s708 = scalar_select %p707, %s31, 3
        %s709 = scalar_lea.vmem %s18, %s708
        %p710 = pneg %p480
        %p711 = pneg %p477
        %p712 = pneg %p501
        %p713 = pneg %p498
        %p714 = scmp.lt.s32.totalorder %s31, 3
        %s715 = scalar_select %p714, %s31, 3
        %s716 = smul.addr %s715, 16
        %s717 = smul.addr %s716, 8
        %s718 = scalar_lea.vmem %s8, %s717
        %p719 = scmp.lt.s32.totalorder %s31, 3
        %s720 = scalar_select %p719, %s31, 3
        %s721 = smul.addr %s720, 16
        %s722 = smul.addr %s721, 8
        %s723 = scalar_lea.vmem %s9, %s722
        %p724 = scmp.lt.s32.totalorder %s31, 3
        %s725 = scalar_select %p724, %s31, 3
        %s726 = scalar_lea.vmem %s10, %s725
        %p727 = scmp.lt.s32.totalorder %s31, 3
        %s728 = scalar_select %p727, %s31, 3
        %s729 = scalar_lea.vmem %s11, %s728
        %p730 = scmp.lt.s32.totalorder %s31, 3
        %s731 = scalar_select %p730, %s31, 3
        %s732 = smul.addr %s731, 16
        %s733 = smul.addr %s732, 8
        %s734 = scalar_lea.vmem %s12, %s733
        %p735 = scmp.lt.s32.totalorder %s31, 3
        %s736 = scalar_select %p735, %s31, 3
        %s737 = scalar_lea.vmem %s13, %s736
        %p738 = scmp.lt.s32.totalorder %s31, 3
        %s739 = scalar_select %p738, %s31, 3
        %s740 = smul.addr %s739, 16
        %s741 = smul.addr %s740, 8
        %s742 = scalar_lea.vmem %s14, %s741
        %p743 = scmp.lt.s32.totalorder %s31, 3
        %s744 = scalar_select %p743, %s31, 3
        %s745 = smul.addr %s744, 16
        %s746 = smul.addr %s745, 8
        %s747 = scalar_lea.vmem %s15, %s746
        %p748 = scmp.lt.s32.totalorder %s31, 3
        %s749 = scalar_select %p748, %s31, 3
        %s750 = scalar_lea.vmem %s16, %s749
        %p751 = scmp.lt.s32.totalorder %s31, 3
        %s752 = scalar_select %p751, %s31, 3
        %s753 = smul.addr %s752, 16
        %s754 = smul.addr %s753, 8
        %s755 = scalar_lea.vmem %s17, %s754
        %p756 = scmp.lt.s32.totalorder %s31, 3
        %s757 = scalar_select %p756, %s31, 3
        %s758 = scalar_lea.vmem %s18, %s757
        %p760 = scmp.eq.s32.totalorder %s31, 0
        // Predicated region
        $region97: #{egnn_forward.1} parent=95 // pred_check
          %p761 = pneg %p760
        $region98: #{egnn_forward.1} parent=95 // pred_check_branch
          %763 = sbr.rel (%p761) target = $region100
        $region99: #{egnn_forward.1} parent=95 // pred_region
          %v764 = vld [vmem:[%s0] sm:$0xff]
          %v765 = vld [vmem:[%s0 + $0x8] sm:$0xff]
          %v766 = vld [vmem:[%s0 + $0x10] sm:$0xff]
          %v767 = vld [vmem:[%s0 + $0x18] sm:$0xff]
          %v768 = vld [vmem:[%s4] sm:$0xff]
          %v769 = vld [vmem:[%s4 + $0x8] sm:$0xff]
          %v770 = vld [vmem:[%s5] sm:$0x1]
          %v772 = vperm.slane %v770, 0
          %vm774 = vcmask 130048
          %v776 = vsel %vm774, %v764, 0
          %v779 = vsel %vm774, %v765, 0
          %v782 = vsel %vm774, %v766, 0
          %v785 = vsel %vm774, %v767, 0
          %787 = vmatpush.msra.mxu0 0.0
          %788 = vmatpush.msra.mxu0 0.0
          %789 = vmatpush.msra.mxu0 0.0
          %790 = vmatpush.msra.mxu0 0.0
          %791 = vmatpush.msra.mxu0 0.0
          %792 = vmatpush.msra.mxu0 0.0
          %793 = vmatpush.msra.mxu0 0.0
          %794 = vmatpush.msra.mxu0 0.0
          %795 = vmatpush.msra.mxu0 0.0
          %796 = vmatpush.msra.mxu0 0.0
          %797 = vmatpush.msra.mxu0 0.0
          %798 = vmatpush.msra.mxu0 0.0
          %799 = vmatpush.msra.mxu0 0.0
          %800 = vmatpush.msra.mxu0 0.0
          %801 = vmatpush.msra.mxu0 %v769
          %802 = vmatpush.msra.mxu0 %v768
          %803 = vmatmul.f32.gmra.mxu0 %v776
          %v804 = vpop.f32.mrf.mxu0
          %v805 = vadd.f32 %v772, %v804
          %806 = vmatmul.f32.gmra.mxu0 %v779
          %v807 = vpop.f32.mrf.mxu0
          %v808 = vadd.f32 %v772, %v807
          %809 = vmatmul.f32.gmra.mxu0 %v782
          %v810 = vpop.f32.mrf.mxu0
          %v811 = vadd.f32 %v772, %v810
          %812 = vmatmul.f32.gmra.mxu0 %v785
          %v813 = vpop.f32.mrf.mxu0
          %v814 = vadd.f32 %v772, %v813
          %815 = vdwg.mxu0
          %816 = vst [vmem:[#allocation2] sm:$0xff] %v805
          %817 = vst [vmem:[#allocation2 + $0x8] sm:$0xff] %v808
          %818 = vst [vmem:[#allocation2 + $0x10] sm:$0xff] %v811
          %819 = vst [vmem:[#allocation2 + $0x18] sm:$0xff] %v814
        $region100: #{egnn_forward.1} parent=95 // pred_fallthru
          _
        %v820 = vld [vmem:[#allocation2] sm:$0xff]
        %v821 = vld [vmem:[#allocation2 + $0x8] sm:$0xff]
        %v822 = vld [vmem:[#allocation2 + $0x10] sm:$0xff]
        %v823 = vld [vmem:[#allocation2 + $0x18] sm:$0xff]
        %v824 = vld [vmem:[%s718] sm:$0xff]
        %v825 = vld [vmem:[%s718 + $0x8] sm:$0xff]
        %v826 = vld [vmem:[%s718 + $0x10] sm:$0xff]
        %v827 = vld [vmem:[%s718 + $0x18] sm:$0xff]
        %v828 = vld [vmem:[%s718 + $0x20] sm:$0xff]
        %v829 = vld [vmem:[%s718 + $0x28] sm:$0xff]
        %v830 = vld [vmem:[%s718 + $0x30] sm:$0xff]
        %v831 = vld [vmem:[%s718 + $0x38] sm:$0xff]
        %v832 = vld [vmem:[%s718 + $0x40] sm:$0xff]
        %v833 = vld [vmem:[%s718 + $0x48] sm:$0xff]
        %v834 = vld [vmem:[%s718 + $0x50] sm:$0xff]
        %v835 = vld [vmem:[%s718 + $0x58] sm:$0xff]
        %v836 = vld [vmem:[%s718 + $0x60] sm:$0xff]
        %v837 = vld [vmem:[%s718 + $0x68] sm:$0xff]
        %v838 = vld [vmem:[%s718 + $0x70] sm:$0xff]
        %v839 = vld [vmem:[%s718 + $0x78] sm:$0xff]
        %840 = vmatpush.msra.mxu0 %v839
        %841 = vmatpush.msra.mxu0 %v838
        %842 = vmatpush.msra.mxu0 %v837
        %843 = vmatpush.msra.mxu0 %v836
        %844 = vmatpush.msra.mxu0 %v835
        %845 = vmatpush.msra.mxu0 %v834
        %846 = vmatpush.msra.mxu0 %v833
        %847 = vmatpush.msra.mxu0 %v832
        %848 = vmatpush.msra.mxu0 %v831
        %849 = vmatpush.msra.mxu0 %v830
        %850 = vmatpush.msra.mxu0 %v829
        %851 = vmatpush.msra.mxu0 %v828
        %852 = vmatpush.msra.mxu0 %v827
        %853 = vmatpush.msra.mxu0 %v826
        %854 = vmatpush.msra.mxu0 %v825
        %855 = vmatpush.msra.mxu0 %v824
        %856 = vmatmul.f32.gmra.mxu0 %v820
        %v857 = vpop.f32.mrf.mxu0
        %v858 = vadd.f32 0.0, %v857
        %859 = vmatmul.f32.gmra.mxu0 %v821
        %v860 = vpop.f32.mrf.mxu0
        %v861 = vadd.f32 0.0, %v860
        %862 = vmatmul.f32.gmra.mxu0 %v822
        %v863 = vpop.f32.mrf.mxu0
        %v864 = vadd.f32 0.0, %v863
        %865 = vmatmul.f32.gmra.mxu0 %v823
        %v866 = vpop.f32.mrf.mxu0
        %v867 = vadd.f32 0.0, %v866
        %868 = vdwg.mxu0
        %v869 = vpack.c.bf16 %v858, %v858
        %v870 = vpack.c.bf16 %v861, %v861
        %v871 = vpack.c.bf16 %v864, %v864
        %v872 = vpack.c.bf16 %v867, %v867
        %873 = vst [vmem:[#allocation3] sm:$0xf] %v869
        %874 = vst [vmem:[#allocation3 + $0x4] sm:$0xf] %v870
        %875 = vst [vmem:[#allocation3 + $0x8] sm:$0xf] %v871
        %876 = vst [vmem:[#allocation3 + $0xc] sm:$0xf] %v872
        %v877 = vld [vmem:[%s723] sm:$0xff]
        %v878 = vld [vmem:[%s723 + $0x8] sm:$0xff]
        %v879 = vld [vmem:[%s723 + $0x10] sm:$0xff]
        %v880 = vld [vmem:[%s723 + $0x18] sm:$0xff]
        %v881 = vld [vmem:[%s723 + $0x20] sm:$0xff]
        %v882 = vld [vmem:[%s723 + $0x28] sm:$0xff]
        %v883 = vld [vmem:[%s723 + $0x30] sm:$0xff]
        %v884 = vld [vmem:[%s723 + $0x38] sm:$0xff]
        %v885 = vld [vmem:[%s723 + $0x40] sm:$0xff]
        %v886 = vld [vmem:[%s723 + $0x48] sm:$0xff]
        %v887 = vld [vmem:[%s723 + $0x50] sm:$0xff]
        %v888 = vld [vmem:[%s723 + $0x58] sm:$0xff]
        %v889 = vld [vmem:[%s723 + $0x60] sm:$0xff]
        %v890 = vld [vmem:[%s723 + $0x68] sm:$0xff]
        %v891 = vld [vmem:[%s723 + $0x70] sm:$0xff]
        %v892 = vld [vmem:[%s723 + $0x78] sm:$0xff]
        %893 = vmatpush.msra.mxu0 %v892
        %894 = vmatpush.msra.mxu0 %v891
        %895 = vmatpush.msra.mxu0 %v890
        %896 = vmatpush.msra.mxu0 %v889
        %897 = vmatpush.msra.mxu0 %v888
        %898 = vmatpush.msra.mxu0 %v887
        %899 = vmatpush.msra.mxu0 %v886
        %900 = vmatpush.msra.mxu0 %v885
        %901 = vmatpush.msra.mxu0 %v884
        %902 = vmatpush.msra.mxu0 %v883
        %903 = vmatpush.msra.mxu0 %v882
        %904 = vmatpush.msra.mxu0 %v881
        %905 = vmatpush.msra.mxu0 %v880
        %906 = vmatpush.msra.mxu0 %v879
        %907 = vmatpush.msra.mxu0 %v878
        %908 = vmatpush.msra.mxu0 %v877
        %909 = vmatmul.f32.gmra.mxu0 %v820
        %v910 = vpop.f32.mrf.mxu0
        %v911 = vadd.f32 0.0, %v910
        %912 = vmatmul.f32.gmra.mxu0 %v821
        %v913 = vpop.f32.mrf.mxu0
        %v914 = vadd.f32 0.0, %v913
        %915 = vmatmul.f32.gmra.mxu0 %v822
        %v916 = vpop.f32.mrf.mxu0
        %v917 = vadd.f32 0.0, %v916
        %918 = vmatmul.f32.gmra.mxu0 %v823
        %v919 = vpop.f32.mrf.mxu0
        %v920 = vadd.f32 0.0, %v919
        %921 = vdwg.mxu0
        %v922 = vpack.c.bf16 %v911, %v911
        %v923 = vpack.c.bf16 %v914, %v914
        %v924 = vpack.c.bf16 %v917, %v917
        %v925 = vpack.c.bf16 %v920, %v920
        %926 = vst [vmem:[#allocation3 + $0x10] sm:$0xf] %v922
        %927 = vst [vmem:[#allocation3 + $0x14] sm:$0xf] %v923
        %928 = vst [vmem:[#allocation3 + $0x18] sm:$0xf] %v924
        %929 = vst [vmem:[#allocation3 + $0x1c] sm:$0xf] %v925
        %v930 = vld [vmem:[%s1] sm:$0xf]
        %v931 = vld [vmem:[%s1 + $0x4] sm:$0xf]
        %v932 = vld [vmem:[%s1 + $0x8] sm:$0xf]
        %v933 = vld [vmem:[%s1 + $0xc] sm:$0xf]
        %v934 = vld [vmem:[%s1 + $0x10] sm:$0xf]
        %v935 = vld [vmem:[%s1 + $0x14] sm:$0xf]
        %v936 = vld [vmem:[%s1 + $0x18] sm:$0xf]
        %v937 = vld [vmem:[%s1 + $0x1c] sm:$0xf]
        %v938 = vld [vmem:[%s1 + $0x20] sm:$0xf]
        %v939 = vld [vmem:[%s1 + $0x24] sm:$0xf]
        %v940 = vld [vmem:[%s1 + $0x28] sm:$0xf]
        %v941 = vld [vmem:[%s1 + $0x2c] sm:$0xf]
        %v942 = vld [vmem:[%s1 + $0x30] sm:$0xf]
        %v943 = vld [vmem:[%s1 + $0x34] sm:$0xf]
        %v944 = vld [vmem:[%s1 + $0x38] sm:$0xf]
        %v945 = vld [vmem:[%s1 + $0x3c] sm:$0xf]
        %v946 = vld [vmem:[%s1 + $0x40] sm:$0xf]
        %v947 = vld [vmem:[%s1 + $0x44] sm:$0xf]
        %v948 = vld [vmem:[%s1 + $0x48] sm:$0xf]
        %v949 = vld [vmem:[%s1 + $0x4c] sm:$0xf]
        %v950 = vld [vmem:[%s1 + $0x50] sm:$0xf]
        %v951 = vld [vmem:[%s1 + $0x54] sm:$0xf]
        %v952 = vld [vmem:[%s1 + $0x58] sm:$0xf]
        %v953 = vld [vmem:[%s1 + $0x5c] sm:$0xf]
        %v954 = vld [vmem:[%s1 + $0x60] sm:$0xf]
        %v955 = vld [vmem:[%s1 + $0x64] sm:$0xf]
        %v956 = vld [vmem:[%s1 + $0x68] sm:$0xf]
        %v957 = vld [vmem:[%s1 + $0x6c] sm:$0xf]
        %v958 = vld [vmem:[%s1 + $0x70] sm:$0xf]
        %v959 = vld [vmem:[%s1 + $0x74] sm:$0xf]
        %v960 = vld [vmem:[%s1 + $0x78] sm:$0xf]
        %v961 = vld [vmem:[%s1 + $0x7c] sm:$0xf]
        %v962 = vld [vmem:[%s1 + $0x80] sm:$0xf]
        %v963 = vld [vmem:[%s1 + $0x84] sm:$0xf]
        %v964 = vld [vmem:[%s1 + $0x88] sm:$0xf]
        %v965 = vld [vmem:[%s1 + $0x8c] sm:$0xf]
        %v966 = vld [vmem:[%s1 + $0x90] sm:$0xf]
        %v967 = vld [vmem:[%s1 + $0x94] sm:$0xf]
        %v968 = vld [vmem:[%s1 + $0x98] sm:$0xf]
        %v969 = vld [vmem:[%s1 + $0x9c] sm:$0xf]
        %v970 = vld [vmem:[%s1 + $0xa0] sm:$0xf]
        %v971 = vld [vmem:[%s1 + $0xa4] sm:$0xf]
        %v972 = vld [vmem:[%s1 + $0xa8] sm:$0xf]
        %v973 = vld [vmem:[%s1 + $0xac] sm:$0xf]
        %v974 = vld [vmem:[%s1 + $0xb0] sm:$0xf]
        %v975 = vld [vmem:[%s1 + $0xb4] sm:$0xf]
        %v976 = vld [vmem:[%s1 + $0xb8] sm:$0xf]
        %v977 = vld [vmem:[%s1 + $0xbc] sm:$0xf]
        %v978 = vld [vmem:[%s1 + $0xc0] sm:$0xf]
        %v979 = vld [vmem:[%s1 + $0xc4] sm:$0xf]
        %v980 = vld [vmem:[%s1 + $0xc8] sm:$0xf]
        %v981 = vld [vmem:[%s1 + $0xcc] sm:$0xf]
        %v982 = vld [vmem:[%s1 + $0xd0] sm:$0xf]
        %v983 = vld [vmem:[%s1 + $0xd4] sm:$0xf]
        %v984 = vld [vmem:[%s1 + $0xd8] sm:$0xf]
        %v985 = vld [vmem:[%s1 + $0xdc] sm:$0xf]
        %v986 = vld [vmem:[%s1 + $0xe0] sm:$0xf]
        %v987 = vld [vmem:[%s1 + $0xe4] sm:$0xf]
        %v988 = vld [vmem:[%s1 + $0xe8] sm:$0xf]
        %v989 = vld [vmem:[%s1 + $0xec] sm:$0xf]
        %v990 = vld [vmem:[%s1 + $0xf0] sm:$0xf]
        %v991 = vld [vmem:[%s1 + $0xf4] sm:$0xf]
        %v992 = vld [vmem:[%s1 + $0xf8] sm:$0xf]
        %v993 = vld [vmem:[%s1 + $0xfc] sm:$0xf]
        %v994 = vld [vmem:[%s1 + $0x100] sm:$0xf]
        %v995 = vld [vmem:[%s1 + $0x104] sm:$0xf]
        %v996 = vld [vmem:[%s1 + $0x108] sm:$0xf]
        %v997 = vld [vmem:[%s1 + $0x10c] sm:$0xf]
        %v998 = vld [vmem:[%s1 + $0x110] sm:$0xf]
        %v999 = vld [vmem:[%s1 + $0x114] sm:$0xf]
        %v1000 = vld [vmem:[%s1 + $0x118] sm:$0xf]
        %v1001 = vld [vmem:[%s1 + $0x11c] sm:$0xf]
        %v1002 = vld [vmem:[%s1 + $0x120] sm:$0xf]
        %v1003 = vld [vmem:[%s1 + $0x124] sm:$0xf]
        %v1004 = vld [vmem:[%s1 + $0x128] sm:$0xf]
        %v1005 = vld [vmem:[%s1 + $0x12c] sm:$0xf]
        %v1006 = vld [vmem:[%s1 + $0x130] sm:$0xf]
        %v1007 = vld [vmem:[%s1 + $0x134] sm:$0xf]
        %v1008 = vld [vmem:[%s1 + $0x138] sm:$0xf]
        %v1009 = vld [vmem:[%s1 + $0x13c] sm:$0xf]
        %v1010 = vld [vmem:[%s1 + $0x140] sm:$0xf]
        %v1011 = vld [vmem:[%s1 + $0x144] sm:$0xf]
        %v1012 = vld [vmem:[%s1 + $0x148] sm:$0xf]
        %v1013 = vld [vmem:[%s1 + $0x14c] sm:$0xf]
        %v1014 = vld [vmem:[%s1 + $0x150] sm:$0xf]
        %v1015 = vld [vmem:[%s1 + $0x154] sm:$0xf]
        %v1016 = vld [vmem:[%s1 + $0x158] sm:$0xf]
        %v1017 = vld [vmem:[%s1 + $0x15c] sm:$0xf]
        %v1018 = vld [vmem:[%s1 + $0x160] sm:$0xf]
        %v1019 = vld [vmem:[%s1 + $0x164] sm:$0xf]
        %v1020 = vld [vmem:[%s1 + $0x168] sm:$0xf]
        %v1021 = vld [vmem:[%s1 + $0x16c] sm:$0xf]
        %v1022 = vld [vmem:[%s1 + $0x170] sm:$0xf]
        %v1023 = vld [vmem:[%s1 + $0x174] sm:$0xf]
        %v1024 = vld [vmem:[%s1 + $0x178] sm:$0xf]
        %v1025 = vld [vmem:[%s1 + $0x17c] sm:$0xf]
        %v1026 = vld [vmem:[%s1 + $0x180] sm:$0xf]
        %v1027 = vld [vmem:[%s1 + $0x184] sm:$0xf]
        %v1028 = vld [vmem:[%s1 + $0x188] sm:$0xf]
        %v1029 = vld [vmem:[%s1 + $0x18c] sm:$0xf]
        %v1030 = vld [vmem:[%s1 + $0x190] sm:$0xf]
        %v1031 = vld [vmem:[%s1 + $0x194] sm:$0xf]
        %v1032 = vld [vmem:[%s1 + $0x198] sm:$0xf]
        %v1033 = vld [vmem:[%s1 + $0x19c] sm:$0xf]
        %v1034 = vld [vmem:[%s1 + $0x1a0] sm:$0xf]
        %v1035 = vld [vmem:[%s1 + $0x1a4] sm:$0xf]
        %v1036 = vld [vmem:[%s1 + $0x1a8] sm:$0xf]
        %v1037 = vld [vmem:[%s1 + $0x1ac] sm:$0xf]
        %v1038 = vld [vmem:[%s1 + $0x1b0] sm:$0xf]
        %v1039 = vld [vmem:[%s1 + $0x1b4] sm:$0xf]
        %v1040 = vld [vmem:[%s1 + $0x1b8] sm:$0xf]
        %v1041 = vld [vmem:[%s1 + $0x1bc] sm:$0xf]
        %v1042 = vld [vmem:[%s1 + $0x1c0] sm:$0xf]
        %v1043 = vld [vmem:[%s1 + $0x1c4] sm:$0xf]
        %v1044 = vld [vmem:[%s1 + $0x1c8] sm:$0xf]
        %v1045 = vld [vmem:[%s1 + $0x1cc] sm:$0xf]
        %v1046 = vld [vmem:[%s1 + $0x1d0] sm:$0xf]
        %v1047 = vld [vmem:[%s1 + $0x1d4] sm:$0xf]
        %v1048 = vld [vmem:[%s1 + $0x1d8] sm:$0xf]
        %v1049 = vld [vmem:[%s1 + $0x1dc] sm:$0xf]
        %v1050 = vld [vmem:[%s1 + $0x1e0] sm:$0xf]
        %v1051 = vld [vmem:[%s1 + $0x1e4] sm:$0xf]
        %v1052 = vld [vmem:[%s1 + $0x1e8] sm:$0xf]
        %v1053 = vld [vmem:[%s1 + $0x1ec] sm:$0xf]
        %v1054 = vld [vmem:[#allocation3] sm:$0xf]
        %v1055 = vld [vmem:[#allocation3 + $0x4] sm:$0xf]
        %v1056 = vld [vmem:[#allocation3 + $0x8] sm:$0xf]
        %v1057 = vld [vmem:[#allocation3 + $0xc] sm:$0xf]
        %v1058 = vld [vmem:[#allocation3 + $0x10] sm:$0xf]
        %v1059 = vld [vmem:[#allocation3 + $0x14] sm:$0xf]
        %v1060 = vld [vmem:[#allocation3 + $0x18] sm:$0xf]
        %v1061 = vld [vmem:[#allocation3 + $0x1c] sm:$0xf]
        %v1062 = vld [vmem:[%s3] sm:$0xff]
        %v1063 = vld [vmem:[%s3 + $0x8] sm:$0xff]
        %v1064 = vld [vmem:[%s3 + $0x10] sm:$0xff]
        %v1065 = vld [vmem:[%s3 + $0x18] sm:$0xff]
        %v1066 = vld [vmem:[%s3 + $0x20] sm:$0xff]
        %v1067 = vld [vmem:[%s3 + $0x28] sm:$0xff]
        %v1068 = vld [vmem:[%s3 + $0x30] sm:$0xff]
        %v1069 = vld [vmem:[%s3 + $0x38] sm:$0xff]
        %v1070 = vld [vmem:[%s3 + $0x40] sm:$0xff]
        %v1071 = vld [vmem:[%s3 + $0x48] sm:$0xff]
        %v1072 = vld [vmem:[%s3 + $0x50] sm:$0xff]
        %v1073 = vld [vmem:[%s3 + $0x58] sm:$0xff]
        %v1074 = vld [vmem:[%s3 + $0x60] sm:$0xff]
        %v1075 = vld [vmem:[%s3 + $0x68] sm:$0xff]
        %v1076 = vld [vmem:[%s3 + $0x70] sm:$0xff]
        %v1077 = vld [vmem:[%s3 + $0x78] sm:$0xff]
        %v1078 = vld [vmem:[%s3 + $0x80] sm:$0xff]
        %v1079 = vld [vmem:[%s3 + $0x88] sm:$0xff]
        %v1080 = vld [vmem:[%s3 + $0x90] sm:$0xff]
        %v1081 = vld [vmem:[%s3 + $0x98] sm:$0xff]
        %v1082 = vld [vmem:[%s3 + $0xa0] sm:$0xff]
        %v1083 = vld [vmem:[%s3 + $0xa8] sm:$0xff]
        %v1084 = vld [vmem:[%s3 + $0xb0] sm:$0xff]
        %v1085 = vld [vmem:[%s3 + $0xb8] sm:$0xff]
        %v1086 = vld [vmem:[%s3 + $0xc0] sm:$0xff]
        %v1087 = vld [vmem:[%s3 + $0xc8] sm:$0xff]
        %v1088 = vld [vmem:[%s3 + $0xd0] sm:$0xff]
        %v1089 = vld [vmem:[%s3 + $0xd8] sm:$0xff]
        %v1090 = vld [vmem:[%s3 + $0xe0] sm:$0xff]
        %v1091 = vld [vmem:[%s3 + $0xe8] sm:$0xff]
        %v1092 = vld [vmem:[%s3 + $0xf0] sm:$0xff]
        %v1093 = vld [vmem:[%s3 + $0xf8] sm:$0xff]
        %v1094 = vld [vmem:[%s3 + $0x100] sm:$0xff]
        %v1095 = vld [vmem:[%s3 + $0x108] sm:$0xff]
        %v1096 = vld [vmem:[%s3 + $0x110] sm:$0xff]
        %v1097 = vld [vmem:[%s3 + $0x118] sm:$0xff]
        %v1098 = vld [vmem:[%s3 + $0x120] sm:$0xff]
        %v1099 = vld [vmem:[%s3 + $0x128] sm:$0xff]
        %v1100 = vld [vmem:[%s3 + $0x130] sm:$0xff]
        %v1101 = vld [vmem:[%s3 + $0x138] sm:$0xff]
        %v1102 = vld [vmem:[%s3 + $0x140] sm:$0xff]
        %v1103 = vld [vmem:[%s3 + $0x148] sm:$0xff]
        %v1104 = vld [vmem:[%s3 + $0x150] sm:$0xff]
        %v1105 = vld [vmem:[%s3 + $0x158] sm:$0xff]
        %v1106 = vld [vmem:[%s3 + $0x160] sm:$0xff]
        %v1107 = vld [vmem:[%s3 + $0x168] sm:$0xff]
        %v1108 = vld [vmem:[%s3 + $0x170] sm:$0xff]
        %v1109 = vld [vmem:[%s3 + $0x178] sm:$0xff]
        %v1110 = vld [vmem:[%s3 + $0x180] sm:$0xff]
        %v1111 = vld [vmem:[%s3 + $0x188] sm:$0xff]
        %v1112 = vld [vmem:[%s3 + $0x190] sm:$0xff]
        %v1113 = vld [vmem:[%s3 + $0x198] sm:$0xff]
        %v1114 = vld [vmem:[%s3 + $0x1a0] sm:$0xff]
        %v1115 = vld [vmem:[%s3 + $0x1a8] sm:$0xff]
        %v1116 = vld [vmem:[%s3 + $0x1b0] sm:$0xff]
        %v1117 = vld [vmem:[%s3 + $0x1b8] sm:$0xff]
        %v1118 = vld [vmem:[%s3 + $0x1c0] sm:$0xff]
        %v1119 = vld [vmem:[%s3 + $0x1c8] sm:$0xff]
        %v1120 = vld [vmem:[%s3 + $0x1d0] sm:$0xff]
        %v1121 = vld [vmem:[%s3 + $0x1d8] sm:$0xff]
        %v1122 = vld [vmem:[%s3 + $0x1e0] sm:$0xff]
        %v1123 = vld [vmem:[%s3 + $0x1e8] sm:$0xff]
        %v1124 = vld [vmem:[%s3 + $0x1f0] sm:$0xff]
        %v1125 = vld [vmem:[%s3 + $0x1f8] sm:$0xff]
        %v1126 = vld [vmem:[%s3 + $0x200] sm:$0xff]
        %v1127 = vld [vmem:[%s3 + $0x208] sm:$0xff]
        %v1128 = vld [vmem:[%s3 + $0x210] sm:$0xff]
        %v1129 = vld [vmem:[%s3 + $0x218] sm:$0xff]
        %v1130 = vld [vmem:[%s3 + $0x220] sm:$0xff]
        %v1131 = vld [vmem:[%s3 + $0x228] sm:$0xff]
        %v1132 = vld [vmem:[%s3 + $0x230] sm:$0xff]
        %v1133 = vld [vmem:[%s3 + $0x238] sm:$0xff]
        %v1134 = vld [vmem:[%s3 + $0x240] sm:$0xff]
        %v1135 = vld [vmem:[%s3 + $0x248] sm:$0xff]
        %v1136 = vld [vmem:[%s3 + $0x250] sm:$0xff]
        %v1137 = vld [vmem:[%s3 + $0x258] sm:$0xff]
        %v1138 = vld [vmem:[%s3 + $0x260] sm:$0xff]
        %v1139 = vld [vmem:[%s3 + $0x268] sm:$0xff]
        %v1140 = vld [vmem:[%s3 + $0x270] sm:$0xff]
        %v1141 = vld [vmem:[%s3 + $0x278] sm:$0xff]
        %v1142 = vld [vmem:[%s3 + $0x280] sm:$0xff]
        %v1143 = vld [vmem:[%s3 + $0x288] sm:$0xff]
        %v1144 = vld [vmem:[%s3 + $0x290] sm:$0xff]
        %v1145 = vld [vmem:[%s3 + $0x298] sm:$0xff]
        %v1146 = vld [vmem:[%s3 + $0x2a0] sm:$0xff]
        %v1147 = vld [vmem:[%s3 + $0x2a8] sm:$0xff]
        %v1148 = vld [vmem:[%s3 + $0x2b0] sm:$0xff]
        %v1149 = vld [vmem:[%s3 + $0x2b8] sm:$0xff]
        %v1150 = vld [vmem:[%s3 + $0x2c0] sm:$0xff]
        %v1151 = vld [vmem:[%s3 + $0x2c8] sm:$0xff]
        %v1152 = vld [vmem:[%s3 + $0x2d0] sm:$0xff]
        %v1153 = vld [vmem:[%s3 + $0x2d8] sm:$0xff]
        %v1154 = vld [vmem:[%s3 + $0x2e0] sm:$0xff]
        %v1155 = vld [vmem:[%s3 + $0x2e8] sm:$0xff]
        %v1156 = vld [vmem:[%s3 + $0x2f0] sm:$0xff]
        %v1157 = vld [vmem:[%s3 + $0x2f8] sm:$0xff]
        %v1158 = vld [vmem:[%s3 + $0x300] sm:$0xff]
        %v1159 = vld [vmem:[%s3 + $0x308] sm:$0xff]
        %v1160 = vld [vmem:[%s3 + $0x310] sm:$0xff]
        %v1161 = vld [vmem:[%s3 + $0x318] sm:$0xff]
        %v1162 = vld [vmem:[%s3 + $0x320] sm:$0xff]
        %v1163 = vld [vmem:[%s3 + $0x328] sm:$0xff]
        %v1164 = vld [vmem:[%s3 + $0x330] sm:$0xff]
        %v1165 = vld [vmem:[%s3 + $0x338] sm:$0xff]
        %v1166 = vld [vmem:[%s3 + $0x340] sm:$0xff]
        %v1167 = vld [vmem:[%s3 + $0x348] sm:$0xff]
        %v1168 = vld [vmem:[%s3 + $0x350] sm:$0xff]
        %v1169 = vld [vmem:[%s3 + $0x358] sm:$0xff]
        %v1170 = vld [vmem:[%s3 + $0x360] sm:$0xff]
        %v1171 = vld [vmem:[%s3 + $0x368] sm:$0xff]
        %v1172 = vld [vmem:[%s3 + $0x370] sm:$0xff]
        %v1173 = vld [vmem:[%s3 + $0x378] sm:$0xff]
        %v1174 = vld [vmem:[%s3 + $0x380] sm:$0xff]
        %v1175 = vld [vmem:[%s3 + $0x388] sm:$0xff]
        %v1176 = vld [vmem:[%s3 + $0x390] sm:$0xff]
        %v1177 = vld [vmem:[%s3 + $0x398] sm:$0xff]
        %v1178 = vld [vmem:[%s3 + $0x3a0] sm:$0xff]
        %v1179 = vld [vmem:[%s3 + $0x3a8] sm:$0xff]
        %v1180 = vld [vmem:[%s3 + $0x3b0] sm:$0xff]
        %v1181 = vld [vmem:[%s3 + $0x3b8] sm:$0xff]
        %v1182 = vld [vmem:[%s3 + $0x3c0] sm:$0xff]
        %v1183 = vld [vmem:[%s3 + $0x3c8] sm:$0xff]
        %v1184 = vld [vmem:[%s3 + $0x3d0] sm:$0xff]
        %v1185 = vld [vmem:[%s3 + $0x3d8] sm:$0xff]
        %v1186 = vld [vmem:[%s726] sm:$0x1]
        %1188 = vset.pattern.permute.xlu0 0
        %1189 = vperm.xlu0 %1188, %v1062
        %v1190 = vpop.permute.xlu0 %1189
        %1193 = vset.pattern.permute.xlu0 0
        %1194 = vperm.xlu0 %1193, %v1063
        %v1195 = vpop.permute.xlu0 %1194
        %1198 = vset.pattern.permute.xlu0 0
        %1199 = vperm.xlu0 %1198, %v1064
        %v1200 = vpop.permute.xlu0 %1199
        %1203 = vset.pattern.permute.xlu0 0
        %1204 = vperm.xlu0 %1203, %v1065
        %v1205 = vpop.permute.xlu0 %1204
        %1208 = vset.pattern.permute.xlu0 0
        %1209 = vperm.xlu0 %1208, %v1066
        %v1210 = vpop.permute.xlu0 %1209
        %1213 = vset.pattern.permute.xlu0 0
        %1214 = vperm.xlu0 %1213, %v1067
        %v1215 = vpop.permute.xlu0 %1214
        %1218 = vset.pattern.permute.xlu0 0
        %1219 = vperm.xlu0 %1218, %v1068
        %v1220 = vpop.permute.xlu0 %1219
        %1223 = vset.pattern.permute.xlu0 0
        %1224 = vperm.xlu0 %1223, %v1069
        %v1225 = vpop.permute.xlu0 %1224
        %1228 = vset.pattern.permute.xlu0 0
        %1229 = vperm.xlu0 %1228, %v1070
        %v1230 = vpop.permute.xlu0 %1229
        %1233 = vset.pattern.permute.xlu0 0
        %1234 = vperm.xlu0 %1233, %v1071
        %v1235 = vpop.permute.xlu0 %1234
        %1238 = vset.pattern.permute.xlu0 0
        %1239 = vperm.xlu0 %1238, %v1072
        %v1240 = vpop.permute.xlu0 %1239
        %1243 = vset.pattern.permute.xlu0 0
        %1244 = vperm.xlu0 %1243, %v1073
        %v1245 = vpop.permute.xlu0 %1244
        %1248 = vset.pattern.permute.xlu0 0
        %1249 = vperm.xlu0 %1248, %v1074
        %v1250 = vpop.permute.xlu0 %1249
        %1253 = vset.pattern.permute.xlu0 0
        %1254 = vperm.xlu0 %1253, %v1075
        %v1255 = vpop.permute.xlu0 %1254
        %1258 = vset.pattern.permute.xlu0 0
        %1259 = vperm.xlu0 %1258, %v1076
        %v1260 = vpop.permute.xlu0 %1259
        %1263 = vset.pattern.permute.xlu0 0
        %1264 = vperm.xlu0 %1263, %v1077
        %v1265 = vpop.permute.xlu0 %1264
        %1268 = vset.pattern.permute.xlu0 0
        %1269 = vperm.xlu0 %1268, %v1078
        %v1270 = vpop.permute.xlu0 %1269
        %1273 = vset.pattern.permute.xlu0 0
        %1274 = vperm.xlu0 %1273, %v1079
        %v1275 = vpop.permute.xlu0 %1274
        %1278 = vset.pattern.permute.xlu0 0
        %1279 = vperm.xlu0 %1278, %v1080
        %v1280 = vpop.permute.xlu0 %1279
        %1283 = vset.pattern.permute.xlu0 0
        %1284 = vperm.xlu0 %1283, %v1081
        %v1285 = vpop.permute.xlu0 %1284
        %1288 = vset.pattern.permute.xlu0 0
        %1289 = vperm.xlu0 %1288, %v1082
        %v1290 = vpop.permute.xlu0 %1289
        %1293 = vset.pattern.permute.xlu0 0
        %1294 = vperm.xlu0 %1293, %v1083
        %v1295 = vpop.permute.xlu0 %1294
        %1298 = vset.pattern.permute.xlu0 0
        %1299 = vperm.xlu0 %1298, %v1084
        %v1300 = vpop.permute.xlu0 %1299
        %1303 = vset.pattern.permute.xlu0 0
        %1304 = vperm.xlu0 %1303, %v1085
        %v1305 = vpop.permute.xlu0 %1304
        %1308 = vset.pattern.permute.xlu0 0
        %1309 = vperm.xlu0 %1308, %v1086
        %v1310 = vpop.permute.xlu0 %1309
        %1313 = vset.pattern.permute.xlu0 0
        %1314 = vperm.xlu0 %1313, %v1087
        %v1315 = vpop.permute.xlu0 %1314
        %1318 = vset.pattern.permute.xlu0 0
        %1319 = vperm.xlu0 %1318, %v1088
        %v1320 = vpop.permute.xlu0 %1319
        %1323 = vset.pattern.permute.xlu0 0
        %1324 = vperm.xlu0 %1323, %v1089
        %v1325 = vpop.permute.xlu0 %1324
        %1328 = vset.pattern.permute.xlu0 0
        %1329 = vperm.xlu0 %1328, %v1090
        %v1330 = vpop.permute.xlu0 %1329
        %1333 = vset.pattern.permute.xlu0 0
        %1334 = vperm.xlu0 %1333, %v1091
        %v1335 = vpop.permute.xlu0 %1334
        %1338 = vset.pattern.permute.xlu0 0
        %1339 = vperm.xlu0 %1338, %v1092
        %v1340 = vpop.permute.xlu0 %1339
        %1343 = vset.pattern.permute.xlu0 0
        %1344 = vperm.xlu0 %1343, %v1093
        %v1345 = vpop.permute.xlu0 %1344
        %1348 = vset.pattern.permute.xlu0 0
        %1349 = vperm.xlu0 %1348, %v1094
        %v1350 = vpop.permute.xlu0 %1349
        %1353 = vset.pattern.permute.xlu0 0
        %1354 = vperm.xlu0 %1353, %v1095
        %v1355 = vpop.permute.xlu0 %1354
        %1358 = vset.pattern.permute.xlu0 0
        %1359 = vperm.xlu0 %1358, %v1096
        %v1360 = vpop.permute.xlu0 %1359
        %1363 = vset.pattern.permute.xlu0 0
        %1364 = vperm.xlu0 %1363, %v1097
        %v1365 = vpop.permute.xlu0 %1364
        %1368 = vset.pattern.permute.xlu0 0
        %1369 = vperm.xlu0 %1368, %v1098
        %v1370 = vpop.permute.xlu0 %1369
        %1373 = vset.pattern.permute.xlu0 0
        %1374 = vperm.xlu0 %1373, %v1099
        %v1375 = vpop.permute.xlu0 %1374
        %1378 = vset.pattern.permute.xlu0 0
        %1379 = vperm.xlu0 %1378, %v1100
        %v1380 = vpop.permute.xlu0 %1379
        %1383 = vset.pattern.permute.xlu0 0
        %1384 = vperm.xlu0 %1383, %v1101
        %v1385 = vpop.permute.xlu0 %1384
        %1388 = vset.pattern.permute.xlu0 0
        %1389 = vperm.xlu0 %1388, %v1102
        %v1390 = vpop.permute.xlu0 %1389
        %1393 = vset.pattern.permute.xlu0 0
        %1394 = vperm.xlu0 %1393, %v1103
        %v1395 = vpop.permute.xlu0 %1394
        %1398 = vset.pattern.permute.xlu0 0
        %1399 = vperm.xlu0 %1398, %v1104
        %v1400 = vpop.permute.xlu0 %1399
        %1403 = vset.pattern.permute.xlu0 0
        %1404 = vperm.xlu0 %1403, %v1105
        %v1405 = vpop.permute.xlu0 %1404
        %1408 = vset.pattern.permute.xlu0 0
        %1409 = vperm.xlu0 %1408, %v1106
        %v1410 = vpop.permute.xlu0 %1409
        %1413 = vset.pattern.permute.xlu0 0
        %1414 = vperm.xlu0 %1413, %v1107
        %v1415 = vpop.permute.xlu0 %1414
        %1418 = vset.pattern.permute.xlu0 0
        %1419 = vperm.xlu0 %1418, %v1108
        %v1420 = vpop.permute.xlu0 %1419
        %1423 = vset.pattern.permute.xlu0 0
        %1424 = vperm.xlu0 %1423, %v1109
        %v1425 = vpop.permute.xlu0 %1424
        %1428 = vset.pattern.permute.xlu0 0
        %1429 = vperm.xlu0 %1428, %v1110
        %v1430 = vpop.permute.xlu0 %1429
        %1433 = vset.pattern.permute.xlu0 0
        %1434 = vperm.xlu0 %1433, %v1111
        %v1435 = vpop.permute.xlu0 %1434
        %1438 = vset.pattern.permute.xlu0 0
        %1439 = vperm.xlu0 %1438, %v1112
        %v1440 = vpop.permute.xlu0 %1439
        %1443 = vset.pattern.permute.xlu0 0
        %1444 = vperm.xlu0 %1443, %v1113
        %v1445 = vpop.permute.xlu0 %1444
        %1448 = vset.pattern.permute.xlu0 0
        %1449 = vperm.xlu0 %1448, %v1114
        %v1450 = vpop.permute.xlu0 %1449
        %1453 = vset.pattern.permute.xlu0 0
        %1454 = vperm.xlu0 %1453, %v1115
        %v1455 = vpop.permute.xlu0 %1454
        %1458 = vset.pattern.permute.xlu0 0
        %1459 = vperm.xlu0 %1458, %v1116
        %v1460 = vpop.permute.xlu0 %1459
        %1463 = vset.pattern.permute.xlu0 0
        %1464 = vperm.xlu0 %1463, %v1117
        %v1465 = vpop.permute.xlu0 %1464
        %1468 = vset.pattern.permute.xlu0 0
        %1469 = vperm.xlu0 %1468, %v1118
        %v1470 = vpop.permute.xlu0 %1469
        %1473 = vset.pattern.permute.xlu0 0
        %1474 = vperm.xlu0 %1473, %v1119
        %v1475 = vpop.permute.xlu0 %1474
        %1478 = vset.pattern.permute.xlu0 0
        %1479 = vperm.xlu0 %1478, %v1120
        %v1480 = vpop.permute.xlu0 %1479
        %1483 = vset.pattern.permute.xlu0 0
        %1484 = vperm.xlu0 %1483, %v1121
        %v1485 = vpop.permute.xlu0 %1484
        %1488 = vset.pattern.permute.xlu0 0
        %1489 = vperm.xlu0 %1488, %v1122
        %v1490 = vpop.permute.xlu0 %1489
        %1493 = vset.pattern.permute.xlu0 0
        %1494 = vperm.xlu0 %1493, %v1123
        %v1495 = vpop.permute.xlu0 %1494
        %1498 = vset.pattern.permute.xlu0 0
        %1499 = vperm.xlu0 %1498, %v1124
        %v1500 = vpop.permute.xlu0 %1499
        %1503 = vset.pattern.permute.xlu0 0
        %1504 = vperm.xlu0 %1503, %v1125
        %v1505 = vpop.permute.xlu0 %1504
        %1508 = vset.pattern.permute.xlu0 0
        %1509 = vperm.xlu0 %1508, %v1126
        %v1510 = vpop.permute.xlu0 %1509
        %1513 = vset.pattern.permute.xlu0 0
        %1514 = vperm.xlu0 %1513, %v1127
        %v1515 = vpop.permute.xlu0 %1514
        %1518 = vset.pattern.permute.xlu0 0
        %1519 = vperm.xlu0 %1518, %v1128
        %v1520 = vpop.permute.xlu0 %1519
        %1523 = vset.pattern.permute.xlu0 0
        %1524 = vperm.xlu0 %1523, %v1129
        %v1525 = vpop.permute.xlu0 %1524
        %1528 = vset.pattern.permute.xlu0 0
        %1529 = vperm.xlu0 %1528, %v1130
        %v1530 = vpop.permute.xlu0 %1529
        %1533 = vset.pattern.permute.xlu0 0
        %1534 = vperm.xlu0 %1533, %v1131
        %v1535 = vpop.permute.xlu0 %1534
        %1538 = vset.pattern.permute.xlu0 0
        %1539 = vperm.xlu0 %1538, %v1132
        %v1540 = vpop.permute.xlu0 %1539
        %1543 = vset.pattern.permute.xlu0 0
        %1544 = vperm.xlu0 %1543, %v1133
        %v1545 = vpop.permute.xlu0 %1544
        %1548 = vset.pattern.permute.xlu0 0
        %1549 = vperm.xlu0 %1548, %v1134
        %v1550 = vpop.permute.xlu0 %1549
        %1553 = vset.pattern.permute.xlu0 0
        %1554 = vperm.xlu0 %1553, %v1135
        %v1555 = vpop.permute.xlu0 %1554
        %1558 = vset.pattern.permute.xlu0 0
        %1559 = vperm.xlu0 %1558, %v1136
        %v1560 = vpop.permute.xlu0 %1559
        %1563 = vset.pattern.permute.xlu0 0
        %1564 = vperm.xlu0 %1563, %v1137
        %v1565 = vpop.permute.xlu0 %1564
        %1568 = vset.pattern.permute.xlu0 0
        %1569 = vperm.xlu0 %1568, %v1138
        %v1570 = vpop.permute.xlu0 %1569
        %1573 = vset.pattern.permute.xlu0 0
        %1574 = vperm.xlu0 %1573, %v1139
        %v1575 = vpop.permute.xlu0 %1574
        %1578 = vset.pattern.permute.xlu0 0
        %1579 = vperm.xlu0 %1578, %v1140
        %v1580 = vpop.permute.xlu0 %1579
        %1583 = vset.pattern.permute.xlu0 0
        %1584 = vperm.xlu0 %1583, %v1141
        %v1585 = vpop.permute.xlu0 %1584
        %1588 = vset.pattern.permute.xlu0 0
        %1589 = vperm.xlu0 %1588, %v1142
        %v1590 = vpop.permute.xlu0 %1589
        %1593 = vset.pattern.permute.xlu0 0
        %1594 = vperm.xlu0 %1593, %v1143
        %v1595 = vpop.permute.xlu0 %1594
        %1598 = vset.pattern.permute.xlu0 0
        %1599 = vperm.xlu0 %1598, %v1144
        %v1600 = vpop.permute.xlu0 %1599
        %1603 = vset.pattern.permute.xlu0 0
        %1604 = vperm.xlu0 %1603, %v1145
        %v1605 = vpop.permute.xlu0 %1604
        %1608 = vset.pattern.permute.xlu0 0
        %1609 = vperm.xlu0 %1608, %v1146
        %v1610 = vpop.permute.xlu0 %1609
        %1613 = vset.pattern.permute.xlu0 0
        %1614 = vperm.xlu0 %1613, %v1147
        %v1615 = vpop.permute.xlu0 %1614
        %1618 = vset.pattern.permute.xlu0 0
        %1619 = vperm.xlu0 %1618, %v1148
        %v1620 = vpop.permute.xlu0 %1619
        %1623 = vset.pattern.permute.xlu0 0
        %1624 = vperm.xlu0 %1623, %v1149
        %v1625 = vpop.permute.xlu0 %1624
        %1628 = vset.pattern.permute.xlu0 0
        %1629 = vperm.xlu0 %1628, %v1150
        %v1630 = vpop.permute.xlu0 %1629
        %1633 = vset.pattern.permute.xlu0 0
        %1634 = vperm.xlu0 %1633, %v1151
        %v1635 = vpop.permute.xlu0 %1634
        %1638 = vset.pattern.permute.xlu0 0
        %1639 = vperm.xlu0 %1638, %v1152
        %v1640 = vpop.permute.xlu0 %1639
        %1643 = vset.pattern.permute.xlu0 0
        %1644 = vperm.xlu0 %1643, %v1153
        %v1645 = vpop.permute.xlu0 %1644
        %1648 = vset.pattern.permute.xlu0 0
        %1649 = vperm.xlu0 %1648, %v1154
        %v1650 = vpop.permute.xlu0 %1649
        %1653 = vset.pattern.permute.xlu0 0
        %1654 = vperm.xlu0 %1653, %v1155
        %v1655 = vpop.permute.xlu0 %1654
        %1658 = vset.pattern.permute.xlu0 0
        %1659 = vperm.xlu0 %1658, %v1156
        %v1660 = vpop.permute.xlu0 %1659
        %1663 = vset.pattern.permute.xlu0 0
        %1664 = vperm.xlu0 %1663, %v1157
        %v1665 = vpop.permute.xlu0 %1664
        %1668 = vset.pattern.permute.xlu0 0
        %1669 = vperm.xlu0 %1668, %v1158
        %v1670 = vpop.permute.xlu0 %1669
        %1673 = vset.pattern.permute.xlu0 0
        %1674 = vperm.xlu0 %1673, %v1159
        %v1675 = vpop.permute.xlu0 %1674
        %1678 = vset.pattern.permute.xlu0 0
        %1679 = vperm.xlu0 %1678, %v1160
        %v1680 = vpop.permute.xlu0 %1679
        %1683 = vset.pattern.permute.xlu0 0
        %1684 = vperm.xlu0 %1683, %v1161
        %v1685 = vpop.permute.xlu0 %1684
        %1688 = vset.pattern.permute.xlu0 0
        %1689 = vperm.xlu0 %1688, %v1162
        %v1690 = vpop.permute.xlu0 %1689
        %1693 = vset.pattern.permute.xlu0 0
        %1694 = vperm.xlu0 %1693, %v1163
        %v1695 = vpop.permute.xlu0 %1694
        %1698 = vset.pattern.permute.xlu0 0
        %1699 = vperm.xlu0 %1698, %v1164
        %v1700 = vpop.permute.xlu0 %1699
        %1703 = vset.pattern.permute.xlu0 0
        %1704 = vperm.xlu0 %1703, %v1165
        %v1705 = vpop.permute.xlu0 %1704
        %1708 = vset.pattern.permute.xlu0 0
        %1709 = vperm.xlu0 %1708, %v1166
        %v1710 = vpop.permute.xlu0 %1709
        %1713 = vset.pattern.permute.xlu0 0
        %1714 = vperm.xlu0 %1713, %v1167
        %v1715 = vpop.permute.xlu0 %1714
        %1718 = vset.pattern.permute.xlu0 0
        %1719 = vperm.xlu0 %1718, %v1168
        %v1720 = vpop.permute.xlu0 %1719
        %1723 = vset.pattern.permute.xlu0 0
        %1724 = vperm.xlu0 %1723, %v1169
        %v1725 = vpop.permute.xlu0 %1724
        %1728 = vset.pattern.permute.xlu0 0
        %1729 = vperm.xlu0 %1728, %v1170
        %v1730 = vpop.permute.xlu0 %1729
        %1733 = vset.pattern.permute.xlu0 0
        %1734 = vperm.xlu0 %1733, %v1171
        %v1735 = vpop.permute.xlu0 %1734
        %1738 = vset.pattern.permute.xlu0 0
        %1739 = vperm.xlu0 %1738, %v1172
        %v1740 = vpop.permute.xlu0 %1739
        %1743 = vset.pattern.permute.xlu0 0
        %1744 = vperm.xlu0 %1743, %v1173
        %v1745 = vpop.permute.xlu0 %1744
        %1748 = vset.pattern.permute.xlu0 0
        %1749 = vperm.xlu0 %1748, %v1174
        %v1750 = vpop.permute.xlu0 %1749
        %1753 = vset.pattern.permute.xlu0 0
        %1754 = vperm.xlu0 %1753, %v1175
        %v1755 = vpop.permute.xlu0 %1754
        %1758 = vset.pattern.permute.xlu0 0
        %1759 = vperm.xlu0 %1758, %v1176
        %v1760 = vpop.permute.xlu0 %1759
        %1763 = vset.pattern.permute.xlu0 0
        %1764 = vperm.xlu0 %1763, %v1177
        %v1765 = vpop.permute.xlu0 %1764
        %1768 = vset.pattern.permute.xlu0 0
        %1769 = vperm.xlu0 %1768, %v1178
        %v1770 = vpop.permute.xlu0 %1769
        %1773 = vset.pattern.permute.xlu0 0
        %1774 = vperm.xlu0 %1773, %v1179
        %v1775 = vpop.permute.xlu0 %1774
        %1778 = vset.pattern.permute.xlu0 0
        %1779 = vperm.xlu0 %1778, %v1180
        %v1780 = vpop.permute.xlu0 %1779
        %1783 = vset.pattern.permute.xlu0 0
        %1784 = vperm.xlu0 %1783, %v1181
        %v1785 = vpop.permute.xlu0 %1784
        %1788 = vset.pattern.permute.xlu0 0
        %1789 = vperm.xlu0 %1788, %v1182
        %v1790 = vpop.permute.xlu0 %1789
        %1793 = vset.pattern.permute.xlu0 0
        %1794 = vperm.xlu0 %1793, %v1183
        %v1795 = vpop.permute.xlu0 %1794
        %1798 = vset.pattern.permute.xlu0 0
        %1799 = vperm.xlu0 %1798, %v1184
        %v1800 = vpop.permute.xlu0 %1799
        %1803 = vset.pattern.permute.xlu0 0
        %1804 = vperm.xlu0 %1803, %v1185
        %v1805 = vpop.permute.xlu0 %1804
        %v1808 = vperm.slane %v1186, 0
        %v1810 = vmul.f32 %v1190, %v1808
        %v1811 = vmul.f32 %v1195, %v1808
        %v1812 = vmul.f32 %v1200, %v1808
        %v1813 = vmul.f32 %v1205, %v1808
        %v1814 = vmul.f32 %v1210, %v1808
        %v1815 = vmul.f32 %v1215, %v1808
        %v1816 = vmul.f32 %v1220, %v1808
        %v1817 = vmul.f32 %v1225, %v1808
        %v1818 = vmul.f32 %v1230, %v1808
        %v1819 = vmul.f32 %v1235, %v1808
        %v1820 = vmul.f32 %v1240, %v1808
        %v1821 = vmul.f32 %v1245, %v1808
        %v1822 = vmul.f32 %v1250, %v1808
        %v1823 = vmul.f32 %v1255, %v1808
        %v1824 = vmul.f32 %v1260, %v1808
        %v1825 = vmul.f32 %v1265, %v1808
        %v1826 = vmul.f32 %v1270, %v1808
        %v1827 = vmul.f32 %v1275, %v1808
        %v1828 = vmul.f32 %v1280, %v1808
        %v1829 = vmul.f32 %v1285, %v1808
        %v1830 = vmul.f32 %v1290, %v1808
        %v1831 = vmul.f32 %v1295, %v1808
        %v1832 = vmul.f32 %v1300, %v1808
        %v1833 = vmul.f32 %v1305, %v1808
        %v1834 = vmul.f32 %v1310, %v1808
        %v1835 = vmul.f32 %v1315, %v1808
        %v1836 = vmul.f32 %v1320, %v1808
        %v1837 = vmul.f32 %v1325, %v1808
        %v1838 = vmul.f32 %v1330, %v1808
        %v1839 = vmul.f32 %v1335, %v1808
        %v1840 = vmul.f32 %v1340, %v1808
        %v1841 = vmul.f32 %v1345, %v1808
        %v1842 = vmul.f32 %v1350, %v1808
        %v1843 = vmul.f32 %v1355, %v1808
        %v1844 = vmul.f32 %v1360, %v1808
        %v1845 = vmul.f32 %v1365, %v1808
        %v1846 = vmul.f32 %v1370, %v1808
        %v1847 = vmul.f32 %v1375, %v1808
        %v1848 = vmul.f32 %v1380, %v1808
        %v1849 = vmul.f32 %v1385, %v1808
        %v1850 = vmul.f32 %v1390, %v1808
        %v1851 = vmul.f32 %v1395, %v1808
        %v1852 = vmul.f32 %v1400, %v1808
        %v1853 = vmul.f32 %v1405, %v1808
        %v1854 = vmul.f32 %v1410, %v1808
        %v1855 = vmul.f32 %v1415, %v1808
        %v1856 = vmul.f32 %v1420, %v1808
        %v1857 = vmul.f32 %v1425, %v1808
        %v1858 = vmul.f32 %v1430, %v1808
        %v1859 = vmul.f32 %v1435, %v1808
        %v1860 = vmul.f32 %v1440, %v1808
        %v1861 = vmul.f32 %v1445, %v1808
        %v1862 = vmul.f32 %v1450, %v1808
        %v1863 = vmul.f32 %v1455, %v1808
        %v1864 = vmul.f32 %v1460, %v1808
        %v1865 = vmul.f32 %v1465, %v1808
        %v1866 = vmul.f32 %v1470, %v1808
        %v1867 = vmul.f32 %v1475, %v1808
        %v1868 = vmul.f32 %v1480, %v1808
        %v1869 = vmul.f32 %v1485, %v1808
        %v1870 = vmul.f32 %v1490, %v1808
        %v1871 = vmul.f32 %v1495, %v1808
        %v1872 = vmul.f32 %v1500, %v1808
        %v1873 = vmul.f32 %v1505, %v1808
        %v1874 = vmul.f32 %v1510, %v1808
        %v1875 = vmul.f32 %v1515, %v1808
        %v1876 = vmul.f32 %v1520, %v1808
        %v1877 = vmul.f32 %v1525, %v1808
        %v1878 = vmul.f32 %v1530, %v1808
        %v1879 = vmul.f32 %v1535, %v1808
        %v1880 = vmul.f32 %v1540, %v1808
        %v1881 = vmul.f32 %v1545, %v1808
        %v1882 = vmul.f32 %v1550, %v1808
        %v1883 = vmul.f32 %v1555, %v1808
        %v1884 = vmul.f32 %v1560, %v1808
        %v1885 = vmul.f32 %v1565, %v1808
        %v1886 = vmul.f32 %v1570, %v1808
        %v1887 = vmul.f32 %v1575, %v1808
        %v1888 = vmul.f32 %v1580, %v1808
        %v1889 = vmul.f32 %v1585, %v1808
        %v1890 = vmul.f32 %v1590, %v1808
        %v1891 = vmul.f32 %v1595, %v1808
        %v1892 = vmul.f32 %v1600, %v1808
        %v1893 = vmul.f32 %v1605, %v1808
        %v1894 = vmul.f32 %v1610, %v1808
        %v1895 = vmul.f32 %v1615, %v1808
        %v1896 = vmul.f32 %v1620, %v1808
        %v1897 = vmul.f32 %v1625, %v1808
        %v1898 = vmul.f32 %v1630, %v1808
        %v1899 = vmul.f32 %v1635, %v1808
        %v1900 = vmul.f32 %v1640, %v1808
        %v1901 = vmul.f32 %v1645, %v1808
        %v1902 = vmul.f32 %v1650, %v1808
        %v1903 = vmul.f32 %v1655, %v1808
        %v1904 = vmul.f32 %v1660, %v1808
        %v1905 = vmul.f32 %v1665, %v1808
        %v1906 = vmul.f32 %v1670, %v1808
        %v1907 = vmul.f32 %v1675, %v1808
        %v1908 = vmul.f32 %v1680, %v1808
        %v1909 = vmul.f32 %v1685, %v1808
        %v1910 = vmul.f32 %v1690, %v1808
        %v1911 = vmul.f32 %v1695, %v1808
        %v1912 = vmul.f32 %v1700, %v1808
        %v1913 = vmul.f32 %v1705, %v1808
        %v1914 = vmul.f32 %v1710, %v1808
        %v1915 = vmul.f32 %v1715, %v1808
        %v1916 = vmul.f32 %v1720, %v1808
        %v1917 = vmul.f32 %v1725, %v1808
        %v1918 = vmul.f32 %v1730, %v1808
        %v1919 = vmul.f32 %v1735, %v1808
        %v1920 = vmul.f32 %v1740, %v1808
        %v1921 = vmul.f32 %v1745, %v1808
        %v1922 = vmul.f32 %v1750, %v1808
        %v1923 = vmul.f32 %v1755, %v1808
        %v1924 = vmul.f32 %v1760, %v1808
        %v1925 = vmul.f32 %v1765, %v1808
        %v1926 = vmul.f32 %v1770, %v1808
        %v1927 = vmul.f32 %v1775, %v1808
        %v1928 = vmul.f32 %v1780, %v1808
        %v1929 = vmul.f32 %v1785, %v1808
        %v1930 = vmul.f32 %v1790, %v1808
        %v1931 = vmul.f32 %v1795, %v1808
        %v1932 = vmul.f32 %v1800, %v1808
        %v1933 = vmul.f32 %v1805, %v1808
        %v2058 = vunpack.c.l.b16 %v930
        %v2059 = vunpack.c.l.b16 %v931
        %v2060 = vunpack.c.l.b16 %v932
        %v2061 = vunpack.c.l.b16 %v933
        %v2062 = vunpack.c.l.b16 %v934
        %v2063 = vunpack.c.l.b16 %v935
        %v2064 = vunpack.c.l.b16 %v936
        %v2065 = vunpack.c.l.b16 %v937
        %v2066 = vunpack.c.l.b16 %v938
        %v2067 = vunpack.c.l.b16 %v939
        %v2068 = vunpack.c.l.b16 %v940
        %v2069 = vunpack.c.l.b16 %v941
        %v2070 = vunpack.c.l.b16 %v942
        %v2071 = vunpack.c.l.b16 %v943
        %v2072 = vunpack.c.l.b16 %v944
        %v2073 = vunpack.c.l.b16 %v945
        %v2074 = vunpack.c.l.b16 %v946
        %v2075 = vunpack.c.l.b16 %v947
        %v2076 = vunpack.c.l.b16 %v948
        %v2077 = vunpack.c.l.b16 %v949
        %v2078 = vunpack.c.l.b16 %v950
        %v2079 = vunpack.c.l.b16 %v951
        %v2080 = vunpack.c.l.b16 %v952
        %v2081 = vunpack.c.l.b16 %v953
        %v2082 = vunpack.c.l.b16 %v954
        %v2083 = vunpack.c.l.b16 %v955
        %v2084 = vunpack.c.l.b16 %v956
        %v2085 = vunpack.c.l.b16 %v957
        %v2086 = vunpack.c.l.b16 %v958
        %v2087 = vunpack.c.l.b16 %v959
        %v2088 = vunpack.c.l.b16 %v960
        %v2089 = vunpack.c.l.b16 %v961
        %v2090 = vunpack.c.l.b16 %v962
        %v2091 = vunpack.c.l.b16 %v963
        %v2092 = vunpack.c.l.b16 %v964
        %v2093 = vunpack.c.l.b16 %v965
        %v2094 = vunpack.c.l.b16 %v966
        %v2095 = vunpack.c.l.b16 %v967
        %v2096 = vunpack.c.l.b16 %v968
        %v2097 = vunpack.c.l.b16 %v969
        %v2098 = vunpack.c.l.b16 %v970
        %v2099 = vunpack.c.l.b16 %v971
        %v2100 = vunpack.c.l.b16 %v972
        %v2101 = vunpack.c.l.b16 %v973
        %v2102 = vunpack.c.l.b16 %v974
        %v2103 = vunpack.c.l.b16 %v975
        %v2104 = vunpack.c.l.b16 %v976
        %v2105 = vunpack.c.l.b16 %v977
        %v2106 = vunpack.c.l.b16 %v978
        %v2107 = vunpack.c.l.b16 %v979
        %v2108 = vunpack.c.l.b16 %v980
        %v2109 = vunpack.c.l.b16 %v981
        %v2110 = vunpack.c.l.b16 %v982
        %v2111 = vunpack.c.l.b16 %v983
        %v2112 = vunpack.c.l.b16 %v984
        %v2113 = vunpack.c.l.b16 %v985
        %v2114 = vunpack.c.l.b16 %v986
        %v2115 = vunpack.c.l.b16 %v987
        %v2116 = vunpack.c.l.b16 %v988
        %v2117 = vunpack.c.l.b16 %v989
        %v2118 = vunpack.c.l.b16 %v990
        %v2119 = vunpack.c.l.b16 %v991
        %v2120 = vunpack.c.l.b16 %v992
        %v2121 = vunpack.c.l.b16 %v993
        %v2122 = vunpack.c.l.b16 %v994
        %v2123 = vunpack.c.l.b16 %v995
        %v2124 = vunpack.c.l.b16 %v996
        %v2125 = vunpack.c.l.b16 %v997
        %v2126 = vunpack.c.l.b16 %v998
        %v2127 = vunpack.c.l.b16 %v999
        %v2128 = vunpack.c.l.b16 %v1000
        %v2129 = vunpack.c.l.b16 %v1001
        %v2130 = vunpack.c.l.b16 %v1002
        %v2131 = vunpack.c.l.b16 %v1003
        %v2132 = vunpack.c.l.b16 %v1004
        %v2133 = vunpack.c.l.b16 %v1005
        %v2134 = vunpack.c.l.b16 %v1006
        %v2135 = vunpack.c.l.b16 %v1007
        %v2136 = vunpack.c.l.b16 %v1008
        %v2137 = vunpack.c.l.b16 %v1009
        %v2138 = vunpack.c.l.b16 %v1010
        %v2139 = vunpack.c.l.b16 %v1011
        %v2140 = vunpack.c.l.b16 %v1012
        %v2141 = vunpack.c.l.b16 %v1013
        %v2142 = vunpack.c.l.b16 %v1014
        %v2143 = vunpack.c.l.b16 %v1015
        %v2144 = vunpack.c.l.b16 %v1016
        %v2145 = vunpack.c.l.b16 %v1017
        %v2146 = vunpack.c.l.b16 %v1018
        %v2147 = vunpack.c.l.b16 %v1019
        %v2148 = vunpack.c.l.b16 %v1020
        %v2149 = vunpack.c.l.b16 %v1021
        %v2150 = vunpack.c.l.b16 %v1022
        %v2151 = vunpack.c.l.b16 %v1023
        %v2152 = vunpack.c.l.b16 %v1024
        %v2153 = vunpack.c.l.b16 %v1025
        %v2154 = vunpack.c.l.b16 %v1026
        %v2155 = vunpack.c.l.b16 %v1027
        %v2156 = vunpack.c.l.b16 %v1028
        %v2157 = vunpack.c.l.b16 %v1029
        %v2158 = vunpack.c.l.b16 %v1030
        %v2159 = vunpack.c.l.b16 %v1031
        %v2160 = vunpack.c.l.b16 %v1032
        %v2161 = vunpack.c.l.b16 %v1033
        %v2162 = vunpack.c.l.b16 %v1034
        %v2163 = vunpack.c.l.b16 %v1035
        %v2164 = vunpack.c.l.b16 %v1036
        %v2165 = vunpack.c.l.b16 %v1037
        %v2166 = vunpack.c.l.b16 %v1038
        %v2167 = vunpack.c.l.b16 %v1039
        %v2168 = vunpack.c.l.b16 %v1040
        %v2169 = vunpack.c.l.b16 %v1041
        %v2170 = vunpack.c.l.b16 %v1042
        %v2171 = vunpack.c.l.b16 %v1043
        %v2172 = vunpack.c.l.b16 %v1044
        %v2173 = vunpack.c.l.b16 %v1045
        %v2174 = vunpack.c.l.b16 %v1046
        %v2175 = vunpack.c.l.b16 %v1047
        %v2176 = vunpack.c.l.b16 %v1048
        %v2177 = vunpack.c.l.b16 %v1049
        %v2178 = vunpack.c.l.b16 %v1050
        %v2179 = vunpack.c.l.b16 %v1051
        %v2180 = vunpack.c.l.b16 %v1052
        %v2181 = vunpack.c.l.b16 %v1053
        %v2182 = vpack.c.b16 %v2059, %v2058
        %v2183 = vpack.c.b16 %v2061, %v2060
        %v2184 = vpack.c.b16 %v2063, %v2062
        %v2185 = vpack.c.b16 %v2065, %v2064
        %v2186 = vpack.c.b16 %v2067, %v2066
        %v2187 = vpack.c.b16 %v2069, %v2068
        %v2188 = vpack.c.b16 %v2071, %v2070
        %v2189 = vpack.c.b16 %v2073, %v2072
        %v2190 = vpack.c.b16 %v2075, %v2074
        %v2191 = vpack.c.b16 %v2077, %v2076
        %v2192 = vpack.c.b16 %v2079, %v2078
        %v2193 = vpack.c.b16 %v2081, %v2080
        %v2194 = vpack.c.b16 %v2083, %v2082
        %v2195 = vpack.c.b16 %v2085, %v2084
        %v2196 = vpack.c.b16 %v2087, %v2086
        %v2197 = vpack.c.b16 %v2089, %v2088
        %v2198 = vpack.c.b16 %v2091, %v2090
        %v2199 = vpack.c.b16 %v2093, %v2092
        %v2200 = vpack.c.b16 %v2095, %v2094
        %v2201 = vpack.c.b16 %v2097, %v2096
        %v2202 = vpack.c.b16 %v2099, %v2098
        %v2203 = vpack.c.b16 %v2101, %v2100
        %v2204 = vpack.c.b16 %v2103, %v2102
        %v2205 = vpack.c.b16 %v2105, %v2104
        %v2206 = vpack.c.b16 %v2107, %v2106
        %v2207 = vpack.c.b16 %v2109, %v2108
        %v2208 = vpack.c.b16 %v2111, %v2110
        %v2209 = vpack.c.b16 %v2113, %v2112
        %v2210 = vpack.c.b16 %v2115, %v2114
        %v2211 = vpack.c.b16 %v2117, %v2116
        %v2212 = vpack.c.b16 %v2119, %v2118
        %v2213 = vpack.c.b16 %v2121, %v2120
        %v2214 = vpack.c.b16 %v2123, %v2122
        %v2215 = vpack.c.b16 %v2125, %v2124
        %v2216 = vpack.c.b16 %v2127, %v2126
        %v2217 = vpack.c.b16 %v2129, %v2128
        %v2218 = vpack.c.b16 %v2131, %v2130
        %v2219 = vpack.c.b16 %v2133, %v2132
        %v2220 = vpack.c.b16 %v2135, %v2134
        %v2221 = vpack.c.b16 %v2137, %v2136
        %v2222 = vpack.c.b16 %v2139, %v2138
        %v2223 = vpack.c.b16 %v2141, %v2140
        %v2224 = vpack.c.b16 %v2143, %v2142
        %v2225 = vpack.c.b16 %v2145, %v2144
        %v2226 = vpack.c.b16 %v2147, %v2146
        %v2227 = vpack.c.b16 %v2149, %v2148
        %v2228 = vpack.c.b16 %v2151, %v2150
        %v2229 = vpack.c.b16 %v2153, %v2152
        %v2230 = vpack.c.b16 %v2155, %v2154
        %v2231 = vpack.c.b16 %v2157, %v2156
        %v2232 = vpack.c.b16 %v2159, %v2158
        %v2233 = vpack.c.b16 %v2161, %v2160
        %v2234 = vpack.c.b16 %v2163, %v2162
        %v2235 = vpack.c.b16 %v2165, %v2164
        %v2236 = vpack.c.b16 %v2167, %v2166
        %v2237 = vpack.c.b16 %v2169, %v2168
        %v2238 = vpack.c.b16 %v2171, %v2170
        %v2239 = vpack.c.b16 %v2173, %v2172
        %v2240 = vpack.c.b16 %v2175, %v2174
        %v2241 = vpack.c.b16 %v2177, %v2176
        %v2242 = vpack.c.b16 %v2179, %v2178
        %v2243 = vpack.c.b16 %v2181, %v2180
        %v2252 = vunpack.c.l.b16 %v1054
        %v2253 = vunpack.c.l.b16 %v1055
        %v2254 = vunpack.c.l.b16 %v1056
        %v2255 = vunpack.c.l.b16 %v1057
        %v2256 = vunpack.c.l.b16 %v1058
        %v2257 = vunpack.c.l.b16 %v1059
        %v2258 = vunpack.c.l.b16 %v1060
        %v2259 = vunpack.c.l.b16 %v1061
        %v2260 = vpack.c.b16 %v2253, %v2252
        %v2261 = vpack.c.b16 %v2255, %v2254
        %v2262 = vpack.c.b16 %v2257, %v2256
        %v2263 = vpack.c.b16 %v2259, %v2258
        %vm2268 = vcmask 523264
        %v2270 = vsel %vm2268, %v2182, 0
        %v2273 = vsel %vm2268, %v2183, 0
        %v2276 = vsel %vm2268, %v2184, 0
        %v2279 = vsel %vm2268, %v2185, 0
        %v2282 = vsel %vm2268, %v2186, 0
        %v2285 = vsel %vm2268, %v2187, 0
        %v2288 = vsel %vm2268, %v2188, 0
        %v2291 = vsel %vm2268, %v2189, 0
        %v2294 = vsel %vm2268, %v2190, 0
        %v2297 = vsel %vm2268, %v2191, 0
        %v2300 = vsel %vm2268, %v2192, 0
        %v2303 = vsel %vm2268, %v2193, 0
        %v2306 = vsel %vm2268, %v2194, 0
        %v2309 = vsel %vm2268, %v2195, 0
        %v2312 = vsel %vm2268, %v2196, 0
        %v2315 = vsel %vm2268, %v2197, 0
        %v2318 = vsel %vm2268, %v2198, 0
        %v2321 = vsel %vm2268, %v2199, 0
        %v2324 = vsel %vm2268, %v2200, 0
        %v2327 = vsel %vm2268, %v2201, 0
        %v2330 = vsel %vm2268, %v2202, 0
        %v2333 = vsel %vm2268, %v2203, 0
        %v2336 = vsel %vm2268, %v2204, 0
        %v2339 = vsel %vm2268, %v2205, 0
        %v2342 = vsel %vm2268, %v2206, 0
        %v2345 = vsel %vm2268, %v2207, 0
        %v2348 = vsel %vm2268, %v2208, 0
        %v2351 = vsel %vm2268, %v2209, 0
        %v2354 = vsel %vm2268, %v2210, 0
        %v2357 = vsel %vm2268, %v2211, 0
        %v2360 = vsel %vm2268, %v2212, 0
        %v2363 = vsel %vm2268, %v2213, 0
        %v2366 = vsel %vm2268, %v2214, 0
        %v2369 = vsel %vm2268, %v2215, 0
        %v2372 = vsel %vm2268, %v2216, 0
        %v2375 = vsel %vm2268, %v2217, 0
        %v2378 = vsel %vm2268, %v2218, 0
        %v2381 = vsel %vm2268, %v2219, 0
        %v2384 = vsel %vm2268, %v2220, 0
        %v2387 = vsel %vm2268, %v2221, 0
        %v2390 = vsel %vm2268, %v2222, 0
        %v2393 = vsel %vm2268, %v2223, 0
        %v2396 = vsel %vm2268, %v2224, 0
        %v2399 = vsel %vm2268, %v2225, 0
        %v2402 = vsel %vm2268, %v2226, 0
        %v2405 = vsel %vm2268, %v2227, 0
        %v2408 = vsel %vm2268, %v2228, 0
        %v2411 = vsel %vm2268, %v2229, 0
        %v2414 = vsel %vm2268, %v2230, 0
        %v2417 = vsel %vm2268, %v2231, 0
        %v2420 = vsel %vm2268, %v2232, 0
        %v2423 = vsel %vm2268, %v2233, 0
        %v2426 = vsel %vm2268, %v2234, 0
        %v2429 = vsel %vm2268, %v2235, 0
        %v2432 = vsel %vm2268, %v2236, 0
        %v2435 = vsel %vm2268, %v2237, 0
        %v2438 = vsel %vm2268, %v2238, 0
        %v2441 = vsel %vm2268, %v2239, 0
        %v2444 = vsel %vm2268, %v2240, 0
        %v2447 = vsel %vm2268, %v2241, 0
        %v2450 = vsel %vm2268, %v2242, 0
        %v2453 = vsel %vm2268, %v2243, 0
        %2455 = vmatpush.bf16.msra.mxu0 0
        %2456 = vmatpush.bf16.msra.mxu0 0
        %2457 = vmatpush.bf16.msra.mxu0 0
        %2458 = vmatpush.bf16.msra.mxu0 0
        %2459 = vmatpush.bf16.msra.mxu0 %v2263
        %2460 = vmatpush.bf16.msra.mxu0 %v2262
        %2461 = vmatpush.bf16.msra.mxu0 %v2261
        %2462 = vmatpush.bf16.msra.mxu0 %v2260
        %2463 = vmatmul.bf16.gmra.mxu0 %v2270
        %v2464 = vpop.f32.mrf.mxu0
        %v2465 = vadd.f32 %v1810, %v2464
        %v2466 = vpop.f32.mrf.mxu0
        %v2467 = vadd.f32 %v1811, %v2466
        %2468 = vmatmul.bf16.gmra.mxu0 %v2273
        %v2469 = vpop.f32.mrf.mxu0
        %v2470 = vadd.f32 %v1812, %v2469
        %v2471 = vpop.f32.mrf.mxu0
        %v2472 = vadd.f32 %v1813, %v2471
        %2473 = vmatmul.bf16.gmra.mxu0 %v2276
        %v2474 = vpop.f32.mrf.mxu0
        %v2475 = vadd.f32 %v1814, %v2474
        %v2476 = vpop.f32.mrf.mxu0
        %v2477 = vadd.f32 %v1815, %v2476
        %2478 = vmatmul.bf16.gmra.mxu0 %v2279
        %v2479 = vpop.f32.mrf.mxu0
        %v2480 = vadd.f32 %v1816, %v2479
        %v2481 = vpop.f32.mrf.mxu0
        %v2482 = vadd.f32 %v1817, %v2481
        %2483 = vmatmul.bf16.gmra.mxu0 %v2282
        %v2484 = vpop.f32.mrf.mxu0
        %v2485 = vadd.f32 %v1818, %v2484
        %v2486 = vpop.f32.mrf.mxu0
        %v2487 = vadd.f32 %v1819, %v2486
        %2488 = vmatmul.bf16.gmra.mxu0 %v2285
        %v2489 = vpop.f32.mrf.mxu0
        %v2490 = vadd.f32 %v1820, %v2489
        %v2491 = vpop.f32.mrf.mxu0
        %v2492 = vadd.f32 %v1821, %v2491
        %2493 = vmatmul.bf16.gmra.mxu0 %v2288
        %v2494 = vpop.f32.mrf.mxu0
        %v2495 = vadd.f32 %v1822, %v2494
        %v2496 = vpop.f32.mrf.mxu0
        %v2497 = vadd.f32 %v1823, %v2496
        %2498 = vmatmul.bf16.gmra.mxu0 %v2291
        %v2499 = vpop.f32.mrf.mxu0
        %v2500 = vadd.f32 %v1824, %v2499
        %v2501 = vpop.f32.mrf.mxu0
        %v2502 = vadd.f32 %v1825, %v2501
        %2503 = vmatmul.bf16.gmra.mxu0 %v2294
        %v2504 = vpop.f32.mrf.mxu0
        %v2505 = vadd.f32 %v1826, %v2504
        %v2506 = vpop.f32.mrf.mxu0
        %v2507 = vadd.f32 %v1827, %v2506
        %2508 = vmatmul.bf16.gmra.mxu0 %v2297
        %v2509 = vpop.f32.mrf.mxu0
        %v2510 = vadd.f32 %v1828, %v2509
        %v2511 = vpop.f32.mrf.mxu0
        %v2512 = vadd.f32 %v1829, %v2511
        %2513 = vmatmul.bf16.gmra.mxu0 %v2300
        %v2514 = vpop.f32.mrf.mxu0
        %v2515 = vadd.f32 %v1830, %v2514
        %v2516 = vpop.f32.mrf.mxu0
        %v2517 = vadd.f32 %v1831, %v2516
        %2518 = vmatmul.bf16.gmra.mxu0 %v2303
        %v2519 = vpop.f32.mrf.mxu0
        %v2520 = vadd.f32 %v1832, %v2519
        %v2521 = vpop.f32.mrf.mxu0
        %v2522 = vadd.f32 %v1833, %v2521
        %2523 = vmatmul.bf16.gmra.mxu0 %v2306
        %v2524 = vpop.f32.mrf.mxu0
        %v2525 = vadd.f32 %v1834, %v2524
        %v2526 = vpop.f32.mrf.mxu0
        %v2527 = vadd.f32 %v1835, %v2526
        %2528 = vmatmul.bf16.gmra.mxu0 %v2309
        %v2529 = vpop.f32.mrf.mxu0
        %v2530 = vadd.f32 %v1836, %v2529
        %v2531 = vpop.f32.mrf.mxu0
        %v2532 = vadd.f32 %v1837, %v2531
        %2533 = vmatmul.bf16.gmra.mxu0 %v2312
        %v2534 = vpop.f32.mrf.mxu0
        %v2535 = vadd.f32 %v1838, %v2534
        %v2536 = vpop.f32.mrf.mxu0
        %v2537 = vadd.f32 %v1839, %v2536
        %2538 = vmatmul.bf16.gmra.mxu0 %v2315
        %v2539 = vpop.f32.mrf.mxu0
        %v2540 = vadd.f32 %v1840, %v2539
        %v2541 = vpop.f32.mrf.mxu0
        %v2542 = vadd.f32 %v1841, %v2541
        %2543 = vmatmul.bf16.gmra.mxu0 %v2318
        %v2544 = vpop.f32.mrf.mxu0
        %v2545 = vadd.f32 %v1842, %v2544
        %v2546 = vpop.f32.mrf.mxu0
        %v2547 = vadd.f32 %v1843, %v2546
        %2548 = vmatmul.bf16.gmra.mxu0 %v2321
        %v2549 = vpop.f32.mrf.mxu0
        %v2550 = vadd.f32 %v1844, %v2549
        %v2551 = vpop.f32.mrf.mxu0
        %v2552 = vadd.f32 %v1845, %v2551
        %2553 = vmatmul.bf16.gmra.mxu0 %v2324
        %v2554 = vpop.f32.mrf.mxu0
        %v2555 = vadd.f32 %v1846, %v2554
        %v2556 = vpop.f32.mrf.mxu0
        %v2557 = vadd.f32 %v1847, %v2556
        %2558 = vmatmul.bf16.gmra.mxu0 %v2327
        %v2559 = vpop.f32.mrf.mxu0
        %v2560 = vadd.f32 %v1848, %v2559
        %v2561 = vpop.f32.mrf.mxu0
        %v2562 = vadd.f32 %v1849, %v2561
        %2563 = vmatmul.bf16.gmra.mxu0 %v2330
        %v2564 = vpop.f32.mrf.mxu0
        %v2565 = vadd.f32 %v1850, %v2564
        %v2566 = vpop.f32.mrf.mxu0
        %v2567 = vadd.f32 %v1851, %v2566
        %2568 = vmatmul.bf16.gmra.mxu0 %v2333
        %v2569 = vpop.f32.mrf.mxu0
        %v2570 = vadd.f32 %v1852, %v2569
        %v2571 = vpop.f32.mrf.mxu0
        %v2572 = vadd.f32 %v1853, %v2571
        %2573 = vmatmul.bf16.gmra.mxu0 %v2336
        %v2574 = vpop.f32.mrf.mxu0
        %v2575 = vadd.f32 %v1854, %v2574
        %v2576 = vpop.f32.mrf.mxu0
        %v2577 = vadd.f32 %v1855, %v2576
        %2578 = vmatmul.bf16.gmra.mxu0 %v2339
        %v2579 = vpop.f32.mrf.mxu0
        %v2580 = vadd.f32 %v1856, %v2579
        %v2581 = vpop.f32.mrf.mxu0
        %v2582 = vadd.f32 %v1857, %v2581
        %2583 = vmatmul.bf16.gmra.mxu0 %v2342
        %v2584 = vpop.f32.mrf.mxu0
        %v2585 = vadd.f32 %v1858, %v2584
        %v2586 = vpop.f32.mrf.mxu0
        %v2587 = vadd.f32 %v1859, %v2586
        %2588 = vmatmul.bf16.gmra.mxu0 %v2345
        %v2589 = vpop.f32.mrf.mxu0
        %v2590 = vadd.f32 %v1860, %v2589
        %v2591 = vpop.f32.mrf.mxu0
        %v2592 = vadd.f32 %v1861, %v2591
        %2593 = vmatmul.bf16.gmra.mxu0 %v2348
        %v2594 = vpop.f32.mrf.mxu0
        %v2595 = vadd.f32 %v1862, %v2594
        %v2596 = vpop.f32.mrf.mxu0
        %v2597 = vadd.f32 %v1863, %v2596
        %2598 = vmatmul.bf16.gmra.mxu0 %v2351
        %v2599 = vpop.f32.mrf.mxu0
        %v2600 = vadd.f32 %v1864, %v2599
        %v2601 = vpop.f32.mrf.mxu0
        %v2602 = vadd.f32 %v1865, %v2601
        %2603 = vmatmul.bf16.gmra.mxu0 %v2354
        %v2604 = vpop.f32.mrf.mxu0
        %v2605 = vadd.f32 %v1866, %v2604
        %v2606 = vpop.f32.mrf.mxu0
        %v2607 = vadd.f32 %v1867, %v2606
        %2608 = vmatmul.bf16.gmra.mxu0 %v2357
        %v2609 = vpop.f32.mrf.mxu0
        %v2610 = vadd.f32 %v1868, %v2609
        %v2611 = vpop.f32.mrf.mxu0
        %v2612 = vadd.f32 %v1869, %v2611
        %2613 = vmatmul.bf16.gmra.mxu0 %v2360
        %v2614 = vpop.f32.mrf.mxu0
        %v2615 = vadd.f32 %v1870, %v2614
        %v2616 = vpop.f32.mrf.mxu0
        %v2617 = vadd.f32 %v1871, %v2616
        %2618 = vmatmul.bf16.gmra.mxu0 %v2363
        %v2619 = vpop.f32.mrf.mxu0
        %v2620 = vadd.f32 %v1872, %v2619
        %v2621 = vpop.f32.mrf.mxu0
        %v2622 = vadd.f32 %v1873, %v2621
        %2623 = vmatmul.bf16.gmra.mxu0 %v2366
        %v2624 = vpop.f32.mrf.mxu0
        %v2625 = vadd.f32 %v1874, %v2624
        %v2626 = vpop.f32.mrf.mxu0
        %v2627 = vadd.f32 %v1875, %v2626
        %2628 = vmatmul.bf16.gmra.mxu0 %v2369
        %v2629 = vpop.f32.mrf.mxu0
        %v2630 = vadd.f32 %v1876, %v2629
        %v2631 = vpop.f32.mrf.mxu0
        %v2632 = vadd.f32 %v1877, %v2631
        %2633 = vmatmul.bf16.gmra.mxu0 %v2372
        %v2634 = vpop.f32.mrf.mxu0
        %v2635 = vadd.f32 %v1878, %v2634
        %v2636 = vpop.f32.mrf.mxu0
        %v2637 = vadd.f32 %v1879, %v2636
        %2638 = vmatmul.bf16.gmra.mxu0 %v2375
        %v2639 = vpop.f32.mrf.mxu0
        %v2640 = vadd.f32 %v1880, %v2639
        %v2641 = vpop.f32.mrf.mxu0
        %v2642 = vadd.f32 %v1881, %v2641
        %2643 = vmatmul.bf16.gmra.mxu0 %v2378
        %v2644 = vpop.f32.mrf.mxu0
        %v2645 = vadd.f32 %v1882, %v2644
        %v2646 = vpop.f32.mrf.mxu0
        %v2647 = vadd.f32 %v1883, %v2646
        %2648 = vmatmul.bf16.gmra.mxu0 %v2381
        %v2649 = vpop.f32.mrf.mxu0
        %v2650 = vadd.f32 %v1884, %v2649
        %v2651 = vpop.f32.mrf.mxu0
        %v2652 = vadd.f32 %v1885, %v2651
        %2653 = vmatmul.bf16.gmra.mxu0 %v2384
        %v2654 = vpop.f32.mrf.mxu0
        %v2655 = vadd.f32 %v1886, %v2654
        %v2656 = vpop.f32.mrf.mxu0
        %v2657 = vadd.f32 %v1887, %v2656
        %2658 = vmatmul.bf16.gmra.mxu0 %v2387
        %v2659 = vpop.f32.mrf.mxu0
        %v2660 = vadd.f32 %v1888, %v2659
        %v2661 = vpop.f32.mrf.mxu0
        %v2662 = vadd.f32 %v1889, %v2661
        %2663 = vmatmul.bf16.gmra.mxu0 %v2390
        %v2664 = vpop.f32.mrf.mxu0
        %v2665 = vadd.f32 %v1890, %v2664
        %v2666 = vpop.f32.mrf.mxu0
        %v2667 = vadd.f32 %v1891, %v2666
        %2668 = vmatmul.bf16.gmra.mxu0 %v2393
        %v2669 = vpop.f32.mrf.mxu0
        %v2670 = vadd.f32 %v1892, %v2669
        %v2671 = vpop.f32.mrf.mxu0
        %v2672 = vadd.f32 %v1893, %v2671
        %2673 = vmatmul.bf16.gmra.mxu0 %v2396
        %v2674 = vpop.f32.mrf.mxu0
        %v2675 = vadd.f32 %v1894, %v2674
        %v2676 = vpop.f32.mrf.mxu0
        %v2677 = vadd.f32 %v1895, %v2676
        %2678 = vmatmul.bf16.gmra.mxu0 %v2399
        %v2679 = vpop.f32.mrf.mxu0
        %v2680 = vadd.f32 %v1896, %v2679
        %v2681 = vpop.f32.mrf.mxu0
        %v2682 = vadd.f32 %v1897, %v2681
        %2683 = vmatmul.bf16.gmra.mxu0 %v2402
        %v2684 = vpop.f32.mrf.mxu0
        %v2685 = vadd.f32 %v1898, %v2684
        %v2686 = vpop.f32.mrf.mxu0
        %v2687 = vadd.f32 %v1899, %v2686
        %2688 = vmatmul.bf16.gmra.mxu0 %v2405
        %v2689 = vpop.f32.mrf.mxu0
        %v2690 = vadd.f32 %v1900, %v2689
        %v2691 = vpop.f32.mrf.mxu0
        %v2692 = vadd.f32 %v1901, %v2691
        %2693 = vmatmul.bf16.gmra.mxu0 %v2408
        %v2694 = vpop.f32.mrf.mxu0
        %v2695 = vadd.f32 %v1902, %v2694
        %v2696 = vpop.f32.mrf.mxu0
        %v2697 = vadd.f32 %v1903, %v2696
        %2698 = vmatmul.bf16.gmra.mxu0 %v2411
        %v2699 = vpop.f32.mrf.mxu0
        %v2700 = vadd.f32 %v1904, %v2699
        %v2701 = vpop.f32.mrf.mxu0
        %v2702 = vadd.f32 %v1905, %v2701
        %2703 = vmatmul.bf16.gmra.mxu0 %v2414
        %v2704 = vpop.f32.mrf.mxu0
        %v2705 = vadd.f32 %v1906, %v2704
        %v2706 = vpop.f32.mrf.mxu0
        %v2707 = vadd.f32 %v1907, %v2706
        %2708 = vmatmul.bf16.gmra.mxu0 %v2417
        %v2709 = vpop.f32.mrf.mxu0
        %v2710 = vadd.f32 %v1908, %v2709
        %v2711 = vpop.f32.mrf.mxu0
        %v2712 = vadd.f32 %v1909, %v2711
        %2713 = vmatmul.bf16.gmra.mxu0 %v2420
        %v2714 = vpop.f32.mrf.mxu0
        %v2715 = vadd.f32 %v1910, %v2714
        %v2716 = vpop.f32.mrf.mxu0
        %v2717 = vadd.f32 %v1911, %v2716
        %2718 = vmatmul.bf16.gmra.mxu0 %v2423
        %v2719 = vpop.f32.mrf.mxu0
        %v2720 = vadd.f32 %v1912, %v2719
        %v2721 = vpop.f32.mrf.mxu0
        %v2722 = vadd.f32 %v1913, %v2721
        %2723 = vmatmul.bf16.gmra.mxu0 %v2426
        %v2724 = vpop.f32.mrf.mxu0
        %v2725 = vadd.f32 %v1914, %v2724
        %v2726 = vpop.f32.mrf.mxu0
        %v2727 = vadd.f32 %v1915, %v2726
        %2728 = vmatmul.bf16.gmra.mxu0 %v2429
        %v2729 = vpop.f32.mrf.mxu0
        %v2730 = vadd.f32 %v1916, %v2729
        %v2731 = vpop.f32.mrf.mxu0
        %v2732 = vadd.f32 %v1917, %v2731
        %2733 = vmatmul.bf16.gmra.mxu0 %v2432
        %v2734 = vpop.f32.mrf.mxu0
        %v2735 = vadd.f32 %v1918, %v2734
        %v2736 = vpop.f32.mrf.mxu0
        %v2737 = vadd.f32 %v1919, %v2736
        %2738 = vmatmul.bf16.gmra.mxu0 %v2435
        %v2739 = vpop.f32.mrf.mxu0
        %v2740 = vadd.f32 %v1920, %v2739
        %v2741 = vpop.f32.mrf.mxu0
        %v2742 = vadd.f32 %v1921, %v2741
        %2743 = vmatmul.bf16.gmra.mxu0 %v2438
        %v2744 = vpop.f32.mrf.mxu0
        %v2745 = vadd.f32 %v1922, %v2744
        %v2746 = vpop.f32.mrf.mxu0
        %v2747 = vadd.f32 %v1923, %v2746
        %2748 = vmatmul.bf16.gmra.mxu0 %v2441
        %v2749 = vpop.f32.mrf.mxu0
        %v2750 = vadd.f32 %v1924, %v2749
        %v2751 = vpop.f32.mrf.mxu0
        %v2752 = vadd.f32 %v1925, %v2751
        %2753 = vmatmul.bf16.gmra.mxu0 %v2444
        %v2754 = vpop.f32.mrf.mxu0
        %v2755 = vadd.f32 %v1926, %v2754
        %v2756 = vpop.f32.mrf.mxu0
        %v2757 = vadd.f32 %v1927, %v2756
        %2758 = vmatmul.bf16.gmra.mxu0 %v2447
        %v2759 = vpop.f32.mrf.mxu0
        %v2760 = vadd.f32 %v1928, %v2759
        %v2761 = vpop.f32.mrf.mxu0
        %v2762 = vadd.f32 %v1929, %v2761
        %2763 = vmatmul.bf16.gmra.mxu0 %v2450
        %v2764 = vpop.f32.mrf.mxu0
        %v2765 = vadd.f32 %v1930, %v2764
        %v2766 = vpop.f32.mrf.mxu0
        %v2767 = vadd.f32 %v1931, %v2766
        %2768 = vmatmul.bf16.gmra.mxu0 %v2453
        %v2769 = vpop.f32.mrf.mxu0
        %v2770 = vadd.f32 %v1932, %v2769
        %v2771 = vpop.f32.mrf.mxu0
        %v2772 = vadd.f32 %v1933, %v2771
        %2773 = vdwg.mxu0
        %v2774 = vld [vmem:[%s729] sm:$0x1]
        %v2776 = vperm.slane %v2774, 0
        %v2778 = vadd.f32 %v2465, %v2776
        %v2779 = vadd.f32 %v2467, %v2776
        %v2780 = vadd.f32 %v2470, %v2776
        %v2781 = vadd.f32 %v2472, %v2776
        %v2782 = vadd.f32 %v2475, %v2776
        %v2783 = vadd.f32 %v2477, %v2776
        %v2784 = vadd.f32 %v2480, %v2776
        %v2785 = vadd.f32 %v2482, %v2776
        %v2786 = vadd.f32 %v2485, %v2776
        %v2787 = vadd.f32 %v2487, %v2776
        %v2788 = vadd.f32 %v2490, %v2776
        %v2789 = vadd.f32 %v2492, %v2776
        %v2790 = vadd.f32 %v2495, %v2776
        %v2791 = vadd.f32 %v2497, %v2776
        %v2792 = vadd.f32 %v2500, %v2776
        %v2793 = vadd.f32 %v2502, %v2776
        %v2794 = vadd.f32 %v2505, %v2776
        %v2795 = vadd.f32 %v2507, %v2776
        %v2796 = vadd.f32 %v2510, %v2776
        %v2797 = vadd.f32 %v2512, %v2776
        %v2798 = vadd.f32 %v2515, %v2776
        %v2799 = vadd.f32 %v2517, %v2776
        %v2800 = vadd.f32 %v2520, %v2776
        %v2801 = vadd.f32 %v2522, %v2776
        %v2802 = vadd.f32 %v2525, %v2776
        %v2803 = vadd.f32 %v2527, %v2776
        %v2804 = vadd.f32 %v2530, %v2776
        %v2805 = vadd.f32 %v2532, %v2776
        %v2806 = vadd.f32 %v2535, %v2776
        %v2807 = vadd.f32 %v2537, %v2776
        %v2808 = vadd.f32 %v2540, %v2776
        %v2809 = vadd.f32 %v2542, %v2776
        %v2810 = vadd.f32 %v2545, %v2776
        %v2811 = vadd.f32 %v2547, %v2776
        %v2812 = vadd.f32 %v2550, %v2776
        %v2813 = vadd.f32 %v2552, %v2776
        %v2814 = vadd.f32 %v2555, %v2776
        %v2815 = vadd.f32 %v2557, %v2776
        %v2816 = vadd.f32 %v2560, %v2776
        %v2817 = vadd.f32 %v2562, %v2776
        %v2818 = vadd.f32 %v2565, %v2776
        %v2819 = vadd.f32 %v2567, %v2776
        %v2820 = vadd.f32 %v2570, %v2776
        %v2821 = vadd.f32 %v2572, %v2776
        %v2822 = vadd.f32 %v2575, %v2776
        %v2823 = vadd.f32 %v2577, %v2776
        %v2824 = vadd.f32 %v2580, %v2776
        %v2825 = vadd.f32 %v2582, %v2776
        %v2826 = vadd.f32 %v2585, %v2776
        %v2827 = vadd.f32 %v2587, %v2776
        %v2828 = vadd.f32 %v2590, %v2776
        %v2829 = vadd.f32 %v2592, %v2776
        %v2830 = vadd.f32 %v2595, %v2776
        %v2831 = vadd.f32 %v2597, %v2776
        %v2832 = vadd.f32 %v2600, %v2776
        %v2833 = vadd.f32 %v2602, %v2776
        %v2834 = vadd.f32 %v2605, %v2776
        %v2835 = vadd.f32 %v2607, %v2776
        %v2836 = vadd.f32 %v2610, %v2776
        %v2837 = vadd.f32 %v2612, %v2776
        %v2838 = vadd.f32 %v2615, %v2776
        %v2839 = vadd.f32 %v2617, %v2776
        %v2840 = vadd.f32 %v2620, %v2776
        %v2841 = vadd.f32 %v2622, %v2776
        %v2842 = vadd.f32 %v2625, %v2776
        %v2843 = vadd.f32 %v2627, %v2776
        %v2844 = vadd.f32 %v2630, %v2776
        %v2845 = vadd.f32 %v2632, %v2776
        %v2846 = vadd.f32 %v2635, %v2776
        %v2847 = vadd.f32 %v2637, %v2776
        %v2848 = vadd.f32 %v2640, %v2776
        %v2849 = vadd.f32 %v2642, %v2776
        %v2850 = vadd.f32 %v2645, %v2776
        %v2851 = vadd.f32 %v2647, %v2776
        %v2852 = vadd.f32 %v2650, %v2776
        %v2853 = vadd.f32 %v2652, %v2776
        %v2854 = vadd.f32 %v2655, %v2776
        %v2855 = vadd.f32 %v2657, %v2776
        %v2856 = vadd.f32 %v2660, %v2776
        %v2857 = vadd.f32 %v2662, %v2776
        %v2858 = vadd.f32 %v2665, %v2776
        %v2859 = vadd.f32 %v2667, %v2776
        %v2860 = vadd.f32 %v2670, %v2776
        %v2861 = vadd.f32 %v2672, %v2776
        %v2862 = vadd.f32 %v2675, %v2776
        %v2863 = vadd.f32 %v2677, %v2776
        %v2864 = vadd.f32 %v2680, %v2776
        %v2865 = vadd.f32 %v2682, %v2776
        %v2866 = vadd.f32 %v2685, %v2776
        %v2867 = vadd.f32 %v2687, %v2776
        %v2868 = vadd.f32 %v2690, %v2776
        %v2869 = vadd.f32 %v2692, %v2776
        %v2870 = vadd.f32 %v2695, %v2776
        %v2871 = vadd.f32 %v2697, %v2776
        %v2872 = vadd.f32 %v2700, %v2776
        %v2873 = vadd.f32 %v2702, %v2776
        %v2874 = vadd.f32 %v2705, %v2776
        %v2875 = vadd.f32 %v2707, %v2776
        %v2876 = vadd.f32 %v2710, %v2776
        %v2877 = vadd.f32 %v2712, %v2776
        %v2878 = vadd.f32 %v2715, %v2776
        %v2879 = vadd.f32 %v2717, %v2776
        %v2880 = vadd.f32 %v2720, %v2776
        %v2881 = vadd.f32 %v2722, %v2776
        %v2882 = vadd.f32 %v2725, %v2776
        %v2883 = vadd.f32 %v2727, %v2776
        %v2884 = vadd.f32 %v2730, %v2776
        %v2885 = vadd.f32 %v2732, %v2776
        %v2886 = vadd.f32 %v2735, %v2776
        %v2887 = vadd.f32 %v2737, %v2776
        %v2888 = vadd.f32 %v2740, %v2776
        %v2889 = vadd.f32 %v2742, %v2776
        %v2890 = vadd.f32 %v2745, %v2776
        %v2891 = vadd.f32 %v2747, %v2776
        %v2892 = vadd.f32 %v2750, %v2776
        %v2893 = vadd.f32 %v2752, %v2776
        %v2894 = vadd.f32 %v2755, %v2776
        %v2895 = vadd.f32 %v2757, %v2776
        %v2896 = vadd.f32 %v2760, %v2776
        %v2897 = vadd.f32 %v2762, %v2776
        %v2898 = vadd.f32 %v2765, %v2776
        %v2899 = vadd.f32 %v2767, %v2776
        %v2900 = vadd.f32 %v2770, %v2776
        %v2901 = vadd.f32 %v2772, %v2776
        %v2902 = vxor.u32 %v2778, 2147483648
        %v2903 = vxor.u32 %v2779, 2147483648
        %v2904 = vxor.u32 %v2780, 2147483648
        %v2905 = vxor.u32 %v2781, 2147483648
        %v2906 = vxor.u32 %v2782, 2147483648
        %v2907 = vxor.u32 %v2783, 2147483648
        %v2908 = vxor.u32 %v2784, 2147483648
        %v2909 = vxor.u32 %v2785, 2147483648
        %v2910 = vxor.u32 %v2786, 2147483648
        %v2911 = vxor.u32 %v2787, 2147483648
        %v2912 = vxor.u32 %v2788, 2147483648
        %v2913 = vxor.u32 %v2789, 2147483648
        %v2914 = vxor.u32 %v2790, 2147483648
        %v2915 = vxor.u32 %v2791, 2147483648
        %v2916 = vxor.u32 %v2792, 2147483648
        %v2917 = vxor.u32 %v2793, 2147483648
        %v2918 = vxor.u32 %v2794, 2147483648
        %v2919 = vxor.u32 %v2795, 2147483648
        %v2920 = vxor.u32 %v2796, 2147483648
        %v2921 = vxor.u32 %v2797, 2147483648
        %v2922 = vxor.u32 %v2798, 2147483648
        %v2923 = vxor.u32 %v2799, 2147483648
        %v2924 = vxor.u32 %v2800, 2147483648
        %v2925 = vxor.u32 %v2801, 2147483648
        %v2926 = vxor.u32 %v2802, 2147483648
        %v2927 = vxor.u32 %v2803, 2147483648
        %v2928 = vxor.u32 %v2804, 2147483648
        %v2929 = vxor.u32 %v2805, 2147483648
        %v2930 = vxor.u32 %v2806, 2147483648
        %v2931 = vxor.u32 %v2807, 2147483648
        %v2932 = vxor.u32 %v2808, 2147483648
        %v2933 = vxor.u32 %v2809, 2147483648
        %v2934 = vxor.u32 %v2810, 2147483648
        %v2935 = vxor.u32 %v2811, 2147483648
        %v2936 = vxor.u32 %v2812, 2147483648
        %v2937 = vxor.u32 %v2813, 2147483648
        %v2938 = vxor.u32 %v2814, 2147483648
        %v2939 = vxor.u32 %v2815, 2147483648
        %v2940 = vxor.u32 %v2816, 2147483648
        %v2941 = vxor.u32 %v2817, 2147483648
        %v2942 = vxor.u32 %v2818, 2147483648
        %v2943 = vxor.u32 %v2819, 2147483648
        %v2944 = vxor.u32 %v2820, 2147483648
        %v2945 = vxor.u32 %v2821, 2147483648
        %v2946 = vxor.u32 %v2822, 2147483648
        %v2947 = vxor.u32 %v2823, 2147483648
        %v2948 = vxor.u32 %v2824, 2147483648
        %v2949 = vxor.u32 %v2825, 2147483648
        %v2950 = vxor.u32 %v2826, 2147483648
        %v2951 = vxor.u32 %v2827, 2147483648
        %v2952 = vxor.u32 %v2828, 2147483648
        %v2953 = vxor.u32 %v2829, 2147483648
        %v2954 = vxor.u32 %v2830, 2147483648
        %v2955 = vxor.u32 %v2831, 2147483648
        %v2956 = vxor.u32 %v2832, 2147483648
        %v2957 = vxor.u32 %v2833, 2147483648
        %v2958 = vxor.u32 %v2834, 2147483648
        %v2959 = vxor.u32 %v2835, 2147483648
        %v2960 = vxor.u32 %v2836, 2147483648
        %v2961 = vxor.u32 %v2837, 2147483648
        %v2962 = vxor.u32 %v2838, 2147483648
        %v2963 = vxor.u32 %v2839, 2147483648
        %v2964 = vxor.u32 %v2840, 2147483648
        %v2965 = vxor.u32 %v2841, 2147483648
        %v2966 = vxor.u32 %v2842, 2147483648
        %v2967 = vxor.u32 %v2843, 2147483648
        %v2968 = vxor.u32 %v2844, 2147483648
        %v2969 = vxor.u32 %v2845, 2147483648
        %v2970 = vxor.u32 %v2846, 2147483648
        %v2971 = vxor.u32 %v2847, 2147483648
        %v2972 = vxor.u32 %v2848, 2147483648
        %v2973 = vxor.u32 %v2849, 2147483648
        %v2974 = vxor.u32 %v2850, 2147483648
        %v2975 = vxor.u32 %v2851, 2147483648
        %v2976 = vxor.u32 %v2852, 2147483648
        %v2977 = vxor.u32 %v2853, 2147483648
        %v2978 = vxor.u32 %v2854, 2147483648
        %v2979 = vxor.u32 %v2855, 2147483648
        %v2980 = vxor.u32 %v2856, 2147483648
        %v2981 = vxor.u32 %v2857, 2147483648
        %v2982 = vxor.u32 %v2858, 2147483648
        %v2983 = vxor.u32 %v2859, 2147483648
        %v2984 = vxor.u32 %v2860, 2147483648
        %v2985 = vxor.u32 %v2861, 2147483648
        %v2986 = vxor.u32 %v2862, 2147483648
        %v2987 = vxor.u32 %v2863, 2147483648
        %v2988 = vxor.u32 %v2864, 2147483648
        %v2989 = vxor.u32 %v2865, 2147483648
        %v2990 = vxor.u32 %v2866, 2147483648
        %v2991 = vxor.u32 %v2867, 2147483648
        %v2992 = vxor.u32 %v2868, 2147483648
        %v2993 = vxor.u32 %v2869, 2147483648
        %v2994 = vxor.u32 %v2870, 2147483648
        %v2995 = vxor.u32 %v2871, 2147483648
        %v2996 = vxor.u32 %v2872, 2147483648
        %v2997 = vxor.u32 %v2873, 2147483648
        %v2998 = vxor.u32 %v2874, 2147483648
        %v2999 = vxor.u32 %v2875, 2147483648
        %v3000 = vxor.u32 %v2876, 2147483648
        %v3001 = vxor.u32 %v2877, 2147483648
        %v3002 = vxor.u32 %v2878, 2147483648
        %v3003 = vxor.u32 %v2879, 2147483648
        %v3004 = vxor.u32 %v2880, 2147483648
        %v3005 = vxor.u32 %v2881, 2147483648
        %v3006 = vxor.u32 %v2882, 2147483648
        %v3007 = vxor.u32 %v2883, 2147483648
        %v3008 = vxor.u32 %v2884, 2147483648
        %v3009 = vxor.u32 %v2885, 2147483648
        %v3010 = vxor.u32 %v2886, 2147483648
        %v3011 = vxor.u32 %v2887, 2147483648
        %v3012 = vxor.u32 %v2888, 2147483648
        %v3013 = vxor.u32 %v2889, 2147483648
        %v3014 = vxor.u32 %v2890, 2147483648
        %v3015 = vxor.u32 %v2891, 2147483648
        %v3016 = vxor.u32 %v2892, 2147483648
        %v3017 = vxor.u32 %v2893, 2147483648
        %v3018 = vxor.u32 %v2894, 2147483648
        %v3019 = vxor.u32 %v2895, 2147483648
        %v3020 = vxor.u32 %v2896, 2147483648
        %v3021 = vxor.u32 %v2897, 2147483648
        %v3022 = vxor.u32 %v2898, 2147483648
        %v3023 = vxor.u32 %v2899, 2147483648
        %v3024 = vxor.u32 %v2900, 2147483648
        %v3025 = vxor.u32 %v2901, 2147483648
        %v3026 = vmul.f32 %v2902, 1.442695
        %v3027 = vpow.pop %v3026
        %v3028 = vmul.f32 %v2903, 1.442695
        %v3029 = vpow.pop %v3028
        %v3030 = vmul.f32 %v2904, 1.442695
        %v3031 = vpow.pop %v3030
        %v3032 = vmul.f32 %v2905, 1.442695
        %v3033 = vpow.pop %v3032
        %v3034 = vmul.f32 %v2906, 1.442695
        %v3035 = vpow.pop %v3034
        %v3036 = vmul.f32 %v2907, 1.442695
        %v3037 = vpow.pop %v3036
        %v3038 = vmul.f32 %v2908, 1.442695
        %v3039 = vpow.pop %v3038
        %v3040 = vmul.f32 %v2909, 1.442695
        %v3041 = vpow.pop %v3040
        %v3042 = vmul.f32 %v2910, 1.442695
        %v3043 = vpow.pop %v3042
        %v3044 = vmul.f32 %v2911, 1.442695
        %v3045 = vpow.pop %v3044
        %v3046 = vmul.f32 %v2912, 1.442695
        %v3047 = vpow.pop %v3046
        %v3048 = vmul.f32 %v2913, 1.442695
        %v3049 = vpow.pop %v3048
        %v3050 = vmul.f32 %v2914, 1.442695
        %v3051 = vpow.pop %v3050
        %v3052 = vmul.f32 %v2915, 1.442695
        %v3053 = vpow.pop %v3052
        %v3054 = vmul.f32 %v2916, 1.442695
        %v3055 = vpow.pop %v3054
        %v3056 = vmul.f32 %v2917, 1.442695
        %v3057 = vpow.pop %v3056
        %v3058 = vmul.f32 %v2918, 1.442695
        %v3059 = vpow.pop %v3058
        %v3060 = vmul.f32 %v2919, 1.442695
        %v3061 = vpow.pop %v3060
        %v3062 = vmul.f32 %v2920, 1.442695
        %v3063 = vpow.pop %v3062
        %v3064 = vmul.f32 %v2921, 1.442695
        %v3065 = vpow.pop %v3064
        %v3066 = vmul.f32 %v2922, 1.442695
        %v3067 = vpow.pop %v3066
        %v3068 = vmul.f32 %v2923, 1.442695
        %v3069 = vpow.pop %v3068
        %v3070 = vmul.f32 %v2924, 1.442695
        %v3071 = vpow.pop %v3070
        %v3072 = vmul.f32 %v2925, 1.442695
        %v3073 = vpow.pop %v3072
        %v3074 = vmul.f32 %v2926, 1.442695
        %v3075 = vpow.pop %v3074
        %v3076 = vmul.f32 %v2927, 1.442695
        %v3077 = vpow.pop %v3076
        %v3078 = vmul.f32 %v2928, 1.442695
        %v3079 = vpow.pop %v3078
        %v3080 = vmul.f32 %v2929, 1.442695
        %v3081 = vpow.pop %v3080
        %v3082 = vmul.f32 %v2930, 1.442695
        %v3083 = vpow.pop %v3082
        %v3084 = vmul.f32 %v2931, 1.442695
        %v3085 = vpow.pop %v3084
        %v3086 = vmul.f32 %v2932, 1.442695
        %v3087 = vpow.pop %v3086
        %v3088 = vmul.f32 %v2933, 1.442695
        %v3089 = vpow.pop %v3088
        %v3090 = vmul.f32 %v2934, 1.442695
        %v3091 = vpow.pop %v3090
        %v3092 = vmul.f32 %v2935, 1.442695
        %v3093 = vpow.pop %v3092
        %v3094 = vmul.f32 %v2936, 1.442695
        %v3095 = vpow.pop %v3094
        %v3096 = vmul.f32 %v2937, 1.442695
        %v3097 = vpow.pop %v3096
        %v3098 = vmul.f32 %v2938, 1.442695
        %v3099 = vpow.pop %v3098
        %v3100 = vmul.f32 %v2939, 1.442695
        %v3101 = vpow.pop %v3100
        %v3102 = vmul.f32 %v2940, 1.442695
        %v3103 = vpow.pop %v3102
        %v3104 = vmul.f32 %v2941, 1.442695
        %v3105 = vpow.pop %v3104
        %v3106 = vmul.f32 %v2942, 1.442695
        %v3107 = vpow.pop %v3106
        %v3108 = vmul.f32 %v2943, 1.442695
        %v3109 = vpow.pop %v3108
        %v3110 = vmul.f32 %v2944, 1.442695
        %v3111 = vpow.pop %v3110
        %v3112 = vmul.f32 %v2945, 1.442695
        %v3113 = vpow.pop %v3112
        %v3114 = vmul.f32 %v2946, 1.442695
        %v3115 = vpow.pop %v3114
        %v3116 = vmul.f32 %v2947, 1.442695
        %v3117 = vpow.pop %v3116
        %v3118 = vmul.f32 %v2948, 1.442695
        %v3119 = vpow.pop %v3118
        %v3120 = vmul.f32 %v2949, 1.442695
        %v3121 = vpow.pop %v3120
        %v3122 = vmul.f32 %v2950, 1.442695
        %v3123 = vpow.pop %v3122
        %v3124 = vmul.f32 %v2951, 1.442695
        %v3125 = vpow.pop %v3124
        %v3126 = vmul.f32 %v2952, 1.442695
        %v3127 = vpow.pop %v3126
        %v3128 = vmul.f32 %v2953, 1.442695
        %v3129 = vpow.pop %v3128
        %v3130 = vmul.f32 %v2954, 1.442695
        %v3131 = vpow.pop %v3130
        %v3132 = vmul.f32 %v2955, 1.442695
        %v3133 = vpow.pop %v3132
        %v3134 = vmul.f32 %v2956, 1.442695
        %v3135 = vpow.pop %v3134
        %v3136 = vmul.f32 %v2957, 1.442695
        %v3137 = vpow.pop %v3136
        %v3138 = vmul.f32 %v2958, 1.442695
        %v3139 = vpow.pop %v3138
        %v3140 = vmul.f32 %v2959, 1.442695
        %v3141 = vpow.pop %v3140
        %v3142 = vmul.f32 %v2960, 1.442695
        %v3143 = vpow.pop %v3142
        %v3144 = vmul.f32 %v2961, 1.442695
        %v3145 = vpow.pop %v3144
        %v3146 = vmul.f32 %v2962, 1.442695
        %v3147 = vpow.pop %v3146
        %v3148 = vmul.f32 %v2963, 1.442695
        %v3149 = vpow.pop %v3148
        %v3150 = vmul.f32 %v2964, 1.442695
        %v3151 = vpow.pop %v3150
        %v3152 = vmul.f32 %v2965, 1.442695
        %v3153 = vpow.pop %v3152
        %v3154 = vmul.f32 %v2966, 1.442695
        %v3155 = vpow.pop %v3154
        %v3156 = vmul.f32 %v2967, 1.442695
        %v3157 = vpow.pop %v3156
        %v3158 = vmul.f32 %v2968, 1.442695
        %v3159 = vpow.pop %v3158
        %v3160 = vmul.f32 %v2969, 1.442695
        %v3161 = vpow.pop %v3160
        %v3162 = vmul.f32 %v2970, 1.442695
        %v3163 = vpow.pop %v3162
        %v3164 = vmul.f32 %v2971, 1.442695
        %v3165 = vpow.pop %v3164
        %v3166 = vmul.f32 %v2972, 1.442695
        %v3167 = vpow.pop %v3166
        %v3168 = vmul.f32 %v2973, 1.442695
        %v3169 = vpow.pop %v3168
        %v3170 = vmul.f32 %v2974, 1.442695
        %v3171 = vpow.pop %v3170
        %v3172 = vmul.f32 %v2975, 1.442695
        %v3173 = vpow.pop %v3172
        %v3174 = vmul.f32 %v2976, 1.442695
        %v3175 = vpow.pop %v3174
        %v3176 = vmul.f32 %v2977, 1.442695
        %v3177 = vpow.pop %v3176
        %v3178 = vmul.f32 %v2978, 1.442695
        %v3179 = vpow.pop %v3178
        %v3180 = vmul.f32 %v2979, 1.442695
        %v3181 = vpow.pop %v3180
        %v3182 = vmul.f32 %v2980, 1.442695
        %v3183 = vpow.pop %v3182
        %v3184 = vmul.f32 %v2981, 1.442695
        %v3185 = vpow.pop %v3184
        %v3186 = vmul.f32 %v2982, 1.442695
        %v3187 = vpow.pop %v3186
        %v3188 = vmul.f32 %v2983, 1.442695
        %v3189 = vpow.pop %v3188
        %v3190 = vmul.f32 %v2984, 1.442695
        %v3191 = vpow.pop %v3190
        %v3192 = vmul.f32 %v2985, 1.442695
        %v3193 = vpow.pop %v3192
        %v3194 = vmul.f32 %v2986, 1.442695
        %v3195 = vpow.pop %v3194
        %v3196 = vmul.f32 %v2987, 1.442695
        %v3197 = vpow.pop %v3196
        %v3198 = vmul.f32 %v2988, 1.442695
        %v3199 = vpow.pop %v3198
        %v3200 = vmul.f32 %v2989, 1.442695
        %v3201 = vpow.pop %v3200
        %v3202 = vmul.f32 %v2990, 1.442695
        %v3203 = vpow.pop %v3202
        %v3204 = vmul.f32 %v2991, 1.442695
        %v3205 = vpow.pop %v3204
        %v3206 = vmul.f32 %v2992, 1.442695
        %v3207 = vpow.pop %v3206
        %v3208 = vmul.f32 %v2993, 1.442695
        %v3209 = vpow.pop %v3208
        %v3210 = vmul.f32 %v2994, 1.442695
        %v3211 = vpow.pop %v3210
        %v3212 = vmul.f32 %v2995, 1.442695
        %v3213 = vpow.pop %v3212
        %v3214 = vmul.f32 %v2996, 1.442695
        %v3215 = vpow.pop %v3214
        %v3216 = vmul.f32 %v2997, 1.442695
        %v3217 = vpow.pop %v3216
        %v3218 = vmul.f32 %v2998, 1.442695
        %v3219 = vpow.pop %v3218
        %v3220 = vmul.f32 %v2999, 1.442695
        %v3221 = vpow.pop %v3220
        %v3222 = vmul.f32 %v3000, 1.442695
        %v3223 = vpow.pop %v3222
        %v3224 = vmul.f32 %v3001, 1.442695
        %v3225 = vpow.pop %v3224
        %v3226 = vmul.f32 %v3002, 1.442695
        %v3227 = vpow.pop %v3226
        %v3228 = vmul.f32 %v3003, 1.442695
        %v3229 = vpow.pop %v3228
        %v3230 = vmul.f32 %v3004, 1.442695
        %v3231 = vpow.pop %v3230
        %v3232 = vmul.f32 %v3005, 1.442695
        %v3233 = vpow.pop %v3232
        %v3234 = vmul.f32 %v3006, 1.442695
        %v3235 = vpow.pop %v3234
        %v3236 = vmul.f32 %v3007, 1.442695
        %v3237 = vpow.pop %v3236
        %v3238 = vmul.f32 %v3008, 1.442695
        %v3239 = vpow.pop %v3238
        %v3240 = vmul.f32 %v3009, 1.442695
        %v3241 = vpow.pop %v3240
        %v3242 = vmul.f32 %v3010, 1.442695
        %v3243 = vpow.pop %v3242
        %v3244 = vmul.f32 %v3011, 1.442695
        %v3245 = vpow.pop %v3244
        %v3246 = vmul.f32 %v3012, 1.442695
        %v3247 = vpow.pop %v3246
        %v3248 = vmul.f32 %v3013, 1.442695
        %v3249 = vpow.pop %v3248
        %v3250 = vmul.f32 %v3014, 1.442695
        %v3251 = vpow.pop %v3250
        %v3252 = vmul.f32 %v3015, 1.442695
        %v3253 = vpow.pop %v3252
        %v3254 = vmul.f32 %v3016, 1.442695
        %v3255 = vpow.pop %v3254
        %v3256 = vmul.f32 %v3017, 1.442695
        %v3257 = vpow.pop %v3256
        %v3258 = vmul.f32 %v3018, 1.442695
        %v3259 = vpow.pop %v3258
        %v3260 = vmul.f32 %v3019, 1.442695
        %v3261 = vpow.pop %v3260
        %v3262 = vmul.f32 %v3020, 1.442695
        %v3263 = vpow.pop %v3262
        %v3264 = vmul.f32 %v3021, 1.442695
        %v3265 = vpow.pop %v3264
        %v3266 = vmul.f32 %v3022, 1.442695
        %v3267 = vpow.pop %v3266
        %v3268 = vmul.f32 %v3023, 1.442695
        %v3269 = vpow.pop %v3268
        %v3270 = vmul.f32 %v3024, 1.442695
        %v3271 = vpow.pop %v3270
        %v3272 = vmul.f32 %v3025, 1.442695
        %v3273 = vpow.pop %v3272
        %v3274 = vadd.f32 %v3027, 1.0
        %v3275 = vadd.f32 %v3029, 1.0
        %v3276 = vadd.f32 %v3031, 1.0
        %v3277 = vadd.f32 %v3033, 1.0
        %v3278 = vadd.f32 %v3035, 1.0
        %v3279 = vadd.f32 %v3037, 1.0
        %v3280 = vadd.f32 %v3039, 1.0
        %v3281 = vadd.f32 %v3041, 1.0
        %v3282 = vadd.f32 %v3043, 1.0
        %v3283 = vadd.f32 %v3045, 1.0
        %v3284 = vadd.f32 %v3047, 1.0
        %v3285 = vadd.f32 %v3049, 1.0
        %v3286 = vadd.f32 %v3051, 1.0
        %v3287 = vadd.f32 %v3053, 1.0
        %v3288 = vadd.f32 %v3055, 1.0
        %v3289 = vadd.f32 %v3057, 1.0
        %v3290 = vadd.f32 %v3059, 1.0
        %v3291 = vadd.f32 %v3061, 1.0
        %v3292 = vadd.f32 %v3063, 1.0
        %v3293 = vadd.f32 %v3065, 1.0
        %v3294 = vadd.f32 %v3067, 1.0
        %v3295 = vadd.f32 %v3069, 1.0
        %v3296 = vadd.f32 %v3071, 1.0
        %v3297 = vadd.f32 %v3073, 1.0
        %v3298 = vadd.f32 %v3075, 1.0
        %v3299 = vadd.f32 %v3077, 1.0
        %v3300 = vadd.f32 %v3079, 1.0
        %v3301 = vadd.f32 %v3081, 1.0
        %v3302 = vadd.f32 %v3083, 1.0
        %v3303 = vadd.f32 %v3085, 1.0
        %v3304 = vadd.f32 %v3087, 1.0
        %v3305 = vadd.f32 %v3089, 1.0
        %v3306 = vadd.f32 %v3091, 1.0
        %v3307 = vadd.f32 %v3093, 1.0
        %v3308 = vadd.f32 %v3095, 1.0
        %v3309 = vadd.f32 %v3097, 1.0
        %v3310 = vadd.f32 %v3099, 1.0
        %v3311 = vadd.f32 %v3101, 1.0
        %v3312 = vadd.f32 %v3103, 1.0
        %v3313 = vadd.f32 %v3105, 1.0
        %v3314 = vadd.f32 %v3107, 1.0
        %v3315 = vadd.f32 %v3109, 1.0
        %v3316 = vadd.f32 %v3111, 1.0
        %v3317 = vadd.f32 %v3113, 1.0
        %v3318 = vadd.f32 %v3115, 1.0
        %v3319 = vadd.f32 %v3117, 1.0
        %v3320 = vadd.f32 %v3119, 1.0
        %v3321 = vadd.f32 %v3121, 1.0
        %v3322 = vadd.f32 %v3123, 1.0
        %v3323 = vadd.f32 %v3125, 1.0
        %v3324 = vadd.f32 %v3127, 1.0
        %v3325 = vadd.f32 %v3129, 1.0
        %v3326 = vadd.f32 %v3131, 1.0
        %v3327 = vadd.f32 %v3133, 1.0
        %v3328 = vadd.f32 %v3135, 1.0
        %v3329 = vadd.f32 %v3137, 1.0
        %v3330 = vadd.f32 %v3139, 1.0
        %v3331 = vadd.f32 %v3141, 1.0
        %v3332 = vadd.f32 %v3143, 1.0
        %v3333 = vadd.f32 %v3145, 1.0
        %v3334 = vadd.f32 %v3147, 1.0
        %v3335 = vadd.f32 %v3149, 1.0
        %v3336 = vadd.f32 %v3151, 1.0
        %v3337 = vadd.f32 %v3153, 1.0
        %v3338 = vadd.f32 %v3155, 1.0
        %v3339 = vadd.f32 %v3157, 1.0
        %v3340 = vadd.f32 %v3159, 1.0
        %v3341 = vadd.f32 %v3161, 1.0
        %v3342 = vadd.f32 %v3163, 1.0
        %v3343 = vadd.f32 %v3165, 1.0
        %v3344 = vadd.f32 %v3167, 1.0
        %v3345 = vadd.f32 %v3169, 1.0
        %v3346 = vadd.f32 %v3171, 1.0
        %v3347 = vadd.f32 %v3173, 1.0
        %v3348 = vadd.f32 %v3175, 1.0
        %v3349 = vadd.f32 %v3177, 1.0
        %v3350 = vadd.f32 %v3179, 1.0
        %v3351 = vadd.f32 %v3181, 1.0
        %v3352 = vadd.f32 %v3183, 1.0
        %v3353 = vadd.f32 %v3185, 1.0
        %v3354 = vadd.f32 %v3187, 1.0
        %v3355 = vadd.f32 %v3189, 1.0
        %v3356 = vadd.f32 %v3191, 1.0
        %v3357 = vadd.f32 %v3193, 1.0
        %v3358 = vadd.f32 %v3195, 1.0
        %v3359 = vadd.f32 %v3197, 1.0
        %v3360 = vadd.f32 %v3199, 1.0
        %v3361 = vadd.f32 %v3201, 1.0
        %v3362 = vadd.f32 %v3203, 1.0
        %v3363 = vadd.f32 %v3205, 1.0
        %v3364 = vadd.f32 %v3207, 1.0
        %v3365 = vadd.f32 %v3209, 1.0
        %v3366 = vadd.f32 %v3211, 1.0
        %v3367 = vadd.f32 %v3213, 1.0
        %v3368 = vadd.f32 %v3215, 1.0
        %v3369 = vadd.f32 %v3217, 1.0
        %v3370 = vadd.f32 %v3219, 1.0
        %v3371 = vadd.f32 %v3221, 1.0
        %v3372 = vadd.f32 %v3223, 1.0
        %v3373 = vadd.f32 %v3225, 1.0
        %v3374 = vadd.f32 %v3227, 1.0
        %v3375 = vadd.f32 %v3229, 1.0
        %v3376 = vadd.f32 %v3231, 1.0
        %v3377 = vadd.f32 %v3233, 1.0
        %v3378 = vadd.f32 %v3235, 1.0
        %v3379 = vadd.f32 %v3237, 1.0
        %v3380 = vadd.f32 %v3239, 1.0
        %v3381 = vadd.f32 %v3241, 1.0
        %v3382 = vadd.f32 %v3243, 1.0
        %v3383 = vadd.f32 %v3245, 1.0
        %v3384 = vadd.f32 %v3247, 1.0
        %v3385 = vadd.f32 %v3249, 1.0
        %v3386 = vadd.f32 %v3251, 1.0
        %v3387 = vadd.f32 %v3253, 1.0
        %v3388 = vadd.f32 %v3255, 1.0
        %v3389 = vadd.f32 %v3257, 1.0
        %v3390 = vadd.f32 %v3259, 1.0
        %v3391 = vadd.f32 %v3261, 1.0
        %v3392 = vadd.f32 %v3263, 1.0
        %v3393 = vadd.f32 %v3265, 1.0
        %v3394 = vadd.f32 %v3267, 1.0
        %v3395 = vadd.f32 %v3269, 1.0
        %v3396 = vadd.f32 %v3271, 1.0
        %v3397 = vadd.f32 %v3273, 1.0
        %v3398 = vrcp.pop %v3274
        %v3399 = vmul.f32 %v3274, %v3398
        %v3400 = vsub.f32 1.0, %v3399
        %v3401 = vmul.f32 %v3398, %v3400
        %v3402 = vadd.f32 %v3398, %v3401
        %vm3403 = vweird.f32 %v3274
        %vm3404 = vweird.f32 %v3398
        %vm3405 = vmor %vm3403, %vm3404
        %v3406 = vsel %vm3405, %v3398, %v3402
        %v3407 = vand.u32 2147483647, %v3274
        %vm3408 = vcmp.eq.f32.partialorder %v3407, 8.507059e+37
        %v3409 = vand.u32 %v3274, 2147483648
        %v3410 = vor.u32 1.1754944e-38, %v3409
        %v3411 = vsel %vm3408, %v3410, %v3406
        %v3412 = vmul.f32 1.0, %v3411
        %v3413 = vrcp.pop %v3275
        %v3414 = vmul.f32 %v3275, %v3413
        %v3415 = vsub.f32 1.0, %v3414
        %v3416 = vmul.f32 %v3413, %v3415
        %v3417 = vadd.f32 %v3413, %v3416
        %vm3418 = vweird.f32 %v3275
        %vm3419 = vweird.f32 %v3413
        %vm3420 = vmor %vm3418, %vm3419
        %v3421 = vsel %vm3420, %v3413, %v3417
        %v3422 = vand.u32 2147483647, %v3275
        %vm3423 = vcmp.eq.f32.partialorder %v3422, 8.507059e+37
        %v3424 = vand.u32 %v3275, 2147483648
        %v3425 = vor.u32 1.1754944e-38, %v3424
        %v3426 = vsel %vm3423, %v3425, %v3421
        %v3427 = vmul.f32 1.0, %v3426
        %v3428 = vrcp.pop %v3276
        %v3429 = vmul.f32 %v3276, %v3428
        %v3430 = vsub.f32 1.0, %v3429
        %v3431 = vmul.f32 %v3428, %v3430
        %v3432 = vadd.f32 %v3428, %v3431
        %vm3433 = vweird.f32 %v3276
        %vm3434 = vweird.f32 %v3428
        %vm3435 = vmor %vm3433, %vm3434
        %v3436 = vsel %vm3435, %v3428, %v3432
        %v3437 = vand.u32 2147483647, %v3276
        %vm3438 = vcmp.eq.f32.partialorder %v3437, 8.507059e+37
        %v3439 = vand.u32 %v3276, 2147483648
        %v3440 = vor.u32 1.1754944e-38, %v3439
        %v3441 = vsel %vm3438, %v3440, %v3436
        %v3442 = vmul.f32 1.0, %v3441
        %v3443 = vrcp.pop %v3277
        %v3444 = vmul.f32 %v3277, %v3443
        %v3445 = vsub.f32 1.0, %v3444
        %v3446 = vmul.f32 %v3443, %v3445
        %v3447 = vadd.f32 %v3443, %v3446
        %vm3448 = vweird.f32 %v3277
        %vm3449 = vweird.f32 %v3443
        %vm3450 = vmor %vm3448, %vm3449
        %v3451 = vsel %vm3450, %v3443, %v3447
        %v3452 = vand.u32 2147483647, %v3277
        %vm3453 = vcmp.eq.f32.partialorder %v3452, 8.507059e+37
        %v3454 = vand.u32 %v3277, 2147483648
        %v3455 = vor.u32 1.1754944e-38, %v3454
        %v3456 = vsel %vm3453, %v3455, %v3451
        %v3457 = vmul.f32 1.0, %v3456
        %v3458 = vrcp.pop %v3278
        %v3459 = vmul.f32 %v3278, %v3458
        %v3460 = vsub.f32 1.0, %v3459
        %v3461 = vmul.f32 %v3458, %v3460
        %v3462 = vadd.f32 %v3458, %v3461
        %vm3463 = vweird.f32 %v3278
        %vm3464 = vweird.f32 %v3458
        %vm3465 = vmor %vm3463, %vm3464
        %v3466 = vsel %vm3465, %v3458, %v3462
        %v3467 = vand.u32 2147483647, %v3278
        %vm3468 = vcmp.eq.f32.partialorder %v3467, 8.507059e+37
        %v3469 = vand.u32 %v3278, 2147483648
        %v3470 = vor.u32 1.1754944e-38, %v3469
        %v3471 = vsel %vm3468, %v3470, %v3466
        %v3472 = vmul.f32 1.0, %v3471
        %v3473 = vrcp.pop %v3279
        %v3474 = vmul.f32 %v3279, %v3473
        %v3475 = vsub.f32 1.0, %v3474
        %v3476 = vmul.f32 %v3473, %v3475
        %v3477 = vadd.f32 %v3473, %v3476
        %vm3478 = vweird.f32 %v3279
        %vm3479 = vweird.f32 %v3473
        %vm3480 = vmor %vm3478, %vm3479
        %v3481 = vsel %vm3480, %v3473, %v3477
        %v3482 = vand.u32 2147483647, %v3279
        %vm3483 = vcmp.eq.f32.partialorder %v3482, 8.507059e+37
        %v3484 = vand.u32 %v3279, 2147483648
        %v3485 = vor.u32 1.1754944e-38, %v3484
        %v3486 = vsel %vm3483, %v3485, %v3481
        %v3487 = vmul.f32 1.0, %v3486
        %v3488 = vrcp.pop %v3280
        %v3489 = vmul.f32 %v3280, %v3488
        %v3490 = vsub.f32 1.0, %v3489
        %v3491 = vmul.f32 %v3488, %v3490
        %v3492 = vadd.f32 %v3488, %v3491
        %vm3493 = vweird.f32 %v3280
        %vm3494 = vweird.f32 %v3488
        %vm3495 = vmor %vm3493, %vm3494
        %v3496 = vsel %vm3495, %v3488, %v3492
        %v3497 = vand.u32 2147483647, %v3280
        %vm3498 = vcmp.eq.f32.partialorder %v3497, 8.507059e+37
        %v3499 = vand.u32 %v3280, 2147483648
        %v3500 = vor.u32 1.1754944e-38, %v3499
        %v3501 = vsel %vm3498, %v3500, %v3496
        %v3502 = vmul.f32 1.0, %v3501
        %v3503 = vrcp.pop %v3281
        %v3504 = vmul.f32 %v3281, %v3503
        %v3505 = vsub.f32 1.0, %v3504
        %v3506 = vmul.f32 %v3503, %v3505
        %v3507 = vadd.f32 %v3503, %v3506
        %vm3508 = vweird.f32 %v3281
        %vm3509 = vweird.f32 %v3503
        %vm3510 = vmor %vm3508, %vm3509
        %v3511 = vsel %vm3510, %v3503, %v3507
        %v3512 = vand.u32 2147483647, %v3281
        %vm3513 = vcmp.eq.f32.partialorder %v3512, 8.507059e+37
        %v3514 = vand.u32 %v3281, 2147483648
        %v3515 = vor.u32 1.1754944e-38, %v3514
        %v3516 = vsel %vm3513, %v3515, %v3511
        %v3517 = vmul.f32 1.0, %v3516
        %v3518 = vrcp.pop %v3282
        %v3519 = vmul.f32 %v3282, %v3518
        %v3520 = vsub.f32 1.0, %v3519
        %v3521 = vmul.f32 %v3518, %v3520
        %v3522 = vadd.f32 %v3518, %v3521
        %vm3523 = vweird.f32 %v3282
        %vm3524 = vweird.f32 %v3518
        %vm3525 = vmor %vm3523, %vm3524
        %v3526 = vsel %vm3525, %v3518, %v3522
        %v3527 = vand.u32 2147483647, %v3282
        %vm3528 = vcmp.eq.f32.partialorder %v3527, 8.507059e+37
        %v3529 = vand.u32 %v3282, 2147483648
        %v3530 = vor.u32 1.1754944e-38, %v3529
        %v3531 = vsel %vm3528, %v3530, %v3526
        %v3532 = vmul.f32 1.0, %v3531
        %v3533 = vrcp.pop %v3283
        %v3534 = vmul.f32 %v3283, %v3533
        %v3535 = vsub.f32 1.0, %v3534
        %v3536 = vmul.f32 %v3533, %v3535
        %v3537 = vadd.f32 %v3533, %v3536
        %vm3538 = vweird.f32 %v3283
        %vm3539 = vweird.f32 %v3533
        %vm3540 = vmor %vm3538, %vm3539
        %v3541 = vsel %vm3540, %v3533, %v3537
        %v3542 = vand.u32 2147483647, %v3283
        %vm3543 = vcmp.eq.f32.partialorder %v3542, 8.507059e+37
        %v3544 = vand.u32 %v3283, 2147483648
        %v3545 = vor.u32 1.1754944e-38, %v3544
        %v3546 = vsel %vm3543, %v3545, %v3541
        %v3547 = vmul.f32 1.0, %v3546
        %v3548 = vrcp.pop %v3284
        %v3549 = vmul.f32 %v3284, %v3548
        %v3550 = vsub.f32 1.0, %v3549
        %v3551 = vmul.f32 %v3548, %v3550
        %v3552 = vadd.f32 %v3548, %v3551
        %vm3553 = vweird.f32 %v3284
        %vm3554 = vweird.f32 %v3548
        %vm3555 = vmor %vm3553, %vm3554
        %v3556 = vsel %vm3555, %v3548, %v3552
        %v3557 = vand.u32 2147483647, %v3284
        %vm3558 = vcmp.eq.f32.partialorder %v3557, 8.507059e+37
        %v3559 = vand.u32 %v3284, 2147483648
        %v3560 = vor.u32 1.1754944e-38, %v3559
        %v3561 = vsel %vm3558, %v3560, %v3556
        %v3562 = vmul.f32 1.0, %v3561
        %v3563 = vrcp.pop %v3285
        %v3564 = vmul.f32 %v3285, %v3563
        %v3565 = vsub.f32 1.0, %v3564
        %v3566 = vmul.f32 %v3563, %v3565
        %v3567 = vadd.f32 %v3563, %v3566
        %vm3568 = vweird.f32 %v3285
        %vm3569 = vweird.f32 %v3563
        %vm3570 = vmor %vm3568, %vm3569
        %v3571 = vsel %vm3570, %v3563, %v3567
        %v3572 = vand.u32 2147483647, %v3285
        %vm3573 = vcmp.eq.f32.partialorder %v3572, 8.507059e+37
        %v3574 = vand.u32 %v3285, 2147483648
        %v3575 = vor.u32 1.1754944e-38, %v3574
        %v3576 = vsel %vm3573, %v3575, %v3571
        %v3577 = vmul.f32 1.0, %v3576
        %v3578 = vrcp.pop %v3286
        %v3579 = vmul.f32 %v3286, %v3578
        %v3580 = vsub.f32 1.0, %v3579
        %v3581 = vmul.f32 %v3578, %v3580
        %v3582 = vadd.f32 %v3578, %v3581
        %vm3583 = vweird.f32 %v3286
        %vm3584 = vweird.f32 %v3578
        %vm3585 = vmor %vm3583, %vm3584
        %v3586 = vsel %vm3585, %v3578, %v3582
        %v3587 = vand.u32 2147483647, %v3286
        %vm3588 = vcmp.eq.f32.partialorder %v3587, 8.507059e+37
        %v3589 = vand.u32 %v3286, 2147483648
        %v3590 = vor.u32 1.1754944e-38, %v3589
        %v3591 = vsel %vm3588, %v3590, %v3586
        %v3592 = vmul.f32 1.0, %v3591
        %v3593 = vrcp.pop %v3287
        %v3594 = vmul.f32 %v3287, %v3593
        %v3595 = vsub.f32 1.0, %v3594
        %v3596 = vmul.f32 %v3593, %v3595
        %v3597 = vadd.f32 %v3593, %v3596
        %vm3598 = vweird.f32 %v3287
        %vm3599 = vweird.f32 %v3593
        %vm3600 = vmor %vm3598, %vm3599
        %v3601 = vsel %vm3600, %v3593, %v3597
        %v3602 = vand.u32 2147483647, %v3287
        %vm3603 = vcmp.eq.f32.partialorder %v3602, 8.507059e+37
        %v3604 = vand.u32 %v3287, 2147483648
        %v3605 = vor.u32 1.1754944e-38, %v3604
        %v3606 = vsel %vm3603, %v3605, %v3601
        %v3607 = vmul.f32 1.0, %v3606
        %v3608 = vrcp.pop %v3288
        %v3609 = vmul.f32 %v3288, %v3608
        %v3610 = vsub.f32 1.0, %v3609
        %v3611 = vmul.f32 %v3608, %v3610
        %v3612 = vadd.f32 %v3608, %v3611
        %vm3613 = vweird.f32 %v3288
        %vm3614 = vweird.f32 %v3608
        %vm3615 = vmor %vm3613, %vm3614
        %v3616 = vsel %vm3615, %v3608, %v3612
        %v3617 = vand.u32 2147483647, %v3288
        %vm3618 = vcmp.eq.f32.partialorder %v3617, 8.507059e+37
        %v3619 = vand.u32 %v3288, 2147483648
        %v3620 = vor.u32 1.1754944e-38, %v3619
        %v3621 = vsel %vm3618, %v3620, %v3616
        %v3622 = vmul.f32 1.0, %v3621
        %v3623 = vrcp.pop %v3289
        %v3624 = vmul.f32 %v3289, %v3623
        %v3625 = vsub.f32 1.0, %v3624
        %v3626 = vmul.f32 %v3623, %v3625
        %v3627 = vadd.f32 %v3623, %v3626
        %vm3628 = vweird.f32 %v3289
        %vm3629 = vweird.f32 %v3623
        %vm3630 = vmor %vm3628, %vm3629
        %v3631 = vsel %vm3630, %v3623, %v3627
        %v3632 = vand.u32 2147483647, %v3289
        %vm3633 = vcmp.eq.f32.partialorder %v3632, 8.507059e+37
        %v3634 = vand.u32 %v3289, 2147483648
        %v3635 = vor.u32 1.1754944e-38, %v3634
        %v3636 = vsel %vm3633, %v3635, %v3631
        %v3637 = vmul.f32 1.0, %v3636
        %v3638 = vrcp.pop %v3290
        %v3639 = vmul.f32 %v3290, %v3638
        %v3640 = vsub.f32 1.0, %v3639
        %v3641 = vmul.f32 %v3638, %v3640
        %v3642 = vadd.f32 %v3638, %v3641
        %vm3643 = vweird.f32 %v3290
        %vm3644 = vweird.f32 %v3638
        %vm3645 = vmor %vm3643, %vm3644
        %v3646 = vsel %vm3645, %v3638, %v3642
        %v3647 = vand.u32 2147483647, %v3290
        %vm3648 = vcmp.eq.f32.partialorder %v3647, 8.507059e+37
        %v3649 = vand.u32 %v3290, 2147483648
        %v3650 = vor.u32 1.1754944e-38, %v3649
        %v3651 = vsel %vm3648, %v3650, %v3646
        %v3652 = vmul.f32 1.0, %v3651
        %v3653 = vrcp.pop %v3291
        %v3654 = vmul.f32 %v3291, %v3653
        %v3655 = vsub.f32 1.0, %v3654
        %v3656 = vmul.f32 %v3653, %v3655
        %v3657 = vadd.f32 %v3653, %v3656
        %vm3658 = vweird.f32 %v3291
        %vm3659 = vweird.f32 %v3653
        %vm3660 = vmor %vm3658, %vm3659
        %v3661 = vsel %vm3660, %v3653, %v3657
        %v3662 = vand.u32 2147483647, %v3291
        %vm3663 = vcmp.eq.f32.partialorder %v3662, 8.507059e+37
        %v3664 = vand.u32 %v3291, 2147483648
        %v3665 = vor.u32 1.1754944e-38, %v3664
        %v3666 = vsel %vm3663, %v3665, %v3661
        %v3667 = vmul.f32 1.0, %v3666
        %v3668 = vrcp.pop %v3292
        %v3669 = vmul.f32 %v3292, %v3668
        %v3670 = vsub.f32 1.0, %v3669
        %v3671 = vmul.f32 %v3668, %v3670
        %v3672 = vadd.f32 %v3668, %v3671
        %vm3673 = vweird.f32 %v3292
        %vm3674 = vweird.f32 %v3668
        %vm3675 = vmor %vm3673, %vm3674
        %v3676 = vsel %vm3675, %v3668, %v3672
        %v3677 = vand.u32 2147483647, %v3292
        %vm3678 = vcmp.eq.f32.partialorder %v3677, 8.507059e+37
        %v3679 = vand.u32 %v3292, 2147483648
        %v3680 = vor.u32 1.1754944e-38, %v3679
        %v3681 = vsel %vm3678, %v3680, %v3676
        %v3682 = vmul.f32 1.0, %v3681
        %v3683 = vrcp.pop %v3293
        %v3684 = vmul.f32 %v3293, %v3683
        %v3685 = vsub.f32 1.0, %v3684
        %v3686 = vmul.f32 %v3683, %v3685
        %v3687 = vadd.f32 %v3683, %v3686
        %vm3688 = vweird.f32 %v3293
        %vm3689 = vweird.f32 %v3683
        %vm3690 = vmor %vm3688, %vm3689
        %v3691 = vsel %vm3690, %v3683, %v3687
        %v3692 = vand.u32 2147483647, %v3293
        %vm3693 = vcmp.eq.f32.partialorder %v3692, 8.507059e+37
        %v3694 = vand.u32 %v3293, 2147483648
        %v3695 = vor.u32 1.1754944e-38, %v3694
        %v3696 = vsel %vm3693, %v3695, %v3691
        %v3697 = vmul.f32 1.0, %v3696
        %v3698 = vrcp.pop %v3294
        %v3699 = vmul.f32 %v3294, %v3698
        %v3700 = vsub.f32 1.0, %v3699
        %v3701 = vmul.f32 %v3698, %v3700
        %v3702 = vadd.f32 %v3698, %v3701
        %vm3703 = vweird.f32 %v3294
        %vm3704 = vweird.f32 %v3698
        %vm3705 = vmor %vm3703, %vm3704
        %v3706 = vsel %vm3705, %v3698, %v3702
        %v3707 = vand.u32 2147483647, %v3294
        %vm3708 = vcmp.eq.f32.partialorder %v3707, 8.507059e+37
        %v3709 = vand.u32 %v3294, 2147483648
        %v3710 = vor.u32 1.1754944e-38, %v3709
        %v3711 = vsel %vm3708, %v3710, %v3706
        %v3712 = vmul.f32 1.0, %v3711
        %v3713 = vrcp.pop %v3295
        %v3714 = vmul.f32 %v3295, %v3713
        %v3715 = vsub.f32 1.0, %v3714
        %v3716 = vmul.f32 %v3713, %v3715
        %v3717 = vadd.f32 %v3713, %v3716
        %vm3718 = vweird.f32 %v3295
        %vm3719 = vweird.f32 %v3713
        %vm3720 = vmor %vm3718, %vm3719
        %v3721 = vsel %vm3720, %v3713, %v3717
        %v3722 = vand.u32 2147483647, %v3295
        %vm3723 = vcmp.eq.f32.partialorder %v3722, 8.507059e+37
        %v3724 = vand.u32 %v3295, 2147483648
        %v3725 = vor.u32 1.1754944e-38, %v3724
        %v3726 = vsel %vm3723, %v3725, %v3721
        %v3727 = vmul.f32 1.0, %v3726
        %v3728 = vrcp.pop %v3296
        %v3729 = vmul.f32 %v3296, %v3728
        %v3730 = vsub.f32 1.0, %v3729
        %v3731 = vmul.f32 %v3728, %v3730
        %v3732 = vadd.f32 %v3728, %v3731
        %vm3733 = vweird.f32 %v3296
        %vm3734 = vweird.f32 %v3728
        %vm3735 = vmor %vm3733, %vm3734
        %v3736 = vsel %vm3735, %v3728, %v3732
        %v3737 = vand.u32 2147483647, %v3296
        %vm3738 = vcmp.eq.f32.partialorder %v3737, 8.507059e+37
        %v3739 = vand.u32 %v3296, 2147483648
        %v3740 = vor.u32 1.1754944e-38, %v3739
        %v3741 = vsel %vm3738, %v3740, %v3736
        %v3742 = vmul.f32 1.0, %v3741
        %v3743 = vrcp.pop %v3297
        %v3744 = vmul.f32 %v3297, %v3743
        %v3745 = vsub.f32 1.0, %v3744
        %v3746 = vmul.f32 %v3743, %v3745
        %v3747 = vadd.f32 %v3743, %v3746
        %vm3748 = vweird.f32 %v3297
        %vm3749 = vweird.f32 %v3743
        %vm3750 = vmor %vm3748, %vm3749
        %v3751 = vsel %vm3750, %v3743, %v3747
        %v3752 = vand.u32 2147483647, %v3297
        %vm3753 = vcmp.eq.f32.partialorder %v3752, 8.507059e+37
        %v3754 = vand.u32 %v3297, 2147483648
        %v3755 = vor.u32 1.1754944e-38, %v3754
        %v3756 = vsel %vm3753, %v3755, %v3751
        %v3757 = vmul.f32 1.0, %v3756
        %v3758 = vrcp.pop %v3298
        %v3759 = vmul.f32 %v3298, %v3758
        %v3760 = vsub.f32 1.0, %v3759
        %v3761 = vmul.f32 %v3758, %v3760
        %v3762 = vadd.f32 %v3758, %v3761
        %vm3763 = vweird.f32 %v3298
        %vm3764 = vweird.f32 %v3758
        %vm3765 = vmor %vm3763, %vm3764
        %v3766 = vsel %vm3765, %v3758, %v3762
        %v3767 = vand.u32 2147483647, %v3298
        %vm3768 = vcmp.eq.f32.partialorder %v3767, 8.507059e+37
        %v3769 = vand.u32 %v3298, 2147483648
        %v3770 = vor.u32 1.1754944e-38, %v3769
        %v3771 = vsel %vm3768, %v3770, %v3766
        %v3772 = vmul.f32 1.0, %v3771
        %v3773 = vrcp.pop %v3299
        %v3774 = vmul.f32 %v3299, %v3773
        %v3775 = vsub.f32 1.0, %v3774
        %v3776 = vmul.f32 %v3773, %v3775
        %v3777 = vadd.f32 %v3773, %v3776
        %vm3778 = vweird.f32 %v3299
        %vm3779 = vweird.f32 %v3773
        %vm3780 = vmor %vm3778, %vm3779
        %v3781 = vsel %vm3780, %v3773, %v3777
        %v3782 = vand.u32 2147483647, %v3299
        %vm3783 = vcmp.eq.f32.partialorder %v3782, 8.507059e+37
        %v3784 = vand.u32 %v3299, 2147483648
        %v3785 = vor.u32 1.1754944e-38, %v3784
        %v3786 = vsel %vm3783, %v3785, %v3781
        %v3787 = vmul.f32 1.0, %v3786
        %v3788 = vrcp.pop %v3300
        %v3789 = vmul.f32 %v3300, %v3788
        %v3790 = vsub.f32 1.0, %v3789
        %v3791 = vmul.f32 %v3788, %v3790
        %v3792 = vadd.f32 %v3788, %v3791
        %vm3793 = vweird.f32 %v3300
        %vm3794 = vweird.f32 %v3788
        %vm3795 = vmor %vm3793, %vm3794
        %v3796 = vsel %vm3795, %v3788, %v3792
        %v3797 = vand.u32 2147483647, %v3300
        %vm3798 = vcmp.eq.f32.partialorder %v3797, 8.507059e+37
        %v3799 = vand.u32 %v3300, 2147483648
        %v3800 = vor.u32 1.1754944e-38, %v3799
        %v3801 = vsel %vm3798, %v3800, %v3796
        %v3802 = vmul.f32 1.0, %v3801
        %v3803 = vrcp.pop %v3301
        %v3804 = vmul.f32 %v3301, %v3803
        %v3805 = vsub.f32 1.0, %v3804
        %v3806 = vmul.f32 %v3803, %v3805
        %v3807 = vadd.f32 %v3803, %v3806
        %vm3808 = vweird.f32 %v3301
        %vm3809 = vweird.f32 %v3803
        %vm3810 = vmor %vm3808, %vm3809
        %v3811 = vsel %vm3810, %v3803, %v3807
        %v3812 = vand.u32 2147483647, %v3301
        %vm3813 = vcmp.eq.f32.partialorder %v3812, 8.507059e+37
        %v3814 = vand.u32 %v3301, 2147483648
        %v3815 = vor.u32 1.1754944e-38, %v3814
        %v3816 = vsel %vm3813, %v3815, %v3811
        %v3817 = vmul.f32 1.0, %v3816
        %v3818 = vrcp.pop %v3302
        %v3819 = vmul.f32 %v3302, %v3818
        %v3820 = vsub.f32 1.0, %v3819
        %v3821 = vmul.f32 %v3818, %v3820
        %v3822 = vadd.f32 %v3818, %v3821
        %vm3823 = vweird.f32 %v3302
        %vm3824 = vweird.f32 %v3818
        %vm3825 = vmor %vm3823, %vm3824
        %v3826 = vsel %vm3825, %v3818, %v3822
        %v3827 = vand.u32 2147483647, %v3302
        %vm3828 = vcmp.eq.f32.partialorder %v3827, 8.507059e+37
        %v3829 = vand.u32 %v3302, 2147483648
        %v3830 = vor.u32 1.1754944e-38, %v3829
        %v3831 = vsel %vm3828, %v3830, %v3826
        %v3832 = vmul.f32 1.0, %v3831
        %v3833 = vrcp.pop %v3303
        %v3834 = vmul.f32 %v3303, %v3833
        %v3835 = vsub.f32 1.0, %v3834
        %v3836 = vmul.f32 %v3833, %v3835
        %v3837 = vadd.f32 %v3833, %v3836
        %vm3838 = vweird.f32 %v3303
        %vm3839 = vweird.f32 %v3833
        %vm3840 = vmor %vm3838, %vm3839
        %v3841 = vsel %vm3840, %v3833, %v3837
        %v3842 = vand.u32 2147483647, %v3303
        %vm3843 = vcmp.eq.f32.partialorder %v3842, 8.507059e+37
        %v3844 = vand.u32 %v3303, 2147483648
        %v3845 = vor.u32 1.1754944e-38, %v3844
        %v3846 = vsel %vm3843, %v3845, %v3841
        %v3847 = vmul.f32 1.0, %v3846
        %v3848 = vrcp.pop %v3304
        %v3849 = vmul.f32 %v3304, %v3848
        %v3850 = vsub.f32 1.0, %v3849
        %v3851 = vmul.f32 %v3848, %v3850
        %v3852 = vadd.f32 %v3848, %v3851
        %vm3853 = vweird.f32 %v3304
        %vm3854 = vweird.f32 %v3848
        %vm3855 = vmor %vm3853, %vm3854
        %v3856 = vsel %vm3855, %v3848, %v3852
        %v3857 = vand.u32 2147483647, %v3304
        %vm3858 = vcmp.eq.f32.partialorder %v3857, 8.507059e+37
        %v3859 = vand.u32 %v3304, 2147483648
        %v3860 = vor.u32 1.1754944e-38, %v3859
        %v3861 = vsel %vm3858, %v3860, %v3856
        %v3862 = vmul.f32 1.0, %v3861
        %v3863 = vrcp.pop %v3305
        %v3864 = vmul.f32 %v3305, %v3863
        %v3865 = vsub.f32 1.0, %v3864
        %v3866 = vmul.f32 %v3863, %v3865
        %v3867 = vadd.f32 %v3863, %v3866
        %vm3868 = vweird.f32 %v3305
        %vm3869 = vweird.f32 %v3863
        %vm3870 = vmor %vm3868, %vm3869
        %v3871 = vsel %vm3870, %v3863, %v3867
        %v3872 = vand.u32 2147483647, %v3305
        %vm3873 = vcmp.eq.f32.partialorder %v3872, 8.507059e+37
        %v3874 = vand.u32 %v3305, 2147483648
        %v3875 = vor.u32 1.1754944e-38, %v3874
        %v3876 = vsel %vm3873, %v3875, %v3871
        %v3877 = vmul.f32 1.0, %v3876
        %v3878 = vrcp.pop %v3306
        %v3879 = vmul.f32 %v3306, %v3878
        %v3880 = vsub.f32 1.0, %v3879
        %v3881 = vmul.f32 %v3878, %v3880
        %v3882 = vadd.f32 %v3878, %v3881
        %vm3883 = vweird.f32 %v3306
        %vm3884 = vweird.f32 %v3878
        %vm3885 = vmor %vm3883, %vm3884
        %v3886 = vsel %vm3885, %v3878, %v3882
        %v3887 = vand.u32 2147483647, %v3306
        %vm3888 = vcmp.eq.f32.partialorder %v3887, 8.507059e+37
        %v3889 = vand.u32 %v3306, 2147483648
        %v3890 = vor.u32 1.1754944e-38, %v3889
        %v3891 = vsel %vm3888, %v3890, %v3886
        %v3892 = vmul.f32 1.0, %v3891
        %v3893 = vrcp.pop %v3307
        %v3894 = vmul.f32 %v3307, %v3893
        %v3895 = vsub.f32 1.0, %v3894
        %v3896 = vmul.f32 %v3893, %v3895
        %v3897 = vadd.f32 %v3893, %v3896
        %vm3898 = vweird.f32 %v3307
        %vm3899 = vweird.f32 %v3893
        %vm3900 = vmor %vm3898, %vm3899
        %v3901 = vsel %vm3900, %v3893, %v3897
        %v3902 = vand.u32 2147483647, %v3307
        %vm3903 = vcmp.eq.f32.partialorder %v3902, 8.507059e+37
        %v3904 = vand.u32 %v3307, 2147483648
        %v3905 = vor.u32 1.1754944e-38, %v3904
        %v3906 = vsel %vm3903, %v3905, %v3901
        %v3907 = vmul.f32 1.0, %v3906
        %v3908 = vrcp.pop %v3308
        %v3909 = vmul.f32 %v3308, %v3908
        %v3910 = vsub.f32 1.0, %v3909
        %v3911 = vmul.f32 %v3908, %v3910
        %v3912 = vadd.f32 %v3908, %v3911
        %vm3913 = vweird.f32 %v3308
        %vm3914 = vweird.f32 %v3908
        %vm3915 = vmor %vm3913, %vm3914
        %v3916 = vsel %vm3915, %v3908, %v3912
        %v3917 = vand.u32 2147483647, %v3308
        %vm3918 = vcmp.eq.f32.partialorder %v3917, 8.507059e+37
        %v3919 = vand.u32 %v3308, 2147483648
        %v3920 = vor.u32 1.1754944e-38, %v3919
        %v3921 = vsel %vm3918, %v3920, %v3916
        %v3922 = vmul.f32 1.0, %v3921
        %v3923 = vrcp.pop %v3309
        %v3924 = vmul.f32 %v3309, %v3923
        %v3925 = vsub.f32 1.0, %v3924
        %v3926 = vmul.f32 %v3923, %v3925
        %v3927 = vadd.f32 %v3923, %v3926
        %vm3928 = vweird.f32 %v3309
        %vm3929 = vweird.f32 %v3923
        %vm3930 = vmor %vm3928, %vm3929
        %v3931 = vsel %vm3930, %v3923, %v3927
        %v3932 = vand.u32 2147483647, %v3309
        %vm3933 = vcmp.eq.f32.partialorder %v3932, 8.507059e+37
        %v3934 = vand.u32 %v3309, 2147483648
        %v3935 = vor.u32 1.1754944e-38, %v3934
        %v3936 = vsel %vm3933, %v3935, %v3931
        %v3937 = vmul.f32 1.0, %v3936
        %v3938 = vrcp.pop %v3310
        %v3939 = vmul.f32 %v3310, %v3938
        %v3940 = vsub.f32 1.0, %v3939
        %v3941 = vmul.f32 %v3938, %v3940
        %v3942 = vadd.f32 %v3938, %v3941
        %vm3943 = vweird.f32 %v3310
        %vm3944 = vweird.f32 %v3938
        %vm3945 = vmor %vm3943, %vm3944
        %v3946 = vsel %vm3945, %v3938, %v3942
        %v3947 = vand.u32 2147483647, %v3310
        %vm3948 = vcmp.eq.f32.partialorder %v3947, 8.507059e+37
        %v3949 = vand.u32 %v3310, 2147483648
        %v3950 = vor.u32 1.1754944e-38, %v3949
        %v3951 = vsel %vm3948, %v3950, %v3946
        %v3952 = vmul.f32 1.0, %v3951
        %v3953 = vrcp.pop %v3311
        %v3954 = vmul.f32 %v3311, %v3953
        %v3955 = vsub.f32 1.0, %v3954
        %v3956 = vmul.f32 %v3953, %v3955
        %v3957 = vadd.f32 %v3953, %v3956
        %vm3958 = vweird.f32 %v3311
        %vm3959 = vweird.f32 %v3953
        %vm3960 = vmor %vm3958, %vm3959
        %v3961 = vsel %vm3960, %v3953, %v3957
        %v3962 = vand.u32 2147483647, %v3311
        %vm3963 = vcmp.eq.f32.partialorder %v3962, 8.507059e+37
        %v3964 = vand.u32 %v3311, 2147483648
        %v3965 = vor.u32 1.1754944e-38, %v3964
        %v3966 = vsel %vm3963, %v3965, %v3961
        %v3967 = vmul.f32 1.0, %v3966
        %v3968 = vrcp.pop %v3312
        %v3969 = vmul.f32 %v3312, %v3968
        %v3970 = vsub.f32 1.0, %v3969
        %v3971 = vmul.f32 %v3968, %v3970
        %v3972 = vadd.f32 %v3968, %v3971
        %vm3973 = vweird.f32 %v3312
        %vm3974 = vweird.f32 %v3968
        %vm3975 = vmor %vm3973, %vm3974
        %v3976 = vsel %vm3975, %v3968, %v3972
        %v3977 = vand.u32 2147483647, %v3312
        %vm3978 = vcmp.eq.f32.partialorder %v3977, 8.507059e+37
        %v3979 = vand.u32 %v3312, 2147483648
        %v3980 = vor.u32 1.1754944e-38, %v3979
        %v3981 = vsel %vm3978, %v3980, %v3976
        %v3982 = vmul.f32 1.0, %v3981
        %v3983 = vrcp.pop %v3313
        %v3984 = vmul.f32 %v3313, %v3983
        %v3985 = vsub.f32 1.0, %v3984
        %v3986 = vmul.f32 %v3983, %v3985
        %v3987 = vadd.f32 %v3983, %v3986
        %vm3988 = vweird.f32 %v3313
        %vm3989 = vweird.f32 %v3983
        %vm3990 = vmor %vm3988, %vm3989
        %v3991 = vsel %vm3990, %v3983, %v3987
        %v3992 = vand.u32 2147483647, %v3313
        %vm3993 = vcmp.eq.f32.partialorder %v3992, 8.507059e+37
        %v3994 = vand.u32 %v3313, 2147483648
        %v3995 = vor.u32 1.1754944e-38, %v3994
        %v3996 = vsel %vm3993, %v3995, %v3991
        %v3997 = vmul.f32 1.0, %v3996
        %v3998 = vrcp.pop %v3314
        %v3999 = vmul.f32 %v3314, %v3998
        %v4000 = vsub.f32 1.0, %v3999
        %v4001 = vmul.f32 %v3998, %v4000
        %v4002 = vadd.f32 %v3998, %v4001
        %vm4003 = vweird.f32 %v3314
        %vm4004 = vweird.f32 %v3998
        %vm4005 = vmor %vm4003, %vm4004
        %v4006 = vsel %vm4005, %v3998, %v4002
        %v4007 = vand.u32 2147483647, %v3314
        %vm4008 = vcmp.eq.f32.partialorder %v4007, 8.507059e+37
        %v4009 = vand.u32 %v3314, 2147483648
        %v4010 = vor.u32 1.1754944e-38, %v4009
        %v4011 = vsel %vm4008, %v4010, %v4006
        %v4012 = vmul.f32 1.0, %v4011
        %v4013 = vrcp.pop %v3315
        %v4014 = vmul.f32 %v3315, %v4013
        %v4015 = vsub.f32 1.0, %v4014
        %v4016 = vmul.f32 %v4013, %v4015
        %v4017 = vadd.f32 %v4013, %v4016
        %vm4018 = vweird.f32 %v3315
        %vm4019 = vweird.f32 %v4013
        %vm4020 = vmor %vm4018, %vm4019
        %v4021 = vsel %vm4020, %v4013, %v4017
        %v4022 = vand.u32 2147483647, %v3315
        %vm4023 = vcmp.eq.f32.partialorder %v4022, 8.507059e+37
        %v4024 = vand.u32 %v3315, 2147483648
        %v4025 = vor.u32 1.1754944e-38, %v4024
        %v4026 = vsel %vm4023, %v4025, %v4021
        %v4027 = vmul.f32 1.0, %v4026
        %v4028 = vrcp.pop %v3316
        %v4029 = vmul.f32 %v3316, %v4028
        %v4030 = vsub.f32 1.0, %v4029
        %v4031 = vmul.f32 %v4028, %v4030
        %v4032 = vadd.f32 %v4028, %v4031
        %vm4033 = vweird.f32 %v3316
        %vm4034 = vweird.f32 %v4028
        %vm4035 = vmor %vm4033, %vm4034
        %v4036 = vsel %vm4035, %v4028, %v4032
        %v4037 = vand.u32 2147483647, %v3316
        %vm4038 = vcmp.eq.f32.partialorder %v4037, 8.507059e+37
        %v4039 = vand.u32 %v3316, 2147483648
        %v4040 = vor.u32 1.1754944e-38, %v4039
        %v4041 = vsel %vm4038, %v4040, %v4036
        %v4042 = vmul.f32 1.0, %v4041
        %v4043 = vrcp.pop %v3317
        %v4044 = vmul.f32 %v3317, %v4043
        %v4045 = vsub.f32 1.0, %v4044
        %v4046 = vmul.f32 %v4043, %v4045
        %v4047 = vadd.f32 %v4043, %v4046
        %vm4048 = vweird.f32 %v3317
        %vm4049 = vweird.f32 %v4043
        %vm4050 = vmor %vm4048, %vm4049
        %v4051 = vsel %vm4050, %v4043, %v4047
        %v4052 = vand.u32 2147483647, %v3317
        %vm4053 = vcmp.eq.f32.partialorder %v4052, 8.507059e+37
        %v4054 = vand.u32 %v3317, 2147483648
        %v4055 = vor.u32 1.1754944e-38, %v4054
        %v4056 = vsel %vm4053, %v4055, %v4051
        %v4057 = vmul.f32 1.0, %v4056
        %v4058 = vrcp.pop %v3318
        %v4059 = vmul.f32 %v3318, %v4058
        %v4060 = vsub.f32 1.0, %v4059
        %v4061 = vmul.f32 %v4058, %v4060
        %v4062 = vadd.f32 %v4058, %v4061
        %vm4063 = vweird.f32 %v3318
        %vm4064 = vweird.f32 %v4058
        %vm4065 = vmor %vm4063, %vm4064
        %v4066 = vsel %vm4065, %v4058, %v4062
        %v4067 = vand.u32 2147483647, %v3318
        %vm4068 = vcmp.eq.f32.partialorder %v4067, 8.507059e+37
        %v4069 = vand.u32 %v3318, 2147483648
        %v4070 = vor.u32 1.1754944e-38, %v4069
        %v4071 = vsel %vm4068, %v4070, %v4066
        %v4072 = vmul.f32 1.0, %v4071
        %v4073 = vrcp.pop %v3319
        %v4074 = vmul.f32 %v3319, %v4073
        %v4075 = vsub.f32 1.0, %v4074
        %v4076 = vmul.f32 %v4073, %v4075
        %v4077 = vadd.f32 %v4073, %v4076
        %vm4078 = vweird.f32 %v3319
        %vm4079 = vweird.f32 %v4073
        %vm4080 = vmor %vm4078, %vm4079
        %v4081 = vsel %vm4080, %v4073, %v4077
        %v4082 = vand.u32 2147483647, %v3319
        %vm4083 = vcmp.eq.f32.partialorder %v4082, 8.507059e+37
        %v4084 = vand.u32 %v3319, 2147483648
        %v4085 = vor.u32 1.1754944e-38, %v4084
        %v4086 = vsel %vm4083, %v4085, %v4081
        %v4087 = vmul.f32 1.0, %v4086
        %v4088 = vrcp.pop %v3320
        %v4089 = vmul.f32 %v3320, %v4088
        %v4090 = vsub.f32 1.0, %v4089
        %v4091 = vmul.f32 %v4088, %v4090
        %v4092 = vadd.f32 %v4088, %v4091
        %vm4093 = vweird.f32 %v3320
        %vm4094 = vweird.f32 %v4088
        %vm4095 = vmor %vm4093, %vm4094
        %v4096 = vsel %vm4095, %v4088, %v4092
        %v4097 = vand.u32 2147483647, %v3320
        %vm4098 = vcmp.eq.f32.partialorder %v4097, 8.507059e+37
        %v4099 = vand.u32 %v3320, 2147483648
        %v4100 = vor.u32 1.1754944e-38, %v4099
        %v4101 = vsel %vm4098, %v4100, %v4096
        %v4102 = vmul.f32 1.0, %v4101
        %v4103 = vrcp.pop %v3321
        %v4104 = vmul.f32 %v3321, %v4103
        %v4105 = vsub.f32 1.0, %v4104
        %v4106 = vmul.f32 %v4103, %v4105
        %v4107 = vadd.f32 %v4103, %v4106
        %vm4108 = vweird.f32 %v3321
        %vm4109 = vweird.f32 %v4103
        %vm4110 = vmor %vm4108, %vm4109
        %v4111 = vsel %vm4110, %v4103, %v4107
        %v4112 = vand.u32 2147483647, %v3321
        %vm4113 = vcmp.eq.f32.partialorder %v4112, 8.507059e+37
        %v4114 = vand.u32 %v3321, 2147483648
        %v4115 = vor.u32 1.1754944e-38, %v4114
        %v4116 = vsel %vm4113, %v4115, %v4111
        %v4117 = vmul.f32 1.0, %v4116
        %v4118 = vrcp.pop %v3322
        %v4119 = vmul.f32 %v3322, %v4118
        %v4120 = vsub.f32 1.0, %v4119
        %v4121 = vmul.f32 %v4118, %v4120
        %v4122 = vadd.f32 %v4118, %v4121
        %vm4123 = vweird.f32 %v3322
        %vm4124 = vweird.f32 %v4118
        %vm4125 = vmor %vm4123, %vm4124
        %v4126 = vsel %vm4125, %v4118, %v4122
        %v4127 = vand.u32 2147483647, %v3322
        %vm4128 = vcmp.eq.f32.partialorder %v4127, 8.507059e+37
        %v4129 = vand.u32 %v3322, 2147483648
        %v4130 = vor.u32 1.1754944e-38, %v4129
        %v4131 = vsel %vm4128, %v4130, %v4126
        %v4132 = vmul.f32 1.0, %v4131
        %v4133 = vrcp.pop %v3323
        %v4134 = vmul.f32 %v3323, %v4133
        %v4135 = vsub.f32 1.0, %v4134
        %v4136 = vmul.f32 %v4133, %v4135
        %v4137 = vadd.f32 %v4133, %v4136
        %vm4138 = vweird.f32 %v3323
        %vm4139 = vweird.f32 %v4133
        %vm4140 = vmor %vm4138, %vm4139
        %v4141 = vsel %vm4140, %v4133, %v4137
        %v4142 = vand.u32 2147483647, %v3323
        %vm4143 = vcmp.eq.f32.partialorder %v4142, 8.507059e+37
        %v4144 = vand.u32 %v3323, 2147483648
        %v4145 = vor.u32 1.1754944e-38, %v4144
        %v4146 = vsel %vm4143, %v4145, %v4141
        %v4147 = vmul.f32 1.0, %v4146
        %v4148 = vrcp.pop %v3324
        %v4149 = vmul.f32 %v3324, %v4148
        %v4150 = vsub.f32 1.0, %v4149
        %v4151 = vmul.f32 %v4148, %v4150
        %v4152 = vadd.f32 %v4148, %v4151
        %vm4153 = vweird.f32 %v3324
        %vm4154 = vweird.f32 %v4148
        %vm4155 = vmor %vm4153, %vm4154
        %v4156 = vsel %vm4155, %v4148, %v4152
        %v4157 = vand.u32 2147483647, %v3324
        %vm4158 = vcmp.eq.f32.partialorder %v4157, 8.507059e+37
        %v4159 = vand.u32 %v3324, 2147483648
        %v4160 = vor.u32 1.1754944e-38, %v4159
        %v4161 = vsel %vm4158, %v4160, %v4156
        %v4162 = vmul.f32 1.0, %v4161
        %v4163 = vrcp.pop %v3325
        %v4164 = vmul.f32 %v3325, %v4163
        %v4165 = vsub.f32 1.0, %v4164
        %v4166 = vmul.f32 %v4163, %v4165
        %v4167 = vadd.f32 %v4163, %v4166
        %vm4168 = vweird.f32 %v3325
        %vm4169 = vweird.f32 %v4163
        %vm4170 = vmor %vm4168, %vm4169
        %v4171 = vsel %vm4170, %v4163, %v4167
        %v4172 = vand.u32 2147483647, %v3325
        %vm4173 = vcmp.eq.f32.partialorder %v4172, 8.507059e+37
        %v4174 = vand.u32 %v3325, 2147483648
        %v4175 = vor.u32 1.1754944e-38, %v4174
        %v4176 = vsel %vm4173, %v4175, %v4171
        %v4177 = vmul.f32 1.0, %v4176
        %v4178 = vrcp.pop %v3326
        %v4179 = vmul.f32 %v3326, %v4178
        %v4180 = vsub.f32 1.0, %v4179
        %v4181 = vmul.f32 %v4178, %v4180
        %v4182 = vadd.f32 %v4178, %v4181
        %vm4183 = vweird.f32 %v3326
        %vm4184 = vweird.f32 %v4178
        %vm4185 = vmor %vm4183, %vm4184
        %v4186 = vsel %vm4185, %v4178, %v4182
        %v4187 = vand.u32 2147483647, %v3326
        %vm4188 = vcmp.eq.f32.partialorder %v4187, 8.507059e+37
        %v4189 = vand.u32 %v3326, 2147483648
        %v4190 = vor.u32 1.1754944e-38, %v4189
        %v4191 = vsel %vm4188, %v4190, %v4186
        %v4192 = vmul.f32 1.0, %v4191
        %v4193 = vrcp.pop %v3327
        %v4194 = vmul.f32 %v3327, %v4193
        %v4195 = vsub.f32 1.0, %v4194
        %v4196 = vmul.f32 %v4193, %v4195
        %v4197 = vadd.f32 %v4193, %v4196
        %vm4198 = vweird.f32 %v3327
        %vm4199 = vweird.f32 %v4193
        %vm4200 = vmor %vm4198, %vm4199
        %v4201 = vsel %vm4200, %v4193, %v4197
        %v4202 = vand.u32 2147483647, %v3327
        %vm4203 = vcmp.eq.f32.partialorder %v4202, 8.507059e+37
        %v4204 = vand.u32 %v3327, 2147483648
        %v4205 = vor.u32 1.1754944e-38, %v4204
        %v4206 = vsel %vm4203, %v4205, %v4201
        %v4207 = vmul.f32 1.0, %v4206
        %v4208 = vrcp.pop %v3328
        %v4209 = vmul.f32 %v3328, %v4208
        %v4210 = vsub.f32 1.0, %v4209
        %v4211 = vmul.f32 %v4208, %v4210
        %v4212 = vadd.f32 %v4208, %v4211
        %vm4213 = vweird.f32 %v3328
        %vm4214 = vweird.f32 %v4208
        %vm4215 = vmor %vm4213, %vm4214
        %v4216 = vsel %vm4215, %v4208, %v4212
        %v4217 = vand.u32 2147483647, %v3328
        %vm4218 = vcmp.eq.f32.partialorder %v4217, 8.507059e+37
        %v4219 = vand.u32 %v3328, 2147483648
        %v4220 = vor.u32 1.1754944e-38, %v4219
        %v4221 = vsel %vm4218, %v4220, %v4216
        %v4222 = vmul.f32 1.0, %v4221
        %v4223 = vrcp.pop %v3329
        %v4224 = vmul.f32 %v3329, %v4223
        %v4225 = vsub.f32 1.0, %v4224
        %v4226 = vmul.f32 %v4223, %v4225
        %v4227 = vadd.f32 %v4223, %v4226
        %vm4228 = vweird.f32 %v3329
        %vm4229 = vweird.f32 %v4223
        %vm4230 = vmor %vm4228, %vm4229
        %v4231 = vsel %vm4230, %v4223, %v4227
        %v4232 = vand.u32 2147483647, %v3329
        %vm4233 = vcmp.eq.f32.partialorder %v4232, 8.507059e+37
        %v4234 = vand.u32 %v3329, 2147483648
        %v4235 = vor.u32 1.1754944e-38, %v4234
        %v4236 = vsel %vm4233, %v4235, %v4231
        %v4237 = vmul.f32 1.0, %v4236
        %v4238 = vrcp.pop %v3330
        %v4239 = vmul.f32 %v3330, %v4238
        %v4240 = vsub.f32 1.0, %v4239
        %v4241 = vmul.f32 %v4238, %v4240
        %v4242 = vadd.f32 %v4238, %v4241
        %vm4243 = vweird.f32 %v3330
        %vm4244 = vweird.f32 %v4238
        %vm4245 = vmor %vm4243, %vm4244
        %v4246 = vsel %vm4245, %v4238, %v4242
        %v4247 = vand.u32 2147483647, %v3330
        %vm4248 = vcmp.eq.f32.partialorder %v4247, 8.507059e+37
        %v4249 = vand.u32 %v3330, 2147483648
        %v4250 = vor.u32 1.1754944e-38, %v4249
        %v4251 = vsel %vm4248, %v4250, %v4246
        %v4252 = vmul.f32 1.0, %v4251
        %v4253 = vrcp.pop %v3331
        %v4254 = vmul.f32 %v3331, %v4253
        %v4255 = vsub.f32 1.0, %v4254
        %v4256 = vmul.f32 %v4253, %v4255
        %v4257 = vadd.f32 %v4253, %v4256
        %vm4258 = vweird.f32 %v3331
        %vm4259 = vweird.f32 %v4253
        %vm4260 = vmor %vm4258, %vm4259
        %v4261 = vsel %vm4260, %v4253, %v4257
        %v4262 = vand.u32 2147483647, %v3331
        %vm4263 = vcmp.eq.f32.partialorder %v4262, 8.507059e+37
        %v4264 = vand.u32 %v3331, 2147483648
        %v4265 = vor.u32 1.1754944e-38, %v4264
        %v4266 = vsel %vm4263, %v4265, %v4261
        %v4267 = vmul.f32 1.0, %v4266
        %v4268 = vrcp.pop %v3332
        %v4269 = vmul.f32 %v3332, %v4268
        %v4270 = vsub.f32 1.0, %v4269
        %v4271 = vmul.f32 %v4268, %v4270
        %v4272 = vadd.f32 %v4268, %v4271
        %vm4273 = vweird.f32 %v3332
        %vm4274 = vweird.f32 %v4268
        %vm4275 = vmor %vm4273, %vm4274
        %v4276 = vsel %vm4275, %v4268, %v4272
        %v4277 = vand.u32 2147483647, %v3332
        %vm4278 = vcmp.eq.f32.partialorder %v4277, 8.507059e+37
        %v4279 = vand.u32 %v3332, 2147483648
        %v4280 = vor.u32 1.1754944e-38, %v4279
        %v4281 = vsel %vm4278, %v4280, %v4276
        %v4282 = vmul.f32 1.0, %v4281
        %v4283 = vrcp.pop %v3333
        %v4284 = vmul.f32 %v3333, %v4283
        %v4285 = vsub.f32 1.0, %v4284
        %v4286 = vmul.f32 %v4283, %v4285
        %v4287 = vadd.f32 %v4283, %v4286
        %vm4288 = vweird.f32 %v3333
        %vm4289 = vweird.f32 %v4283
        %vm4290 = vmor %vm4288, %vm4289
        %v4291 = vsel %vm4290, %v4283, %v4287
        %v4292 = vand.u32 2147483647, %v3333
        %vm4293 = vcmp.eq.f32.partialorder %v4292, 8.507059e+37
        %v4294 = vand.u32 %v3333, 2147483648
        %v4295 = vor.u32 1.1754944e-38, %v4294
        %v4296 = vsel %vm4293, %v4295, %v4291
        %v4297 = vmul.f32 1.0, %v4296
        %v4298 = vrcp.pop %v3334
        %v4299 = vmul.f32 %v3334, %v4298
        %v4300 = vsub.f32 1.0, %v4299
        %v4301 = vmul.f32 %v4298, %v4300
        %v4302 = vadd.f32 %v4298, %v4301
        %vm4303 = vweird.f32 %v3334
        %vm4304 = vweird.f32 %v4298
        %vm4305 = vmor %vm4303, %vm4304
        %v4306 = vsel %vm4305, %v4298, %v4302
        %v4307 = vand.u32 2147483647, %v3334
        %vm4308 = vcmp.eq.f32.partialorder %v4307, 8.507059e+37
        %v4309 = vand.u32 %v3334, 2147483648
        %v4310 = vor.u32 1.1754944e-38, %v4309
        %v4311 = vsel %vm4308, %v4310, %v4306
        %v4312 = vmul.f32 1.0, %v4311
        %v4313 = vrcp.pop %v3335
        %v4314 = vmul.f32 %v3335, %v4313
        %v4315 = vsub.f32 1.0, %v4314
        %v4316 = vmul.f32 %v4313, %v4315
        %v4317 = vadd.f32 %v4313, %v4316
        %vm4318 = vweird.f32 %v3335
        %vm4319 = vweird.f32 %v4313
        %vm4320 = vmor %vm4318, %vm4319
        %v4321 = vsel %vm4320, %v4313, %v4317
        %v4322 = vand.u32 2147483647, %v3335
        %vm4323 = vcmp.eq.f32.partialorder %v4322, 8.507059e+37
        %v4324 = vand.u32 %v3335, 2147483648
        %v4325 = vor.u32 1.1754944e-38, %v4324
        %v4326 = vsel %vm4323, %v4325, %v4321
        %v4327 = vmul.f32 1.0, %v4326
        %v4328 = vrcp.pop %v3336
        %v4329 = vmul.f32 %v3336, %v4328
        %v4330 = vsub.f32 1.0, %v4329
        %v4331 = vmul.f32 %v4328, %v4330
        %v4332 = vadd.f32 %v4328, %v4331
        %vm4333 = vweird.f32 %v3336
        %vm4334 = vweird.f32 %v4328
        %vm4335 = vmor %vm4333, %vm4334
        %v4336 = vsel %vm4335, %v4328, %v4332
        %v4337 = vand.u32 2147483647, %v3336
        %vm4338 = vcmp.eq.f32.partialorder %v4337, 8.507059e+37
        %v4339 = vand.u32 %v3336, 2147483648
        %v4340 = vor.u32 1.1754944e-38, %v4339
        %v4341 = vsel %vm4338, %v4340, %v4336
        %v4342 = vmul.f32 1.0, %v4341
        %v4343 = vrcp.pop %v3337
        %v4344 = vmul.f32 %v3337, %v4343
        %v4345 = vsub.f32 1.0, %v4344
        %v4346 = vmul.f32 %v4343, %v4345
        %v4347 = vadd.f32 %v4343, %v4346
        %vm4348 = vweird.f32 %v3337
        %vm4349 = vweird.f32 %v4343
        %vm4350 = vmor %vm4348, %vm4349
        %v4351 = vsel %vm4350, %v4343, %v4347
        %v4352 = vand.u32 2147483647, %v3337
        %vm4353 = vcmp.eq.f32.partialorder %v4352, 8.507059e+37
        %v4354 = vand.u32 %v3337, 2147483648
        %v4355 = vor.u32 1.1754944e-38, %v4354
        %v4356 = vsel %vm4353, %v4355, %v4351
        %v4357 = vmul.f32 1.0, %v4356
        %v4358 = vrcp.pop %v3338
        %v4359 = vmul.f32 %v3338, %v4358
        %v4360 = vsub.f32 1.0, %v4359
        %v4361 = vmul.f32 %v4358, %v4360
        %v4362 = vadd.f32 %v4358, %v4361
        %vm4363 = vweird.f32 %v3338
        %vm4364 = vweird.f32 %v4358
        %vm4365 = vmor %vm4363, %vm4364
        %v4366 = vsel %vm4365, %v4358, %v4362
        %v4367 = vand.u32 2147483647, %v3338
        %vm4368 = vcmp.eq.f32.partialorder %v4367, 8.507059e+37
        %v4369 = vand.u32 %v3338, 2147483648
        %v4370 = vor.u32 1.1754944e-38, %v4369
        %v4371 = vsel %vm4368, %v4370, %v4366
        %v4372 = vmul.f32 1.0, %v4371
        %v4373 = vrcp.pop %v3339
        %v4374 = vmul.f32 %v3339, %v4373
        %v4375 = vsub.f32 1.0, %v4374
        %v4376 = vmul.f32 %v4373, %v4375
        %v4377 = vadd.f32 %v4373, %v4376
        %vm4378 = vweird.f32 %v3339
        %vm4379 = vweird.f32 %v4373
        %vm4380 = vmor %vm4378, %vm4379
        %v4381 = vsel %vm4380, %v4373, %v4377
        %v4382 = vand.u32 2147483647, %v3339
        %vm4383 = vcmp.eq.f32.partialorder %v4382, 8.507059e+37
        %v4384 = vand.u32 %v3339, 2147483648
        %v4385 = vor.u32 1.1754944e-38, %v4384
        %v4386 = vsel %vm4383, %v4385, %v4381
        %v4387 = vmul.f32 1.0, %v4386
        %v4388 = vrcp.pop %v3340
        %v4389 = vmul.f32 %v3340, %v4388
        %v4390 = vsub.f32 1.0, %v4389
        %v4391 = vmul.f32 %v4388, %v4390
        %v4392 = vadd.f32 %v4388, %v4391
        %vm4393 = vweird.f32 %v3340
        %vm4394 = vweird.f32 %v4388
        %vm4395 = vmor %vm4393, %vm4394
        %v4396 = vsel %vm4395, %v4388, %v4392
        %v4397 = vand.u32 2147483647, %v3340
        %vm4398 = vcmp.eq.f32.partialorder %v4397, 8.507059e+37
        %v4399 = vand.u32 %v3340, 2147483648
        %v4400 = vor.u32 1.1754944e-38, %v4399
        %v4401 = vsel %vm4398, %v4400, %v4396
        %v4402 = vmul.f32 1.0, %v4401
        %v4403 = vrcp.pop %v3341
        %v4404 = vmul.f32 %v3341, %v4403
        %v4405 = vsub.f32 1.0, %v4404
        %v4406 = vmul.f32 %v4403, %v4405
        %v4407 = vadd.f32 %v4403, %v4406
        %vm4408 = vweird.f32 %v3341
        %vm4409 = vweird.f32 %v4403
        %vm4410 = vmor %vm4408, %vm4409
        %v4411 = vsel %vm4410, %v4403, %v4407
        %v4412 = vand.u32 2147483647, %v3341
        %vm4413 = vcmp.eq.f32.partialorder %v4412, 8.507059e+37
        %v4414 = vand.u32 %v3341, 2147483648
        %v4415 = vor.u32 1.1754944e-38, %v4414
        %v4416 = vsel %vm4413, %v4415, %v4411
        %v4417 = vmul.f32 1.0, %v4416
        %v4418 = vrcp.pop %v3342
        %v4419 = vmul.f32 %v3342, %v4418
        %v4420 = vsub.f32 1.0, %v4419
        %v4421 = vmul.f32 %v4418, %v4420
        %v4422 = vadd.f32 %v4418, %v4421
        %vm4423 = vweird.f32 %v3342
        %vm4424 = vweird.f32 %v4418
        %vm4425 = vmor %vm4423, %vm4424
        %v4426 = vsel %vm4425, %v4418, %v4422
        %v4427 = vand.u32 2147483647, %v3342
        %vm4428 = vcmp.eq.f32.partialorder %v4427, 8.507059e+37
        %v4429 = vand.u32 %v3342, 2147483648
        %v4430 = vor.u32 1.1754944e-38, %v4429
        %v4431 = vsel %vm4428, %v4430, %v4426
        %v4432 = vmul.f32 1.0, %v4431
        %v4433 = vrcp.pop %v3343
        %v4434 = vmul.f32 %v3343, %v4433
        %v4435 = vsub.f32 1.0, %v4434
        %v4436 = vmul.f32 %v4433, %v4435
        %v4437 = vadd.f32 %v4433, %v4436
        %vm4438 = vweird.f32 %v3343
        %vm4439 = vweird.f32 %v4433
        %vm4440 = vmor %vm4438, %vm4439
        %v4441 = vsel %vm4440, %v4433, %v4437
        %v4442 = vand.u32 2147483647, %v3343
        %vm4443 = vcmp.eq.f32.partialorder %v4442, 8.507059e+37
        %v4444 = vand.u32 %v3343, 2147483648
        %v4445 = vor.u32 1.1754944e-38, %v4444
        %v4446 = vsel %vm4443, %v4445, %v4441
        %v4447 = vmul.f32 1.0, %v4446
        %v4448 = vrcp.pop %v3344
        %v4449 = vmul.f32 %v3344, %v4448
        %v4450 = vsub.f32 1.0, %v4449
        %v4451 = vmul.f32 %v4448, %v4450
        %v4452 = vadd.f32 %v4448, %v4451
        %vm4453 = vweird.f32 %v3344
        %vm4454 = vweird.f32 %v4448
        %vm4455 = vmor %vm4453, %vm4454
        %v4456 = vsel %vm4455, %v4448, %v4452
        %v4457 = vand.u32 2147483647, %v3344
        %vm4458 = vcmp.eq.f32.partialorder %v4457, 8.507059e+37
        %v4459 = vand.u32 %v3344, 2147483648
        %v4460 = vor.u32 1.1754944e-38, %v4459
        %v4461 = vsel %vm4458, %v4460, %v4456
        %v4462 = vmul.f32 1.0, %v4461
        %v4463 = vrcp.pop %v3345
        %v4464 = vmul.f32 %v3345, %v4463
        %v4465 = vsub.f32 1.0, %v4464
        %v4466 = vmul.f32 %v4463, %v4465
        %v4467 = vadd.f32 %v4463, %v4466
        %vm4468 = vweird.f32 %v3345
        %vm4469 = vweird.f32 %v4463
        %vm4470 = vmor %vm4468, %vm4469
        %v4471 = vsel %vm4470, %v4463, %v4467
        %v4472 = vand.u32 2147483647, %v3345
        %vm4473 = vcmp.eq.f32.partialorder %v4472, 8.507059e+37
        %v4474 = vand.u32 %v3345, 2147483648
        %v4475 = vor.u32 1.1754944e-38, %v4474
        %v4476 = vsel %vm4473, %v4475, %v4471
        %v4477 = vmul.f32 1.0, %v4476
        %v4478 = vrcp.pop %v3346
        %v4479 = vmul.f32 %v3346, %v4478
        %v4480 = vsub.f32 1.0, %v4479
        %v4481 = vmul.f32 %v4478, %v4480
        %v4482 = vadd.f32 %v4478, %v4481
        %vm4483 = vweird.f32 %v3346
        %vm4484 = vweird.f32 %v4478
        %vm4485 = vmor %vm4483, %vm4484
        %v4486 = vsel %vm4485, %v4478, %v4482
        %v4487 = vand.u32 2147483647, %v3346
        %vm4488 = vcmp.eq.f32.partialorder %v4487, 8.507059e+37
        %v4489 = vand.u32 %v3346, 2147483648
        %v4490 = vor.u32 1.1754944e-38, %v4489
        %v4491 = vsel %vm4488, %v4490, %v4486
        %v4492 = vmul.f32 1.0, %v4491
        %v4493 = vrcp.pop %v3347
        %v4494 = vmul.f32 %v3347, %v4493
        %v4495 = vsub.f32 1.0, %v4494
        %v4496 = vmul.f32 %v4493, %v4495
        %v4497 = vadd.f32 %v4493, %v4496
        %vm4498 = vweird.f32 %v3347
        %vm4499 = vweird.f32 %v4493
        %vm4500 = vmor %vm4498, %vm4499
        %v4501 = vsel %vm4500, %v4493, %v4497
        %v4502 = vand.u32 2147483647, %v3347
        %vm4503 = vcmp.eq.f32.partialorder %v4502, 8.507059e+37
        %v4504 = vand.u32 %v3347, 2147483648
        %v4505 = vor.u32 1.1754944e-38, %v4504
        %v4506 = vsel %vm4503, %v4505, %v4501
        %v4507 = vmul.f32 1.0, %v4506
        %v4508 = vrcp.pop %v3348
        %v4509 = vmul.f32 %v3348, %v4508
        %v4510 = vsub.f32 1.0, %v4509
        %v4511 = vmul.f32 %v4508, %v4510
        %v4512 = vadd.f32 %v4508, %v4511
        %vm4513 = vweird.f32 %v3348
        %vm4514 = vweird.f32 %v4508
        %vm4515 = vmor %vm4513, %vm4514
        %v4516 = vsel %vm4515, %v4508, %v4512
        %v4517 = vand.u32 2147483647, %v3348
        %vm4518 = vcmp.eq.f32.partialorder %v4517, 8.507059e+37
        %v4519 = vand.u32 %v3348, 2147483648
        %v4520 = vor.u32 1.1754944e-38, %v4519
        %v4521 = vsel %vm4518, %v4520, %v4516
        %v4522 = vmul.f32 1.0, %v4521
        %v4523 = vrcp.pop %v3349
        %v4524 = vmul.f32 %v3349, %v4523
        %v4525 = vsub.f32 1.0, %v4524
        %v4526 = vmul.f32 %v4523, %v4525
        %v4527 = vadd.f32 %v4523, %v4526
        %vm4528 = vweird.f32 %v3349
        %vm4529 = vweird.f32 %v4523
        %vm4530 = vmor %vm4528, %vm4529
        %v4531 = vsel %vm4530, %v4523, %v4527
        %v4532 = vand.u32 2147483647, %v3349
        %vm4533 = vcmp.eq.f32.partialorder %v4532, 8.507059e+37
        %v4534 = vand.u32 %v3349, 2147483648
        %v4535 = vor.u32 1.1754944e-38, %v4534
        %v4536 = vsel %vm4533, %v4535, %v4531
        %v4537 = vmul.f32 1.0, %v4536
        %v4538 = vrcp.pop %v3350
        %v4539 = vmul.f32 %v3350, %v4538
        %v4540 = vsub.f32 1.0, %v4539
        %v4541 = vmul.f32 %v4538, %v4540
        %v4542 = vadd.f32 %v4538, %v4541
        %vm4543 = vweird.f32 %v3350
        %vm4544 = vweird.f32 %v4538
        %vm4545 = vmor %vm4543, %vm4544
        %v4546 = vsel %vm4545, %v4538, %v4542
        %v4547 = vand.u32 2147483647, %v3350
        %vm4548 = vcmp.eq.f32.partialorder %v4547, 8.507059e+37
        %v4549 = vand.u32 %v3350, 2147483648
        %v4550 = vor.u32 1.1754944e-38, %v4549
        %v4551 = vsel %vm4548, %v4550, %v4546
        %v4552 = vmul.f32 1.0, %v4551
        %v4553 = vrcp.pop %v3351
        %v4554 = vmul.f32 %v3351, %v4553
        %v4555 = vsub.f32 1.0, %v4554
        %v4556 = vmul.f32 %v4553, %v4555
        %v4557 = vadd.f32 %v4553, %v4556
        %vm4558 = vweird.f32 %v3351
        %vm4559 = vweird.f32 %v4553
        %vm4560 = vmor %vm4558, %vm4559
        %v4561 = vsel %vm4560, %v4553, %v4557
        %v4562 = vand.u32 2147483647, %v3351
        %vm4563 = vcmp.eq.f32.partialorder %v4562, 8.507059e+37
        %v4564 = vand.u32 %v3351, 2147483648
        %v4565 = vor.u32 1.1754944e-38, %v4564
        %v4566 = vsel %vm4563, %v4565, %v4561
        %v4567 = vmul.f32 1.0, %v4566
        %v4568 = vrcp.pop %v3352
        %v4569 = vmul.f32 %v3352, %v4568
        %v4570 = vsub.f32 1.0, %v4569
        %v4571 = vmul.f32 %v4568, %v4570
        %v4572 = vadd.f32 %v4568, %v4571
        %vm4573 = vweird.f32 %v3352
        %vm4574 = vweird.f32 %v4568
        %vm4575 = vmor %vm4573, %vm4574
        %v4576 = vsel %vm4575, %v4568, %v4572
        %v4577 = vand.u32 2147483647, %v3352
        %vm4578 = vcmp.eq.f32.partialorder %v4577, 8.507059e+37
        %v4579 = vand.u32 %v3352, 2147483648
        %v4580 = vor.u32 1.1754944e-38, %v4579
        %v4581 = vsel %vm4578, %v4580, %v4576
        %v4582 = vmul.f32 1.0, %v4581
        %v4583 = vrcp.pop %v3353
        %v4584 = vmul.f32 %v3353, %v4583
        %v4585 = vsub.f32 1.0, %v4584
        %v4586 = vmul.f32 %v4583, %v4585
        %v4587 = vadd.f32 %v4583, %v4586
        %vm4588 = vweird.f32 %v3353
        %vm4589 = vweird.f32 %v4583
        %vm4590 = vmor %vm4588, %vm4589
        %v4591 = vsel %vm4590, %v4583, %v4587
        %v4592 = vand.u32 2147483647, %v3353
        %vm4593 = vcmp.eq.f32.partialorder %v4592, 8.507059e+37
        %v4594 = vand.u32 %v3353, 2147483648
        %v4595 = vor.u32 1.1754944e-38, %v4594
        %v4596 = vsel %vm4593, %v4595, %v4591
        %v4597 = vmul.f32 1.0, %v4596
        %v4598 = vrcp.pop %v3354
        %v4599 = vmul.f32 %v3354, %v4598
        %v4600 = vsub.f32 1.0, %v4599
        %v4601 = vmul.f32 %v4598, %v4600
        %v4602 = vadd.f32 %v4598, %v4601
        %vm4603 = vweird.f32 %v3354
        %vm4604 = vweird.f32 %v4598
        %vm4605 = vmor %vm4603, %vm4604
        %v4606 = vsel %vm4605, %v4598, %v4602
        %v4607 = vand.u32 2147483647, %v3354
        %vm4608 = vcmp.eq.f32.partialorder %v4607, 8.507059e+37
        %v4609 = vand.u32 %v3354, 2147483648
        %v4610 = vor.u32 1.1754944e-38, %v4609
        %v4611 = vsel %vm4608, %v4610, %v4606
        %v4612 = vmul.f32 1.0, %v4611
        %v4613 = vrcp.pop %v3355
        %v4614 = vmul.f32 %v3355, %v4613
        %v4615 = vsub.f32 1.0, %v4614
        %v4616 = vmul.f32 %v4613, %v4615
        %v4617 = vadd.f32 %v4613, %v4616
        %vm4618 = vweird.f32 %v3355
        %vm4619 = vweird.f32 %v4613
        %vm4620 = vmor %vm4618, %vm4619
        %v4621 = vsel %vm4620, %v4613, %v4617
        %v4622 = vand.u32 2147483647, %v3355
        %vm4623 = vcmp.eq.f32.partialorder %v4622, 8.507059e+37
        %v4624 = vand.u32 %v3355, 2147483648
        %v4625 = vor.u32 1.1754944e-38, %v4624
        %v4626 = vsel %vm4623, %v4625, %v4621
        %v4627 = vmul.f32 1.0, %v4626
        %v4628 = vrcp.pop %v3356
        %v4629 = vmul.f32 %v3356, %v4628
        %v4630 = vsub.f32 1.0, %v4629
        %v4631 = vmul.f32 %v4628, %v4630
        %v4632 = vadd.f32 %v4628, %v4631
        %vm4633 = vweird.f32 %v3356
        %vm4634 = vweird.f32 %v4628
        %vm4635 = vmor %vm4633, %vm4634
        %v4636 = vsel %vm4635, %v4628, %v4632
        %v4637 = vand.u32 2147483647, %v3356
        %vm4638 = vcmp.eq.f32.partialorder %v4637, 8.507059e+37
        %v4639 = vand.u32 %v3356, 2147483648
        %v4640 = vor.u32 1.1754944e-38, %v4639
        %v4641 = vsel %vm4638, %v4640, %v4636
        %v4642 = vmul.f32 1.0, %v4641
        %v4643 = vrcp.pop %v3357
        %v4644 = vmul.f32 %v3357, %v4643
        %v4645 = vsub.f32 1.0, %v4644
        %v4646 = vmul.f32 %v4643, %v4645
        %v4647 = vadd.f32 %v4643, %v4646
        %vm4648 = vweird.f32 %v3357
        %vm4649 = vweird.f32 %v4643
        %vm4650 = vmor %vm4648, %vm4649
        %v4651 = vsel %vm4650, %v4643, %v4647
        %v4652 = vand.u32 2147483647, %v3357
        %vm4653 = vcmp.eq.f32.partialorder %v4652, 8.507059e+37
        %v4654 = vand.u32 %v3357, 2147483648
        %v4655 = vor.u32 1.1754944e-38, %v4654
        %v4656 = vsel %vm4653, %v4655, %v4651
        %v4657 = vmul.f32 1.0, %v4656
        %v4658 = vrcp.pop %v3358
        %v4659 = vmul.f32 %v3358, %v4658
        %v4660 = vsub.f32 1.0, %v4659
        %v4661 = vmul.f32 %v4658, %v4660
        %v4662 = vadd.f32 %v4658, %v4661
        %vm4663 = vweird.f32 %v3358
        %vm4664 = vweird.f32 %v4658
        %vm4665 = vmor %vm4663, %vm4664
        %v4666 = vsel %vm4665, %v4658, %v4662
        %v4667 = vand.u32 2147483647, %v3358
        %vm4668 = vcmp.eq.f32.partialorder %v4667, 8.507059e+37
        %v4669 = vand.u32 %v3358, 2147483648
        %v4670 = vor.u32 1.1754944e-38, %v4669
        %v4671 = vsel %vm4668, %v4670, %v4666
        %v4672 = vmul.f32 1.0, %v4671
        %v4673 = vrcp.pop %v3359
        %v4674 = vmul.f32 %v3359, %v4673
        %v4675 = vsub.f32 1.0, %v4674
        %v4676 = vmul.f32 %v4673, %v4675
        %v4677 = vadd.f32 %v4673, %v4676
        %vm4678 = vweird.f32 %v3359
        %vm4679 = vweird.f32 %v4673
        %vm4680 = vmor %vm4678, %vm4679
        %v4681 = vsel %vm4680, %v4673, %v4677
        %v4682 = vand.u32 2147483647, %v3359
        %vm4683 = vcmp.eq.f32.partialorder %v4682, 8.507059e+37
        %v4684 = vand.u32 %v3359, 2147483648
        %v4685 = vor.u32 1.1754944e-38, %v4684
        %v4686 = vsel %vm4683, %v4685, %v4681
        %v4687 = vmul.f32 1.0, %v4686
        %v4688 = vrcp.pop %v3360
        %v4689 = vmul.f32 %v3360, %v4688
        %v4690 = vsub.f32 1.0, %v4689
        %v4691 = vmul.f32 %v4688, %v4690
        %v4692 = vadd.f32 %v4688, %v4691
        %vm4693 = vweird.f32 %v3360
        %vm4694 = vweird.f32 %v4688
        %vm4695 = vmor %vm4693, %vm4694
        %v4696 = vsel %vm4695, %v4688, %v4692
        %v4697 = vand.u32 2147483647, %v3360
        %vm4698 = vcmp.eq.f32.partialorder %v4697, 8.507059e+37
        %v4699 = vand.u32 %v3360, 2147483648
        %v4700 = vor.u32 1.1754944e-38, %v4699
        %v4701 = vsel %vm4698, %v4700, %v4696
        %v4702 = vmul.f32 1.0, %v4701
        %v4703 = vrcp.pop %v3361
        %v4704 = vmul.f32 %v3361, %v4703
        %v4705 = vsub.f32 1.0, %v4704
        %v4706 = vmul.f32 %v4703, %v4705
        %v4707 = vadd.f32 %v4703, %v4706
        %vm4708 = vweird.f32 %v3361
        %vm4709 = vweird.f32 %v4703
        %vm4710 = vmor %vm4708, %vm4709
        %v4711 = vsel %vm4710, %v4703, %v4707
        %v4712 = vand.u32 2147483647, %v3361
        %vm4713 = vcmp.eq.f32.partialorder %v4712, 8.507059e+37
        %v4714 = vand.u32 %v3361, 2147483648
        %v4715 = vor.u32 1.1754944e-38, %v4714
        %v4716 = vsel %vm4713, %v4715, %v4711
        %v4717 = vmul.f32 1.0, %v4716
        %v4718 = vrcp.pop %v3362
        %v4719 = vmul.f32 %v3362, %v4718
        %v4720 = vsub.f32 1.0, %v4719
        %v4721 = vmul.f32 %v4718, %v4720
        %v4722 = vadd.f32 %v4718, %v4721
        %vm4723 = vweird.f32 %v3362
        %vm4724 = vweird.f32 %v4718
        %vm4725 = vmor %vm4723, %vm4724
        %v4726 = vsel %vm4725, %v4718, %v4722
        %v4727 = vand.u32 2147483647, %v3362
        %vm4728 = vcmp.eq.f32.partialorder %v4727, 8.507059e+37
        %v4729 = vand.u32 %v3362, 2147483648
        %v4730 = vor.u32 1.1754944e-38, %v4729
        %v4731 = vsel %vm4728, %v4730, %v4726
        %v4732 = vmul.f32 1.0, %v4731
        %v4733 = vrcp.pop %v3363
        %v4734 = vmul.f32 %v3363, %v4733
        %v4735 = vsub.f32 1.0, %v4734
        %v4736 = vmul.f32 %v4733, %v4735
        %v4737 = vadd.f32 %v4733, %v4736
        %vm4738 = vweird.f32 %v3363
        %vm4739 = vweird.f32 %v4733
        %vm4740 = vmor %vm4738, %vm4739
        %v4741 = vsel %vm4740, %v4733, %v4737
        %v4742 = vand.u32 2147483647, %v3363
        %vm4743 = vcmp.eq.f32.partialorder %v4742, 8.507059e+37
        %v4744 = vand.u32 %v3363, 2147483648
        %v4745 = vor.u32 1.1754944e-38, %v4744
        %v4746 = vsel %vm4743, %v4745, %v4741
        %v4747 = vmul.f32 1.0, %v4746
        %v4748 = vrcp.pop %v3364
        %v4749 = vmul.f32 %v3364, %v4748
        %v4750 = vsub.f32 1.0, %v4749
        %v4751 = vmul.f32 %v4748, %v4750
        %v4752 = vadd.f32 %v4748, %v4751
        %vm4753 = vweird.f32 %v3364
        %vm4754 = vweird.f32 %v4748
        %vm4755 = vmor %vm4753, %vm4754
        %v4756 = vsel %vm4755, %v4748, %v4752
        %v4757 = vand.u32 2147483647, %v3364
        %vm4758 = vcmp.eq.f32.partialorder %v4757, 8.507059e+37
        %v4759 = vand.u32 %v3364, 2147483648
        %v4760 = vor.u32 1.1754944e-38, %v4759
        %v4761 = vsel %vm4758, %v4760, %v4756
        %v4762 = vmul.f32 1.0, %v4761
        %v4763 = vrcp.pop %v3365
        %v4764 = vmul.f32 %v3365, %v4763
        %v4765 = vsub.f32 1.0, %v4764
        %v4766 = vmul.f32 %v4763, %v4765
        %v4767 = vadd.f32 %v4763, %v4766
        %vm4768 = vweird.f32 %v3365
        %vm4769 = vweird.f32 %v4763
        %vm4770 = vmor %vm4768, %vm4769
        %v4771 = vsel %vm4770, %v4763, %v4767
        %v4772 = vand.u32 2147483647, %v3365
        %vm4773 = vcmp.eq.f32.partialorder %v4772, 8.507059e+37
        %v4774 = vand.u32 %v3365, 2147483648
        %v4775 = vor.u32 1.1754944e-38, %v4774
        %v4776 = vsel %vm4773, %v4775, %v4771
        %v4777 = vmul.f32 1.0, %v4776
        %v4778 = vrcp.pop %v3366
        %v4779 = vmul.f32 %v3366, %v4778
        %v4780 = vsub.f32 1.0, %v4779
        %v4781 = vmul.f32 %v4778, %v4780
        %v4782 = vadd.f32 %v4778, %v4781
        %vm4783 = vweird.f32 %v3366
        %vm4784 = vweird.f32 %v4778
        %vm4785 = vmor %vm4783, %vm4784
        %v4786 = vsel %vm4785, %v4778, %v4782
        %v4787 = vand.u32 2147483647, %v3366
        %vm4788 = vcmp.eq.f32.partialorder %v4787, 8.507059e+37
        %v4789 = vand.u32 %v3366, 2147483648
        %v4790 = vor.u32 1.1754944e-38, %v4789
        %v4791 = vsel %vm4788, %v4790, %v4786
        %v4792 = vmul.f32 1.0, %v4791
        %v4793 = vrcp.pop %v3367
        %v4794 = vmul.f32 %v3367, %v4793
        %v4795 = vsub.f32 1.0, %v4794
        %v4796 = vmul.f32 %v4793, %v4795
        %v4797 = vadd.f32 %v4793, %v4796
        %vm4798 = vweird.f32 %v3367
        %vm4799 = vweird.f32 %v4793
        %vm4800 = vmor %vm4798, %vm4799
        %v4801 = vsel %vm4800, %v4793, %v4797
        %v4802 = vand.u32 2147483647, %v3367
        %vm4803 = vcmp.eq.f32.partialorder %v4802, 8.507059e+37
        %v4804 = vand.u32 %v3367, 2147483648
        %v4805 = vor.u32 1.1754944e-38, %v4804
        %v4806 = vsel %vm4803, %v4805, %v4801
        %v4807 = vmul.f32 1.0, %v4806
        %v4808 = vrcp.pop %v3368
        %v4809 = vmul.f32 %v3368, %v4808
        %v4810 = vsub.f32 1.0, %v4809
        %v4811 = vmul.f32 %v4808, %v4810
        %v4812 = vadd.f32 %v4808, %v4811
        %vm4813 = vweird.f32 %v3368
        %vm4814 = vweird.f32 %v4808
        %vm4815 = vmor %vm4813, %vm4814
        %v4816 = vsel %vm4815, %v4808, %v4812
        %v4817 = vand.u32 2147483647, %v3368
        %vm4818 = vcmp.eq.f32.partialorder %v4817, 8.507059e+37
        %v4819 = vand.u32 %v3368, 2147483648
        %v4820 = vor.u32 1.1754944e-38, %v4819
        %v4821 = vsel %vm4818, %v4820, %v4816
        %v4822 = vmul.f32 1.0, %v4821
        %v4823 = vrcp.pop %v3369
        %v4824 = vmul.f32 %v3369, %v4823
        %v4825 = vsub.f32 1.0, %v4824
        %v4826 = vmul.f32 %v4823, %v4825
        %v4827 = vadd.f32 %v4823, %v4826
        %vm4828 = vweird.f32 %v3369
        %vm4829 = vweird.f32 %v4823
        %vm4830 = vmor %vm4828, %vm4829
        %v4831 = vsel %vm4830, %v4823, %v4827
        %v4832 = vand.u32 2147483647, %v3369
        %vm4833 = vcmp.eq.f32.partialorder %v4832, 8.507059e+37
        %v4834 = vand.u32 %v3369, 2147483648
        %v4835 = vor.u32 1.1754944e-38, %v4834
        %v4836 = vsel %vm4833, %v4835, %v4831
        %v4837 = vmul.f32 1.0, %v4836
        %v4838 = vrcp.pop %v3370
        %v4839 = vmul.f32 %v3370, %v4838
        %v4840 = vsub.f32 1.0, %v4839
        %v4841 = vmul.f32 %v4838, %v4840
        %v4842 = vadd.f32 %v4838, %v4841
        %vm4843 = vweird.f32 %v3370
        %vm4844 = vweird.f32 %v4838
        %vm4845 = vmor %vm4843, %vm4844
        %v4846 = vsel %vm4845, %v4838, %v4842
        %v4847 = vand.u32 2147483647, %v3370
        %vm4848 = vcmp.eq.f32.partialorder %v4847, 8.507059e+37
        %v4849 = vand.u32 %v3370, 2147483648
        %v4850 = vor.u32 1.1754944e-38, %v4849
        %v4851 = vsel %vm4848, %v4850, %v4846
        %v4852 = vmul.f32 1.0, %v4851
        %v4853 = vrcp.pop %v3371
        %v4854 = vmul.f32 %v3371, %v4853
        %v4855 = vsub.f32 1.0, %v4854
        %v4856 = vmul.f32 %v4853, %v4855
        %v4857 = vadd.f32 %v4853, %v4856
        %vm4858 = vweird.f32 %v3371
        %vm4859 = vweird.f32 %v4853
        %vm4860 = vmor %vm4858, %vm4859
        %v4861 = vsel %vm4860, %v4853, %v4857
        %v4862 = vand.u32 2147483647, %v3371
        %vm4863 = vcmp.eq.f32.partialorder %v4862, 8.507059e+37
        %v4864 = vand.u32 %v3371, 2147483648
        %v4865 = vor.u32 1.1754944e-38, %v4864
        %v4866 = vsel %vm4863, %v4865, %v4861
        %v4867 = vmul.f32 1.0, %v4866
        %v4868 = vrcp.pop %v3372
        %v4869 = vmul.f32 %v3372, %v4868
        %v4870 = vsub.f32 1.0, %v4869
        %v4871 = vmul.f32 %v4868, %v4870
        %v4872 = vadd.f32 %v4868, %v4871
        %vm4873 = vweird.f32 %v3372
        %vm4874 = vweird.f32 %v4868
        %vm4875 = vmor %vm4873, %vm4874
        %v4876 = vsel %vm4875, %v4868, %v4872
        %v4877 = vand.u32 2147483647, %v3372
        %vm4878 = vcmp.eq.f32.partialorder %v4877, 8.507059e+37
        %v4879 = vand.u32 %v3372, 2147483648
        %v4880 = vor.u32 1.1754944e-38, %v4879
        %v4881 = vsel %vm4878, %v4880, %v4876
        %v4882 = vmul.f32 1.0, %v4881
        %v4883 = vrcp.pop %v3373
        %v4884 = vmul.f32 %v3373, %v4883
        %v4885 = vsub.f32 1.0, %v4884
        %v4886 = vmul.f32 %v4883, %v4885
        %v4887 = vadd.f32 %v4883, %v4886
        %vm4888 = vweird.f32 %v3373
        %vm4889 = vweird.f32 %v4883
        %vm4890 = vmor %vm4888, %vm4889
        %v4891 = vsel %vm4890, %v4883, %v4887
        %v4892 = vand.u32 2147483647, %v3373
        %vm4893 = vcmp.eq.f32.partialorder %v4892, 8.507059e+37
        %v4894 = vand.u32 %v3373, 2147483648
        %v4895 = vor.u32 1.1754944e-38, %v4894
        %v4896 = vsel %vm4893, %v4895, %v4891
        %v4897 = vmul.f32 1.0, %v4896
        %v4898 = vrcp.pop %v3374
        %v4899 = vmul.f32 %v3374, %v4898
        %v4900 = vsub.f32 1.0, %v4899
        %v4901 = vmul.f32 %v4898, %v4900
        %v4902 = vadd.f32 %v4898, %v4901
        %vm4903 = vweird.f32 %v3374
        %vm4904 = vweird.f32 %v4898
        %vm4905 = vmor %vm4903, %vm4904
        %v4906 = vsel %vm4905, %v4898, %v4902
        %v4907 = vand.u32 2147483647, %v3374
        %vm4908 = vcmp.eq.f32.partialorder %v4907, 8.507059e+37
        %v4909 = vand.u32 %v3374, 2147483648
        %v4910 = vor.u32 1.1754944e-38, %v4909
        %v4911 = vsel %vm4908, %v4910, %v4906
        %v4912 = vmul.f32 1.0, %v4911
        %v4913 = vrcp.pop %v3375
        %v4914 = vmul.f32 %v3375, %v4913
        %v4915 = vsub.f32 1.0, %v4914
        %v4916 = vmul.f32 %v4913, %v4915
        %v4917 = vadd.f32 %v4913, %v4916
        %vm4918 = vweird.f32 %v3375
        %vm4919 = vweird.f32 %v4913
        %vm4920 = vmor %vm4918, %vm4919
        %v4921 = vsel %vm4920, %v4913, %v4917
        %v4922 = vand.u32 2147483647, %v3375
        %vm4923 = vcmp.eq.f32.partialorder %v4922, 8.507059e+37
        %v4924 = vand.u32 %v3375, 2147483648
        %v4925 = vor.u32 1.1754944e-38, %v4924
        %v4926 = vsel %vm4923, %v4925, %v4921
        %v4927 = vmul.f32 1.0, %v4926
        %v4928 = vrcp.pop %v3376
        %v4929 = vmul.f32 %v3376, %v4928
        %v4930 = vsub.f32 1.0, %v4929
        %v4931 = vmul.f32 %v4928, %v4930
        %v4932 = vadd.f32 %v4928, %v4931
        %vm4933 = vweird.f32 %v3376
        %vm4934 = vweird.f32 %v4928
        %vm4935 = vmor %vm4933, %vm4934
        %v4936 = vsel %vm4935, %v4928, %v4932
        %v4937 = vand.u32 2147483647, %v3376
        %vm4938 = vcmp.eq.f32.partialorder %v4937, 8.507059e+37
        %v4939 = vand.u32 %v3376, 2147483648
        %v4940 = vor.u32 1.1754944e-38, %v4939
        %v4941 = vsel %vm4938, %v4940, %v4936
        %v4942 = vmul.f32 1.0, %v4941
        %v4943 = vrcp.pop %v3377
        %v4944 = vmul.f32 %v3377, %v4943
        %v4945 = vsub.f32 1.0, %v4944
        %v4946 = vmul.f32 %v4943, %v4945
        %v4947 = vadd.f32 %v4943, %v4946
        %vm4948 = vweird.f32 %v3377
        %vm4949 = vweird.f32 %v4943
        %vm4950 = vmor %vm4948, %vm4949
        %v4951 = vsel %vm4950, %v4943, %v4947
        %v4952 = vand.u32 2147483647, %v3377
        %vm4953 = vcmp.eq.f32.partialorder %v4952, 8.507059e+37
        %v4954 = vand.u32 %v3377, 2147483648
        %v4955 = vor.u32 1.1754944e-38, %v4954
        %v4956 = vsel %vm4953, %v4955, %v4951
        %v4957 = vmul.f32 1.0, %v4956
        %v4958 = vrcp.pop %v3378
        %v4959 = vmul.f32 %v3378, %v4958
        %v4960 = vsub.f32 1.0, %v4959
        %v4961 = vmul.f32 %v4958, %v4960
        %v4962 = vadd.f32 %v4958, %v4961
        %vm4963 = vweird.f32 %v3378
        %vm4964 = vweird.f32 %v4958
        %vm4965 = vmor %vm4963, %vm4964
        %v4966 = vsel %vm4965, %v4958, %v4962
        %v4967 = vand.u32 2147483647, %v3378
        %vm4968 = vcmp.eq.f32.partialorder %v4967, 8.507059e+37
        %v4969 = vand.u32 %v3378, 2147483648
        %v4970 = vor.u32 1.1754944e-38, %v4969
        %v4971 = vsel %vm4968, %v4970, %v4966
        %v4972 = vmul.f32 1.0, %v4971
        %v4973 = vrcp.pop %v3379
        %v4974 = vmul.f32 %v3379, %v4973
        %v4975 = vsub.f32 1.0, %v4974
        %v4976 = vmul.f32 %v4973, %v4975
        %v4977 = vadd.f32 %v4973, %v4976
        %vm4978 = vweird.f32 %v3379
        %vm4979 = vweird.f32 %v4973
        %vm4980 = vmor %vm4978, %vm4979
        %v4981 = vsel %vm4980, %v4973, %v4977
        %v4982 = vand.u32 2147483647, %v3379
        %vm4983 = vcmp.eq.f32.partialorder %v4982, 8.507059e+37
        %v4984 = vand.u32 %v3379, 2147483648
        %v4985 = vor.u32 1.1754944e-38, %v4984
        %v4986 = vsel %vm4983, %v4985, %v4981
        %v4987 = vmul.f32 1.0, %v4986
        %v4988 = vrcp.pop %v3380
        %v4989 = vmul.f32 %v3380, %v4988
        %v4990 = vsub.f32 1.0, %v4989
        %v4991 = vmul.f32 %v4988, %v4990
        %v4992 = vadd.f32 %v4988, %v4991
        %vm4993 = vweird.f32 %v3380
        %vm4994 = vweird.f32 %v4988
        %vm4995 = vmor %vm4993, %vm4994
        %v4996 = vsel %vm4995, %v4988, %v4992
        %v4997 = vand.u32 2147483647, %v3380
        %vm4998 = vcmp.eq.f32.partialorder %v4997, 8.507059e+37
        %v4999 = vand.u32 %v3380, 2147483648
        %v5000 = vor.u32 1.1754944e-38, %v4999
        %v5001 = vsel %vm4998, %v5000, %v4996
        %v5002 = vmul.f32 1.0, %v5001
        %v5003 = vrcp.pop %v3381
        %v5004 = vmul.f32 %v3381, %v5003
        %v5005 = vsub.f32 1.0, %v5004
        %v5006 = vmul.f32 %v5003, %v5005
        %v5007 = vadd.f32 %v5003, %v5006
        %vm5008 = vweird.f32 %v3381
        %vm5009 = vweird.f32 %v5003
        %vm5010 = vmor %vm5008, %vm5009
        %v5011 = vsel %vm5010, %v5003, %v5007
        %v5012 = vand.u32 2147483647, %v3381
        %vm5013 = vcmp.eq.f32.partialorder %v5012, 8.507059e+37
        %v5014 = vand.u32 %v3381, 2147483648
        %v5015 = vor.u32 1.1754944e-38, %v5014
        %v5016 = vsel %vm5013, %v5015, %v5011
        %v5017 = vmul.f32 1.0, %v5016
        %v5018 = vrcp.pop %v3382
        %v5019 = vmul.f32 %v3382, %v5018
        %v5020 = vsub.f32 1.0, %v5019
        %v5021 = vmul.f32 %v5018, %v5020
        %v5022 = vadd.f32 %v5018, %v5021
        %vm5023 = vweird.f32 %v3382
        %vm5024 = vweird.f32 %v5018
        %vm5025 = vmor %vm5023, %vm5024
        %v5026 = vsel %vm5025, %v5018, %v5022
        %v5027 = vand.u32 2147483647, %v3382
        %vm5028 = vcmp.eq.f32.partialorder %v5027, 8.507059e+37
        %v5029 = vand.u32 %v3382, 2147483648
        %v5030 = vor.u32 1.1754944e-38, %v5029
        %v5031 = vsel %vm5028, %v5030, %v5026
        %v5032 = vmul.f32 1.0, %v5031
        %v5033 = vrcp.pop %v3383
        %v5034 = vmul.f32 %v3383, %v5033
        %v5035 = vsub.f32 1.0, %v5034
        %v5036 = vmul.f32 %v5033, %v5035
        %v5037 = vadd.f32 %v5033, %v5036
        %vm5038 = vweird.f32 %v3383
        %vm5039 = vweird.f32 %v5033
        %vm5040 = vmor %vm5038, %vm5039
        %v5041 = vsel %vm5040, %v5033, %v5037
        %v5042 = vand.u32 2147483647, %v3383
        %vm5043 = vcmp.eq.f32.partialorder %v5042, 8.507059e+37
        %v5044 = vand.u32 %v3383, 2147483648
        %v5045 = vor.u32 1.1754944e-38, %v5044
        %v5046 = vsel %vm5043, %v5045, %v5041
        %v5047 = vmul.f32 1.0, %v5046
        %v5048 = vrcp.pop %v3384
        %v5049 = vmul.f32 %v3384, %v5048
        %v5050 = vsub.f32 1.0, %v5049
        %v5051 = vmul.f32 %v5048, %v5050
        %v5052 = vadd.f32 %v5048, %v5051
        %vm5053 = vweird.f32 %v3384
        %vm5054 = vweird.f32 %v5048
        %vm5055 = vmor %vm5053, %vm5054
        %v5056 = vsel %vm5055, %v5048, %v5052
        %v5057 = vand.u32 2147483647, %v3384
        %vm5058 = vcmp.eq.f32.partialorder %v5057, 8.507059e+37
        %v5059 = vand.u32 %v3384, 2147483648
        %v5060 = vor.u32 1.1754944e-38, %v5059
        %v5061 = vsel %vm5058, %v5060, %v5056
        %v5062 = vmul.f32 1.0, %v5061
        %v5063 = vrcp.pop %v3385
        %v5064 = vmul.f32 %v3385, %v5063
        %v5065 = vsub.f32 1.0, %v5064
        %v5066 = vmul.f32 %v5063, %v5065
        %v5067 = vadd.f32 %v5063, %v5066
        %vm5068 = vweird.f32 %v3385
        %vm5069 = vweird.f32 %v5063
        %vm5070 = vmor %vm5068, %vm5069
        %v5071 = vsel %vm5070, %v5063, %v5067
        %v5072 = vand.u32 2147483647, %v3385
        %vm5073 = vcmp.eq.f32.partialorder %v5072, 8.507059e+37
        %v5074 = vand.u32 %v3385, 2147483648
        %v5075 = vor.u32 1.1754944e-38, %v5074
        %v5076 = vsel %vm5073, %v5075, %v5071
        %v5077 = vmul.f32 1.0, %v5076
        %v5078 = vrcp.pop %v3386
        %v5079 = vmul.f32 %v3386, %v5078
        %v5080 = vsub.f32 1.0, %v5079
        %v5081 = vmul.f32 %v5078, %v5080
        %v5082 = vadd.f32 %v5078, %v5081
        %vm5083 = vweird.f32 %v3386
        %vm5084 = vweird.f32 %v5078
        %vm5085 = vmor %vm5083, %vm5084
        %v5086 = vsel %vm5085, %v5078, %v5082
        %v5087 = vand.u32 2147483647, %v3386
        %vm5088 = vcmp.eq.f32.partialorder %v5087, 8.507059e+37
        %v5089 = vand.u32 %v3386, 2147483648
        %v5090 = vor.u32 1.1754944e-38, %v5089
        %v5091 = vsel %vm5088, %v5090, %v5086
        %v5092 = vmul.f32 1.0, %v5091
        %v5093 = vrcp.pop %v3387
        %v5094 = vmul.f32 %v3387, %v5093
        %v5095 = vsub.f32 1.0, %v5094
        %v5096 = vmul.f32 %v5093, %v5095
        %v5097 = vadd.f32 %v5093, %v5096
        %vm5098 = vweird.f32 %v3387
        %vm5099 = vweird.f32 %v5093
        %vm5100 = vmor %vm5098, %vm5099
        %v5101 = vsel %vm5100, %v5093, %v5097
        %v5102 = vand.u32 2147483647, %v3387
        %vm5103 = vcmp.eq.f32.partialorder %v5102, 8.507059e+37
        %v5104 = vand.u32 %v3387, 2147483648
        %v5105 = vor.u32 1.1754944e-38, %v5104
        %v5106 = vsel %vm5103, %v5105, %v5101
        %v5107 = vmul.f32 1.0, %v5106
        %v5108 = vrcp.pop %v3388
        %v5109 = vmul.f32 %v3388, %v5108
        %v5110 = vsub.f32 1.0, %v5109
        %v5111 = vmul.f32 %v5108, %v5110
        %v5112 = vadd.f32 %v5108, %v5111
        %vm5113 = vweird.f32 %v3388
        %vm5114 = vweird.f32 %v5108
        %vm5115 = vmor %vm5113, %vm5114
        %v5116 = vsel %vm5115, %v5108, %v5112
        %v5117 = vand.u32 2147483647, %v3388
        %vm5118 = vcmp.eq.f32.partialorder %v5117, 8.507059e+37
        %v5119 = vand.u32 %v3388, 2147483648
        %v5120 = vor.u32 1.1754944e-38, %v5119
        %v5121 = vsel %vm5118, %v5120, %v5116
        %v5122 = vmul.f32 1.0, %v5121
        %v5123 = vrcp.pop %v3389
        %v5124 = vmul.f32 %v3389, %v5123
        %v5125 = vsub.f32 1.0, %v5124
        %v5126 = vmul.f32 %v5123, %v5125
        %v5127 = vadd.f32 %v5123, %v5126
        %vm5128 = vweird.f32 %v3389
        %vm5129 = vweird.f32 %v5123
        %vm5130 = vmor %vm5128, %vm5129
        %v5131 = vsel %vm5130, %v5123, %v5127
        %v5132 = vand.u32 2147483647, %v3389
        %vm5133 = vcmp.eq.f32.partialorder %v5132, 8.507059e+37
        %v5134 = vand.u32 %v3389, 2147483648
        %v5135 = vor.u32 1.1754944e-38, %v5134
        %v5136 = vsel %vm5133, %v5135, %v5131
        %v5137 = vmul.f32 1.0, %v5136
        %v5138 = vrcp.pop %v3390
        %v5139 = vmul.f32 %v3390, %v5138
        %v5140 = vsub.f32 1.0, %v5139
        %v5141 = vmul.f32 %v5138, %v5140
        %v5142 = vadd.f32 %v5138, %v5141
        %vm5143 = vweird.f32 %v3390
        %vm5144 = vweird.f32 %v5138
        %vm5145 = vmor %vm5143, %vm5144
        %v5146 = vsel %vm5145, %v5138, %v5142
        %v5147 = vand.u32 2147483647, %v3390
        %vm5148 = vcmp.eq.f32.partialorder %v5147, 8.507059e+37
        %v5149 = vand.u32 %v3390, 2147483648
        %v5150 = vor.u32 1.1754944e-38, %v5149
        %v5151 = vsel %vm5148, %v5150, %v5146
        %v5152 = vmul.f32 1.0, %v5151
        %v5153 = vrcp.pop %v3391
        %v5154 = vmul.f32 %v3391, %v5153
        %v5155 = vsub.f32 1.0, %v5154
        %v5156 = vmul.f32 %v5153, %v5155
        %v5157 = vadd.f32 %v5153, %v5156
        %vm5158 = vweird.f32 %v3391
        %vm5159 = vweird.f32 %v5153
        %vm5160 = vmor %vm5158, %vm5159
        %v5161 = vsel %vm5160, %v5153, %v5157
        %v5162 = vand.u32 2147483647, %v3391
        %vm5163 = vcmp.eq.f32.partialorder %v5162, 8.507059e+37
        %v5164 = vand.u32 %v3391, 2147483648
        %v5165 = vor.u32 1.1754944e-38, %v5164
        %v5166 = vsel %vm5163, %v5165, %v5161
        %v5167 = vmul.f32 1.0, %v5166
        %v5168 = vrcp.pop %v3392
        %v5169 = vmul.f32 %v3392, %v5168
        %v5170 = vsub.f32 1.0, %v5169
        %v5171 = vmul.f32 %v5168, %v5170
        %v5172 = vadd.f32 %v5168, %v5171
        %vm5173 = vweird.f32 %v3392
        %vm5174 = vweird.f32 %v5168
        %vm5175 = vmor %vm5173, %vm5174
        %v5176 = vsel %vm5175, %v5168, %v5172
        %v5177 = vand.u32 2147483647, %v3392
        %vm5178 = vcmp.eq.f32.partialorder %v5177, 8.507059e+37
        %v5179 = vand.u32 %v3392, 2147483648
        %v5180 = vor.u32 1.1754944e-38, %v5179
        %v5181 = vsel %vm5178, %v5180, %v5176
        %v5182 = vmul.f32 1.0, %v5181
        %v5183 = vrcp.pop %v3393
        %v5184 = vmul.f32 %v3393, %v5183
        %v5185 = vsub.f32 1.0, %v5184
        %v5186 = vmul.f32 %v5183, %v5185
        %v5187 = vadd.f32 %v5183, %v5186
        %vm5188 = vweird.f32 %v3393
        %vm5189 = vweird.f32 %v5183
        %vm5190 = vmor %vm5188, %vm5189
        %v5191 = vsel %vm5190, %v5183, %v5187
        %v5192 = vand.u32 2147483647, %v3393
        %vm5193 = vcmp.eq.f32.partialorder %v5192, 8.507059e+37
        %v5194 = vand.u32 %v3393, 2147483648
        %v5195 = vor.u32 1.1754944e-38, %v5194
        %v5196 = vsel %vm5193, %v5195, %v5191
        %v5197 = vmul.f32 1.0, %v5196
        %v5198 = vrcp.pop %v3394
        %v5199 = vmul.f32 %v3394, %v5198
        %v5200 = vsub.f32 1.0, %v5199
        %v5201 = vmul.f32 %v5198, %v5200
        %v5202 = vadd.f32 %v5198, %v5201
        %vm5203 = vweird.f32 %v3394
        %vm5204 = vweird.f32 %v5198
        %vm5205 = vmor %vm5203, %vm5204
        %v5206 = vsel %vm5205, %v5198, %v5202
        %v5207 = vand.u32 2147483647, %v3394
        %vm5208 = vcmp.eq.f32.partialorder %v5207, 8.507059e+37
        %v5209 = vand.u32 %v3394, 2147483648
        %v5210 = vor.u32 1.1754944e-38, %v5209
        %v5211 = vsel %vm5208, %v5210, %v5206
        %v5212 = vmul.f32 1.0, %v5211
        %v5213 = vrcp.pop %v3395
        %v5214 = vmul.f32 %v3395, %v5213
        %v5215 = vsub.f32 1.0, %v5214
        %v5216 = vmul.f32 %v5213, %v5215
        %v5217 = vadd.f32 %v5213, %v5216
        %vm5218 = vweird.f32 %v3395
        %vm5219 = vweird.f32 %v5213
        %vm5220 = vmor %vm5218, %vm5219
        %v5221 = vsel %vm5220, %v5213, %v5217
        %v5222 = vand.u32 2147483647, %v3395
        %vm5223 = vcmp.eq.f32.partialorder %v5222, 8.507059e+37
        %v5224 = vand.u32 %v3395, 2147483648
        %v5225 = vor.u32 1.1754944e-38, %v5224
        %v5226 = vsel %vm5223, %v5225, %v5221
        %v5227 = vmul.f32 1.0, %v5226
        %v5228 = vrcp.pop %v3396
        %v5229 = vmul.f32 %v3396, %v5228
        %v5230 = vsub.f32 1.0, %v5229
        %v5231 = vmul.f32 %v5228, %v5230
        %v5232 = vadd.f32 %v5228, %v5231
        %vm5233 = vweird.f32 %v3396
        %vm5234 = vweird.f32 %v5228
        %vm5235 = vmor %vm5233, %vm5234
        %v5236 = vsel %vm5235, %v5228, %v5232
        %v5237 = vand.u32 2147483647, %v3396
        %vm5238 = vcmp.eq.f32.partialorder %v5237, 8.507059e+37
        %v5239 = vand.u32 %v3396, 2147483648
        %v5240 = vor.u32 1.1754944e-38, %v5239
        %v5241 = vsel %vm5238, %v5240, %v5236
        %v5242 = vmul.f32 1.0, %v5241
        %v5243 = vrcp.pop %v3397
        %v5244 = vmul.f32 %v3397, %v5243
        %v5245 = vsub.f32 1.0, %v5244
        %v5246 = vmul.f32 %v5243, %v5245
        %v5247 = vadd.f32 %v5243, %v5246
        %vm5248 = vweird.f32 %v3397
        %vm5249 = vweird.f32 %v5243
        %vm5250 = vmor %vm5248, %vm5249
        %v5251 = vsel %vm5250, %v5243, %v5247
        %v5252 = vand.u32 2147483647, %v3397
        %vm5253 = vcmp.eq.f32.partialorder %v5252, 8.507059e+37
        %v5254 = vand.u32 %v3397, 2147483648
        %v5255 = vor.u32 1.1754944e-38, %v5254
        %v5256 = vsel %vm5253, %v5255, %v5251
        %v5257 = vmul.f32 1.0, %v5256
        %v5258 = vmul.f32 %v2778, %v3412
        %v5259 = vmul.f32 %v2779, %v3427
        %v5260 = vmul.f32 %v2780, %v3442
        %v5261 = vmul.f32 %v2781, %v3457
        %v5262 = vmul.f32 %v2782, %v3472
        %v5263 = vmul.f32 %v2783, %v3487
        %v5264 = vmul.f32 %v2784, %v3502
        %v5265 = vmul.f32 %v2785, %v3517
        %v5266 = vmul.f32 %v2786, %v3532
        %v5267 = vmul.f32 %v2787, %v3547
        %v5268 = vmul.f32 %v2788, %v3562
        %v5269 = vmul.f32 %v2789, %v3577
        %v5270 = vmul.f32 %v2790, %v3592
        %v5271 = vmul.f32 %v2791, %v3607
        %v5272 = vmul.f32 %v2792, %v3622
        %v5273 = vmul.f32 %v2793, %v3637
        %v5274 = vmul.f32 %v2794, %v3652
        %v5275 = vmul.f32 %v2795, %v3667
        %v5276 = vmul.f32 %v2796, %v3682
        %v5277 = vmul.f32 %v2797, %v3697
        %v5278 = vmul.f32 %v2798, %v3712
        %v5279 = vmul.f32 %v2799, %v3727
        %v5280 = vmul.f32 %v2800, %v3742
        %v5281 = vmul.f32 %v2801, %v3757
        %v5282 = vmul.f32 %v2802, %v3772
        %v5283 = vmul.f32 %v2803, %v3787
        %v5284 = vmul.f32 %v2804, %v3802
        %v5285 = vmul.f32 %v2805, %v3817
        %v5286 = vmul.f32 %v2806, %v3832
        %v5287 = vmul.f32 %v2807, %v3847
        %v5288 = vmul.f32 %v2808, %v3862
        %v5289 = vmul.f32 %v2809, %v3877
        %v5290 = vmul.f32 %v2810, %v3892
        %v5291 = vmul.f32 %v2811, %v3907
        %v5292 = vmul.f32 %v2812, %v3922
        %v5293 = vmul.f32 %v2813, %v3937
        %v5294 = vmul.f32 %v2814, %v3952
        %v5295 = vmul.f32 %v2815, %v3967
        %v5296 = vmul.f32 %v2816, %v3982
        %v5297 = vmul.f32 %v2817, %v3997
        %v5298 = vmul.f32 %v2818, %v4012
        %v5299 = vmul.f32 %v2819, %v4027
        %v5300 = vmul.f32 %v2820, %v4042
        %v5301 = vmul.f32 %v2821, %v4057
        %v5302 = vmul.f32 %v2822, %v4072
        %v5303 = vmul.f32 %v2823, %v4087
        %v5304 = vmul.f32 %v2824, %v4102
        %v5305 = vmul.f32 %v2825, %v4117
        %v5306 = vmul.f32 %v2826, %v4132
        %v5307 = vmul.f32 %v2827, %v4147
        %v5308 = vmul.f32 %v2828, %v4162
        %v5309 = vmul.f32 %v2829, %v4177
        %v5310 = vmul.f32 %v2830, %v4192
        %v5311 = vmul.f32 %v2831, %v4207
        %v5312 = vmul.f32 %v2832, %v4222
        %v5313 = vmul.f32 %v2833, %v4237
        %v5314 = vmul.f32 %v2834, %v4252
        %v5315 = vmul.f32 %v2835, %v4267
        %v5316 = vmul.f32 %v2836, %v4282
        %v5317 = vmul.f32 %v2837, %v4297
        %v5318 = vmul.f32 %v2838, %v4312
        %v5319 = vmul.f32 %v2839, %v4327
        %v5320 = vmul.f32 %v2840, %v4342
        %v5321 = vmul.f32 %v2841, %v4357
        %v5322 = vmul.f32 %v2842, %v4372
        %v5323 = vmul.f32 %v2843, %v4387
        %v5324 = vmul.f32 %v2844, %v4402
        %v5325 = vmul.f32 %v2845, %v4417
        %v5326 = vmul.f32 %v2846, %v4432
        %v5327 = vmul.f32 %v2847, %v4447
        %v5328 = vmul.f32 %v2848, %v4462
        %v5329 = vmul.f32 %v2849, %v4477
        %v5330 = vmul.f32 %v2850, %v4492
        %v5331 = vmul.f32 %v2851, %v4507
        %v5332 = vmul.f32 %v2852, %v4522
        %v5333 = vmul.f32 %v2853, %v4537
        %v5334 = vmul.f32 %v2854, %v4552
        %v5335 = vmul.f32 %v2855, %v4567
        %v5336 = vmul.f32 %v2856, %v4582
        %v5337 = vmul.f32 %v2857, %v4597
        %v5338 = vmul.f32 %v2858, %v4612
        %v5339 = vmul.f32 %v2859, %v4627
        %v5340 = vmul.f32 %v2860, %v4642
        %v5341 = vmul.f32 %v2861, %v4657
        %v5342 = vmul.f32 %v2862, %v4672
        %v5343 = vmul.f32 %v2863, %v4687
        %v5344 = vmul.f32 %v2864, %v4702
        %v5345 = vmul.f32 %v2865, %v4717
        %v5346 = vmul.f32 %v2866, %v4732
        %v5347 = vmul.f32 %v2867, %v4747
        %v5348 = vmul.f32 %v2868, %v4762
        %v5349 = vmul.f32 %v2869, %v4777
        %v5350 = vmul.f32 %v2870, %v4792
        %v5351 = vmul.f32 %v2871, %v4807
        %v5352 = vmul.f32 %v2872, %v4822
        %v5353 = vmul.f32 %v2873, %v4837
        %v5354 = vmul.f32 %v2874, %v4852
        %v5355 = vmul.f32 %v2875, %v4867
        %v5356 = vmul.f32 %v2876, %v4882
        %v5357 = vmul.f32 %v2877, %v4897
        %v5358 = vmul.f32 %v2878, %v4912
        %v5359 = vmul.f32 %v2879, %v4927
        %v5360 = vmul.f32 %v2880, %v4942
        %v5361 = vmul.f32 %v2881, %v4957
        %v5362 = vmul.f32 %v2882, %v4972
        %v5363 = vmul.f32 %v2883, %v4987
        %v5364 = vmul.f32 %v2884, %v5002
        %v5365 = vmul.f32 %v2885, %v5017
        %v5366 = vmul.f32 %v2886, %v5032
        %v5367 = vmul.f32 %v2887, %v5047
        %v5368 = vmul.f32 %v2888, %v5062
        %v5369 = vmul.f32 %v2889, %v5077
        %v5370 = vmul.f32 %v2890, %v5092
        %v5371 = vmul.f32 %v2891, %v5107
        %v5372 = vmul.f32 %v2892, %v5122
        %v5373 = vmul.f32 %v2893, %v5137
        %v5374 = vmul.f32 %v2894, %v5152
        %v5375 = vmul.f32 %v2895, %v5167
        %v5376 = vmul.f32 %v2896, %v5182
        %v5377 = vmul.f32 %v2897, %v5197
        %v5378 = vmul.f32 %v2898, %v5212
        %v5379 = vmul.f32 %v2899, %v5227
        %v5380 = vmul.f32 %v2900, %v5242
        %v5381 = vmul.f32 %v2901, %v5257
        %v5382 = vld [vmem:[%s734] sm:$0xff]
        %v5383 = vld [vmem:[%s734 + $0x8] sm:$0xff]
        %v5384 = vld [vmem:[%s734 + $0x10] sm:$0xff]
        %v5385 = vld [vmem:[%s734 + $0x18] sm:$0xff]
        %v5386 = vld [vmem:[%s734 + $0x20] sm:$0xff]
        %v5387 = vld [vmem:[%s734 + $0x28] sm:$0xff]
        %v5388 = vld [vmem:[%s734 + $0x30] sm:$0xff]
        %v5389 = vld [vmem:[%s734 + $0x38] sm:$0xff]
        %v5390 = vld [vmem:[%s734 + $0x40] sm:$0xff]
        %v5391 = vld [vmem:[%s734 + $0x48] sm:$0xff]
        %v5392 = vld [vmem:[%s734 + $0x50] sm:$0xff]
        %v5393 = vld [vmem:[%s734 + $0x58] sm:$0xff]
        %v5394 = vld [vmem:[%s734 + $0x60] sm:$0xff]
        %v5395 = vld [vmem:[%s734 + $0x68] sm:$0xff]
        %v5396 = vld [vmem:[%s734 + $0x70] sm:$0xff]
        %v5397 = vld [vmem:[%s734 + $0x78] sm:$0xff]
        %v5398 = vld [vmem:[%s737] sm:$0x1]
        %v5400 = vperm.slane %v5398, 0
        %5402 = vmatpush.msra.mxu0 %v5397
        %5403 = vmatpush.msra.mxu0 %v5396
        %5404 = vmatpush.msra.mxu0 %v5395
        %5405 = vmatpush.msra.mxu0 %v5394
        %5406 = vmatpush.msra.mxu0 %v5393
        %5407 = vmatpush.msra.mxu0 %v5392
        %5408 = vmatpush.msra.mxu0 %v5391
        %5409 = vmatpush.msra.mxu0 %v5390
        %5410 = vmatpush.msra.mxu0 %v5389
        %5411 = vmatpush.msra.mxu0 %v5388
        %5412 = vmatpush.msra.mxu0 %v5387
        %5413 = vmatpush.msra.mxu0 %v5386
        %5414 = vmatpush.msra.mxu0 %v5385
        %5415 = vmatpush.msra.mxu0 %v5384
        %5416 = vmatpush.msra.mxu0 %v5383
        %5417 = vmatpush.msra.mxu0 %v5382
        %5418 = vmatmul.f32.gmra.mxu0 %v5258
        %v5419 = vpop.f32.mrf.mxu0
        %v5420 = vadd.f32 %v5400, %v5419
        %5421 = vmatmul.f32.gmra.mxu0 %v5259
        %v5422 = vpop.f32.mrf.mxu0
        %v5423 = vadd.f32 %v5400, %v5422
        %5424 = vmatmul.f32.gmra.mxu0 %v5260
        %v5425 = vpop.f32.mrf.mxu0
        %v5426 = vadd.f32 %v5400, %v5425
        %5427 = vmatmul.f32.gmra.mxu0 %v5261
        %v5428 = vpop.f32.mrf.mxu0
        %v5429 = vadd.f32 %v5400, %v5428
        %5430 = vmatmul.f32.gmra.mxu0 %v5262
        %v5431 = vpop.f32.mrf.mxu0
        %v5432 = vadd.f32 %v5400, %v5431
        %5433 = vmatmul.f32.gmra.mxu0 %v5263
        %v5434 = vpop.f32.mrf.mxu0
        %v5435 = vadd.f32 %v5400, %v5434
        %5436 = vmatmul.f32.gmra.mxu0 %v5264
        %v5437 = vpop.f32.mrf.mxu0
        %v5438 = vadd.f32 %v5400, %v5437
        %5439 = vmatmul.f32.gmra.mxu0 %v5265
        %v5440 = vpop.f32.mrf.mxu0
        %v5441 = vadd.f32 %v5400, %v5440
        %5442 = vmatmul.f32.gmra.mxu0 %v5266
        %v5443 = vpop.f32.mrf.mxu0
        %v5444 = vadd.f32 %v5400, %v5443
        %5445 = vmatmul.f32.gmra.mxu0 %v5267
        %v5446 = vpop.f32.mrf.mxu0
        %v5447 = vadd.f32 %v5400, %v5446
        %5448 = vmatmul.f32.gmra.mxu0 %v5268
        %v5449 = vpop.f32.mrf.mxu0
        %v5450 = vadd.f32 %v5400, %v5449
        %5451 = vmatmul.f32.gmra.mxu0 %v5269
        %v5452 = vpop.f32.mrf.mxu0
        %v5453 = vadd.f32 %v5400, %v5452
        %5454 = vmatmul.f32.gmra.mxu0 %v5270
        %v5455 = vpop.f32.mrf.mxu0
        %v5456 = vadd.f32 %v5400, %v5455
        %5457 = vmatmul.f32.gmra.mxu0 %v5271
        %v5458 = vpop.f32.mrf.mxu0
        %v5459 = vadd.f32 %v5400, %v5458
        %5460 = vmatmul.f32.gmra.mxu0 %v5272
        %v5461 = vpop.f32.mrf.mxu0
        %v5462 = vadd.f32 %v5400, %v5461
        %5463 = vmatmul.f32.gmra.mxu0 %v5273
        %v5464 = vpop.f32.mrf.mxu0
        %v5465 = vadd.f32 %v5400, %v5464
        %5466 = vmatmul.f32.gmra.mxu0 %v5274
        %v5467 = vpop.f32.mrf.mxu0
        %v5468 = vadd.f32 %v5400, %v5467
        %5469 = vmatmul.f32.gmra.mxu0 %v5275
        %v5470 = vpop.f32.mrf.mxu0
        %v5471 = vadd.f32 %v5400, %v5470
        %5472 = vmatmul.f32.gmra.mxu0 %v5276
        %v5473 = vpop.f32.mrf.mxu0
        %v5474 = vadd.f32 %v5400, %v5473
        %5475 = vmatmul.f32.gmra.mxu0 %v5277
        %v5476 = vpop.f32.mrf.mxu0
        %v5477 = vadd.f32 %v5400, %v5476
        %5478 = vmatmul.f32.gmra.mxu0 %v5278
        %v5479 = vpop.f32.mrf.mxu0
        %v5480 = vadd.f32 %v5400, %v5479
        %5481 = vmatmul.f32.gmra.mxu0 %v5279
        %v5482 = vpop.f32.mrf.mxu0
        %v5483 = vadd.f32 %v5400, %v5482
        %5484 = vmatmul.f32.gmra.mxu0 %v5280
        %v5485 = vpop.f32.mrf.mxu0
        %v5486 = vadd.f32 %v5400, %v5485
        %5487 = vmatmul.f32.gmra.mxu0 %v5281
        %v5488 = vpop.f32.mrf.mxu0
        %v5489 = vadd.f32 %v5400, %v5488
        %5490 = vmatmul.f32.gmra.mxu0 %v5282
        %v5491 = vpop.f32.mrf.mxu0
        %v5492 = vadd.f32 %v5400, %v5491
        %5493 = vmatmul.f32.gmra.mxu0 %v5283
        %v5494 = vpop.f32.mrf.mxu0
        %v5495 = vadd.f32 %v5400, %v5494
        %5496 = vmatmul.f32.gmra.mxu0 %v5284
        %v5497 = vpop.f32.mrf.mxu0
        %v5498 = vadd.f32 %v5400, %v5497
        %5499 = vmatmul.f32.gmra.mxu0 %v5285
        %v5500 = vpop.f32.mrf.mxu0
        %v5501 = vadd.f32 %v5400, %v5500
        %5502 = vmatmul.f32.gmra.mxu0 %v5286
        %v5503 = vpop.f32.mrf.mxu0
        %v5504 = vadd.f32 %v5400, %v5503
        %5505 = vmatmul.f32.gmra.mxu0 %v5287
        %v5506 = vpop.f32.mrf.mxu0
        %v5507 = vadd.f32 %v5400, %v5506
        %5508 = vmatmul.f32.gmra.mxu0 %v5288
        %v5509 = vpop.f32.mrf.mxu0
        %v5510 = vadd.f32 %v5400, %v5509
        %5511 = vmatmul.f32.gmra.mxu0 %v5289
        %v5512 = vpop.f32.mrf.mxu0
        %v5513 = vadd.f32 %v5400, %v5512
        %5514 = vmatmul.f32.gmra.mxu0 %v5290
        %v5515 = vpop.f32.mrf.mxu0
        %v5516 = vadd.f32 %v5400, %v5515
        %5517 = vmatmul.f32.gmra.mxu0 %v5291
        %v5518 = vpop.f32.mrf.mxu0
        %v5519 = vadd.f32 %v5400, %v5518
        %5520 = vmatmul.f32.gmra.mxu0 %v5292
        %v5521 = vpop.f32.mrf.mxu0
        %v5522 = vadd.f32 %v5400, %v5521
        %5523 = vmatmul.f32.gmra.mxu0 %v5293
        %v5524 = vpop.f32.mrf.mxu0
        %v5525 = vadd.f32 %v5400, %v5524
        %5526 = vmatmul.f32.gmra.mxu0 %v5294
        %v5527 = vpop.f32.mrf.mxu0
        %v5528 = vadd.f32 %v5400, %v5527
        %5529 = vmatmul.f32.gmra.mxu0 %v5295
        %v5530 = vpop.f32.mrf.mxu0
        %v5531 = vadd.f32 %v5400, %v5530
        %5532 = vmatmul.f32.gmra.mxu0 %v5296
        %v5533 = vpop.f32.mrf.mxu0
        %v5534 = vadd.f32 %v5400, %v5533
        %5535 = vmatmul.f32.gmra.mxu0 %v5297
        %v5536 = vpop.f32.mrf.mxu0
        %v5537 = vadd.f32 %v5400, %v5536
        %5538 = vmatmul.f32.gmra.mxu0 %v5298
        %v5539 = vpop.f32.mrf.mxu0
        %v5540 = vadd.f32 %v5400, %v5539
        %5541 = vmatmul.f32.gmra.mxu0 %v5299
        %v5542 = vpop.f32.mrf.mxu0
        %v5543 = vadd.f32 %v5400, %v5542
        %5544 = vmatmul.f32.gmra.mxu0 %v5300
        %v5545 = vpop.f32.mrf.mxu0
        %v5546 = vadd.f32 %v5400, %v5545
        %5547 = vmatmul.f32.gmra.mxu0 %v5301
        %v5548 = vpop.f32.mrf.mxu0
        %v5549 = vadd.f32 %v5400, %v5548
        %5550 = vmatmul.f32.gmra.mxu0 %v5302
        %v5551 = vpop.f32.mrf.mxu0
        %v5552 = vadd.f32 %v5400, %v5551
        %5553 = vmatmul.f32.gmra.mxu0 %v5303
        %v5554 = vpop.f32.mrf.mxu0
        %v5555 = vadd.f32 %v5400, %v5554
        %5556 = vmatmul.f32.gmra.mxu0 %v5304
        %v5557 = vpop.f32.mrf.mxu0
        %v5558 = vadd.f32 %v5400, %v5557
        %5559 = vmatmul.f32.gmra.mxu0 %v5305
        %v5560 = vpop.f32.mrf.mxu0
        %v5561 = vadd.f32 %v5400, %v5560
        %5562 = vmatmul.f32.gmra.mxu0 %v5306
        %v5563 = vpop.f32.mrf.mxu0
        %v5564 = vadd.f32 %v5400, %v5563
        %5565 = vmatmul.f32.gmra.mxu0 %v5307
        %v5566 = vpop.f32.mrf.mxu0
        %v5567 = vadd.f32 %v5400, %v5566
        %5568 = vmatmul.f32.gmra.mxu0 %v5308
        %v5569 = vpop.f32.mrf.mxu0
        %v5570 = vadd.f32 %v5400, %v5569
        %5571 = vmatmul.f32.gmra.mxu0 %v5309
        %v5572 = vpop.f32.mrf.mxu0
        %v5573 = vadd.f32 %v5400, %v5572
        %5574 = vmatmul.f32.gmra.mxu0 %v5310
        %v5575 = vpop.f32.mrf.mxu0
        %v5576 = vadd.f32 %v5400, %v5575
        %5577 = vmatmul.f32.gmra.mxu0 %v5311
        %v5578 = vpop.f32.mrf.mxu0
        %v5579 = vadd.f32 %v5400, %v5578
        %5580 = vmatmul.f32.gmra.mxu0 %v5312
        %v5581 = vpop.f32.mrf.mxu0
        %v5582 = vadd.f32 %v5400, %v5581
        %5583 = vmatmul.f32.gmra.mxu0 %v5313
        %v5584 = vpop.f32.mrf.mxu0
        %v5585 = vadd.f32 %v5400, %v5584
        %5586 = vmatmul.f32.gmra.mxu0 %v5314
        %v5587 = vpop.f32.mrf.mxu0
        %v5588 = vadd.f32 %v5400, %v5587
        %5589 = vmatmul.f32.gmra.mxu0 %v5315
        %v5590 = vpop.f32.mrf.mxu0
        %v5591 = vadd.f32 %v5400, %v5590
        %5592 = vmatmul.f32.gmra.mxu0 %v5316
        %v5593 = vpop.f32.mrf.mxu0
        %v5594 = vadd.f32 %v5400, %v5593
        %5595 = vmatmul.f32.gmra.mxu0 %v5317
        %v5596 = vpop.f32.mrf.mxu0
        %v5597 = vadd.f32 %v5400, %v5596
        %5598 = vmatmul.f32.gmra.mxu0 %v5318
        %v5599 = vpop.f32.mrf.mxu0
        %v5600 = vadd.f32 %v5400, %v5599
        %5601 = vmatmul.f32.gmra.mxu0 %v5319
        %v5602 = vpop.f32.mrf.mxu0
        %v5603 = vadd.f32 %v5400, %v5602
        %5604 = vmatmul.f32.gmra.mxu0 %v5320
        %v5605 = vpop.f32.mrf.mxu0
        %v5606 = vadd.f32 %v5400, %v5605
        %5607 = vmatmul.f32.gmra.mxu0 %v5321
        %v5608 = vpop.f32.mrf.mxu0
        %v5609 = vadd.f32 %v5400, %v5608
        %5610 = vmatmul.f32.gmra.mxu0 %v5322
        %v5611 = vpop.f32.mrf.mxu0
        %v5612 = vadd.f32 %v5400, %v5611
        %5613 = vmatmul.f32.gmra.mxu0 %v5323
        %v5614 = vpop.f32.mrf.mxu0
        %v5615 = vadd.f32 %v5400, %v5614
        %5616 = vmatmul.f32.gmra.mxu0 %v5324
        %v5617 = vpop.f32.mrf.mxu0
        %v5618 = vadd.f32 %v5400, %v5617
        %5619 = vmatmul.f32.gmra.mxu0 %v5325
        %v5620 = vpop.f32.mrf.mxu0
        %v5621 = vadd.f32 %v5400, %v5620
        %5622 = vmatmul.f32.gmra.mxu0 %v5326
        %v5623 = vpop.f32.mrf.mxu0
        %v5624 = vadd.f32 %v5400, %v5623
        %5625 = vmatmul.f32.gmra.mxu0 %v5327
        %v5626 = vpop.f32.mrf.mxu0
        %v5627 = vadd.f32 %v5400, %v5626
        %5628 = vmatmul.f32.gmra.mxu0 %v5328
        %v5629 = vpop.f32.mrf.mxu0
        %v5630 = vadd.f32 %v5400, %v5629
        %5631 = vmatmul.f32.gmra.mxu0 %v5329
        %v5632 = vpop.f32.mrf.mxu0
        %v5633 = vadd.f32 %v5400, %v5632
        %5634 = vmatmul.f32.gmra.mxu0 %v5330
        %v5635 = vpop.f32.mrf.mxu0
        %v5636 = vadd.f32 %v5400, %v5635
        %5637 = vmatmul.f32.gmra.mxu0 %v5331
        %v5638 = vpop.f32.mrf.mxu0
        %v5639 = vadd.f32 %v5400, %v5638
        %5640 = vmatmul.f32.gmra.mxu0 %v5332
        %v5641 = vpop.f32.mrf.mxu0
        %v5642 = vadd.f32 %v5400, %v5641
        %5643 = vmatmul.f32.gmra.mxu0 %v5333
        %v5644 = vpop.f32.mrf.mxu0
        %v5645 = vadd.f32 %v5400, %v5644
        %5646 = vmatmul.f32.gmra.mxu0 %v5334
        %v5647 = vpop.f32.mrf.mxu0
        %v5648 = vadd.f32 %v5400, %v5647
        %5649 = vmatmul.f32.gmra.mxu0 %v5335
        %v5650 = vpop.f32.mrf.mxu0
        %v5651 = vadd.f32 %v5400, %v5650
        %5652 = vmatmul.f32.gmra.mxu0 %v5336
        %v5653 = vpop.f32.mrf.mxu0
        %v5654 = vadd.f32 %v5400, %v5653
        %5655 = vmatmul.f32.gmra.mxu0 %v5337
        %v5656 = vpop.f32.mrf.mxu0
        %v5657 = vadd.f32 %v5400, %v5656
        %5658 = vmatmul.f32.gmra.mxu0 %v5338
        %v5659 = vpop.f32.mrf.mxu0
        %v5660 = vadd.f32 %v5400, %v5659
        %5661 = vmatmul.f32.gmra.mxu0 %v5339
        %v5662 = vpop.f32.mrf.mxu0
        %v5663 = vadd.f32 %v5400, %v5662
        %5664 = vmatmul.f32.gmra.mxu0 %v5340
        %v5665 = vpop.f32.mrf.mxu0
        %v5666 = vadd.f32 %v5400, %v5665
        %5667 = vmatmul.f32.gmra.mxu0 %v5341
        %v5668 = vpop.f32.mrf.mxu0
        %v5669 = vadd.f32 %v5400, %v5668
        %5670 = vmatmul.f32.gmra.mxu0 %v5342
        %v5671 = vpop.f32.mrf.mxu0
        %v5672 = vadd.f32 %v5400, %v5671
        %5673 = vmatmul.f32.gmra.mxu0 %v5343
        %v5674 = vpop.f32.mrf.mxu0
        %v5675 = vadd.f32 %v5400, %v5674
        %5676 = vmatmul.f32.gmra.mxu0 %v5344
        %v5677 = vpop.f32.mrf.mxu0
        %v5678 = vadd.f32 %v5400, %v5677
        %5679 = vmatmul.f32.gmra.mxu0 %v5345
        %v5680 = vpop.f32.mrf.mxu0
        %v5681 = vadd.f32 %v5400, %v5680
        %5682 = vmatmul.f32.gmra.mxu0 %v5346
        %v5683 = vpop.f32.mrf.mxu0
        %v5684 = vadd.f32 %v5400, %v5683
        %5685 = vmatmul.f32.gmra.mxu0 %v5347
        %v5686 = vpop.f32.mrf.mxu0
        %v5687 = vadd.f32 %v5400, %v5686
        %5688 = vmatmul.f32.gmra.mxu0 %v5348
        %v5689 = vpop.f32.mrf.mxu0
        %v5690 = vadd.f32 %v5400, %v5689
        %5691 = vmatmul.f32.gmra.mxu0 %v5349
        %v5692 = vpop.f32.mrf.mxu0
        %v5693 = vadd.f32 %v5400, %v5692
        %5694 = vmatmul.f32.gmra.mxu0 %v5350
        %v5695 = vpop.f32.mrf.mxu0
        %v5696 = vadd.f32 %v5400, %v5695
        %5697 = vmatmul.f32.gmra.mxu0 %v5351
        %v5698 = vpop.f32.mrf.mxu0
        %v5699 = vadd.f32 %v5400, %v5698
        %5700 = vmatmul.f32.gmra.mxu0 %v5352
        %v5701 = vpop.f32.mrf.mxu0
        %v5702 = vadd.f32 %v5400, %v5701
        %5703 = vmatmul.f32.gmra.mxu0 %v5353
        %v5704 = vpop.f32.mrf.mxu0
        %v5705 = vadd.f32 %v5400, %v5704
        %5706 = vmatmul.f32.gmra.mxu0 %v5354
        %v5707 = vpop.f32.mrf.mxu0
        %v5708 = vadd.f32 %v5400, %v5707
        %5709 = vmatmul.f32.gmra.mxu0 %v5355
        %v5710 = vpop.f32.mrf.mxu0
        %v5711 = vadd.f32 %v5400, %v5710
        %5712 = vmatmul.f32.gmra.mxu0 %v5356
        %v5713 = vpop.f32.mrf.mxu0
        %v5714 = vadd.f32 %v5400, %v5713
        %5715 = vmatmul.f32.gmra.mxu0 %v5357
        %v5716 = vpop.f32.mrf.mxu0
        %v5717 = vadd.f32 %v5400, %v5716
        %5718 = vmatmul.f32.gmra.mxu0 %v5358
        %v5719 = vpop.f32.mrf.mxu0
        %v5720 = vadd.f32 %v5400, %v5719
        %5721 = vmatmul.f32.gmra.mxu0 %v5359
        %v5722 = vpop.f32.mrf.mxu0
        %v5723 = vadd.f32 %v5400, %v5722
        %5724 = vmatmul.f32.gmra.mxu0 %v5360
        %v5725 = vpop.f32.mrf.mxu0
        %v5726 = vadd.f32 %v5400, %v5725
        %5727 = vmatmul.f32.gmra.mxu0 %v5361
        %v5728 = vpop.f32.mrf.mxu0
        %v5729 = vadd.f32 %v5400, %v5728
        %5730 = vmatmul.f32.gmra.mxu0 %v5362
        %v5731 = vpop.f32.mrf.mxu0
        %v5732 = vadd.f32 %v5400, %v5731
        %5733 = vmatmul.f32.gmra.mxu0 %v5363
        %v5734 = vpop.f32.mrf.mxu0
        %v5735 = vadd.f32 %v5400, %v5734
        %5736 = vmatmul.f32.gmra.mxu0 %v5364
        %v5737 = vpop.f32.mrf.mxu0
        %v5738 = vadd.f32 %v5400, %v5737
        %5739 = vmatmul.f32.gmra.mxu0 %v5365
        %v5740 = vpop.f32.mrf.mxu0
        %v5741 = vadd.f32 %v5400, %v5740
        %5742 = vmatmul.f32.gmra.mxu0 %v5366
        %v5743 = vpop.f32.mrf.mxu0
        %v5744 = vadd.f32 %v5400, %v5743
        %5745 = vmatmul.f32.gmra.mxu0 %v5367
        %v5746 = vpop.f32.mrf.mxu0
        %v5747 = vadd.f32 %v5400, %v5746
        %5748 = vmatmul.f32.gmra.mxu0 %v5368
        %v5749 = vpop.f32.mrf.mxu0
        %v5750 = vadd.f32 %v5400, %v5749
        %5751 = vmatmul.f32.gmra.mxu0 %v5369
        %v5752 = vpop.f32.mrf.mxu0
        %v5753 = vadd.f32 %v5400, %v5752
        %5754 = vmatmul.f32.gmra.mxu0 %v5370
        %v5755 = vpop.f32.mrf.mxu0
        %v5756 = vadd.f32 %v5400, %v5755
        %5757 = vmatmul.f32.gmra.mxu0 %v5371
        %v5758 = vpop.f32.mrf.mxu0
        %v5759 = vadd.f32 %v5400, %v5758
        %5760 = vmatmul.f32.gmra.mxu0 %v5372
        %v5761 = vpop.f32.mrf.mxu0
        %v5762 = vadd.f32 %v5400, %v5761
        %5763 = vmatmul.f32.gmra.mxu0 %v5373
        %v5764 = vpop.f32.mrf.mxu0
        %v5765 = vadd.f32 %v5400, %v5764
        %5766 = vmatmul.f32.gmra.mxu0 %v5374
        %v5767 = vpop.f32.mrf.mxu0
        %v5768 = vadd.f32 %v5400, %v5767
        %5769 = vmatmul.f32.gmra.mxu0 %v5375
        %v5770 = vpop.f32.mrf.mxu0
        %v5771 = vadd.f32 %v5400, %v5770
        %5772 = vmatmul.f32.gmra.mxu0 %v5376
        %v5773 = vpop.f32.mrf.mxu0
        %v5774 = vadd.f32 %v5400, %v5773
        %5775 = vmatmul.f32.gmra.mxu0 %v5377
        %v5776 = vpop.f32.mrf.mxu0
        %v5777 = vadd.f32 %v5400, %v5776
        %5778 = vmatmul.f32.gmra.mxu0 %v5378
        %v5779 = vpop.f32.mrf.mxu0
        %v5780 = vadd.f32 %v5400, %v5779
        %5781 = vmatmul.f32.gmra.mxu0 %v5379
        %v5782 = vpop.f32.mrf.mxu0
        %v5783 = vadd.f32 %v5400, %v5782
        %5784 = vmatmul.f32.gmra.mxu0 %v5380
        %v5785 = vpop.f32.mrf.mxu0
        %v5786 = vadd.f32 %v5400, %v5785
        %5787 = vmatmul.f32.gmra.mxu0 %v5381
        %v5788 = vpop.f32.mrf.mxu0
        %v5789 = vadd.f32 %v5400, %v5788
        %5790 = vdwg.mxu0
        %v5791 = vxor.u32 %v5420, 2147483648
        %v5792 = vxor.u32 %v5423, 2147483648
        %v5793 = vxor.u32 %v5426, 2147483648
        %v5794 = vxor.u32 %v5429, 2147483648
        %v5795 = vxor.u32 %v5432, 2147483648
        %v5796 = vxor.u32 %v5435, 2147483648
        %v5797 = vxor.u32 %v5438, 2147483648
        %v5798 = vxor.u32 %v5441, 2147483648
        %v5799 = vxor.u32 %v5444, 2147483648
        %v5800 = vxor.u32 %v5447, 2147483648
        %v5801 = vxor.u32 %v5450, 2147483648
        %v5802 = vxor.u32 %v5453, 2147483648
        %v5803 = vxor.u32 %v5456, 2147483648
        %v5804 = vxor.u32 %v5459, 2147483648
        %v5805 = vxor.u32 %v5462, 2147483648
        %v5806 = vxor.u32 %v5465, 2147483648
        %v5807 = vxor.u32 %v5468, 2147483648
        %v5808 = vxor.u32 %v5471, 2147483648
        %v5809 = vxor.u32 %v5474, 2147483648
        %v5810 = vxor.u32 %v5477, 2147483648
        %v5811 = vxor.u32 %v5480, 2147483648
        %v5812 = vxor.u32 %v5483, 2147483648
        %v5813 = vxor.u32 %v5486, 2147483648
        %v5814 = vxor.u32 %v5489, 2147483648
        %v5815 = vxor.u32 %v5492, 2147483648
        %v5816 = vxor.u32 %v5495, 2147483648
        %v5817 = vxor.u32 %v5498, 2147483648
        %v5818 = vxor.u32 %v5501, 2147483648
        %v5819 = vxor.u32 %v5504, 2147483648
        %v5820 = vxor.u32 %v5507, 2147483648
        %v5821 = vxor.u32 %v5510, 2147483648
        %v5822 = vxor.u32 %v5513, 2147483648
        %v5823 = vxor.u32 %v5516, 2147483648
        %v5824 = vxor.u32 %v5519, 2147483648
        %v5825 = vxor.u32 %v5522, 2147483648
        %v5826 = vxor.u32 %v5525, 2147483648
        %v5827 = vxor.u32 %v5528, 2147483648
        %v5828 = vxor.u32 %v5531, 2147483648
        %v5829 = vxor.u32 %v5534, 2147483648
        %v5830 = vxor.u32 %v5537, 2147483648
        %v5831 = vxor.u32 %v5540, 2147483648
        %v5832 = vxor.u32 %v5543, 2147483648
        %v5833 = vxor.u32 %v5546, 2147483648
        %v5834 = vxor.u32 %v5549, 2147483648
        %v5835 = vxor.u32 %v5552, 2147483648
        %v5836 = vxor.u32 %v5555, 2147483648
        %v5837 = vxor.u32 %v5558, 2147483648
        %v5838 = vxor.u32 %v5561, 2147483648
        %v5839 = vxor.u32 %v5564, 2147483648
        %v5840 = vxor.u32 %v5567, 2147483648
        %v5841 = vxor.u32 %v5570, 2147483648
        %v5842 = vxor.u32 %v5573, 2147483648
        %v5843 = vxor.u32 %v5576, 2147483648
        %v5844 = vxor.u32 %v5579, 2147483648
        %v5845 = vxor.u32 %v5582, 2147483648
        %v5846 = vxor.u32 %v5585, 2147483648
        %v5847 = vxor.u32 %v5588, 2147483648
        %v5848 = vxor.u32 %v5591, 2147483648
        %v5849 = vxor.u32 %v5594, 2147483648
        %v5850 = vxor.u32 %v5597, 2147483648
        %v5851 = vxor.u32 %v5600, 2147483648
        %v5852 = vxor.u32 %v5603, 2147483648
        %v5853 = vxor.u32 %v5606, 2147483648
        %v5854 = vxor.u32 %v5609, 2147483648
        %v5855 = vxor.u32 %v5612, 2147483648
        %v5856 = vxor.u32 %v5615, 2147483648
        %v5857 = vxor.u32 %v5618, 2147483648
        %v5858 = vxor.u32 %v5621, 2147483648
        %v5859 = vxor.u32 %v5624, 2147483648
        %v5860 = vxor.u32 %v5627, 2147483648
        %v5861 = vxor.u32 %v5630, 2147483648
        %v5862 = vxor.u32 %v5633, 2147483648
        %v5863 = vxor.u32 %v5636, 2147483648
        %v5864 = vxor.u32 %v5639, 2147483648
        %v5865 = vxor.u32 %v5642, 2147483648
        %v5866 = vxor.u32 %v5645, 2147483648
        %v5867 = vxor.u32 %v5648, 2147483648
        %v5868 = vxor.u32 %v5651, 2147483648
        %v5869 = vxor.u32 %v5654, 2147483648
        %v5870 = vxor.u32 %v5657, 2147483648
        %v5871 = vxor.u32 %v5660, 2147483648
        %v5872 = vxor.u32 %v5663, 2147483648
        %v5873 = vxor.u32 %v5666, 2147483648
        %v5874 = vxor.u32 %v5669, 2147483648
        %v5875 = vxor.u32 %v5672, 2147483648
        %v5876 = vxor.u32 %v5675, 2147483648
        %v5877 = vxor.u32 %v5678, 2147483648
        %v5878 = vxor.u32 %v5681, 2147483648
        %v5879 = vxor.u32 %v5684, 2147483648
        %v5880 = vxor.u32 %v5687, 2147483648
        %v5881 = vxor.u32 %v5690, 2147483648
        %v5882 = vxor.u32 %v5693, 2147483648
        %v5883 = vxor.u32 %v5696, 2147483648
        %v5884 = vxor.u32 %v5699, 2147483648
        %v5885 = vxor.u32 %v5702, 2147483648
        %v5886 = vxor.u32 %v5705, 2147483648
        %v5887 = vxor.u32 %v5708, 2147483648
        %v5888 = vxor.u32 %v5711, 2147483648
        %v5889 = vxor.u32 %v5714, 2147483648
        %v5890 = vxor.u32 %v5717, 2147483648
        %v5891 = vxor.u32 %v5720, 2147483648
        %v5892 = vxor.u32 %v5723, 2147483648
        %v5893 = vxor.u32 %v5726, 2147483648
        %v5894 = vxor.u32 %v5729, 2147483648
        %v5895 = vxor.u32 %v5732, 2147483648
        %v5896 = vxor.u32 %v5735, 2147483648
        %v5897 = vxor.u32 %v5738, 2147483648
        %v5898 = vxor.u32 %v5741, 2147483648
        %v5899 = vxor.u32 %v5744, 2147483648
        %v5900 = vxor.u32 %v5747, 2147483648
        %v5901 = vxor.u32 %v5750, 2147483648
        %v5902 = vxor.u32 %v5753, 2147483648
        %v5903 = vxor.u32 %v5756, 2147483648
        %v5904 = vxor.u32 %v5759, 2147483648
        %v5905 = vxor.u32 %v5762, 2147483648
        %v5906 = vxor.u32 %v5765, 2147483648
        %v5907 = vxor.u32 %v5768, 2147483648
        %v5908 = vxor.u32 %v5771, 2147483648
        %v5909 = vxor.u32 %v5774, 2147483648
        %v5910 = vxor.u32 %v5777, 2147483648
        %v5911 = vxor.u32 %v5780, 2147483648
        %v5912 = vxor.u32 %v5783, 2147483648
        %v5913 = vxor.u32 %v5786, 2147483648
        %v5914 = vxor.u32 %v5789, 2147483648
        %v5915 = vmul.f32 %v5791, 1.442695
        %v5916 = vpow.pop %v5915
        %v5917 = vmul.f32 %v5792, 1.442695
        %v5918 = vpow.pop %v5917
        %v5919 = vmul.f32 %v5793, 1.442695
        %v5920 = vpow.pop %v5919
        %v5921 = vmul.f32 %v5794, 1.442695
        %v5922 = vpow.pop %v5921
        %v5923 = vmul.f32 %v5795, 1.442695
        %v5924 = vpow.pop %v5923
        %v5925 = vmul.f32 %v5796, 1.442695
        %v5926 = vpow.pop %v5925
        %v5927 = vmul.f32 %v5797, 1.442695
        %v5928 = vpow.pop %v5927
        %v5929 = vmul.f32 %v5798, 1.442695
        %v5930 = vpow.pop %v5929
        %v5931 = vmul.f32 %v5799, 1.442695
        %v5932 = vpow.pop %v5931
        %v5933 = vmul.f32 %v5800, 1.442695
        %v5934 = vpow.pop %v5933
        %v5935 = vmul.f32 %v5801, 1.442695
        %v5936 = vpow.pop %v5935
        %v5937 = vmul.f32 %v5802, 1.442695
        %v5938 = vpow.pop %v5937
        %v5939 = vmul.f32 %v5803, 1.442695
        %v5940 = vpow.pop %v5939
        %v5941 = vmul.f32 %v5804, 1.442695
        %v5942 = vpow.pop %v5941
        %v5943 = vmul.f32 %v5805, 1.442695
        %v5944 = vpow.pop %v5943
        %v5945 = vmul.f32 %v5806, 1.442695
        %v5946 = vpow.pop %v5945
        %v5947 = vmul.f32 %v5807, 1.442695
        %v5948 = vpow.pop %v5947
        %v5949 = vmul.f32 %v5808, 1.442695
        %v5950 = vpow.pop %v5949
        %v5951 = vmul.f32 %v5809, 1.442695
        %v5952 = vpow.pop %v5951
        %v5953 = vmul.f32 %v5810, 1.442695
        %v5954 = vpow.pop %v5953
        %v5955 = vmul.f32 %v5811, 1.442695
        %v5956 = vpow.pop %v5955
        %v5957 = vmul.f32 %v5812, 1.442695
        %v5958 = vpow.pop %v5957
        %v5959 = vmul.f32 %v5813, 1.442695
        %v5960 = vpow.pop %v5959
        %v5961 = vmul.f32 %v5814, 1.442695
        %v5962 = vpow.pop %v5961
        %v5963 = vmul.f32 %v5815, 1.442695
        %v5964 = vpow.pop %v5963
        %v5965 = vmul.f32 %v5816, 1.442695
        %v5966 = vpow.pop %v5965
        %v5967 = vmul.f32 %v5817, 1.442695
        %v5968 = vpow.pop %v5967
        %v5969 = vmul.f32 %v5818, 1.442695
        %v5970 = vpow.pop %v5969
        %v5971 = vmul.f32 %v5819, 1.442695
        %v5972 = vpow.pop %v5971
        %v5973 = vmul.f32 %v5820, 1.442695
        %v5974 = vpow.pop %v5973
        %v5975 = vmul.f32 %v5821, 1.442695
        %v5976 = vpow.pop %v5975
        %v5977 = vmul.f32 %v5822, 1.442695
        %v5978 = vpow.pop %v5977
        %v5979 = vmul.f32 %v5823, 1.442695
        %v5980 = vpow.pop %v5979
        %v5981 = vmul.f32 %v5824, 1.442695
        %v5982 = vpow.pop %v5981
        %v5983 = vmul.f32 %v5825, 1.442695
        %v5984 = vpow.pop %v5983
        %v5985 = vmul.f32 %v5826, 1.442695
        %v5986 = vpow.pop %v5985
        %v5987 = vmul.f32 %v5827, 1.442695
        %v5988 = vpow.pop %v5987
        %v5989 = vmul.f32 %v5828, 1.442695
        %v5990 = vpow.pop %v5989
        %v5991 = vmul.f32 %v5829, 1.442695
        %v5992 = vpow.pop %v5991
        %v5993 = vmul.f32 %v5830, 1.442695
        %v5994 = vpow.pop %v5993
        %v5995 = vmul.f32 %v5831, 1.442695
        %v5996 = vpow.pop %v5995
        %v5997 = vmul.f32 %v5832, 1.442695
        %v5998 = vpow.pop %v5997
        %v5999 = vmul.f32 %v5833, 1.442695
        %v6000 = vpow.pop %v5999
        %v6001 = vmul.f32 %v5834, 1.442695
        %v6002 = vpow.pop %v6001
        %v6003 = vmul.f32 %v5835, 1.442695
        %v6004 = vpow.pop %v6003
        %v6005 = vmul.f32 %v5836, 1.442695
        %v6006 = vpow.pop %v6005
        %v6007 = vmul.f32 %v5837, 1.442695
        %v6008 = vpow.pop %v6007
        %v6009 = vmul.f32 %v5838, 1.442695
        %v6010 = vpow.pop %v6009
        %v6011 = vmul.f32 %v5839, 1.442695
        %v6012 = vpow.pop %v6011
        %v6013 = vmul.f32 %v5840, 1.442695
        %v6014 = vpow.pop %v6013
        %v6015 = vmul.f32 %v5841, 1.442695
        %v6016 = vpow.pop %v6015
        %v6017 = vmul.f32 %v5842, 1.442695
        %v6018 = vpow.pop %v6017
        %v6019 = vmul.f32 %v5843, 1.442695
        %v6020 = vpow.pop %v6019
        %v6021 = vmul.f32 %v5844, 1.442695
        %v6022 = vpow.pop %v6021
        %v6023 = vmul.f32 %v5845, 1.442695
        %v6024 = vpow.pop %v6023
        %v6025 = vmul.f32 %v5846, 1.442695
        %v6026 = vpow.pop %v6025
        %v6027 = vmul.f32 %v5847, 1.442695
        %v6028 = vpow.pop %v6027
        %v6029 = vmul.f32 %v5848, 1.442695
        %v6030 = vpow.pop %v6029
        %v6031 = vmul.f32 %v5849, 1.442695
        %v6032 = vpow.pop %v6031
        %v6033 = vmul.f32 %v5850, 1.442695
        %v6034 = vpow.pop %v6033
        %v6035 = vmul.f32 %v5851, 1.442695
        %v6036 = vpow.pop %v6035
        %v6037 = vmul.f32 %v5852, 1.442695
        %v6038 = vpow.pop %v6037
        %v6039 = vmul.f32 %v5853, 1.442695
        %v6040 = vpow.pop %v6039
        %v6041 = vmul.f32 %v5854, 1.442695
        %v6042 = vpow.pop %v6041
        %v6043 = vmul.f32 %v5855, 1.442695
        %v6044 = vpow.pop %v6043
        %v6045 = vmul.f32 %v5856, 1.442695
        %v6046 = vpow.pop %v6045
        %v6047 = vmul.f32 %v5857, 1.442695
        %v6048 = vpow.pop %v6047
        %v6049 = vmul.f32 %v5858, 1.442695
        %v6050 = vpow.pop %v6049
        %v6051 = vmul.f32 %v5859, 1.442695
        %v6052 = vpow.pop %v6051
        %v6053 = vmul.f32 %v5860, 1.442695
        %v6054 = vpow.pop %v6053
        %v6055 = vmul.f32 %v5861, 1.442695
        %v6056 = vpow.pop %v6055
        %v6057 = vmul.f32 %v5862, 1.442695
        %v6058 = vpow.pop %v6057
        %v6059 = vmul.f32 %v5863, 1.442695
        %v6060 = vpow.pop %v6059
        %v6061 = vmul.f32 %v5864, 1.442695
        %v6062 = vpow.pop %v6061
        %v6063 = vmul.f32 %v5865, 1.442695
        %v6064 = vpow.pop %v6063
        %v6065 = vmul.f32 %v5866, 1.442695
        %v6066 = vpow.pop %v6065
        %v6067 = vmul.f32 %v5867, 1.442695
        %v6068 = vpow.pop %v6067
        %v6069 = vmul.f32 %v5868, 1.442695
        %v6070 = vpow.pop %v6069
        %v6071 = vmul.f32 %v5869, 1.442695
        %v6072 = vpow.pop %v6071
        %v6073 = vmul.f32 %v5870, 1.442695
        %v6074 = vpow.pop %v6073
        %v6075 = vmul.f32 %v5871, 1.442695
        %v6076 = vpow.pop %v6075
        %v6077 = vmul.f32 %v5872, 1.442695
        %v6078 = vpow.pop %v6077
        %v6079 = vmul.f32 %v5873, 1.442695
        %v6080 = vpow.pop %v6079
        %v6081 = vmul.f32 %v5874, 1.442695
        %v6082 = vpow.pop %v6081
        %v6083 = vmul.f32 %v5875, 1.442695
        %v6084 = vpow.pop %v6083
        %v6085 = vmul.f32 %v5876, 1.442695
        %v6086 = vpow.pop %v6085
        %v6087 = vmul.f32 %v5877, 1.442695
        %v6088 = vpow.pop %v6087
        %v6089 = vmul.f32 %v5878, 1.442695
        %v6090 = vpow.pop %v6089
        %v6091 = vmul.f32 %v5879, 1.442695
        %v6092 = vpow.pop %v6091
        %v6093 = vmul.f32 %v5880, 1.442695
        %v6094 = vpow.pop %v6093
        %v6095 = vmul.f32 %v5881, 1.442695
        %v6096 = vpow.pop %v6095
        %v6097 = vmul.f32 %v5882, 1.442695
        %v6098 = vpow.pop %v6097
        %v6099 = vmul.f32 %v5883, 1.442695
        %v6100 = vpow.pop %v6099
        %v6101 = vmul.f32 %v5884, 1.442695
        %v6102 = vpow.pop %v6101
        %v6103 = vmul.f32 %v5885, 1.442695
        %v6104 = vpow.pop %v6103
        %v6105 = vmul.f32 %v5886, 1.442695
        %v6106 = vpow.pop %v6105
        %v6107 = vmul.f32 %v5887, 1.442695
        %v6108 = vpow.pop %v6107
        %v6109 = vmul.f32 %v5888, 1.442695
        %v6110 = vpow.pop %v6109
        %v6111 = vmul.f32 %v5889, 1.442695
        %v6112 = vpow.pop %v6111
        %v6113 = vmul.f32 %v5890, 1.442695
        %v6114 = vpow.pop %v6113
        %v6115 = vmul.f32 %v5891, 1.442695
        %v6116 = vpow.pop %v6115
        %v6117 = vmul.f32 %v5892, 1.442695
        %v6118 = vpow.pop %v6117
        %v6119 = vmul.f32 %v5893, 1.442695
        %v6120 = vpow.pop %v6119
        %v6121 = vmul.f32 %v5894, 1.442695
        %v6122 = vpow.pop %v6121
        %v6123 = vmul.f32 %v5895, 1.442695
        %v6124 = vpow.pop %v6123
        %v6125 = vmul.f32 %v5896, 1.442695
        %v6126 = vpow.pop %v6125
        %v6127 = vmul.f32 %v5897, 1.442695
        %v6128 = vpow.pop %v6127
        %v6129 = vmul.f32 %v5898, 1.442695
        %v6130 = vpow.pop %v6129
        %v6131 = vmul.f32 %v5899, 1.442695
        %v6132 = vpow.pop %v6131
        %v6133 = vmul.f32 %v5900, 1.442695
        %v6134 = vpow.pop %v6133
        %v6135 = vmul.f32 %v5901, 1.442695
        %v6136 = vpow.pop %v6135
        %v6137 = vmul.f32 %v5902, 1.442695
        %v6138 = vpow.pop %v6137
        %v6139 = vmul.f32 %v5903, 1.442695
        %v6140 = vpow.pop %v6139
        %v6141 = vmul.f32 %v5904, 1.442695
        %v6142 = vpow.pop %v6141
        %v6143 = vmul.f32 %v5905, 1.442695
        %v6144 = vpow.pop %v6143
        %v6145 = vmul.f32 %v5906, 1.442695
        %v6146 = vpow.pop %v6145
        %v6147 = vmul.f32 %v5907, 1.442695
        %v6148 = vpow.pop %v6147
        %v6149 = vmul.f32 %v5908, 1.442695
        %v6150 = vpow.pop %v6149
        %v6151 = vmul.f32 %v5909, 1.442695
        %v6152 = vpow.pop %v6151
        %v6153 = vmul.f32 %v5910, 1.442695
        %v6154 = vpow.pop %v6153
        %v6155 = vmul.f32 %v5911, 1.442695
        %v6156 = vpow.pop %v6155
        %v6157 = vmul.f32 %v5912, 1.442695
        %v6158 = vpow.pop %v6157
        %v6159 = vmul.f32 %v5913, 1.442695
        %v6160 = vpow.pop %v6159
        %v6161 = vmul.f32 %v5914, 1.442695
        %v6162 = vpow.pop %v6161
        %v6163 = vadd.f32 %v5916, 1.0
        %v6164 = vadd.f32 %v5918, 1.0
        %v6165 = vadd.f32 %v5920, 1.0
        %v6166 = vadd.f32 %v5922, 1.0
        %v6167 = vadd.f32 %v5924, 1.0
        %v6168 = vadd.f32 %v5926, 1.0
        %v6169 = vadd.f32 %v5928, 1.0
        %v6170 = vadd.f32 %v5930, 1.0
        %v6171 = vadd.f32 %v5932, 1.0
        %v6172 = vadd.f32 %v5934, 1.0
        %v6173 = vadd.f32 %v5936, 1.0
        %v6174 = vadd.f32 %v5938, 1.0
        %v6175 = vadd.f32 %v5940, 1.0
        %v6176 = vadd.f32 %v5942, 1.0
        %v6177 = vadd.f32 %v5944, 1.0
        %v6178 = vadd.f32 %v5946, 1.0
        %v6179 = vadd.f32 %v5948, 1.0
        %v6180 = vadd.f32 %v5950, 1.0
        %v6181 = vadd.f32 %v5952, 1.0
        %v6182 = vadd.f32 %v5954, 1.0
        %v6183 = vadd.f32 %v5956, 1.0
        %v6184 = vadd.f32 %v5958, 1.0
        %v6185 = vadd.f32 %v5960, 1.0
        %v6186 = vadd.f32 %v5962, 1.0
        %v6187 = vadd.f32 %v5964, 1.0
        %v6188 = vadd.f32 %v5966, 1.0
        %v6189 = vadd.f32 %v5968, 1.0
        %v6190 = vadd.f32 %v5970, 1.0
        %v6191 = vadd.f32 %v5972, 1.0
        %v6192 = vadd.f32 %v5974, 1.0
        %v6193 = vadd.f32 %v5976, 1.0
        %v6194 = vadd.f32 %v5978, 1.0
        %v6195 = vadd.f32 %v5980, 1.0
        %v6196 = vadd.f32 %v5982, 1.0
        %v6197 = vadd.f32 %v5984, 1.0
        %v6198 = vadd.f32 %v5986, 1.0
        %v6199 = vadd.f32 %v5988, 1.0
        %v6200 = vadd.f32 %v5990, 1.0
        %v6201 = vadd.f32 %v5992, 1.0
        %v6202 = vadd.f32 %v5994, 1.0
        %v6203 = vadd.f32 %v5996, 1.0
        %v6204 = vadd.f32 %v5998, 1.0
        %v6205 = vadd.f32 %v6000, 1.0
        %v6206 = vadd.f32 %v6002, 1.0
        %v6207 = vadd.f32 %v6004, 1.0
        %v6208 = vadd.f32 %v6006, 1.0
        %v6209 = vadd.f32 %v6008, 1.0
        %v6210 = vadd.f32 %v6010, 1.0
        %v6211 = vadd.f32 %v6012, 1.0
        %v6212 = vadd.f32 %v6014, 1.0
        %v6213 = vadd.f32 %v6016, 1.0
        %v6214 = vadd.f32 %v6018, 1.0
        %v6215 = vadd.f32 %v6020, 1.0
        %v6216 = vadd.f32 %v6022, 1.0
        %v6217 = vadd.f32 %v6024, 1.0
        %v6218 = vadd.f32 %v6026, 1.0
        %v6219 = vadd.f32 %v6028, 1.0
        %v6220 = vadd.f32 %v6030, 1.0
        %v6221 = vadd.f32 %v6032, 1.0
        %v6222 = vadd.f32 %v6034, 1.0
        %v6223 = vadd.f32 %v6036, 1.0
        %v6224 = vadd.f32 %v6038, 1.0
        %v6225 = vadd.f32 %v6040, 1.0
        %v6226 = vadd.f32 %v6042, 1.0
        %v6227 = vadd.f32 %v6044, 1.0
        %v6228 = vadd.f32 %v6046, 1.0
        %v6229 = vadd.f32 %v6048, 1.0
        %v6230 = vadd.f32 %v6050, 1.0
        %v6231 = vadd.f32 %v6052, 1.0
        %v6232 = vadd.f32 %v6054, 1.0
        %v6233 = vadd.f32 %v6056, 1.0
        %v6234 = vadd.f32 %v6058, 1.0
        %v6235 = vadd.f32 %v6060, 1.0
        %v6236 = vadd.f32 %v6062, 1.0
        %v6237 = vadd.f32 %v6064, 1.0
        %v6238 = vadd.f32 %v6066, 1.0
        %v6239 = vadd.f32 %v6068, 1.0
        %v6240 = vadd.f32 %v6070, 1.0
        %v6241 = vadd.f32 %v6072, 1.0
        %v6242 = vadd.f32 %v6074, 1.0
        %v6243 = vadd.f32 %v6076, 1.0
        %v6244 = vadd.f32 %v6078, 1.0
        %v6245 = vadd.f32 %v6080, 1.0
        %v6246 = vadd.f32 %v6082, 1.0
        %v6247 = vadd.f32 %v6084, 1.0
        %v6248 = vadd.f32 %v6086, 1.0
        %v6249 = vadd.f32 %v6088, 1.0
        %v6250 = vadd.f32 %v6090, 1.0
        %v6251 = vadd.f32 %v6092, 1.0
        %v6252 = vadd.f32 %v6094, 1.0
        %v6253 = vadd.f32 %v6096, 1.0
        %v6254 = vadd.f32 %v6098, 1.0
        %v6255 = vadd.f32 %v6100, 1.0
        %v6256 = vadd.f32 %v6102, 1.0
        %v6257 = vadd.f32 %v6104, 1.0
        %v6258 = vadd.f32 %v6106, 1.0
        %v6259 = vadd.f32 %v6108, 1.0
        %v6260 = vadd.f32 %v6110, 1.0
        %v6261 = vadd.f32 %v6112, 1.0
        %v6262 = vadd.f32 %v6114, 1.0
        %v6263 = vadd.f32 %v6116, 1.0
        %v6264 = vadd.f32 %v6118, 1.0
        %v6265 = vadd.f32 %v6120, 1.0
        %v6266 = vadd.f32 %v6122, 1.0
        %v6267 = vadd.f32 %v6124, 1.0
        %v6268 = vadd.f32 %v6126, 1.0
        %v6269 = vadd.f32 %v6128, 1.0
        %v6270 = vadd.f32 %v6130, 1.0
        %v6271 = vadd.f32 %v6132, 1.0
        %v6272 = vadd.f32 %v6134, 1.0
        %v6273 = vadd.f32 %v6136, 1.0
        %v6274 = vadd.f32 %v6138, 1.0
        %v6275 = vadd.f32 %v6140, 1.0
        %v6276 = vadd.f32 %v6142, 1.0
        %v6277 = vadd.f32 %v6144, 1.0
        %v6278 = vadd.f32 %v6146, 1.0
        %v6279 = vadd.f32 %v6148, 1.0
        %v6280 = vadd.f32 %v6150, 1.0
        %v6281 = vadd.f32 %v6152, 1.0
        %v6282 = vadd.f32 %v6154, 1.0
        %v6283 = vadd.f32 %v6156, 1.0
        %v6284 = vadd.f32 %v6158, 1.0
        %v6285 = vadd.f32 %v6160, 1.0
        %v6286 = vadd.f32 %v6162, 1.0
        %v6287 = vrcp.pop %v6163
        %v6288 = vmul.f32 %v6163, %v6287
        %v6289 = vsub.f32 1.0, %v6288
        %v6290 = vmul.f32 %v6287, %v6289
        %v6291 = vadd.f32 %v6287, %v6290
        %vm6292 = vweird.f32 %v6163
        %vm6293 = vweird.f32 %v6287
        %vm6294 = vmor %vm6292, %vm6293
        %v6295 = vsel %vm6294, %v6287, %v6291
        %v6296 = vand.u32 2147483647, %v6163
        %vm6297 = vcmp.eq.f32.partialorder %v6296, 8.507059e+37
        %v6298 = vand.u32 %v6163, 2147483648
        %v6299 = vor.u32 1.1754944e-38, %v6298
        %v6300 = vsel %vm6297, %v6299, %v6295
        %v6301 = vmul.f32 1.0, %v6300
        %v6302 = vrcp.pop %v6164
        %v6303 = vmul.f32 %v6164, %v6302
        %v6304 = vsub.f32 1.0, %v6303
        %v6305 = vmul.f32 %v6302, %v6304
        %v6306 = vadd.f32 %v6302, %v6305
        %vm6307 = vweird.f32 %v6164
        %vm6308 = vweird.f32 %v6302
        %vm6309 = vmor %vm6307, %vm6308
        %v6310 = vsel %vm6309, %v6302, %v6306
        %v6311 = vand.u32 2147483647, %v6164
        %vm6312 = vcmp.eq.f32.partialorder %v6311, 8.507059e+37
        %v6313 = vand.u32 %v6164, 2147483648
        %v6314 = vor.u32 1.1754944e-38, %v6313
        %v6315 = vsel %vm6312, %v6314, %v6310
        %v6316 = vmul.f32 1.0, %v6315
        %v6317 = vrcp.pop %v6165
        %v6318 = vmul.f32 %v6165, %v6317
        %v6319 = vsub.f32 1.0, %v6318
        %v6320 = vmul.f32 %v6317, %v6319
        %v6321 = vadd.f32 %v6317, %v6320
        %vm6322 = vweird.f32 %v6165
        %vm6323 = vweird.f32 %v6317
        %vm6324 = vmor %vm6322, %vm6323
        %v6325 = vsel %vm6324, %v6317, %v6321
        %v6326 = vand.u32 2147483647, %v6165
        %vm6327 = vcmp.eq.f32.partialorder %v6326, 8.507059e+37
        %v6328 = vand.u32 %v6165, 2147483648
        %v6329 = vor.u32 1.1754944e-38, %v6328
        %v6330 = vsel %vm6327, %v6329, %v6325
        %v6331 = vmul.f32 1.0, %v6330
        %v6332 = vrcp.pop %v6166
        %v6333 = vmul.f32 %v6166, %v6332
        %v6334 = vsub.f32 1.0, %v6333
        %v6335 = vmul.f32 %v6332, %v6334
        %v6336 = vadd.f32 %v6332, %v6335
        %vm6337 = vweird.f32 %v6166
        %vm6338 = vweird.f32 %v6332
        %vm6339 = vmor %vm6337, %vm6338
        %v6340 = vsel %vm6339, %v6332, %v6336
        %v6341 = vand.u32 2147483647, %v6166
        %vm6342 = vcmp.eq.f32.partialorder %v6341, 8.507059e+37
        %v6343 = vand.u32 %v6166, 2147483648
        %v6344 = vor.u32 1.1754944e-38, %v6343
        %v6345 = vsel %vm6342, %v6344, %v6340
        %v6346 = vmul.f32 1.0, %v6345
        %v6347 = vrcp.pop %v6167
        %v6348 = vmul.f32 %v6167, %v6347
        %v6349 = vsub.f32 1.0, %v6348
        %v6350 = vmul.f32 %v6347, %v6349
        %v6351 = vadd.f32 %v6347, %v6350
        %vm6352 = vweird.f32 %v6167
        %vm6353 = vweird.f32 %v6347
        %vm6354 = vmor %vm6352, %vm6353
        %v6355 = vsel %vm6354, %v6347, %v6351
        %v6356 = vand.u32 2147483647, %v6167
        %vm6357 = vcmp.eq.f32.partialorder %v6356, 8.507059e+37
        %v6358 = vand.u32 %v6167, 2147483648
        %v6359 = vor.u32 1.1754944e-38, %v6358
        %v6360 = vsel %vm6357, %v6359, %v6355
        %v6361 = vmul.f32 1.0, %v6360
        %v6362 = vrcp.pop %v6168
        %v6363 = vmul.f32 %v6168, %v6362
        %v6364 = vsub.f32 1.0, %v6363
        %v6365 = vmul.f32 %v6362, %v6364
        %v6366 = vadd.f32 %v6362, %v6365
        %vm6367 = vweird.f32 %v6168
        %vm6368 = vweird.f32 %v6362
        %vm6369 = vmor %vm6367, %vm6368
        %v6370 = vsel %vm6369, %v6362, %v6366
        %v6371 = vand.u32 2147483647, %v6168
        %vm6372 = vcmp.eq.f32.partialorder %v6371, 8.507059e+37
        %v6373 = vand.u32 %v6168, 2147483648
        %v6374 = vor.u32 1.1754944e-38, %v6373
        %v6375 = vsel %vm6372, %v6374, %v6370
        %v6376 = vmul.f32 1.0, %v6375
        %v6377 = vrcp.pop %v6169
        %v6378 = vmul.f32 %v6169, %v6377
        %v6379 = vsub.f32 1.0, %v6378
        %v6380 = vmul.f32 %v6377, %v6379
        %v6381 = vadd.f32 %v6377, %v6380
        %vm6382 = vweird.f32 %v6169
        %vm6383 = vweird.f32 %v6377
        %vm6384 = vmor %vm6382, %vm6383
        %v6385 = vsel %vm6384, %v6377, %v6381
        %v6386 = vand.u32 2147483647, %v6169
        %vm6387 = vcmp.eq.f32.partialorder %v6386, 8.507059e+37
        %v6388 = vand.u32 %v6169, 2147483648
        %v6389 = vor.u32 1.1754944e-38, %v6388
        %v6390 = vsel %vm6387, %v6389, %v6385
        %v6391 = vmul.f32 1.0, %v6390
        %v6392 = vrcp.pop %v6170
        %v6393 = vmul.f32 %v6170, %v6392
        %v6394 = vsub.f32 1.0, %v6393
        %v6395 = vmul.f32 %v6392, %v6394
        %v6396 = vadd.f32 %v6392, %v6395
        %vm6397 = vweird.f32 %v6170
        %vm6398 = vweird.f32 %v6392
        %vm6399 = vmor %vm6397, %vm6398
        %v6400 = vsel %vm6399, %v6392, %v6396
        %v6401 = vand.u32 2147483647, %v6170
        %vm6402 = vcmp.eq.f32.partialorder %v6401, 8.507059e+37
        %v6403 = vand.u32 %v6170, 2147483648
        %v6404 = vor.u32 1.1754944e-38, %v6403
        %v6405 = vsel %vm6402, %v6404, %v6400
        %v6406 = vmul.f32 1.0, %v6405
        %v6407 = vrcp.pop %v6171
        %v6408 = vmul.f32 %v6171, %v6407
        %v6409 = vsub.f32 1.0, %v6408
        %v6410 = vmul.f32 %v6407, %v6409
        %v6411 = vadd.f32 %v6407, %v6410
        %vm6412 = vweird.f32 %v6171
        %vm6413 = vweird.f32 %v6407
        %vm6414 = vmor %vm6412, %vm6413
        %v6415 = vsel %vm6414, %v6407, %v6411
        %v6416 = vand.u32 2147483647, %v6171
        %vm6417 = vcmp.eq.f32.partialorder %v6416, 8.507059e+37
        %v6418 = vand.u32 %v6171, 2147483648
        %v6419 = vor.u32 1.1754944e-38, %v6418
        %v6420 = vsel %vm6417, %v6419, %v6415
        %v6421 = vmul.f32 1.0, %v6420
        %v6422 = vrcp.pop %v6172
        %v6423 = vmul.f32 %v6172, %v6422
        %v6424 = vsub.f32 1.0, %v6423
        %v6425 = vmul.f32 %v6422, %v6424
        %v6426 = vadd.f32 %v6422, %v6425
        %vm6427 = vweird.f32 %v6172
        %vm6428 = vweird.f32 %v6422
        %vm6429 = vmor %vm6427, %vm6428
        %v6430 = vsel %vm6429, %v6422, %v6426
        %v6431 = vand.u32 2147483647, %v6172
        %vm6432 = vcmp.eq.f32.partialorder %v6431, 8.507059e+37
        %v6433 = vand.u32 %v6172, 2147483648
        %v6434 = vor.u32 1.1754944e-38, %v6433
        %v6435 = vsel %vm6432, %v6434, %v6430
        %v6436 = vmul.f32 1.0, %v6435
        %v6437 = vrcp.pop %v6173
        %v6438 = vmul.f32 %v6173, %v6437
        %v6439 = vsub.f32 1.0, %v6438
        %v6440 = vmul.f32 %v6437, %v6439
        %v6441 = vadd.f32 %v6437, %v6440
        %vm6442 = vweird.f32 %v6173
        %vm6443 = vweird.f32 %v6437
        %vm6444 = vmor %vm6442, %vm6443
        %v6445 = vsel %vm6444, %v6437, %v6441
        %v6446 = vand.u32 2147483647, %v6173
        %vm6447 = vcmp.eq.f32.partialorder %v6446, 8.507059e+37
        %v6448 = vand.u32 %v6173, 2147483648
        %v6449 = vor.u32 1.1754944e-38, %v6448
        %v6450 = vsel %vm6447, %v6449, %v6445
        %v6451 = vmul.f32 1.0, %v6450
        %v6452 = vrcp.pop %v6174
        %v6453 = vmul.f32 %v6174, %v6452
        %v6454 = vsub.f32 1.0, %v6453
        %v6455 = vmul.f32 %v6452, %v6454
        %v6456 = vadd.f32 %v6452, %v6455
        %vm6457 = vweird.f32 %v6174
        %vm6458 = vweird.f32 %v6452
        %vm6459 = vmor %vm6457, %vm6458
        %v6460 = vsel %vm6459, %v6452, %v6456
        %v6461 = vand.u32 2147483647, %v6174
        %vm6462 = vcmp.eq.f32.partialorder %v6461, 8.507059e+37
        %v6463 = vand.u32 %v6174, 2147483648
        %v6464 = vor.u32 1.1754944e-38, %v6463
        %v6465 = vsel %vm6462, %v6464, %v6460
        %v6466 = vmul.f32 1.0, %v6465
        %v6467 = vrcp.pop %v6175
        %v6468 = vmul.f32 %v6175, %v6467
        %v6469 = vsub.f32 1.0, %v6468
        %v6470 = vmul.f32 %v6467, %v6469
        %v6471 = vadd.f32 %v6467, %v6470
        %vm6472 = vweird.f32 %v6175
        %vm6473 = vweird.f32 %v6467
        %vm6474 = vmor %vm6472, %vm6473
        %v6475 = vsel %vm6474, %v6467, %v6471
        %v6476 = vand.u32 2147483647, %v6175
        %vm6477 = vcmp.eq.f32.partialorder %v6476, 8.507059e+37
        %v6478 = vand.u32 %v6175, 2147483648
        %v6479 = vor.u32 1.1754944e-38, %v6478
        %v6480 = vsel %vm6477, %v6479, %v6475
        %v6481 = vmul.f32 1.0, %v6480
        %v6482 = vrcp.pop %v6176
        %v6483 = vmul.f32 %v6176, %v6482
        %v6484 = vsub.f32 1.0, %v6483
        %v6485 = vmul.f32 %v6482, %v6484
        %v6486 = vadd.f32 %v6482, %v6485
        %vm6487 = vweird.f32 %v6176
        %vm6488 = vweird.f32 %v6482
        %vm6489 = vmor %vm6487, %vm6488
        %v6490 = vsel %vm6489, %v6482, %v6486
        %v6491 = vand.u32 2147483647, %v6176
        %vm6492 = vcmp.eq.f32.partialorder %v6491, 8.507059e+37
        %v6493 = vand.u32 %v6176, 2147483648
        %v6494 = vor.u32 1.1754944e-38, %v6493
        %v6495 = vsel %vm6492, %v6494, %v6490
        %v6496 = vmul.f32 1.0, %v6495
        %v6497 = vrcp.pop %v6177
        %v6498 = vmul.f32 %v6177, %v6497
        %v6499 = vsub.f32 1.0, %v6498
        %v6500 = vmul.f32 %v6497, %v6499
        %v6501 = vadd.f32 %v6497, %v6500
        %vm6502 = vweird.f32 %v6177
        %vm6503 = vweird.f32 %v6497
        %vm6504 = vmor %vm6502, %vm6503
        %v6505 = vsel %vm6504, %v6497, %v6501
        %v6506 = vand.u32 2147483647, %v6177
        %vm6507 = vcmp.eq.f32.partialorder %v6506, 8.507059e+37
        %v6508 = vand.u32 %v6177, 2147483648
        %v6509 = vor.u32 1.1754944e-38, %v6508
        %v6510 = vsel %vm6507, %v6509, %v6505
        %v6511 = vmul.f32 1.0, %v6510
        %v6512 = vrcp.pop %v6178
        %v6513 = vmul.f32 %v6178, %v6512
        %v6514 = vsub.f32 1.0, %v6513
        %v6515 = vmul.f32 %v6512, %v6514
        %v6516 = vadd.f32 %v6512, %v6515
        %vm6517 = vweird.f32 %v6178
        %vm6518 = vweird.f32 %v6512
        %vm6519 = vmor %vm6517, %vm6518
        %v6520 = vsel %vm6519, %v6512, %v6516
        %v6521 = vand.u32 2147483647, %v6178
        %vm6522 = vcmp.eq.f32.partialorder %v6521, 8.507059e+37
        %v6523 = vand.u32 %v6178, 2147483648
        %v6524 = vor.u32 1.1754944e-38, %v6523
        %v6525 = vsel %vm6522, %v6524, %v6520
        %v6526 = vmul.f32 1.0, %v6525
        %v6527 = vrcp.pop %v6179
        %v6528 = vmul.f32 %v6179, %v6527
        %v6529 = vsub.f32 1.0, %v6528
        %v6530 = vmul.f32 %v6527, %v6529
        %v6531 = vadd.f32 %v6527, %v6530
        %vm6532 = vweird.f32 %v6179
        %vm6533 = vweird.f32 %v6527
        %vm6534 = vmor %vm6532, %vm6533
        %v6535 = vsel %vm6534, %v6527, %v6531
        %v6536 = vand.u32 2147483647, %v6179
        %vm6537 = vcmp.eq.f32.partialorder %v6536, 8.507059e+37
        %v6538 = vand.u32 %v6179, 2147483648
        %v6539 = vor.u32 1.1754944e-38, %v6538
        %v6540 = vsel %vm6537, %v6539, %v6535
        %v6541 = vmul.f32 1.0, %v6540
        %v6542 = vrcp.pop %v6180
        %v6543 = vmul.f32 %v6180, %v6542
        %v6544 = vsub.f32 1.0, %v6543
        %v6545 = vmul.f32 %v6542, %v6544
        %v6546 = vadd.f32 %v6542, %v6545
        %vm6547 = vweird.f32 %v6180
        %vm6548 = vweird.f32 %v6542
        %vm6549 = vmor %vm6547, %vm6548
        %v6550 = vsel %vm6549, %v6542, %v6546
        %v6551 = vand.u32 2147483647, %v6180
        %vm6552 = vcmp.eq.f32.partialorder %v6551, 8.507059e+37
        %v6553 = vand.u32 %v6180, 2147483648
        %v6554 = vor.u32 1.1754944e-38, %v6553
        %v6555 = vsel %vm6552, %v6554, %v6550
        %v6556 = vmul.f32 1.0, %v6555
        %v6557 = vrcp.pop %v6181
        %v6558 = vmul.f32 %v6181, %v6557
        %v6559 = vsub.f32 1.0, %v6558
        %v6560 = vmul.f32 %v6557, %v6559
        %v6561 = vadd.f32 %v6557, %v6560
        %vm6562 = vweird.f32 %v6181
        %vm6563 = vweird.f32 %v6557
        %vm6564 = vmor %vm6562, %vm6563
        %v6565 = vsel %vm6564, %v6557, %v6561
        %v6566 = vand.u32 2147483647, %v6181
        %vm6567 = vcmp.eq.f32.partialorder %v6566, 8.507059e+37
        %v6568 = vand.u32 %v6181, 2147483648
        %v6569 = vor.u32 1.1754944e-38, %v6568
        %v6570 = vsel %vm6567, %v6569, %v6565
        %v6571 = vmul.f32 1.0, %v6570
        %v6572 = vrcp.pop %v6182
        %v6573 = vmul.f32 %v6182, %v6572
        %v6574 = vsub.f32 1.0, %v6573
        %v6575 = vmul.f32 %v6572, %v6574
        %v6576 = vadd.f32 %v6572, %v6575
        %vm6577 = vweird.f32 %v6182
        %vm6578 = vweird.f32 %v6572
        %vm6579 = vmor %vm6577, %vm6578
        %v6580 = vsel %vm6579, %v6572, %v6576
        %v6581 = vand.u32 2147483647, %v6182
        %vm6582 = vcmp.eq.f32.partialorder %v6581, 8.507059e+37
        %v6583 = vand.u32 %v6182, 2147483648
        %v6584 = vor.u32 1.1754944e-38, %v6583
        %v6585 = vsel %vm6582, %v6584, %v6580
        %v6586 = vmul.f32 1.0, %v6585
        %v6587 = vrcp.pop %v6183
        %v6588 = vmul.f32 %v6183, %v6587
        %v6589 = vsub.f32 1.0, %v6588
        %v6590 = vmul.f32 %v6587, %v6589
        %v6591 = vadd.f32 %v6587, %v6590
        %vm6592 = vweird.f32 %v6183
        %vm6593 = vweird.f32 %v6587
        %vm6594 = vmor %vm6592, %vm6593
        %v6595 = vsel %vm6594, %v6587, %v6591
        %v6596 = vand.u32 2147483647, %v6183
        %vm6597 = vcmp.eq.f32.partialorder %v6596, 8.507059e+37
        %v6598 = vand.u32 %v6183, 2147483648
        %v6599 = vor.u32 1.1754944e-38, %v6598
        %v6600 = vsel %vm6597, %v6599, %v6595
        %v6601 = vmul.f32 1.0, %v6600
        %v6602 = vrcp.pop %v6184
        %v6603 = vmul.f32 %v6184, %v6602
        %v6604 = vsub.f32 1.0, %v6603
        %v6605 = vmul.f32 %v6602, %v6604
        %v6606 = vadd.f32 %v6602, %v6605
        %vm6607 = vweird.f32 %v6184
        %vm6608 = vweird.f32 %v6602
        %vm6609 = vmor %vm6607, %vm6608
        %v6610 = vsel %vm6609, %v6602, %v6606
        %v6611 = vand.u32 2147483647, %v6184
        %vm6612 = vcmp.eq.f32.partialorder %v6611, 8.507059e+37
        %v6613 = vand.u32 %v6184, 2147483648
        %v6614 = vor.u32 1.1754944e-38, %v6613
        %v6615 = vsel %vm6612, %v6614, %v6610
        %v6616 = vmul.f32 1.0, %v6615
        %v6617 = vrcp.pop %v6185
        %v6618 = vmul.f32 %v6185, %v6617
        %v6619 = vsub.f32 1.0, %v6618
        %v6620 = vmul.f32 %v6617, %v6619
        %v6621 = vadd.f32 %v6617, %v6620
        %vm6622 = vweird.f32 %v6185
        %vm6623 = vweird.f32 %v6617
        %vm6624 = vmor %vm6622, %vm6623
        %v6625 = vsel %vm6624, %v6617, %v6621
        %v6626 = vand.u32 2147483647, %v6185
        %vm6627 = vcmp.eq.f32.partialorder %v6626, 8.507059e+37
        %v6628 = vand.u32 %v6185, 2147483648
        %v6629 = vor.u32 1.1754944e-38, %v6628
        %v6630 = vsel %vm6627, %v6629, %v6625
        %v6631 = vmul.f32 1.0, %v6630
        %v6632 = vrcp.pop %v6186
        %v6633 = vmul.f32 %v6186, %v6632
        %v6634 = vsub.f32 1.0, %v6633
        %v6635 = vmul.f32 %v6632, %v6634
        %v6636 = vadd.f32 %v6632, %v6635
        %vm6637 = vweird.f32 %v6186
        %vm6638 = vweird.f32 %v6632
        %vm6639 = vmor %vm6637, %vm6638
        %v6640 = vsel %vm6639, %v6632, %v6636
        %v6641 = vand.u32 2147483647, %v6186
        %vm6642 = vcmp.eq.f32.partialorder %v6641, 8.507059e+37
        %v6643 = vand.u32 %v6186, 2147483648
        %v6644 = vor.u32 1.1754944e-38, %v6643
        %v6645 = vsel %vm6642, %v6644, %v6640
        %v6646 = vmul.f32 1.0, %v6645
        %v6647 = vrcp.pop %v6187
        %v6648 = vmul.f32 %v6187, %v6647
        %v6649 = vsub.f32 1.0, %v6648
        %v6650 = vmul.f32 %v6647, %v6649
        %v6651 = vadd.f32 %v6647, %v6650
        %vm6652 = vweird.f32 %v6187
        %vm6653 = vweird.f32 %v6647
        %vm6654 = vmor %vm6652, %vm6653
        %v6655 = vsel %vm6654, %v6647, %v6651
        %v6656 = vand.u32 2147483647, %v6187
        %vm6657 = vcmp.eq.f32.partialorder %v6656, 8.507059e+37
        %v6658 = vand.u32 %v6187, 2147483648
        %v6659 = vor.u32 1.1754944e-38, %v6658
        %v6660 = vsel %vm6657, %v6659, %v6655
        %v6661 = vmul.f32 1.0, %v6660
        %v6662 = vrcp.pop %v6188
        %v6663 = vmul.f32 %v6188, %v6662
        %v6664 = vsub.f32 1.0, %v6663
        %v6665 = vmul.f32 %v6662, %v6664
        %v6666 = vadd.f32 %v6662, %v6665
        %vm6667 = vweird.f32 %v6188
        %vm6668 = vweird.f32 %v6662
        %vm6669 = vmor %vm6667, %vm6668
        %v6670 = vsel %vm6669, %v6662, %v6666
        %v6671 = vand.u32 2147483647, %v6188
        %vm6672 = vcmp.eq.f32.partialorder %v6671, 8.507059e+37
        %v6673 = vand.u32 %v6188, 2147483648
        %v6674 = vor.u32 1.1754944e-38, %v6673
        %v6675 = vsel %vm6672, %v6674, %v6670
        %v6676 = vmul.f32 1.0, %v6675
        %v6677 = vrcp.pop %v6189
        %v6678 = vmul.f32 %v6189, %v6677
        %v6679 = vsub.f32 1.0, %v6678
        %v6680 = vmul.f32 %v6677, %v6679
        %v6681 = vadd.f32 %v6677, %v6680
        %vm6682 = vweird.f32 %v6189
        %vm6683 = vweird.f32 %v6677
        %vm6684 = vmor %vm6682, %vm6683
        %v6685 = vsel %vm6684, %v6677, %v6681
        %v6686 = vand.u32 2147483647, %v6189
        %vm6687 = vcmp.eq.f32.partialorder %v6686, 8.507059e+37
        %v6688 = vand.u32 %v6189, 2147483648
        %v6689 = vor.u32 1.1754944e-38, %v6688
        %v6690 = vsel %vm6687, %v6689, %v6685
        %v6691 = vmul.f32 1.0, %v6690
        %v6692 = vrcp.pop %v6190
        %v6693 = vmul.f32 %v6190, %v6692
        %v6694 = vsub.f32 1.0, %v6693
        %v6695 = vmul.f32 %v6692, %v6694
        %v6696 = vadd.f32 %v6692, %v6695
        %vm6697 = vweird.f32 %v6190
        %vm6698 = vweird.f32 %v6692
        %vm6699 = vmor %vm6697, %vm6698
        %v6700 = vsel %vm6699, %v6692, %v6696
        %v6701 = vand.u32 2147483647, %v6190
        %vm6702 = vcmp.eq.f32.partialorder %v6701, 8.507059e+37
        %v6703 = vand.u32 %v6190, 2147483648
        %v6704 = vor.u32 1.1754944e-38, %v6703
        %v6705 = vsel %vm6702, %v6704, %v6700
        %v6706 = vmul.f32 1.0, %v6705
        %v6707 = vrcp.pop %v6191
        %v6708 = vmul.f32 %v6191, %v6707
        %v6709 = vsub.f32 1.0, %v6708
        %v6710 = vmul.f32 %v6707, %v6709
        %v6711 = vadd.f32 %v6707, %v6710
        %vm6712 = vweird.f32 %v6191
        %vm6713 = vweird.f32 %v6707
        %vm6714 = vmor %vm6712, %vm6713
        %v6715 = vsel %vm6714, %v6707, %v6711
        %v6716 = vand.u32 2147483647, %v6191
        %vm6717 = vcmp.eq.f32.partialorder %v6716, 8.507059e+37
        %v6718 = vand.u32 %v6191, 2147483648
        %v6719 = vor.u32 1.1754944e-38, %v6718
        %v6720 = vsel %vm6717, %v6719, %v6715
        %v6721 = vmul.f32 1.0, %v6720
        %v6722 = vrcp.pop %v6192
        %v6723 = vmul.f32 %v6192, %v6722
        %v6724 = vsub.f32 1.0, %v6723
        %v6725 = vmul.f32 %v6722, %v6724
        %v6726 = vadd.f32 %v6722, %v6725
        %vm6727 = vweird.f32 %v6192
        %vm6728 = vweird.f32 %v6722
        %vm6729 = vmor %vm6727, %vm6728
        %v6730 = vsel %vm6729, %v6722, %v6726
        %v6731 = vand.u32 2147483647, %v6192
        %vm6732 = vcmp.eq.f32.partialorder %v6731, 8.507059e+37
        %v6733 = vand.u32 %v6192, 2147483648
        %v6734 = vor.u32 1.1754944e-38, %v6733
        %v6735 = vsel %vm6732, %v6734, %v6730
        %v6736 = vmul.f32 1.0, %v6735
        %v6737 = vrcp.pop %v6193
        %v6738 = vmul.f32 %v6193, %v6737
        %v6739 = vsub.f32 1.0, %v6738
        %v6740 = vmul.f32 %v6737, %v6739
        %v6741 = vadd.f32 %v6737, %v6740
        %vm6742 = vweird.f32 %v6193
        %vm6743 = vweird.f32 %v6737
        %vm6744 = vmor %vm6742, %vm6743
        %v6745 = vsel %vm6744, %v6737, %v6741
        %v6746 = vand.u32 2147483647, %v6193
        %vm6747 = vcmp.eq.f32.partialorder %v6746, 8.507059e+37
        %v6748 = vand.u32 %v6193, 2147483648
        %v6749 = vor.u32 1.1754944e-38, %v6748
        %v6750 = vsel %vm6747, %v6749, %v6745
        %v6751 = vmul.f32 1.0, %v6750
        %v6752 = vrcp.pop %v6194
        %v6753 = vmul.f32 %v6194, %v6752
        %v6754 = vsub.f32 1.0, %v6753
        %v6755 = vmul.f32 %v6752, %v6754
        %v6756 = vadd.f32 %v6752, %v6755
        %vm6757 = vweird.f32 %v6194
        %vm6758 = vweird.f32 %v6752
        %vm6759 = vmor %vm6757, %vm6758
        %v6760 = vsel %vm6759, %v6752, %v6756
        %v6761 = vand.u32 2147483647, %v6194
        %vm6762 = vcmp.eq.f32.partialorder %v6761, 8.507059e+37
        %v6763 = vand.u32 %v6194, 2147483648
        %v6764 = vor.u32 1.1754944e-38, %v6763
        %v6765 = vsel %vm6762, %v6764, %v6760
        %v6766 = vmul.f32 1.0, %v6765
        %v6767 = vrcp.pop %v6195
        %v6768 = vmul.f32 %v6195, %v6767
        %v6769 = vsub.f32 1.0, %v6768
        %v6770 = vmul.f32 %v6767, %v6769
        %v6771 = vadd.f32 %v6767, %v6770
        %vm6772 = vweird.f32 %v6195
        %vm6773 = vweird.f32 %v6767
        %vm6774 = vmor %vm6772, %vm6773
        %v6775 = vsel %vm6774, %v6767, %v6771
        %v6776 = vand.u32 2147483647, %v6195
        %vm6777 = vcmp.eq.f32.partialorder %v6776, 8.507059e+37
        %v6778 = vand.u32 %v6195, 2147483648
        %v6779 = vor.u32 1.1754944e-38, %v6778
        %v6780 = vsel %vm6777, %v6779, %v6775
        %v6781 = vmul.f32 1.0, %v6780
        %v6782 = vrcp.pop %v6196
        %v6783 = vmul.f32 %v6196, %v6782
        %v6784 = vsub.f32 1.0, %v6783
        %v6785 = vmul.f32 %v6782, %v6784
        %v6786 = vadd.f32 %v6782, %v6785
        %vm6787 = vweird.f32 %v6196
        %vm6788 = vweird.f32 %v6782
        %vm6789 = vmor %vm6787, %vm6788
        %v6790 = vsel %vm6789, %v6782, %v6786
        %v6791 = vand.u32 2147483647, %v6196
        %vm6792 = vcmp.eq.f32.partialorder %v6791, 8.507059e+37
        %v6793 = vand.u32 %v6196, 2147483648
        %v6794 = vor.u32 1.1754944e-38, %v6793
        %v6795 = vsel %vm6792, %v6794, %v6790
        %v6796 = vmul.f32 1.0, %v6795
        %v6797 = vrcp.pop %v6197
        %v6798 = vmul.f32 %v6197, %v6797
        %v6799 = vsub.f32 1.0, %v6798
        %v6800 = vmul.f32 %v6797, %v6799
        %v6801 = vadd.f32 %v6797, %v6800
        %vm6802 = vweird.f32 %v6197
        %vm6803 = vweird.f32 %v6797
        %vm6804 = vmor %vm6802, %vm6803
        %v6805 = vsel %vm6804, %v6797, %v6801
        %v6806 = vand.u32 2147483647, %v6197
        %vm6807 = vcmp.eq.f32.partialorder %v6806, 8.507059e+37
        %v6808 = vand.u32 %v6197, 2147483648
        %v6809 = vor.u32 1.1754944e-38, %v6808
        %v6810 = vsel %vm6807, %v6809, %v6805
        %v6811 = vmul.f32 1.0, %v6810
        %v6812 = vrcp.pop %v6198
        %v6813 = vmul.f32 %v6198, %v6812
        %v6814 = vsub.f32 1.0, %v6813
        %v6815 = vmul.f32 %v6812, %v6814
        %v6816 = vadd.f32 %v6812, %v6815
        %vm6817 = vweird.f32 %v6198
        %vm6818 = vweird.f32 %v6812
        %vm6819 = vmor %vm6817, %vm6818
        %v6820 = vsel %vm6819, %v6812, %v6816
        %v6821 = vand.u32 2147483647, %v6198
        %vm6822 = vcmp.eq.f32.partialorder %v6821, 8.507059e+37
        %v6823 = vand.u32 %v6198, 2147483648
        %v6824 = vor.u32 1.1754944e-38, %v6823
        %v6825 = vsel %vm6822, %v6824, %v6820
        %v6826 = vmul.f32 1.0, %v6825
        %v6827 = vrcp.pop %v6199
        %v6828 = vmul.f32 %v6199, %v6827
        %v6829 = vsub.f32 1.0, %v6828
        %v6830 = vmul.f32 %v6827, %v6829
        %v6831 = vadd.f32 %v6827, %v6830
        %vm6832 = vweird.f32 %v6199
        %vm6833 = vweird.f32 %v6827
        %vm6834 = vmor %vm6832, %vm6833
        %v6835 = vsel %vm6834, %v6827, %v6831
        %v6836 = vand.u32 2147483647, %v6199
        %vm6837 = vcmp.eq.f32.partialorder %v6836, 8.507059e+37
        %v6838 = vand.u32 %v6199, 2147483648
        %v6839 = vor.u32 1.1754944e-38, %v6838
        %v6840 = vsel %vm6837, %v6839, %v6835
        %v6841 = vmul.f32 1.0, %v6840
        %v6842 = vrcp.pop %v6200
        %v6843 = vmul.f32 %v6200, %v6842
        %v6844 = vsub.f32 1.0, %v6843
        %v6845 = vmul.f32 %v6842, %v6844
        %v6846 = vadd.f32 %v6842, %v6845
        %vm6847 = vweird.f32 %v6200
        %vm6848 = vweird.f32 %v6842
        %vm6849 = vmor %vm6847, %vm6848
        %v6850 = vsel %vm6849, %v6842, %v6846
        %v6851 = vand.u32 2147483647, %v6200
        %vm6852 = vcmp.eq.f32.partialorder %v6851, 8.507059e+37
        %v6853 = vand.u32 %v6200, 2147483648
        %v6854 = vor.u32 1.1754944e-38, %v6853
        %v6855 = vsel %vm6852, %v6854, %v6850
        %v6856 = vmul.f32 1.0, %v6855
        %v6857 = vrcp.pop %v6201
        %v6858 = vmul.f32 %v6201, %v6857
        %v6859 = vsub.f32 1.0, %v6858
        %v6860 = vmul.f32 %v6857, %v6859
        %v6861 = vadd.f32 %v6857, %v6860
        %vm6862 = vweird.f32 %v6201
        %vm6863 = vweird.f32 %v6857
        %vm6864 = vmor %vm6862, %vm6863
        %v6865 = vsel %vm6864, %v6857, %v6861
        %v6866 = vand.u32 2147483647, %v6201
        %vm6867 = vcmp.eq.f32.partialorder %v6866, 8.507059e+37
        %v6868 = vand.u32 %v6201, 2147483648
        %v6869 = vor.u32 1.1754944e-38, %v6868
        %v6870 = vsel %vm6867, %v6869, %v6865
        %v6871 = vmul.f32 1.0, %v6870
        %v6872 = vrcp.pop %v6202
        %v6873 = vmul.f32 %v6202, %v6872
        %v6874 = vsub.f32 1.0, %v6873
        %v6875 = vmul.f32 %v6872, %v6874
        %v6876 = vadd.f32 %v6872, %v6875
        %vm6877 = vweird.f32 %v6202
        %vm6878 = vweird.f32 %v6872
        %vm6879 = vmor %vm6877, %vm6878
        %v6880 = vsel %vm6879, %v6872, %v6876
        %v6881 = vand.u32 2147483647, %v6202
        %vm6882 = vcmp.eq.f32.partialorder %v6881, 8.507059e+37
        %v6883 = vand.u32 %v6202, 2147483648
        %v6884 = vor.u32 1.1754944e-38, %v6883
        %v6885 = vsel %vm6882, %v6884, %v6880
        %v6886 = vmul.f32 1.0, %v6885
        %v6887 = vrcp.pop %v6203
        %v6888 = vmul.f32 %v6203, %v6887
        %v6889 = vsub.f32 1.0, %v6888
        %v6890 = vmul.f32 %v6887, %v6889
        %v6891 = vadd.f32 %v6887, %v6890
        %vm6892 = vweird.f32 %v6203
        %vm6893 = vweird.f32 %v6887
        %vm6894 = vmor %vm6892, %vm6893
        %v6895 = vsel %vm6894, %v6887, %v6891
        %v6896 = vand.u32 2147483647, %v6203
        %vm6897 = vcmp.eq.f32.partialorder %v6896, 8.507059e+37
        %v6898 = vand.u32 %v6203, 2147483648
        %v6899 = vor.u32 1.1754944e-38, %v6898
        %v6900 = vsel %vm6897, %v6899, %v6895
        %v6901 = vmul.f32 1.0, %v6900
        %v6902 = vrcp.pop %v6204
        %v6903 = vmul.f32 %v6204, %v6902
        %v6904 = vsub.f32 1.0, %v6903
        %v6905 = vmul.f32 %v6902, %v6904
        %v6906 = vadd.f32 %v6902, %v6905
        %vm6907 = vweird.f32 %v6204
        %vm6908 = vweird.f32 %v6902
        %vm6909 = vmor %vm6907, %vm6908
        %v6910 = vsel %vm6909, %v6902, %v6906
        %v6911 = vand.u32 2147483647, %v6204
        %vm6912 = vcmp.eq.f32.partialorder %v6911, 8.507059e+37
        %v6913 = vand.u32 %v6204, 2147483648
        %v6914 = vor.u32 1.1754944e-38, %v6913
        %v6915 = vsel %vm6912, %v6914, %v6910
        %v6916 = vmul.f32 1.0, %v6915
        %v6917 = vrcp.pop %v6205
        %v6918 = vmul.f32 %v6205, %v6917
        %v6919 = vsub.f32 1.0, %v6918
        %v6920 = vmul.f32 %v6917, %v6919
        %v6921 = vadd.f32 %v6917, %v6920
        %vm6922 = vweird.f32 %v6205
        %vm6923 = vweird.f32 %v6917
        %vm6924 = vmor %vm6922, %vm6923
        %v6925 = vsel %vm6924, %v6917, %v6921
        %v6926 = vand.u32 2147483647, %v6205
        %vm6927 = vcmp.eq.f32.partialorder %v6926, 8.507059e+37
        %v6928 = vand.u32 %v6205, 2147483648
        %v6929 = vor.u32 1.1754944e-38, %v6928
        %v6930 = vsel %vm6927, %v6929, %v6925
        %v6931 = vmul.f32 1.0, %v6930
        %v6932 = vrcp.pop %v6206
        %v6933 = vmul.f32 %v6206, %v6932
        %v6934 = vsub.f32 1.0, %v6933
        %v6935 = vmul.f32 %v6932, %v6934
        %v6936 = vadd.f32 %v6932, %v6935
        %vm6937 = vweird.f32 %v6206
        %vm6938 = vweird.f32 %v6932
        %vm6939 = vmor %vm6937, %vm6938
        %v6940 = vsel %vm6939, %v6932, %v6936
        %v6941 = vand.u32 2147483647, %v6206
        %vm6942 = vcmp.eq.f32.partialorder %v6941, 8.507059e+37
        %v6943 = vand.u32 %v6206, 2147483648
        %v6944 = vor.u32 1.1754944e-38, %v6943
        %v6945 = vsel %vm6942, %v6944, %v6940
        %v6946 = vmul.f32 1.0, %v6945
        %v6947 = vrcp.pop %v6207
        %v6948 = vmul.f32 %v6207, %v6947
        %v6949 = vsub.f32 1.0, %v6948
        %v6950 = vmul.f32 %v6947, %v6949
        %v6951 = vadd.f32 %v6947, %v6950
        %vm6952 = vweird.f32 %v6207
        %vm6953 = vweird.f32 %v6947
        %vm6954 = vmor %vm6952, %vm6953
        %v6955 = vsel %vm6954, %v6947, %v6951
        %v6956 = vand.u32 2147483647, %v6207
        %vm6957 = vcmp.eq.f32.partialorder %v6956, 8.507059e+37
        %v6958 = vand.u32 %v6207, 2147483648
        %v6959 = vor.u32 1.1754944e-38, %v6958
        %v6960 = vsel %vm6957, %v6959, %v6955
        %v6961 = vmul.f32 1.0, %v6960
        %v6962 = vrcp.pop %v6208
        %v6963 = vmul.f32 %v6208, %v6962
        %v6964 = vsub.f32 1.0, %v6963
        %v6965 = vmul.f32 %v6962, %v6964
        %v6966 = vadd.f32 %v6962, %v6965
        %vm6967 = vweird.f32 %v6208
        %vm6968 = vweird.f32 %v6962
        %vm6969 = vmor %vm6967, %vm6968
        %v6970 = vsel %vm6969, %v6962, %v6966
        %v6971 = vand.u32 2147483647, %v6208
        %vm6972 = vcmp.eq.f32.partialorder %v6971, 8.507059e+37
        %v6973 = vand.u32 %v6208, 2147483648
        %v6974 = vor.u32 1.1754944e-38, %v6973
        %v6975 = vsel %vm6972, %v6974, %v6970
        %v6976 = vmul.f32 1.0, %v6975
        %v6977 = vrcp.pop %v6209
        %v6978 = vmul.f32 %v6209, %v6977
        %v6979 = vsub.f32 1.0, %v6978
        %v6980 = vmul.f32 %v6977, %v6979
        %v6981 = vadd.f32 %v6977, %v6980
        %vm6982 = vweird.f32 %v6209
        %vm6983 = vweird.f32 %v6977
        %vm6984 = vmor %vm6982, %vm6983
        %v6985 = vsel %vm6984, %v6977, %v6981
        %v6986 = vand.u32 2147483647, %v6209
        %vm6987 = vcmp.eq.f32.partialorder %v6986, 8.507059e+37
        %v6988 = vand.u32 %v6209, 2147483648
        %v6989 = vor.u32 1.1754944e-38, %v6988
        %v6990 = vsel %vm6987, %v6989, %v6985
        %v6991 = vmul.f32 1.0, %v6990
        %v6992 = vrcp.pop %v6210
        %v6993 = vmul.f32 %v6210, %v6992
        %v6994 = vsub.f32 1.0, %v6993
        %v6995 = vmul.f32 %v6992, %v6994
        %v6996 = vadd.f32 %v6992, %v6995
        %vm6997 = vweird.f32 %v6210
        %vm6998 = vweird.f32 %v6992
        %vm6999 = vmor %vm6997, %vm6998
        %v7000 = vsel %vm6999, %v6992, %v6996
        %v7001 = vand.u32 2147483647, %v6210
        %vm7002 = vcmp.eq.f32.partialorder %v7001, 8.507059e+37
        %v7003 = vand.u32 %v6210, 2147483648
        %v7004 = vor.u32 1.1754944e-38, %v7003
        %v7005 = vsel %vm7002, %v7004, %v7000
        %v7006 = vmul.f32 1.0, %v7005
        %v7007 = vrcp.pop %v6211
        %v7008 = vmul.f32 %v6211, %v7007
        %v7009 = vsub.f32 1.0, %v7008
        %v7010 = vmul.f32 %v7007, %v7009
        %v7011 = vadd.f32 %v7007, %v7010
        %vm7012 = vweird.f32 %v6211
        %vm7013 = vweird.f32 %v7007
        %vm7014 = vmor %vm7012, %vm7013
        %v7015 = vsel %vm7014, %v7007, %v7011
        %v7016 = vand.u32 2147483647, %v6211
        %vm7017 = vcmp.eq.f32.partialorder %v7016, 8.507059e+37
        %v7018 = vand.u32 %v6211, 2147483648
        %v7019 = vor.u32 1.1754944e-38, %v7018
        %v7020 = vsel %vm7017, %v7019, %v7015
        %v7021 = vmul.f32 1.0, %v7020
        %v7022 = vrcp.pop %v6212
        %v7023 = vmul.f32 %v6212, %v7022
        %v7024 = vsub.f32 1.0, %v7023
        %v7025 = vmul.f32 %v7022, %v7024
        %v7026 = vadd.f32 %v7022, %v7025
        %vm7027 = vweird.f32 %v6212
        %vm7028 = vweird.f32 %v7022
        %vm7029 = vmor %vm7027, %vm7028
        %v7030 = vsel %vm7029, %v7022, %v7026
        %v7031 = vand.u32 2147483647, %v6212
        %vm7032 = vcmp.eq.f32.partialorder %v7031, 8.507059e+37
        %v7033 = vand.u32 %v6212, 2147483648
        %v7034 = vor.u32 1.1754944e-38, %v7033
        %v7035 = vsel %vm7032, %v7034, %v7030
        %v7036 = vmul.f32 1.0, %v7035
        %v7037 = vrcp.pop %v6213
        %v7038 = vmul.f32 %v6213, %v7037
        %v7039 = vsub.f32 1.0, %v7038
        %v7040 = vmul.f32 %v7037, %v7039
        %v7041 = vadd.f32 %v7037, %v7040
        %vm7042 = vweird.f32 %v6213
        %vm7043 = vweird.f32 %v7037
        %vm7044 = vmor %vm7042, %vm7043
        %v7045 = vsel %vm7044, %v7037, %v7041
        %v7046 = vand.u32 2147483647, %v6213
        %vm7047 = vcmp.eq.f32.partialorder %v7046, 8.507059e+37
        %v7048 = vand.u32 %v6213, 2147483648
        %v7049 = vor.u32 1.1754944e-38, %v7048
        %v7050 = vsel %vm7047, %v7049, %v7045
        %v7051 = vmul.f32 1.0, %v7050
        %v7052 = vrcp.pop %v6214
        %v7053 = vmul.f32 %v6214, %v7052
        %v7054 = vsub.f32 1.0, %v7053
        %v7055 = vmul.f32 %v7052, %v7054
        %v7056 = vadd.f32 %v7052, %v7055
        %vm7057 = vweird.f32 %v6214
        %vm7058 = vweird.f32 %v7052
        %vm7059 = vmor %vm7057, %vm7058
        %v7060 = vsel %vm7059, %v7052, %v7056
        %v7061 = vand.u32 2147483647, %v6214
        %vm7062 = vcmp.eq.f32.partialorder %v7061, 8.507059e+37
        %v7063 = vand.u32 %v6214, 2147483648
        %v7064 = vor.u32 1.1754944e-38, %v7063
        %v7065 = vsel %vm7062, %v7064, %v7060
        %v7066 = vmul.f32 1.0, %v7065
        %v7067 = vrcp.pop %v6215
        %v7068 = vmul.f32 %v6215, %v7067
        %v7069 = vsub.f32 1.0, %v7068
        %v7070 = vmul.f32 %v7067, %v7069
        %v7071 = vadd.f32 %v7067, %v7070
        %vm7072 = vweird.f32 %v6215
        %vm7073 = vweird.f32 %v7067
        %vm7074 = vmor %vm7072, %vm7073
        %v7075 = vsel %vm7074, %v7067, %v7071
        %v7076 = vand.u32 2147483647, %v6215
        %vm7077 = vcmp.eq.f32.partialorder %v7076, 8.507059e+37
        %v7078 = vand.u32 %v6215, 2147483648
        %v7079 = vor.u32 1.1754944e-38, %v7078
        %v7080 = vsel %vm7077, %v7079, %v7075
        %v7081 = vmul.f32 1.0, %v7080
        %v7082 = vrcp.pop %v6216
        %v7083 = vmul.f32 %v6216, %v7082
        %v7084 = vsub.f32 1.0, %v7083
        %v7085 = vmul.f32 %v7082, %v7084
        %v7086 = vadd.f32 %v7082, %v7085
        %vm7087 = vweird.f32 %v6216
        %vm7088 = vweird.f32 %v7082
        %vm7089 = vmor %vm7087, %vm7088
        %v7090 = vsel %vm7089, %v7082, %v7086
        %v7091 = vand.u32 2147483647, %v6216
        %vm7092 = vcmp.eq.f32.partialorder %v7091, 8.507059e+37
        %v7093 = vand.u32 %v6216, 2147483648
        %v7094 = vor.u32 1.1754944e-38, %v7093
        %v7095 = vsel %vm7092, %v7094, %v7090
        %v7096 = vmul.f32 1.0, %v7095
        %v7097 = vrcp.pop %v6217
        %v7098 = vmul.f32 %v6217, %v7097
        %v7099 = vsub.f32 1.0, %v7098
        %v7100 = vmul.f32 %v7097, %v7099
        %v7101 = vadd.f32 %v7097, %v7100
        %vm7102 = vweird.f32 %v6217
        %vm7103 = vweird.f32 %v7097
        %vm7104 = vmor %vm7102, %vm7103
        %v7105 = vsel %vm7104, %v7097, %v7101
        %v7106 = vand.u32 2147483647, %v6217
        %vm7107 = vcmp.eq.f32.partialorder %v7106, 8.507059e+37
        %v7108 = vand.u32 %v6217, 2147483648
        %v7109 = vor.u32 1.1754944e-38, %v7108
        %v7110 = vsel %vm7107, %v7109, %v7105
        %v7111 = vmul.f32 1.0, %v7110
        %v7112 = vrcp.pop %v6218
        %v7113 = vmul.f32 %v6218, %v7112
        %v7114 = vsub.f32 1.0, %v7113
        %v7115 = vmul.f32 %v7112, %v7114
        %v7116 = vadd.f32 %v7112, %v7115
        %vm7117 = vweird.f32 %v6218
        %vm7118 = vweird.f32 %v7112
        %vm7119 = vmor %vm7117, %vm7118
        %v7120 = vsel %vm7119, %v7112, %v7116
        %v7121 = vand.u32 2147483647, %v6218
        %vm7122 = vcmp.eq.f32.partialorder %v7121, 8.507059e+37
        %v7123 = vand.u32 %v6218, 2147483648
        %v7124 = vor.u32 1.1754944e-38, %v7123
        %v7125 = vsel %vm7122, %v7124, %v7120
        %v7126 = vmul.f32 1.0, %v7125
        %v7127 = vrcp.pop %v6219
        %v7128 = vmul.f32 %v6219, %v7127
        %v7129 = vsub.f32 1.0, %v7128
        %v7130 = vmul.f32 %v7127, %v7129
        %v7131 = vadd.f32 %v7127, %v7130
        %vm7132 = vweird.f32 %v6219
        %vm7133 = vweird.f32 %v7127
        %vm7134 = vmor %vm7132, %vm7133
        %v7135 = vsel %vm7134, %v7127, %v7131
        %v7136 = vand.u32 2147483647, %v6219
        %vm7137 = vcmp.eq.f32.partialorder %v7136, 8.507059e+37
        %v7138 = vand.u32 %v6219, 2147483648
        %v7139 = vor.u32 1.1754944e-38, %v7138
        %v7140 = vsel %vm7137, %v7139, %v7135
        %v7141 = vmul.f32 1.0, %v7140
        %v7142 = vrcp.pop %v6220
        %v7143 = vmul.f32 %v6220, %v7142
        %v7144 = vsub.f32 1.0, %v7143
        %v7145 = vmul.f32 %v7142, %v7144
        %v7146 = vadd.f32 %v7142, %v7145
        %vm7147 = vweird.f32 %v6220
        %vm7148 = vweird.f32 %v7142
        %vm7149 = vmor %vm7147, %vm7148
        %v7150 = vsel %vm7149, %v7142, %v7146
        %v7151 = vand.u32 2147483647, %v6220
        %vm7152 = vcmp.eq.f32.partialorder %v7151, 8.507059e+37
        %v7153 = vand.u32 %v6220, 2147483648
        %v7154 = vor.u32 1.1754944e-38, %v7153
        %v7155 = vsel %vm7152, %v7154, %v7150
        %v7156 = vmul.f32 1.0, %v7155
        %v7157 = vrcp.pop %v6221
        %v7158 = vmul.f32 %v6221, %v7157
        %v7159 = vsub.f32 1.0, %v7158
        %v7160 = vmul.f32 %v7157, %v7159
        %v7161 = vadd.f32 %v7157, %v7160
        %vm7162 = vweird.f32 %v6221
        %vm7163 = vweird.f32 %v7157
        %vm7164 = vmor %vm7162, %vm7163
        %v7165 = vsel %vm7164, %v7157, %v7161
        %v7166 = vand.u32 2147483647, %v6221
        %vm7167 = vcmp.eq.f32.partialorder %v7166, 8.507059e+37
        %v7168 = vand.u32 %v6221, 2147483648
        %v7169 = vor.u32 1.1754944e-38, %v7168
        %v7170 = vsel %vm7167, %v7169, %v7165
        %v7171 = vmul.f32 1.0, %v7170
        %v7172 = vrcp.pop %v6222
        %v7173 = vmul.f32 %v6222, %v7172
        %v7174 = vsub.f32 1.0, %v7173
        %v7175 = vmul.f32 %v7172, %v7174
        %v7176 = vadd.f32 %v7172, %v7175
        %vm7177 = vweird.f32 %v6222
        %vm7178 = vweird.f32 %v7172
        %vm7179 = vmor %vm7177, %vm7178
        %v7180 = vsel %vm7179, %v7172, %v7176
        %v7181 = vand.u32 2147483647, %v6222
        %vm7182 = vcmp.eq.f32.partialorder %v7181, 8.507059e+37
        %v7183 = vand.u32 %v6222, 2147483648
        %v7184 = vor.u32 1.1754944e-38, %v7183
        %v7185 = vsel %vm7182, %v7184, %v7180
        %v7186 = vmul.f32 1.0, %v7185
        %v7187 = vrcp.pop %v6223
        %v7188 = vmul.f32 %v6223, %v7187
        %v7189 = vsub.f32 1.0, %v7188
        %v7190 = vmul.f32 %v7187, %v7189
        %v7191 = vadd.f32 %v7187, %v7190
        %vm7192 = vweird.f32 %v6223
        %vm7193 = vweird.f32 %v7187
        %vm7194 = vmor %vm7192, %vm7193
        %v7195 = vsel %vm7194, %v7187, %v7191
        %v7196 = vand.u32 2147483647, %v6223
        %vm7197 = vcmp.eq.f32.partialorder %v7196, 8.507059e+37
        %v7198 = vand.u32 %v6223, 2147483648
        %v7199 = vor.u32 1.1754944e-38, %v7198
        %v7200 = vsel %vm7197, %v7199, %v7195
        %v7201 = vmul.f32 1.0, %v7200
        %v7202 = vrcp.pop %v6224
        %v7203 = vmul.f32 %v6224, %v7202
        %v7204 = vsub.f32 1.0, %v7203
        %v7205 = vmul.f32 %v7202, %v7204
        %v7206 = vadd.f32 %v7202, %v7205
        %vm7207 = vweird.f32 %v6224
        %vm7208 = vweird.f32 %v7202
        %vm7209 = vmor %vm7207, %vm7208
        %v7210 = vsel %vm7209, %v7202, %v7206
        %v7211 = vand.u32 2147483647, %v6224
        %vm7212 = vcmp.eq.f32.partialorder %v7211, 8.507059e+37
        %v7213 = vand.u32 %v6224, 2147483648
        %v7214 = vor.u32 1.1754944e-38, %v7213
        %v7215 = vsel %vm7212, %v7214, %v7210
        %v7216 = vmul.f32 1.0, %v7215
        %v7217 = vrcp.pop %v6225
        %v7218 = vmul.f32 %v6225, %v7217
        %v7219 = vsub.f32 1.0, %v7218
        %v7220 = vmul.f32 %v7217, %v7219
        %v7221 = vadd.f32 %v7217, %v7220
        %vm7222 = vweird.f32 %v6225
        %vm7223 = vweird.f32 %v7217
        %vm7224 = vmor %vm7222, %vm7223
        %v7225 = vsel %vm7224, %v7217, %v7221
        %v7226 = vand.u32 2147483647, %v6225
        %vm7227 = vcmp.eq.f32.partialorder %v7226, 8.507059e+37
        %v7228 = vand.u32 %v6225, 2147483648
        %v7229 = vor.u32 1.1754944e-38, %v7228
        %v7230 = vsel %vm7227, %v7229, %v7225
        %v7231 = vmul.f32 1.0, %v7230
        %v7232 = vrcp.pop %v6226
        %v7233 = vmul.f32 %v6226, %v7232
        %v7234 = vsub.f32 1.0, %v7233
        %v7235 = vmul.f32 %v7232, %v7234
        %v7236 = vadd.f32 %v7232, %v7235
        %vm7237 = vweird.f32 %v6226
        %vm7238 = vweird.f32 %v7232
        %vm7239 = vmor %vm7237, %vm7238
        %v7240 = vsel %vm7239, %v7232, %v7236
        %v7241 = vand.u32 2147483647, %v6226
        %vm7242 = vcmp.eq.f32.partialorder %v7241, 8.507059e+37
        %v7243 = vand.u32 %v6226, 2147483648
        %v7244 = vor.u32 1.1754944e-38, %v7243
        %v7245 = vsel %vm7242, %v7244, %v7240
        %v7246 = vmul.f32 1.0, %v7245
        %v7247 = vrcp.pop %v6227
        %v7248 = vmul.f32 %v6227, %v7247
        %v7249 = vsub.f32 1.0, %v7248
        %v7250 = vmul.f32 %v7247, %v7249
        %v7251 = vadd.f32 %v7247, %v7250
        %vm7252 = vweird.f32 %v6227
        %vm7253 = vweird.f32 %v7247
        %vm7254 = vmor %vm7252, %vm7253
        %v7255 = vsel %vm7254, %v7247, %v7251
        %v7256 = vand.u32 2147483647, %v6227
        %vm7257 = vcmp.eq.f32.partialorder %v7256, 8.507059e+37
        %v7258 = vand.u32 %v6227, 2147483648
        %v7259 = vor.u32 1.1754944e-38, %v7258
        %v7260 = vsel %vm7257, %v7259, %v7255
        %v7261 = vmul.f32 1.0, %v7260
        %v7262 = vrcp.pop %v6228
        %v7263 = vmul.f32 %v6228, %v7262
        %v7264 = vsub.f32 1.0, %v7263
        %v7265 = vmul.f32 %v7262, %v7264
        %v7266 = vadd.f32 %v7262, %v7265
        %vm7267 = vweird.f32 %v6228
        %vm7268 = vweird.f32 %v7262
        %vm7269 = vmor %vm7267, %vm7268
        %v7270 = vsel %vm7269, %v7262, %v7266
        %v7271 = vand.u32 2147483647, %v6228
        %vm7272 = vcmp.eq.f32.partialorder %v7271, 8.507059e+37
        %v7273 = vand.u32 %v6228, 2147483648
        %v7274 = vor.u32 1.1754944e-38, %v7273
        %v7275 = vsel %vm7272, %v7274, %v7270
        %v7276 = vmul.f32 1.0, %v7275
        %v7277 = vrcp.pop %v6229
        %v7278 = vmul.f32 %v6229, %v7277
        %v7279 = vsub.f32 1.0, %v7278
        %v7280 = vmul.f32 %v7277, %v7279
        %v7281 = vadd.f32 %v7277, %v7280
        %vm7282 = vweird.f32 %v6229
        %vm7283 = vweird.f32 %v7277
        %vm7284 = vmor %vm7282, %vm7283
        %v7285 = vsel %vm7284, %v7277, %v7281
        %v7286 = vand.u32 2147483647, %v6229
        %vm7287 = vcmp.eq.f32.partialorder %v7286, 8.507059e+37
        %v7288 = vand.u32 %v6229, 2147483648
        %v7289 = vor.u32 1.1754944e-38, %v7288
        %v7290 = vsel %vm7287, %v7289, %v7285
        %v7291 = vmul.f32 1.0, %v7290
        %v7292 = vrcp.pop %v6230
        %v7293 = vmul.f32 %v6230, %v7292
        %v7294 = vsub.f32 1.0, %v7293
        %v7295 = vmul.f32 %v7292, %v7294
        %v7296 = vadd.f32 %v7292, %v7295
        %vm7297 = vweird.f32 %v6230
        %vm7298 = vweird.f32 %v7292
        %vm7299 = vmor %vm7297, %vm7298
        %v7300 = vsel %vm7299, %v7292, %v7296
        %v7301 = vand.u32 2147483647, %v6230
        %vm7302 = vcmp.eq.f32.partialorder %v7301, 8.507059e+37
        %v7303 = vand.u32 %v6230, 2147483648
        %v7304 = vor.u32 1.1754944e-38, %v7303
        %v7305 = vsel %vm7302, %v7304, %v7300
        %v7306 = vmul.f32 1.0, %v7305
        %v7307 = vrcp.pop %v6231
        %v7308 = vmul.f32 %v6231, %v7307
        %v7309 = vsub.f32 1.0, %v7308
        %v7310 = vmul.f32 %v7307, %v7309
        %v7311 = vadd.f32 %v7307, %v7310
        %vm7312 = vweird.f32 %v6231
        %vm7313 = vweird.f32 %v7307
        %vm7314 = vmor %vm7312, %vm7313
        %v7315 = vsel %vm7314, %v7307, %v7311
        %v7316 = vand.u32 2147483647, %v6231
        %vm7317 = vcmp.eq.f32.partialorder %v7316, 8.507059e+37
        %v7318 = vand.u32 %v6231, 2147483648
        %v7319 = vor.u32 1.1754944e-38, %v7318
        %v7320 = vsel %vm7317, %v7319, %v7315
        %v7321 = vmul.f32 1.0, %v7320
        %v7322 = vrcp.pop %v6232
        %v7323 = vmul.f32 %v6232, %v7322
        %v7324 = vsub.f32 1.0, %v7323
        %v7325 = vmul.f32 %v7322, %v7324
        %v7326 = vadd.f32 %v7322, %v7325
        %vm7327 = vweird.f32 %v6232
        %vm7328 = vweird.f32 %v7322
        %vm7329 = vmor %vm7327, %vm7328
        %v7330 = vsel %vm7329, %v7322, %v7326
        %v7331 = vand.u32 2147483647, %v6232
        %vm7332 = vcmp.eq.f32.partialorder %v7331, 8.507059e+37
        %v7333 = vand.u32 %v6232, 2147483648
        %v7334 = vor.u32 1.1754944e-38, %v7333
        %v7335 = vsel %vm7332, %v7334, %v7330
        %v7336 = vmul.f32 1.0, %v7335
        %v7337 = vrcp.pop %v6233
        %v7338 = vmul.f32 %v6233, %v7337
        %v7339 = vsub.f32 1.0, %v7338
        %v7340 = vmul.f32 %v7337, %v7339
        %v7341 = vadd.f32 %v7337, %v7340
        %vm7342 = vweird.f32 %v6233
        %vm7343 = vweird.f32 %v7337
        %vm7344 = vmor %vm7342, %vm7343
        %v7345 = vsel %vm7344, %v7337, %v7341
        %v7346 = vand.u32 2147483647, %v6233
        %vm7347 = vcmp.eq.f32.partialorder %v7346, 8.507059e+37
        %v7348 = vand.u32 %v6233, 2147483648
        %v7349 = vor.u32 1.1754944e-38, %v7348
        %v7350 = vsel %vm7347, %v7349, %v7345
        %v7351 = vmul.f32 1.0, %v7350
        %v7352 = vrcp.pop %v6234
        %v7353 = vmul.f32 %v6234, %v7352
        %v7354 = vsub.f32 1.0, %v7353
        %v7355 = vmul.f32 %v7352, %v7354
        %v7356 = vadd.f32 %v7352, %v7355
        %vm7357 = vweird.f32 %v6234
        %vm7358 = vweird.f32 %v7352
        %vm7359 = vmor %vm7357, %vm7358
        %v7360 = vsel %vm7359, %v7352, %v7356
        %v7361 = vand.u32 2147483647, %v6234
        %vm7362 = vcmp.eq.f32.partialorder %v7361, 8.507059e+37
        %v7363 = vand.u32 %v6234, 2147483648
        %v7364 = vor.u32 1.1754944e-38, %v7363
        %v7365 = vsel %vm7362, %v7364, %v7360
        %v7366 = vmul.f32 1.0, %v7365
        %v7367 = vrcp.pop %v6235
        %v7368 = vmul.f32 %v6235, %v7367
        %v7369 = vsub.f32 1.0, %v7368
        %v7370 = vmul.f32 %v7367, %v7369
        %v7371 = vadd.f32 %v7367, %v7370
        %vm7372 = vweird.f32 %v6235
        %vm7373 = vweird.f32 %v7367
        %vm7374 = vmor %vm7372, %vm7373
        %v7375 = vsel %vm7374, %v7367, %v7371
        %v7376 = vand.u32 2147483647, %v6235
        %vm7377 = vcmp.eq.f32.partialorder %v7376, 8.507059e+37
        %v7378 = vand.u32 %v6235, 2147483648
        %v7379 = vor.u32 1.1754944e-38, %v7378
        %v7380 = vsel %vm7377, %v7379, %v7375
        %v7381 = vmul.f32 1.0, %v7380
        %v7382 = vrcp.pop %v6236
        %v7383 = vmul.f32 %v6236, %v7382
        %v7384 = vsub.f32 1.0, %v7383
        %v7385 = vmul.f32 %v7382, %v7384
        %v7386 = vadd.f32 %v7382, %v7385
        %vm7387 = vweird.f32 %v6236
        %vm7388 = vweird.f32 %v7382
        %vm7389 = vmor %vm7387, %vm7388
        %v7390 = vsel %vm7389, %v7382, %v7386
        %v7391 = vand.u32 2147483647, %v6236
        %vm7392 = vcmp.eq.f32.partialorder %v7391, 8.507059e+37
        %v7393 = vand.u32 %v6236, 2147483648
        %v7394 = vor.u32 1.1754944e-38, %v7393
        %v7395 = vsel %vm7392, %v7394, %v7390
        %v7396 = vmul.f32 1.0, %v7395
        %v7397 = vrcp.pop %v6237
        %v7398 = vmul.f32 %v6237, %v7397
        %v7399 = vsub.f32 1.0, %v7398
        %v7400 = vmul.f32 %v7397, %v7399
        %v7401 = vadd.f32 %v7397, %v7400
        %vm7402 = vweird.f32 %v6237
        %vm7403 = vweird.f32 %v7397
        %vm7404 = vmor %vm7402, %vm7403
        %v7405 = vsel %vm7404, %v7397, %v7401
        %v7406 = vand.u32 2147483647, %v6237
        %vm7407 = vcmp.eq.f32.partialorder %v7406, 8.507059e+37
        %v7408 = vand.u32 %v6237, 2147483648
        %v7409 = vor.u32 1.1754944e-38, %v7408
        %v7410 = vsel %vm7407, %v7409, %v7405
        %v7411 = vmul.f32 1.0, %v7410
        %v7412 = vrcp.pop %v6238
        %v7413 = vmul.f32 %v6238, %v7412
        %v7414 = vsub.f32 1.0, %v7413
        %v7415 = vmul.f32 %v7412, %v7414
        %v7416 = vadd.f32 %v7412, %v7415
        %vm7417 = vweird.f32 %v6238
        %vm7418 = vweird.f32 %v7412
        %vm7419 = vmor %vm7417, %vm7418
        %v7420 = vsel %vm7419, %v7412, %v7416
        %v7421 = vand.u32 2147483647, %v6238
        %vm7422 = vcmp.eq.f32.partialorder %v7421, 8.507059e+37
        %v7423 = vand.u32 %v6238, 2147483648
        %v7424 = vor.u32 1.1754944e-38, %v7423
        %v7425 = vsel %vm7422, %v7424, %v7420
        %v7426 = vmul.f32 1.0, %v7425
        %v7427 = vrcp.pop %v6239
        %v7428 = vmul.f32 %v6239, %v7427
        %v7429 = vsub.f32 1.0, %v7428
        %v7430 = vmul.f32 %v7427, %v7429
        %v7431 = vadd.f32 %v7427, %v7430
        %vm7432 = vweird.f32 %v6239
        %vm7433 = vweird.f32 %v7427
        %vm7434 = vmor %vm7432, %vm7433
        %v7435 = vsel %vm7434, %v7427, %v7431
        %v7436 = vand.u32 2147483647, %v6239
        %vm7437 = vcmp.eq.f32.partialorder %v7436, 8.507059e+37
        %v7438 = vand.u32 %v6239, 2147483648
        %v7439 = vor.u32 1.1754944e-38, %v7438
        %v7440 = vsel %vm7437, %v7439, %v7435
        %v7441 = vmul.f32 1.0, %v7440
        %v7442 = vrcp.pop %v6240
        %v7443 = vmul.f32 %v6240, %v7442
        %v7444 = vsub.f32 1.0, %v7443
        %v7445 = vmul.f32 %v7442, %v7444
        %v7446 = vadd.f32 %v7442, %v7445
        %vm7447 = vweird.f32 %v6240
        %vm7448 = vweird.f32 %v7442
        %vm7449 = vmor %vm7447, %vm7448
        %v7450 = vsel %vm7449, %v7442, %v7446
        %v7451 = vand.u32 2147483647, %v6240
        %vm7452 = vcmp.eq.f32.partialorder %v7451, 8.507059e+37
        %v7453 = vand.u32 %v6240, 2147483648
        %v7454 = vor.u32 1.1754944e-38, %v7453
        %v7455 = vsel %vm7452, %v7454, %v7450
        %v7456 = vmul.f32 1.0, %v7455
        %v7457 = vrcp.pop %v6241
        %v7458 = vmul.f32 %v6241, %v7457
        %v7459 = vsub.f32 1.0, %v7458
        %v7460 = vmul.f32 %v7457, %v7459
        %v7461 = vadd.f32 %v7457, %v7460
        %vm7462 = vweird.f32 %v6241
        %vm7463 = vweird.f32 %v7457
        %vm7464 = vmor %vm7462, %vm7463
        %v7465 = vsel %vm7464, %v7457, %v7461
        %v7466 = vand.u32 2147483647, %v6241
        %vm7467 = vcmp.eq.f32.partialorder %v7466, 8.507059e+37
        %v7468 = vand.u32 %v6241, 2147483648
        %v7469 = vor.u32 1.1754944e-38, %v7468
        %v7470 = vsel %vm7467, %v7469, %v7465
        %v7471 = vmul.f32 1.0, %v7470
        %v7472 = vrcp.pop %v6242
        %v7473 = vmul.f32 %v6242, %v7472
        %v7474 = vsub.f32 1.0, %v7473
        %v7475 = vmul.f32 %v7472, %v7474
        %v7476 = vadd.f32 %v7472, %v7475
        %vm7477 = vweird.f32 %v6242
        %vm7478 = vweird.f32 %v7472
        %vm7479 = vmor %vm7477, %vm7478
        %v7480 = vsel %vm7479, %v7472, %v7476
        %v7481 = vand.u32 2147483647, %v6242
        %vm7482 = vcmp.eq.f32.partialorder %v7481, 8.507059e+37
        %v7483 = vand.u32 %v6242, 2147483648
        %v7484 = vor.u32 1.1754944e-38, %v7483
        %v7485 = vsel %vm7482, %v7484, %v7480
        %v7486 = vmul.f32 1.0, %v7485
        %v7487 = vrcp.pop %v6243
        %v7488 = vmul.f32 %v6243, %v7487
        %v7489 = vsub.f32 1.0, %v7488
        %v7490 = vmul.f32 %v7487, %v7489
        %v7491 = vadd.f32 %v7487, %v7490
        %vm7492 = vweird.f32 %v6243
        %vm7493 = vweird.f32 %v7487
        %vm7494 = vmor %vm7492, %vm7493
        %v7495 = vsel %vm7494, %v7487, %v7491
        %v7496 = vand.u32 2147483647, %v6243
        %vm7497 = vcmp.eq.f32.partialorder %v7496, 8.507059e+37
        %v7498 = vand.u32 %v6243, 2147483648
        %v7499 = vor.u32 1.1754944e-38, %v7498
        %v7500 = vsel %vm7497, %v7499, %v7495
        %v7501 = vmul.f32 1.0, %v7500
        %v7502 = vrcp.pop %v6244
        %v7503 = vmul.f32 %v6244, %v7502
        %v7504 = vsub.f32 1.0, %v7503
        %v7505 = vmul.f32 %v7502, %v7504
        %v7506 = vadd.f32 %v7502, %v7505
        %vm7507 = vweird.f32 %v6244
        %vm7508 = vweird.f32 %v7502
        %vm7509 = vmor %vm7507, %vm7508
        %v7510 = vsel %vm7509, %v7502, %v7506
        %v7511 = vand.u32 2147483647, %v6244
        %vm7512 = vcmp.eq.f32.partialorder %v7511, 8.507059e+37
        %v7513 = vand.u32 %v6244, 2147483648
        %v7514 = vor.u32 1.1754944e-38, %v7513
        %v7515 = vsel %vm7512, %v7514, %v7510
        %v7516 = vmul.f32 1.0, %v7515
        %v7517 = vrcp.pop %v6245
        %v7518 = vmul.f32 %v6245, %v7517
        %v7519 = vsub.f32 1.0, %v7518
        %v7520 = vmul.f32 %v7517, %v7519
        %v7521 = vadd.f32 %v7517, %v7520
        %vm7522 = vweird.f32 %v6245
        %vm7523 = vweird.f32 %v7517
        %vm7524 = vmor %vm7522, %vm7523
        %v7525 = vsel %vm7524, %v7517, %v7521
        %v7526 = vand.u32 2147483647, %v6245
        %vm7527 = vcmp.eq.f32.partialorder %v7526, 8.507059e+37
        %v7528 = vand.u32 %v6245, 2147483648
        %v7529 = vor.u32 1.1754944e-38, %v7528
        %v7530 = vsel %vm7527, %v7529, %v7525
        %v7531 = vmul.f32 1.0, %v7530
        %v7532 = vrcp.pop %v6246
        %v7533 = vmul.f32 %v6246, %v7532
        %v7534 = vsub.f32 1.0, %v7533
        %v7535 = vmul.f32 %v7532, %v7534
        %v7536 = vadd.f32 %v7532, %v7535
        %vm7537 = vweird.f32 %v6246
        %vm7538 = vweird.f32 %v7532
        %vm7539 = vmor %vm7537, %vm7538
        %v7540 = vsel %vm7539, %v7532, %v7536
        %v7541 = vand.u32 2147483647, %v6246
        %vm7542 = vcmp.eq.f32.partialorder %v7541, 8.507059e+37
        %v7543 = vand.u32 %v6246, 2147483648
        %v7544 = vor.u32 1.1754944e-38, %v7543
        %v7545 = vsel %vm7542, %v7544, %v7540
        %v7546 = vmul.f32 1.0, %v7545
        %v7547 = vrcp.pop %v6247
        %v7548 = vmul.f32 %v6247, %v7547
        %v7549 = vsub.f32 1.0, %v7548
        %v7550 = vmul.f32 %v7547, %v7549
        %v7551 = vadd.f32 %v7547, %v7550
        %vm7552 = vweird.f32 %v6247
        %vm7553 = vweird.f32 %v7547
        %vm7554 = vmor %vm7552, %vm7553
        %v7555 = vsel %vm7554, %v7547, %v7551
        %v7556 = vand.u32 2147483647, %v6247
        %vm7557 = vcmp.eq.f32.partialorder %v7556, 8.507059e+37
        %v7558 = vand.u32 %v6247, 2147483648
        %v7559 = vor.u32 1.1754944e-38, %v7558
        %v7560 = vsel %vm7557, %v7559, %v7555
        %v7561 = vmul.f32 1.0, %v7560
        %v7562 = vrcp.pop %v6248
        %v7563 = vmul.f32 %v6248, %v7562
        %v7564 = vsub.f32 1.0, %v7563
        %v7565 = vmul.f32 %v7562, %v7564
        %v7566 = vadd.f32 %v7562, %v7565
        %vm7567 = vweird.f32 %v6248
        %vm7568 = vweird.f32 %v7562
        %vm7569 = vmor %vm7567, %vm7568
        %v7570 = vsel %vm7569, %v7562, %v7566
        %v7571 = vand.u32 2147483647, %v6248
        %vm7572 = vcmp.eq.f32.partialorder %v7571, 8.507059e+37
        %v7573 = vand.u32 %v6248, 2147483648
        %v7574 = vor.u32 1.1754944e-38, %v7573
        %v7575 = vsel %vm7572, %v7574, %v7570
        %v7576 = vmul.f32 1.0, %v7575
        %v7577 = vrcp.pop %v6249
        %v7578 = vmul.f32 %v6249, %v7577
        %v7579 = vsub.f32 1.0, %v7578
        %v7580 = vmul.f32 %v7577, %v7579
        %v7581 = vadd.f32 %v7577, %v7580
        %vm7582 = vweird.f32 %v6249
        %vm7583 = vweird.f32 %v7577
        %vm7584 = vmor %vm7582, %vm7583
        %v7585 = vsel %vm7584, %v7577, %v7581
        %v7586 = vand.u32 2147483647, %v6249
        %vm7587 = vcmp.eq.f32.partialorder %v7586, 8.507059e+37
        %v7588 = vand.u32 %v6249, 2147483648
        %v7589 = vor.u32 1.1754944e-38, %v7588
        %v7590 = vsel %vm7587, %v7589, %v7585
        %v7591 = vmul.f32 1.0, %v7590
        %v7592 = vrcp.pop %v6250
        %v7593 = vmul.f32 %v6250, %v7592
        %v7594 = vsub.f32 1.0, %v7593
        %v7595 = vmul.f32 %v7592, %v7594
        %v7596 = vadd.f32 %v7592, %v7595
        %vm7597 = vweird.f32 %v6250
        %vm7598 = vweird.f32 %v7592
        %vm7599 = vmor %vm7597, %vm7598
        %v7600 = vsel %vm7599, %v7592, %v7596
        %v7601 = vand.u32 2147483647, %v6250
        %vm7602 = vcmp.eq.f32.partialorder %v7601, 8.507059e+37
        %v7603 = vand.u32 %v6250, 2147483648
        %v7604 = vor.u32 1.1754944e-38, %v7603
        %v7605 = vsel %vm7602, %v7604, %v7600
        %v7606 = vmul.f32 1.0, %v7605
        %v7607 = vrcp.pop %v6251
        %v7608 = vmul.f32 %v6251, %v7607
        %v7609 = vsub.f32 1.0, %v7608
        %v7610 = vmul.f32 %v7607, %v7609
        %v7611 = vadd.f32 %v7607, %v7610
        %vm7612 = vweird.f32 %v6251
        %vm7613 = vweird.f32 %v7607
        %vm7614 = vmor %vm7612, %vm7613
        %v7615 = vsel %vm7614, %v7607, %v7611
        %v7616 = vand.u32 2147483647, %v6251
        %vm7617 = vcmp.eq.f32.partialorder %v7616, 8.507059e+37
        %v7618 = vand.u32 %v6251, 2147483648
        %v7619 = vor.u32 1.1754944e-38, %v7618
        %v7620 = vsel %vm7617, %v7619, %v7615
        %v7621 = vmul.f32 1.0, %v7620
        %v7622 = vrcp.pop %v6252
        %v7623 = vmul.f32 %v6252, %v7622
        %v7624 = vsub.f32 1.0, %v7623
        %v7625 = vmul.f32 %v7622, %v7624
        %v7626 = vadd.f32 %v7622, %v7625
        %vm7627 = vweird.f32 %v6252
        %vm7628 = vweird.f32 %v7622
        %vm7629 = vmor %vm7627, %vm7628
        %v7630 = vsel %vm7629, %v7622, %v7626
        %v7631 = vand.u32 2147483647, %v6252
        %vm7632 = vcmp.eq.f32.partialorder %v7631, 8.507059e+37
        %v7633 = vand.u32 %v6252, 2147483648
        %v7634 = vor.u32 1.1754944e-38, %v7633
        %v7635 = vsel %vm7632, %v7634, %v7630
        %v7636 = vmul.f32 1.0, %v7635
        %v7637 = vrcp.pop %v6253
        %v7638 = vmul.f32 %v6253, %v7637
        %v7639 = vsub.f32 1.0, %v7638
        %v7640 = vmul.f32 %v7637, %v7639
        %v7641 = vadd.f32 %v7637, %v7640
        %vm7642 = vweird.f32 %v6253
        %vm7643 = vweird.f32 %v7637
        %vm7644 = vmor %vm7642, %vm7643
        %v7645 = vsel %vm7644, %v7637, %v7641
        %v7646 = vand.u32 2147483647, %v6253
        %vm7647 = vcmp.eq.f32.partialorder %v7646, 8.507059e+37
        %v7648 = vand.u32 %v6253, 2147483648
        %v7649 = vor.u32 1.1754944e-38, %v7648
        %v7650 = vsel %vm7647, %v7649, %v7645
        %v7651 = vmul.f32 1.0, %v7650
        %v7652 = vrcp.pop %v6254
        %v7653 = vmul.f32 %v6254, %v7652
        %v7654 = vsub.f32 1.0, %v7653
        %v7655 = vmul.f32 %v7652, %v7654
        %v7656 = vadd.f32 %v7652, %v7655
        %vm7657 = vweird.f32 %v6254
        %vm7658 = vweird.f32 %v7652
        %vm7659 = vmor %vm7657, %vm7658
        %v7660 = vsel %vm7659, %v7652, %v7656
        %v7661 = vand.u32 2147483647, %v6254
        %vm7662 = vcmp.eq.f32.partialorder %v7661, 8.507059e+37
        %v7663 = vand.u32 %v6254, 2147483648
        %v7664 = vor.u32 1.1754944e-38, %v7663
        %v7665 = vsel %vm7662, %v7664, %v7660
        %v7666 = vmul.f32 1.0, %v7665
        %v7667 = vrcp.pop %v6255
        %v7668 = vmul.f32 %v6255, %v7667
        %v7669 = vsub.f32 1.0, %v7668
        %v7670 = vmul.f32 %v7667, %v7669
        %v7671 = vadd.f32 %v7667, %v7670
        %vm7672 = vweird.f32 %v6255
        %vm7673 = vweird.f32 %v7667
        %vm7674 = vmor %vm7672, %vm7673
        %v7675 = vsel %vm7674, %v7667, %v7671
        %v7676 = vand.u32 2147483647, %v6255
        %vm7677 = vcmp.eq.f32.partialorder %v7676, 8.507059e+37
        %v7678 = vand.u32 %v6255, 2147483648
        %v7679 = vor.u32 1.1754944e-38, %v7678
        %v7680 = vsel %vm7677, %v7679, %v7675
        %v7681 = vmul.f32 1.0, %v7680
        %v7682 = vrcp.pop %v6256
        %v7683 = vmul.f32 %v6256, %v7682
        %v7684 = vsub.f32 1.0, %v7683
        %v7685 = vmul.f32 %v7682, %v7684
        %v7686 = vadd.f32 %v7682, %v7685
        %vm7687 = vweird.f32 %v6256
        %vm7688 = vweird.f32 %v7682
        %vm7689 = vmor %vm7687, %vm7688
        %v7690 = vsel %vm7689, %v7682, %v7686
        %v7691 = vand.u32 2147483647, %v6256
        %vm7692 = vcmp.eq.f32.partialorder %v7691, 8.507059e+37
        %v7693 = vand.u32 %v6256, 2147483648
        %v7694 = vor.u32 1.1754944e-38, %v7693
        %v7695 = vsel %vm7692, %v7694, %v7690
        %v7696 = vmul.f32 1.0, %v7695
        %v7697 = vrcp.pop %v6257
        %v7698 = vmul.f32 %v6257, %v7697
        %v7699 = vsub.f32 1.0, %v7698
        %v7700 = vmul.f32 %v7697, %v7699
        %v7701 = vadd.f32 %v7697, %v7700
        %vm7702 = vweird.f32 %v6257
        %vm7703 = vweird.f32 %v7697
        %vm7704 = vmor %vm7702, %vm7703
        %v7705 = vsel %vm7704, %v7697, %v7701
        %v7706 = vand.u32 2147483647, %v6257
        %vm7707 = vcmp.eq.f32.partialorder %v7706, 8.507059e+37
        %v7708 = vand.u32 %v6257, 2147483648
        %v7709 = vor.u32 1.1754944e-38, %v7708
        %v7710 = vsel %vm7707, %v7709, %v7705
        %v7711 = vmul.f32 1.0, %v7710
        %v7712 = vrcp.pop %v6258
        %v7713 = vmul.f32 %v6258, %v7712
        %v7714 = vsub.f32 1.0, %v7713
        %v7715 = vmul.f32 %v7712, %v7714
        %v7716 = vadd.f32 %v7712, %v7715
        %vm7717 = vweird.f32 %v6258
        %vm7718 = vweird.f32 %v7712
        %vm7719 = vmor %vm7717, %vm7718
        %v7720 = vsel %vm7719, %v7712, %v7716
        %v7721 = vand.u32 2147483647, %v6258
        %vm7722 = vcmp.eq.f32.partialorder %v7721, 8.507059e+37
        %v7723 = vand.u32 %v6258, 2147483648
        %v7724 = vor.u32 1.1754944e-38, %v7723
        %v7725 = vsel %vm7722, %v7724, %v7720
        %v7726 = vmul.f32 1.0, %v7725
        %v7727 = vrcp.pop %v6259
        %v7728 = vmul.f32 %v6259, %v7727
        %v7729 = vsub.f32 1.0, %v7728
        %v7730 = vmul.f32 %v7727, %v7729
        %v7731 = vadd.f32 %v7727, %v7730
        %vm7732 = vweird.f32 %v6259
        %vm7733 = vweird.f32 %v7727
        %vm7734 = vmor %vm7732, %vm7733
        %v7735 = vsel %vm7734, %v7727, %v7731
        %v7736 = vand.u32 2147483647, %v6259
        %vm7737 = vcmp.eq.f32.partialorder %v7736, 8.507059e+37
        %v7738 = vand.u32 %v6259, 2147483648
        %v7739 = vor.u32 1.1754944e-38, %v7738
        %v7740 = vsel %vm7737, %v7739, %v7735
        %v7741 = vmul.f32 1.0, %v7740
        %v7742 = vrcp.pop %v6260
        %v7743 = vmul.f32 %v6260, %v7742
        %v7744 = vsub.f32 1.0, %v7743
        %v7745 = vmul.f32 %v7742, %v7744
        %v7746 = vadd.f32 %v7742, %v7745
        %vm7747 = vweird.f32 %v6260
        %vm7748 = vweird.f32 %v7742
        %vm7749 = vmor %vm7747, %vm7748
        %v7750 = vsel %vm7749, %v7742, %v7746
        %v7751 = vand.u32 2147483647, %v6260
        %vm7752 = vcmp.eq.f32.partialorder %v7751, 8.507059e+37
        %v7753 = vand.u32 %v6260, 2147483648
        %v7754 = vor.u32 1.1754944e-38, %v7753
        %v7755 = vsel %vm7752, %v7754, %v7750
        %v7756 = vmul.f32 1.0, %v7755
        %v7757 = vrcp.pop %v6261
        %v7758 = vmul.f32 %v6261, %v7757
        %v7759 = vsub.f32 1.0, %v7758
        %v7760 = vmul.f32 %v7757, %v7759
        %v7761 = vadd.f32 %v7757, %v7760
        %vm7762 = vweird.f32 %v6261
        %vm7763 = vweird.f32 %v7757
        %vm7764 = vmor %vm7762, %vm7763
        %v7765 = vsel %vm7764, %v7757, %v7761
        %v7766 = vand.u32 2147483647, %v6261
        %vm7767 = vcmp.eq.f32.partialorder %v7766, 8.507059e+37
        %v7768 = vand.u32 %v6261, 2147483648
        %v7769 = vor.u32 1.1754944e-38, %v7768
        %v7770 = vsel %vm7767, %v7769, %v7765
        %v7771 = vmul.f32 1.0, %v7770
        %v7772 = vrcp.pop %v6262
        %v7773 = vmul.f32 %v6262, %v7772
        %v7774 = vsub.f32 1.0, %v7773
        %v7775 = vmul.f32 %v7772, %v7774
        %v7776 = vadd.f32 %v7772, %v7775
        %vm7777 = vweird.f32 %v6262
        %vm7778 = vweird.f32 %v7772
        %vm7779 = vmor %vm7777, %vm7778
        %v7780 = vsel %vm7779, %v7772, %v7776
        %v7781 = vand.u32 2147483647, %v6262
        %vm7782 = vcmp.eq.f32.partialorder %v7781, 8.507059e+37
        %v7783 = vand.u32 %v6262, 2147483648
        %v7784 = vor.u32 1.1754944e-38, %v7783
        %v7785 = vsel %vm7782, %v7784, %v7780
        %v7786 = vmul.f32 1.0, %v7785
        %v7787 = vrcp.pop %v6263
        %v7788 = vmul.f32 %v6263, %v7787
        %v7789 = vsub.f32 1.0, %v7788
        %v7790 = vmul.f32 %v7787, %v7789
        %v7791 = vadd.f32 %v7787, %v7790
        %vm7792 = vweird.f32 %v6263
        %vm7793 = vweird.f32 %v7787
        %vm7794 = vmor %vm7792, %vm7793
        %v7795 = vsel %vm7794, %v7787, %v7791
        %v7796 = vand.u32 2147483647, %v6263
        %vm7797 = vcmp.eq.f32.partialorder %v7796, 8.507059e+37
        %v7798 = vand.u32 %v6263, 2147483648
        %v7799 = vor.u32 1.1754944e-38, %v7798
        %v7800 = vsel %vm7797, %v7799, %v7795
        %v7801 = vmul.f32 1.0, %v7800
        %v7802 = vrcp.pop %v6264
        %v7803 = vmul.f32 %v6264, %v7802
        %v7804 = vsub.f32 1.0, %v7803
        %v7805 = vmul.f32 %v7802, %v7804
        %v7806 = vadd.f32 %v7802, %v7805
        %vm7807 = vweird.f32 %v6264
        %vm7808 = vweird.f32 %v7802
        %vm7809 = vmor %vm7807, %vm7808
        %v7810 = vsel %vm7809, %v7802, %v7806
        %v7811 = vand.u32 2147483647, %v6264
        %vm7812 = vcmp.eq.f32.partialorder %v7811, 8.507059e+37
        %v7813 = vand.u32 %v6264, 2147483648
        %v7814 = vor.u32 1.1754944e-38, %v7813
        %v7815 = vsel %vm7812, %v7814, %v7810
        %v7816 = vmul.f32 1.0, %v7815
        %v7817 = vrcp.pop %v6265
        %v7818 = vmul.f32 %v6265, %v7817
        %v7819 = vsub.f32 1.0, %v7818
        %v7820 = vmul.f32 %v7817, %v7819
        %v7821 = vadd.f32 %v7817, %v7820
        %vm7822 = vweird.f32 %v6265
        %vm7823 = vweird.f32 %v7817
        %vm7824 = vmor %vm7822, %vm7823
        %v7825 = vsel %vm7824, %v7817, %v7821
        %v7826 = vand.u32 2147483647, %v6265
        %vm7827 = vcmp.eq.f32.partialorder %v7826, 8.507059e+37
        %v7828 = vand.u32 %v6265, 2147483648
        %v7829 = vor.u32 1.1754944e-38, %v7828
        %v7830 = vsel %vm7827, %v7829, %v7825
        %v7831 = vmul.f32 1.0, %v7830
        %v7832 = vrcp.pop %v6266
        %v7833 = vmul.f32 %v6266, %v7832
        %v7834 = vsub.f32 1.0, %v7833
        %v7835 = vmul.f32 %v7832, %v7834
        %v7836 = vadd.f32 %v7832, %v7835
        %vm7837 = vweird.f32 %v6266
        %vm7838 = vweird.f32 %v7832
        %vm7839 = vmor %vm7837, %vm7838
        %v7840 = vsel %vm7839, %v7832, %v7836
        %v7841 = vand.u32 2147483647, %v6266
        %vm7842 = vcmp.eq.f32.partialorder %v7841, 8.507059e+37
        %v7843 = vand.u32 %v6266, 2147483648
        %v7844 = vor.u32 1.1754944e-38, %v7843
        %v7845 = vsel %vm7842, %v7844, %v7840
        %v7846 = vmul.f32 1.0, %v7845
        %v7847 = vrcp.pop %v6267
        %v7848 = vmul.f32 %v6267, %v7847
        %v7849 = vsub.f32 1.0, %v7848
        %v7850 = vmul.f32 %v7847, %v7849
        %v7851 = vadd.f32 %v7847, %v7850
        %vm7852 = vweird.f32 %v6267
        %vm7853 = vweird.f32 %v7847
        %vm7854 = vmor %vm7852, %vm7853
        %v7855 = vsel %vm7854, %v7847, %v7851
        %v7856 = vand.u32 2147483647, %v6267
        %vm7857 = vcmp.eq.f32.partialorder %v7856, 8.507059e+37
        %v7858 = vand.u32 %v6267, 2147483648
        %v7859 = vor.u32 1.1754944e-38, %v7858
        %v7860 = vsel %vm7857, %v7859, %v7855
        %v7861 = vmul.f32 1.0, %v7860
        %v7862 = vrcp.pop %v6268
        %v7863 = vmul.f32 %v6268, %v7862
        %v7864 = vsub.f32 1.0, %v7863
        %v7865 = vmul.f32 %v7862, %v7864
        %v7866 = vadd.f32 %v7862, %v7865
        %vm7867 = vweird.f32 %v6268
        %vm7868 = vweird.f32 %v7862
        %vm7869 = vmor %vm7867, %vm7868
        %v7870 = vsel %vm7869, %v7862, %v7866
        %v7871 = vand.u32 2147483647, %v6268
        %vm7872 = vcmp.eq.f32.partialorder %v7871, 8.507059e+37
        %v7873 = vand.u32 %v6268, 2147483648
        %v7874 = vor.u32 1.1754944e-38, %v7873
        %v7875 = vsel %vm7872, %v7874, %v7870
        %v7876 = vmul.f32 1.0, %v7875
        %v7877 = vrcp.pop %v6269
        %v7878 = vmul.f32 %v6269, %v7877
        %v7879 = vsub.f32 1.0, %v7878
        %v7880 = vmul.f32 %v7877, %v7879
        %v7881 = vadd.f32 %v7877, %v7880
        %vm7882 = vweird.f32 %v6269
        %vm7883 = vweird.f32 %v7877
        %vm7884 = vmor %vm7882, %vm7883
        %v7885 = vsel %vm7884, %v7877, %v7881
        %v7886 = vand.u32 2147483647, %v6269
        %vm7887 = vcmp.eq.f32.partialorder %v7886, 8.507059e+37
        %v7888 = vand.u32 %v6269, 2147483648
        %v7889 = vor.u32 1.1754944e-38, %v7888
        %v7890 = vsel %vm7887, %v7889, %v7885
        %v7891 = vmul.f32 1.0, %v7890
        %v7892 = vrcp.pop %v6270
        %v7893 = vmul.f32 %v6270, %v7892
        %v7894 = vsub.f32 1.0, %v7893
        %v7895 = vmul.f32 %v7892, %v7894
        %v7896 = vadd.f32 %v7892, %v7895
        %vm7897 = vweird.f32 %v6270
        %vm7898 = vweird.f32 %v7892
        %vm7899 = vmor %vm7897, %vm7898
        %v7900 = vsel %vm7899, %v7892, %v7896
        %v7901 = vand.u32 2147483647, %v6270
        %vm7902 = vcmp.eq.f32.partialorder %v7901, 8.507059e+37
        %v7903 = vand.u32 %v6270, 2147483648
        %v7904 = vor.u32 1.1754944e-38, %v7903
        %v7905 = vsel %vm7902, %v7904, %v7900
        %v7906 = vmul.f32 1.0, %v7905
        %v7907 = vrcp.pop %v6271
        %v7908 = vmul.f32 %v6271, %v7907
        %v7909 = vsub.f32 1.0, %v7908
        %v7910 = vmul.f32 %v7907, %v7909
        %v7911 = vadd.f32 %v7907, %v7910
        %vm7912 = vweird.f32 %v6271
        %vm7913 = vweird.f32 %v7907
        %vm7914 = vmor %vm7912, %vm7913
        %v7915 = vsel %vm7914, %v7907, %v7911
        %v7916 = vand.u32 2147483647, %v6271
        %vm7917 = vcmp.eq.f32.partialorder %v7916, 8.507059e+37
        %v7918 = vand.u32 %v6271, 2147483648
        %v7919 = vor.u32 1.1754944e-38, %v7918
        %v7920 = vsel %vm7917, %v7919, %v7915
        %v7921 = vmul.f32 1.0, %v7920
        %v7922 = vrcp.pop %v6272
        %v7923 = vmul.f32 %v6272, %v7922
        %v7924 = vsub.f32 1.0, %v7923
        %v7925 = vmul.f32 %v7922, %v7924
        %v7926 = vadd.f32 %v7922, %v7925
        %vm7927 = vweird.f32 %v6272
        %vm7928 = vweird.f32 %v7922
        %vm7929 = vmor %vm7927, %vm7928
        %v7930 = vsel %vm7929, %v7922, %v7926
        %v7931 = vand.u32 2147483647, %v6272
        %vm7932 = vcmp.eq.f32.partialorder %v7931, 8.507059e+37
        %v7933 = vand.u32 %v6272, 2147483648
        %v7934 = vor.u32 1.1754944e-38, %v7933
        %v7935 = vsel %vm7932, %v7934, %v7930
        %v7936 = vmul.f32 1.0, %v7935
        %v7937 = vrcp.pop %v6273
        %v7938 = vmul.f32 %v6273, %v7937
        %v7939 = vsub.f32 1.0, %v7938
        %v7940 = vmul.f32 %v7937, %v7939
        %v7941 = vadd.f32 %v7937, %v7940
        %vm7942 = vweird.f32 %v6273
        %vm7943 = vweird.f32 %v7937
        %vm7944 = vmor %vm7942, %vm7943
        %v7945 = vsel %vm7944, %v7937, %v7941
        %v7946 = vand.u32 2147483647, %v6273
        %vm7947 = vcmp.eq.f32.partialorder %v7946, 8.507059e+37
        %v7948 = vand.u32 %v6273, 2147483648
        %v7949 = vor.u32 1.1754944e-38, %v7948
        %v7950 = vsel %vm7947, %v7949, %v7945
        %v7951 = vmul.f32 1.0, %v7950
        %v7952 = vrcp.pop %v6274
        %v7953 = vmul.f32 %v6274, %v7952
        %v7954 = vsub.f32 1.0, %v7953
        %v7955 = vmul.f32 %v7952, %v7954
        %v7956 = vadd.f32 %v7952, %v7955
        %vm7957 = vweird.f32 %v6274
        %vm7958 = vweird.f32 %v7952
        %vm7959 = vmor %vm7957, %vm7958
        %v7960 = vsel %vm7959, %v7952, %v7956
        %v7961 = vand.u32 2147483647, %v6274
        %vm7962 = vcmp.eq.f32.partialorder %v7961, 8.507059e+37
        %v7963 = vand.u32 %v6274, 2147483648
        %v7964 = vor.u32 1.1754944e-38, %v7963
        %v7965 = vsel %vm7962, %v7964, %v7960
        %v7966 = vmul.f32 1.0, %v7965
        %v7967 = vrcp.pop %v6275
        %v7968 = vmul.f32 %v6275, %v7967
        %v7969 = vsub.f32 1.0, %v7968
        %v7970 = vmul.f32 %v7967, %v7969
        %v7971 = vadd.f32 %v7967, %v7970
        %vm7972 = vweird.f32 %v6275
        %vm7973 = vweird.f32 %v7967
        %vm7974 = vmor %vm7972, %vm7973
        %v7975 = vsel %vm7974, %v7967, %v7971
        %v7976 = vand.u32 2147483647, %v6275
        %vm7977 = vcmp.eq.f32.partialorder %v7976, 8.507059e+37
        %v7978 = vand.u32 %v6275, 2147483648
        %v7979 = vor.u32 1.1754944e-38, %v7978
        %v7980 = vsel %vm7977, %v7979, %v7975
        %v7981 = vmul.f32 1.0, %v7980
        %v7982 = vrcp.pop %v6276
        %v7983 = vmul.f32 %v6276, %v7982
        %v7984 = vsub.f32 1.0, %v7983
        %v7985 = vmul.f32 %v7982, %v7984
        %v7986 = vadd.f32 %v7982, %v7985
        %vm7987 = vweird.f32 %v6276
        %vm7988 = vweird.f32 %v7982
        %vm7989 = vmor %vm7987, %vm7988
        %v7990 = vsel %vm7989, %v7982, %v7986
        %v7991 = vand.u32 2147483647, %v6276
        %vm7992 = vcmp.eq.f32.partialorder %v7991, 8.507059e+37
        %v7993 = vand.u32 %v6276, 2147483648
        %v7994 = vor.u32 1.1754944e-38, %v7993
        %v7995 = vsel %vm7992, %v7994, %v7990
        %v7996 = vmul.f32 1.0, %v7995
        %v7997 = vrcp.pop %v6277
        %v7998 = vmul.f32 %v6277, %v7997
        %v7999 = vsub.f32 1.0, %v7998
        %v8000 = vmul.f32 %v7997, %v7999
        %v8001 = vadd.f32 %v7997, %v8000
        %vm8002 = vweird.f32 %v6277
        %vm8003 = vweird.f32 %v7997
        %vm8004 = vmor %vm8002, %vm8003
        %v8005 = vsel %vm8004, %v7997, %v8001
        %v8006 = vand.u32 2147483647, %v6277
        %vm8007 = vcmp.eq.f32.partialorder %v8006, 8.507059e+37
        %v8008 = vand.u32 %v6277, 2147483648
        %v8009 = vor.u32 1.1754944e-38, %v8008
        %v8010 = vsel %vm8007, %v8009, %v8005
        %v8011 = vmul.f32 1.0, %v8010
        %v8012 = vrcp.pop %v6278
        %v8013 = vmul.f32 %v6278, %v8012
        %v8014 = vsub.f32 1.0, %v8013
        %v8015 = vmul.f32 %v8012, %v8014
        %v8016 = vadd.f32 %v8012, %v8015
        %vm8017 = vweird.f32 %v6278
        %vm8018 = vweird.f32 %v8012
        %vm8019 = vmor %vm8017, %vm8018
        %v8020 = vsel %vm8019, %v8012, %v8016
        %v8021 = vand.u32 2147483647, %v6278
        %vm8022 = vcmp.eq.f32.partialorder %v8021, 8.507059e+37
        %v8023 = vand.u32 %v6278, 2147483648
        %v8024 = vor.u32 1.1754944e-38, %v8023
        %v8025 = vsel %vm8022, %v8024, %v8020
        %v8026 = vmul.f32 1.0, %v8025
        %v8027 = vrcp.pop %v6279
        %v8028 = vmul.f32 %v6279, %v8027
        %v8029 = vsub.f32 1.0, %v8028
        %v8030 = vmul.f32 %v8027, %v8029
        %v8031 = vadd.f32 %v8027, %v8030
        %vm8032 = vweird.f32 %v6279
        %vm8033 = vweird.f32 %v8027
        %vm8034 = vmor %vm8032, %vm8033
        %v8035 = vsel %vm8034, %v8027, %v8031
        %v8036 = vand.u32 2147483647, %v6279
        %vm8037 = vcmp.eq.f32.partialorder %v8036, 8.507059e+37
        %v8038 = vand.u32 %v6279, 2147483648
        %v8039 = vor.u32 1.1754944e-38, %v8038
        %v8040 = vsel %vm8037, %v8039, %v8035
        %v8041 = vmul.f32 1.0, %v8040
        %v8042 = vrcp.pop %v6280
        %v8043 = vmul.f32 %v6280, %v8042
        %v8044 = vsub.f32 1.0, %v8043
        %v8045 = vmul.f32 %v8042, %v8044
        %v8046 = vadd.f32 %v8042, %v8045
        %vm8047 = vweird.f32 %v6280
        %vm8048 = vweird.f32 %v8042
        %vm8049 = vmor %vm8047, %vm8048
        %v8050 = vsel %vm8049, %v8042, %v8046
        %v8051 = vand.u32 2147483647, %v6280
        %vm8052 = vcmp.eq.f32.partialorder %v8051, 8.507059e+37
        %v8053 = vand.u32 %v6280, 2147483648
        %v8054 = vor.u32 1.1754944e-38, %v8053
        %v8055 = vsel %vm8052, %v8054, %v8050
        %v8056 = vmul.f32 1.0, %v8055
        %v8057 = vrcp.pop %v6281
        %v8058 = vmul.f32 %v6281, %v8057
        %v8059 = vsub.f32 1.0, %v8058
        %v8060 = vmul.f32 %v8057, %v8059
        %v8061 = vadd.f32 %v8057, %v8060
        %vm8062 = vweird.f32 %v6281
        %vm8063 = vweird.f32 %v8057
        %vm8064 = vmor %vm8062, %vm8063
        %v8065 = vsel %vm8064, %v8057, %v8061
        %v8066 = vand.u32 2147483647, %v6281
        %vm8067 = vcmp.eq.f32.partialorder %v8066, 8.507059e+37
        %v8068 = vand.u32 %v6281, 2147483648
        %v8069 = vor.u32 1.1754944e-38, %v8068
        %v8070 = vsel %vm8067, %v8069, %v8065
        %v8071 = vmul.f32 1.0, %v8070
        %v8072 = vrcp.pop %v6282
        %v8073 = vmul.f32 %v6282, %v8072
        %v8074 = vsub.f32 1.0, %v8073
        %v8075 = vmul.f32 %v8072, %v8074
        %v8076 = vadd.f32 %v8072, %v8075
        %vm8077 = vweird.f32 %v6282
        %vm8078 = vweird.f32 %v8072
        %vm8079 = vmor %vm8077, %vm8078
        %v8080 = vsel %vm8079, %v8072, %v8076
        %v8081 = vand.u32 2147483647, %v6282
        %vm8082 = vcmp.eq.f32.partialorder %v8081, 8.507059e+37
        %v8083 = vand.u32 %v6282, 2147483648
        %v8084 = vor.u32 1.1754944e-38, %v8083
        %v8085 = vsel %vm8082, %v8084, %v8080
        %v8086 = vmul.f32 1.0, %v8085
        %v8087 = vrcp.pop %v6283
        %v8088 = vmul.f32 %v6283, %v8087
        %v8089 = vsub.f32 1.0, %v8088
        %v8090 = vmul.f32 %v8087, %v8089
        %v8091 = vadd.f32 %v8087, %v8090
        %vm8092 = vweird.f32 %v6283
        %vm8093 = vweird.f32 %v8087
        %vm8094 = vmor %vm8092, %vm8093
        %v8095 = vsel %vm8094, %v8087, %v8091
        %v8096 = vand.u32 2147483647, %v6283
        %vm8097 = vcmp.eq.f32.partialorder %v8096, 8.507059e+37
        %v8098 = vand.u32 %v6283, 2147483648
        %v8099 = vor.u32 1.1754944e-38, %v8098
        %v8100 = vsel %vm8097, %v8099, %v8095
        %v8101 = vmul.f32 1.0, %v8100
        %v8102 = vrcp.pop %v6284
        %v8103 = vmul.f32 %v6284, %v8102
        %v8104 = vsub.f32 1.0, %v8103
        %v8105 = vmul.f32 %v8102, %v8104
        %v8106 = vadd.f32 %v8102, %v8105
        %vm8107 = vweird.f32 %v6284
        %vm8108 = vweird.f32 %v8102
        %vm8109 = vmor %vm8107, %vm8108
        %v8110 = vsel %vm8109, %v8102, %v8106
        %v8111 = vand.u32 2147483647, %v6284
        %vm8112 = vcmp.eq.f32.partialorder %v8111, 8.507059e+37
        %v8113 = vand.u32 %v6284, 2147483648
        %v8114 = vor.u32 1.1754944e-38, %v8113
        %v8115 = vsel %vm8112, %v8114, %v8110
        %v8116 = vmul.f32 1.0, %v8115
        %v8117 = vrcp.pop %v6285
        %v8118 = vmul.f32 %v6285, %v8117
        %v8119 = vsub.f32 1.0, %v8118
        %v8120 = vmul.f32 %v8117, %v8119
        %v8121 = vadd.f32 %v8117, %v8120
        %vm8122 = vweird.f32 %v6285
        %vm8123 = vweird.f32 %v8117
        %vm8124 = vmor %vm8122, %vm8123
        %v8125 = vsel %vm8124, %v8117, %v8121
        %v8126 = vand.u32 2147483647, %v6285
        %vm8127 = vcmp.eq.f32.partialorder %v8126, 8.507059e+37
        %v8128 = vand.u32 %v6285, 2147483648
        %v8129 = vor.u32 1.1754944e-38, %v8128
        %v8130 = vsel %vm8127, %v8129, %v8125
        %v8131 = vmul.f32 1.0, %v8130
        %v8132 = vrcp.pop %v6286
        %v8133 = vmul.f32 %v6286, %v8132
        %v8134 = vsub.f32 1.0, %v8133
        %v8135 = vmul.f32 %v8132, %v8134
        %v8136 = vadd.f32 %v8132, %v8135
        %vm8137 = vweird.f32 %v6286
        %vm8138 = vweird.f32 %v8132
        %vm8139 = vmor %vm8137, %vm8138
        %v8140 = vsel %vm8139, %v8132, %v8136
        %v8141 = vand.u32 2147483647, %v6286
        %vm8142 = vcmp.eq.f32.partialorder %v8141, 8.507059e+37
        %v8143 = vand.u32 %v6286, 2147483648
        %v8144 = vor.u32 1.1754944e-38, %v8143
        %v8145 = vsel %vm8142, %v8144, %v8140
        %v8146 = vmul.f32 1.0, %v8145
        %v8147 = vmul.f32 %v5420, %v6301
        %v8148 = vmul.f32 %v5423, %v6316
        %v8149 = vmul.f32 %v5426, %v6331
        %v8150 = vmul.f32 %v5429, %v6346
        %v8151 = vmul.f32 %v5432, %v6361
        %v8152 = vmul.f32 %v5435, %v6376
        %v8153 = vmul.f32 %v5438, %v6391
        %v8154 = vmul.f32 %v5441, %v6406
        %v8155 = vmul.f32 %v5444, %v6421
        %v8156 = vmul.f32 %v5447, %v6436
        %v8157 = vmul.f32 %v5450, %v6451
        %v8158 = vmul.f32 %v5453, %v6466
        %v8159 = vmul.f32 %v5456, %v6481
        %v8160 = vmul.f32 %v5459, %v6496
        %v8161 = vmul.f32 %v5462, %v6511
        %v8162 = vmul.f32 %v5465, %v6526
        %v8163 = vmul.f32 %v5468, %v6541
        %v8164 = vmul.f32 %v5471, %v6556
        %v8165 = vmul.f32 %v5474, %v6571
        %v8166 = vmul.f32 %v5477, %v6586
        %v8167 = vmul.f32 %v5480, %v6601
        %v8168 = vmul.f32 %v5483, %v6616
        %v8169 = vmul.f32 %v5486, %v6631
        %v8170 = vmul.f32 %v5489, %v6646
        %v8171 = vmul.f32 %v5492, %v6661
        %v8172 = vmul.f32 %v5495, %v6676
        %v8173 = vmul.f32 %v5498, %v6691
        %v8174 = vmul.f32 %v5501, %v6706
        %v8175 = vmul.f32 %v5504, %v6721
        %v8176 = vmul.f32 %v5507, %v6736
        %v8177 = vmul.f32 %v5510, %v6751
        %v8178 = vmul.f32 %v5513, %v6766
        %v8179 = vmul.f32 %v5516, %v6781
        %v8180 = vmul.f32 %v5519, %v6796
        %v8181 = vmul.f32 %v5522, %v6811
        %v8182 = vmul.f32 %v5525, %v6826
        %v8183 = vmul.f32 %v5528, %v6841
        %v8184 = vmul.f32 %v5531, %v6856
        %v8185 = vmul.f32 %v5534, %v6871
        %v8186 = vmul.f32 %v5537, %v6886
        %v8187 = vmul.f32 %v5540, %v6901
        %v8188 = vmul.f32 %v5543, %v6916
        %v8189 = vmul.f32 %v5546, %v6931
        %v8190 = vmul.f32 %v5549, %v6946
        %v8191 = vmul.f32 %v5552, %v6961
        %v8192 = vmul.f32 %v5555, %v6976
        %v8193 = vmul.f32 %v5558, %v6991
        %v8194 = vmul.f32 %v5561, %v7006
        %v8195 = vmul.f32 %v5564, %v7021
        %v8196 = vmul.f32 %v5567, %v7036
        %v8197 = vmul.f32 %v5570, %v7051
        %v8198 = vmul.f32 %v5573, %v7066
        %v8199 = vmul.f32 %v5576, %v7081
        %v8200 = vmul.f32 %v5579, %v7096
        %v8201 = vmul.f32 %v5582, %v7111
        %v8202 = vmul.f32 %v5585, %v7126
        %v8203 = vmul.f32 %v5588, %v7141
        %v8204 = vmul.f32 %v5591, %v7156
        %v8205 = vmul.f32 %v5594, %v7171
        %v8206 = vmul.f32 %v5597, %v7186
        %v8207 = vmul.f32 %v5600, %v7201
        %v8208 = vmul.f32 %v5603, %v7216
        %v8209 = vmul.f32 %v5606, %v7231
        %v8210 = vmul.f32 %v5609, %v7246
        %v8211 = vmul.f32 %v5612, %v7261
        %v8212 = vmul.f32 %v5615, %v7276
        %v8213 = vmul.f32 %v5618, %v7291
        %v8214 = vmul.f32 %v5621, %v7306
        %v8215 = vmul.f32 %v5624, %v7321
        %v8216 = vmul.f32 %v5627, %v7336
        %v8217 = vmul.f32 %v5630, %v7351
        %v8218 = vmul.f32 %v5633, %v7366
        %v8219 = vmul.f32 %v5636, %v7381
        %v8220 = vmul.f32 %v5639, %v7396
        %v8221 = vmul.f32 %v5642, %v7411
        %v8222 = vmul.f32 %v5645, %v7426
        %v8223 = vmul.f32 %v5648, %v7441
        %v8224 = vmul.f32 %v5651, %v7456
        %v8225 = vmul.f32 %v5654, %v7471
        %v8226 = vmul.f32 %v5657, %v7486
        %v8227 = vmul.f32 %v5660, %v7501
        %v8228 = vmul.f32 %v5663, %v7516
        %v8229 = vmul.f32 %v5666, %v7531
        %v8230 = vmul.f32 %v5669, %v7546
        %v8231 = vmul.f32 %v5672, %v7561
        %v8232 = vmul.f32 %v5675, %v7576
        %v8233 = vmul.f32 %v5678, %v7591
        %v8234 = vmul.f32 %v5681, %v7606
        %v8235 = vmul.f32 %v5684, %v7621
        %v8236 = vmul.f32 %v5687, %v7636
        %v8237 = vmul.f32 %v5690, %v7651
        %v8238 = vmul.f32 %v5693, %v7666
        %v8239 = vmul.f32 %v5696, %v7681
        %v8240 = vmul.f32 %v5699, %v7696
        %v8241 = vmul.f32 %v5702, %v7711
        %v8242 = vmul.f32 %v5705, %v7726
        %v8243 = vmul.f32 %v5708, %v7741
        %v8244 = vmul.f32 %v5711, %v7756
        %v8245 = vmul.f32 %v5714, %v7771
        %v8246 = vmul.f32 %v5717, %v7786
        %v8247 = vmul.f32 %v5720, %v7801
        %v8248 = vmul.f32 %v5723, %v7816
        %v8249 = vmul.f32 %v5726, %v7831
        %v8250 = vmul.f32 %v5729, %v7846
        %v8251 = vmul.f32 %v5732, %v7861
        %v8252 = vmul.f32 %v5735, %v7876
        %v8253 = vmul.f32 %v5738, %v7891
        %v8254 = vmul.f32 %v5741, %v7906
        %v8255 = vmul.f32 %v5744, %v7921
        %v8256 = vmul.f32 %v5747, %v7936
        %v8257 = vmul.f32 %v5750, %v7951
        %v8258 = vmul.f32 %v5753, %v7966
        %v8259 = vmul.f32 %v5756, %v7981
        %v8260 = vmul.f32 %v5759, %v7996
        %v8261 = vmul.f32 %v5762, %v8011
        %v8262 = vmul.f32 %v5765, %v8026
        %v8263 = vmul.f32 %v5768, %v8041
        %v8264 = vmul.f32 %v5771, %v8056
        %v8265 = vmul.f32 %v5774, %v8071
        %v8266 = vmul.f32 %v5777, %v8086
        %v8267 = vmul.f32 %v5780, %v8101
        %v8268 = vmul.f32 %v5783, %v8116
        %v8269 = vmul.f32 %v5786, %v8131
        %v8270 = vmul.f32 %v5789, %v8146
        %v8271 = vpack.c.bf16 %v8148, %v8147
        %v8272 = vpack.c.bf16 %v8150, %v8149
        %v8273 = vpack.c.bf16 %v8152, %v8151
        %v8274 = vpack.c.bf16 %v8154, %v8153
        %v8275 = vpack.c.bf16 %v8156, %v8155
        %v8276 = vpack.c.bf16 %v8158, %v8157
        %v8277 = vpack.c.bf16 %v8160, %v8159
        %v8278 = vpack.c.bf16 %v8162, %v8161
        %v8279 = vpack.c.bf16 %v8164, %v8163
        %v8280 = vpack.c.bf16 %v8166, %v8165
        %v8281 = vpack.c.bf16 %v8168, %v8167
        %v8282 = vpack.c.bf16 %v8170, %v8169
        %v8283 = vpack.c.bf16 %v8172, %v8171
        %v8284 = vpack.c.bf16 %v8174, %v8173
        %v8285 = vpack.c.bf16 %v8176, %v8175
        %v8286 = vpack.c.bf16 %v8178, %v8177
        %v8287 = vpack.c.bf16 %v8180, %v8179
        %v8288 = vpack.c.bf16 %v8182, %v8181
        %v8289 = vpack.c.bf16 %v8184, %v8183
        %v8290 = vpack.c.bf16 %v8186, %v8185
        %v8291 = vpack.c.bf16 %v8188, %v8187
        %v8292 = vpack.c.bf16 %v8190, %v8189
        %v8293 = vpack.c.bf16 %v8192, %v8191
        %v8294 = vpack.c.bf16 %v8194, %v8193
        %v8295 = vpack.c.bf16 %v8196, %v8195
        %v8296 = vpack.c.bf16 %v8198, %v8197
        %v8297 = vpack.c.bf16 %v8200, %v8199
        %v8298 = vpack.c.bf16 %v8202, %v8201
        %v8299 = vpack.c.bf16 %v8204, %v8203
        %v8300 = vpack.c.bf16 %v8206, %v8205
        %v8301 = vpack.c.bf16 %v8208, %v8207
        %v8302 = vpack.c.bf16 %v8210, %v8209
        %v8303 = vpack.c.bf16 %v8212, %v8211
        %v8304 = vpack.c.bf16 %v8214, %v8213
        %v8305 = vpack.c.bf16 %v8216, %v8215
        %v8306 = vpack.c.bf16 %v8218, %v8217
        %v8307 = vpack.c.bf16 %v8220, %v8219
        %v8308 = vpack.c.bf16 %v8222, %v8221
        %v8309 = vpack.c.bf16 %v8224, %v8223
        %v8310 = vpack.c.bf16 %v8226, %v8225
        %v8311 = vpack.c.bf16 %v8228, %v8227
        %v8312 = vpack.c.bf16 %v8230, %v8229
        %v8313 = vpack.c.bf16 %v8232, %v8231
        %v8314 = vpack.c.bf16 %v8234, %v8233
        %v8315 = vpack.c.bf16 %v8236, %v8235
        %v8316 = vpack.c.bf16 %v8238, %v8237
        %v8317 = vpack.c.bf16 %v8240, %v8239
        %v8318 = vpack.c.bf16 %v8242, %v8241
        %v8319 = vpack.c.bf16 %v8244, %v8243
        %v8320 = vpack.c.bf16 %v8246, %v8245
        %v8321 = vpack.c.bf16 %v8248, %v8247
        %v8322 = vpack.c.bf16 %v8250, %v8249
        %v8323 = vpack.c.bf16 %v8252, %v8251
        %v8324 = vpack.c.bf16 %v8254, %v8253
        %v8325 = vpack.c.bf16 %v8256, %v8255
        %v8326 = vpack.c.bf16 %v8258, %v8257
        %v8327 = vpack.c.bf16 %v8260, %v8259
        %v8328 = vpack.c.bf16 %v8262, %v8261
        %v8329 = vpack.c.bf16 %v8264, %v8263
        %v8330 = vpack.c.bf16 %v8266, %v8265
        %v8331 = vpack.c.bf16 %v8268, %v8267
        %v8332 = vpack.c.bf16 %v8270, %v8269
        %v8333 = vld [vmem:[%s2] sm:$0xff]
        %v8334 = vld [vmem:[%s2 + $0x8] sm:$0xff]
        %v8335 = vld [vmem:[%s2 + $0x10] sm:$0xff]
        %v8336 = vld [vmem:[%s2 + $0x18] sm:$0xff]
        %v8337 = vld [vmem:[%s2 + $0x20] sm:$0xff]
        %v8338 = vld [vmem:[%s2 + $0x28] sm:$0xff]
        %v8339 = vld [vmem:[%s2 + $0x30] sm:$0xff]
        %v8340 = vld [vmem:[%s2 + $0x38] sm:$0xff]
        %v8341 = vld [vmem:[%s2 + $0x40] sm:$0xff]
        %v8342 = vld [vmem:[%s2 + $0x48] sm:$0xff]
        %v8343 = vld [vmem:[%s2 + $0x50] sm:$0xff]
        %v8344 = vld [vmem:[%s2 + $0x58] sm:$0xff]
        %v8345 = vld [vmem:[%s2 + $0x60] sm:$0xff]
        %v8346 = vld [vmem:[%s2 + $0x68] sm:$0xff]
        %v8347 = vld [vmem:[%s2 + $0x70] sm:$0xff]
        %v8348 = vld [vmem:[%s2 + $0x78] sm:$0xff]
        %v8365 = vunpack.c.l.b16 %v8333
        %v8366 = vunpack.c.h.b16 %v8333
        %v8367 = vunpack.c.l.b16 %v8334
        %v8368 = vunpack.c.h.b16 %v8334
        %v8369 = vunpack.c.l.b16 %v8335
        %v8370 = vunpack.c.h.b16 %v8335
        %v8371 = vunpack.c.l.b16 %v8336
        %v8372 = vunpack.c.h.b16 %v8336
        %v8373 = vunpack.c.l.b16 %v8337
        %v8374 = vunpack.c.h.b16 %v8337
        %v8375 = vunpack.c.l.b16 %v8338
        %v8376 = vunpack.c.h.b16 %v8338
        %v8377 = vunpack.c.l.b16 %v8339
        %v8378 = vunpack.c.h.b16 %v8339
        %v8379 = vunpack.c.l.b16 %v8340
        %v8380 = vunpack.c.h.b16 %v8340
        %v8381 = vunpack.c.l.b16 %v8341
        %v8382 = vunpack.c.h.b16 %v8341
        %v8383 = vunpack.c.l.b16 %v8342
        %v8384 = vunpack.c.h.b16 %v8342
        %v8385 = vunpack.c.l.b16 %v8343
        %v8386 = vunpack.c.h.b16 %v8343
        %v8387 = vunpack.c.l.b16 %v8344
        %v8388 = vunpack.c.h.b16 %v8344
        %v8389 = vunpack.c.l.b16 %v8345
        %v8390 = vunpack.c.h.b16 %v8345
        %v8391 = vunpack.c.l.b16 %v8346
        %v8392 = vunpack.c.h.b16 %v8346
        %v8393 = vunpack.c.l.b16 %v8347
        %v8394 = vunpack.c.h.b16 %v8347
        %v8395 = vunpack.c.l.b16 %v8348
        %v8396 = vunpack.c.h.b16 %v8348
        %v8397 = vpack.c.b16 %v8373, %v8365
        %v8398 = vpack.c.b16 %v8374, %v8366
        %v8399 = vpack.c.b16 %v8375, %v8367
        %v8400 = vpack.c.b16 %v8376, %v8368
        %v8401 = vpack.c.b16 %v8377, %v8369
        %v8402 = vpack.c.b16 %v8378, %v8370
        %v8403 = vpack.c.b16 %v8379, %v8371
        %v8404 = vpack.c.b16 %v8380, %v8372
        %v8405 = vpack.c.b16 %v8389, %v8381
        %v8406 = vpack.c.b16 %v8390, %v8382
        %v8407 = vpack.c.b16 %v8391, %v8383
        %v8408 = vpack.c.b16 %v8392, %v8384
        %v8409 = vpack.c.b16 %v8393, %v8385
        %v8410 = vpack.c.b16 %v8394, %v8386
        %v8411 = vpack.c.b16 %v8395, %v8387
        %v8412 = vpack.c.b16 %v8396, %v8388
        %vm8427 = vcmask 785408
        %v8429 = vsel %vm8427, %v8404, 0
        %v8432 = vsel %vm8427, %v8412, 0
        %8434 = vmatpush.bf16.msra.mxu0 %v8278
        %8435 = vmatpush.bf16.msra.mxu0 %v8277
        %8436 = vmatpush.bf16.msra.mxu0 %v8276
        %8437 = vmatpush.bf16.msra.mxu0 %v8275
        %8438 = vmatpush.bf16.msra.mxu0 %v8274
        %8439 = vmatpush.bf16.msra.mxu0 %v8273
        %8440 = vmatpush.bf16.msra.mxu0 %v8272
        %8441 = vmatpush.bf16.msra.mxu0 %v8271
        %8442 = vmatmul.bf16.gmra.mxu0 %v8397
        %v8443 = vpop.f32.mrf.mxu0
        %v8444 = vadd.f32 0.0, %v8443
        %v8445 = vpop.f32.mrf.mxu0
        %v8446 = vadd.f32 0.0, %v8445
        %8447 = vmatmul.bf16.gmra.mxu0 %v8405
        %v8448 = vpop.f32.mrf.mxu0
        %v8449 = vadd.f32 0.0, %v8448
        %v8450 = vpop.f32.mrf.mxu0
        %v8451 = vadd.f32 0.0, %v8450
        %8452 = vdwg.mxu0
        %8453 = vmatpush.bf16.msra.mxu0 %v8286
        %8454 = vmatpush.bf16.msra.mxu0 %v8285
        %8455 = vmatpush.bf16.msra.mxu0 %v8284
        %8456 = vmatpush.bf16.msra.mxu0 %v8283
        %8457 = vmatpush.bf16.msra.mxu0 %v8282
        %8458 = vmatpush.bf16.msra.mxu0 %v8281
        %8459 = vmatpush.bf16.msra.mxu0 %v8280
        %8460 = vmatpush.bf16.msra.mxu0 %v8279
        %8461 = vmatmul.bf16.gmra.mxu0 %v8398
        %v8462 = vpop.f32.mrf.mxu0
        %v8463 = vadd.f32 %v8444, %v8462
        %v8464 = vpop.f32.mrf.mxu0
        %v8465 = vadd.f32 %v8446, %v8464
        %8466 = vmatmul.bf16.gmra.mxu0 %v8406
        %v8467 = vpop.f32.mrf.mxu0
        %v8468 = vadd.f32 %v8449, %v8467
        %v8469 = vpop.f32.mrf.mxu0
        %v8470 = vadd.f32 %v8451, %v8469
        %8471 = vdwg.mxu0
        %8472 = vmatpush.bf16.msra.mxu0 %v8294
        %8473 = vmatpush.bf16.msra.mxu0 %v8293
        %8474 = vmatpush.bf16.msra.mxu0 %v8292
        %8475 = vmatpush.bf16.msra.mxu0 %v8291
        %8476 = vmatpush.bf16.msra.mxu0 %v8290
        %8477 = vmatpush.bf16.msra.mxu0 %v8289
        %8478 = vmatpush.bf16.msra.mxu0 %v8288
        %8479 = vmatpush.bf16.msra.mxu0 %v8287
        %8480 = vmatmul.bf16.gmra.mxu0 %v8399
        %v8481 = vpop.f32.mrf.mxu0
        %v8482 = vadd.f32 %v8463, %v8481
        %v8483 = vpop.f32.mrf.mxu0
        %v8484 = vadd.f32 %v8465, %v8483
        %8485 = vmatmul.bf16.gmra.mxu0 %v8407
        %v8486 = vpop.f32.mrf.mxu0
        %v8487 = vadd.f32 %v8468, %v8486
        %v8488 = vpop.f32.mrf.mxu0
        %v8489 = vadd.f32 %v8470, %v8488
        %8490 = vdwg.mxu0
        %8491 = vmatpush.bf16.msra.mxu0 %v8302
        %8492 = vmatpush.bf16.msra.mxu0 %v8301
        %8493 = vmatpush.bf16.msra.mxu0 %v8300
        %8494 = vmatpush.bf16.msra.mxu0 %v8299
        %8495 = vmatpush.bf16.msra.mxu0 %v8298
        %8496 = vmatpush.bf16.msra.mxu0 %v8297
        %8497 = vmatpush.bf16.msra.mxu0 %v8296
        %8498 = vmatpush.bf16.msra.mxu0 %v8295
        %8499 = vmatmul.bf16.gmra.mxu0 %v8400
        %v8500 = vpop.f32.mrf.mxu0
        %v8501 = vadd.f32 %v8482, %v8500
        %v8502 = vpop.f32.mrf.mxu0
        %v8503 = vadd.f32 %v8484, %v8502
        %8504 = vmatmul.bf16.gmra.mxu0 %v8408
        %v8505 = vpop.f32.mrf.mxu0
        %v8506 = vadd.f32 %v8487, %v8505
        %v8507 = vpop.f32.mrf.mxu0
        %v8508 = vadd.f32 %v8489, %v8507
        %8509 = vdwg.mxu0
        %8510 = vmatpush.bf16.msra.mxu0 %v8310
        %8511 = vmatpush.bf16.msra.mxu0 %v8309
        %8512 = vmatpush.bf16.msra.mxu0 %v8308
        %8513 = vmatpush.bf16.msra.mxu0 %v8307
        %8514 = vmatpush.bf16.msra.mxu0 %v8306
        %8515 = vmatpush.bf16.msra.mxu0 %v8305
        %8516 = vmatpush.bf16.msra.mxu0 %v8304
        %8517 = vmatpush.bf16.msra.mxu0 %v8303
        %8518 = vmatmul.bf16.gmra.mxu0 %v8401
        %v8519 = vpop.f32.mrf.mxu0
        %v8520 = vadd.f32 %v8501, %v8519
        %v8521 = vpop.f32.mrf.mxu0
        %v8522 = vadd.f32 %v8503, %v8521
        %8523 = vmatmul.bf16.gmra.mxu0 %v8409
        %v8524 = vpop.f32.mrf.mxu0
        %v8525 = vadd.f32 %v8506, %v8524
        %v8526 = vpop.f32.mrf.mxu0
        %v8527 = vadd.f32 %v8508, %v8526
        %8528 = vdwg.mxu0
        %8529 = vmatpush.bf16.msra.mxu0 %v8318
        %8530 = vmatpush.bf16.msra.mxu0 %v8317
        %8531 = vmatpush.bf16.msra.mxu0 %v8316
        %8532 = vmatpush.bf16.msra.mxu0 %v8315
        %8533 = vmatpush.bf16.msra.mxu0 %v8314
        %8534 = vmatpush.bf16.msra.mxu0 %v8313
        %8535 = vmatpush.bf16.msra.mxu0 %v8312
        %8536 = vmatpush.bf16.msra.mxu0 %v8311
        %8537 = vmatmul.bf16.gmra.mxu0 %v8402
        %v8538 = vpop.f32.mrf.mxu0
        %v8539 = vadd.f32 %v8520, %v8538
        %v8540 = vpop.f32.mrf.mxu0
        %v8541 = vadd.f32 %v8522, %v8540
        %8542 = vmatmul.bf16.gmra.mxu0 %v8410
        %v8543 = vpop.f32.mrf.mxu0
        %v8544 = vadd.f32 %v8525, %v8543
        %v8545 = vpop.f32.mrf.mxu0
        %v8546 = vadd.f32 %v8527, %v8545
        %8547 = vdwg.mxu0
        %8548 = vmatpush.bf16.msra.mxu0 %v8326
        %8549 = vmatpush.bf16.msra.mxu0 %v8325
        %8550 = vmatpush.bf16.msra.mxu0 %v8324
        %8551 = vmatpush.bf16.msra.mxu0 %v8323
        %8552 = vmatpush.bf16.msra.mxu0 %v8322
        %8553 = vmatpush.bf16.msra.mxu0 %v8321
        %8554 = vmatpush.bf16.msra.mxu0 %v8320
        %8555 = vmatpush.bf16.msra.mxu0 %v8319
        %8556 = vmatmul.bf16.gmra.mxu0 %v8403
        %v8557 = vpop.f32.mrf.mxu0
        %v8558 = vadd.f32 %v8539, %v8557
        %v8559 = vpop.f32.mrf.mxu0
        %v8560 = vadd.f32 %v8541, %v8559
        %8561 = vmatmul.bf16.gmra.mxu0 %v8411
        %v8562 = vpop.f32.mrf.mxu0
        %v8563 = vadd.f32 %v8544, %v8562
        %v8564 = vpop.f32.mrf.mxu0
        %v8565 = vadd.f32 %v8546, %v8564
        %8566 = vdwg.mxu0
        %8567 = vmatpush.bf16.msra.mxu0 0
        %8568 = vmatpush.bf16.msra.mxu0 0
        %8569 = vmatpush.bf16.msra.mxu0 %v8332
        %8570 = vmatpush.bf16.msra.mxu0 %v8331
        %8571 = vmatpush.bf16.msra.mxu0 %v8330
        %8572 = vmatpush.bf16.msra.mxu0 %v8329
        %8573 = vmatpush.bf16.msra.mxu0 %v8328
        %8574 = vmatpush.bf16.msra.mxu0 %v8327
        %8575 = vmatmul.bf16.gmra.mxu0 %v8429
        %v8576 = vpop.f32.mrf.mxu0
        %v8577 = vadd.f32 %v8558, %v8576
        %v8578 = vpop.f32.mrf.mxu0
        %v8579 = vadd.f32 %v8560, %v8578
        %8580 = vmatmul.bf16.gmra.mxu0 %v8432
        %v8581 = vpop.f32.mrf.mxu0
        %v8582 = vadd.f32 %v8563, %v8581
        %v8583 = vpop.f32.mrf.mxu0
        %v8584 = vadd.f32 %v8565, %v8583
        %8585 = vdwg.mxu0
        %v8586 = vld [vmem:[%s742] sm:$0xff]
        %v8587 = vld [vmem:[%s742 + $0x8] sm:$0xff]
        %v8588 = vld [vmem:[%s742 + $0x10] sm:$0xff]
        %v8589 = vld [vmem:[%s742 + $0x18] sm:$0xff]
        %v8590 = vld [vmem:[%s742 + $0x20] sm:$0xff]
        %v8591 = vld [vmem:[%s742 + $0x28] sm:$0xff]
        %v8592 = vld [vmem:[%s742 + $0x30] sm:$0xff]
        %v8593 = vld [vmem:[%s742 + $0x38] sm:$0xff]
        %v8594 = vld [vmem:[%s742 + $0x40] sm:$0xff]
        %v8595 = vld [vmem:[%s742 + $0x48] sm:$0xff]
        %v8596 = vld [vmem:[%s742 + $0x50] sm:$0xff]
        %v8597 = vld [vmem:[%s742 + $0x58] sm:$0xff]
        %v8598 = vld [vmem:[%s742 + $0x60] sm:$0xff]
        %v8599 = vld [vmem:[%s742 + $0x68] sm:$0xff]
        %v8600 = vld [vmem:[%s742 + $0x70] sm:$0xff]
        %v8601 = vld [vmem:[%s742 + $0x78] sm:$0xff]
        %v8602 = vld [vmem:[%s747] sm:$0xff]
        %v8603 = vld [vmem:[%s747 + $0x8] sm:$0xff]
        %v8604 = vld [vmem:[%s747 + $0x10] sm:$0xff]
        %v8605 = vld [vmem:[%s747 + $0x18] sm:$0xff]
        %v8606 = vld [vmem:[%s747 + $0x20] sm:$0xff]
        %v8607 = vld [vmem:[%s747 + $0x28] sm:$0xff]
        %v8608 = vld [vmem:[%s747 + $0x30] sm:$0xff]
        %v8609 = vld [vmem:[%s747 + $0x38] sm:$0xff]
        %v8610 = vld [vmem:[%s747 + $0x40] sm:$0xff]
        %v8611 = vld [vmem:[%s747 + $0x48] sm:$0xff]
        %v8612 = vld [vmem:[%s747 + $0x50] sm:$0xff]
        %v8613 = vld [vmem:[%s747 + $0x58] sm:$0xff]
        %v8614 = vld [vmem:[%s747 + $0x60] sm:$0xff]
        %v8615 = vld [vmem:[%s747 + $0x68] sm:$0xff]
        %v8616 = vld [vmem:[%s747 + $0x70] sm:$0xff]
        %v8617 = vld [vmem:[%s747 + $0x78] sm:$0xff]
        %8618 = vmatpush.msra.mxu0 %v8617
        %8619 = vmatpush.msra.mxu0 %v8616
        %8620 = vmatpush.msra.mxu0 %v8615
        %8621 = vmatpush.msra.mxu0 %v8614
        %8622 = vmatpush.msra.mxu0 %v8613
        %8623 = vmatpush.msra.mxu0 %v8612
        %8624 = vmatpush.msra.mxu0 %v8611
        %8625 = vmatpush.msra.mxu0 %v8610
        %8626 = vmatpush.msra.mxu0 %v8609
        %8627 = vmatpush.msra.mxu0 %v8608
        %8628 = vmatpush.msra.mxu0 %v8607
        %8629 = vmatpush.msra.mxu0 %v8606
        %8630 = vmatpush.msra.mxu0 %v8605
        %8631 = vmatpush.msra.mxu0 %v8604
        %8632 = vmatpush.msra.mxu0 %v8603
        %8633 = vmatpush.msra.mxu0 %v8602
        %8634 = vmatmul.f32.gmra.mxu0 %v8577
        %v8635 = vpop.f32.mrf.mxu0
        %v8636 = vadd.f32 0.0, %v8635
        %8637 = vmatmul.f32.gmra.mxu0 %v8579
        %v8638 = vpop.f32.mrf.mxu0
        %v8639 = vadd.f32 0.0, %v8638
        %8640 = vmatmul.f32.gmra.mxu0 %v8582
        %v8641 = vpop.f32.mrf.mxu0
        %v8642 = vadd.f32 0.0, %v8641
        %8643 = vmatmul.f32.gmra.mxu0 %v8584
        %v8644 = vpop.f32.mrf.mxu0
        %v8645 = vadd.f32 0.0, %v8644
        %8646 = vdwg.mxu0
        %8647 = vmatpush.msra.mxu0 %v8601
        %8648 = vmatpush.msra.mxu0 %v8600
        %8649 = vmatpush.msra.mxu0 %v8599
        %8650 = vmatpush.msra.mxu0 %v8598
        %8651 = vmatpush.msra.mxu0 %v8597
        %8652 = vmatpush.msra.mxu0 %v8596
        %8653 = vmatpush.msra.mxu0 %v8595
        %8654 = vmatpush.msra.mxu0 %v8594
        %8655 = vmatpush.msra.mxu0 %v8593
        %8656 = vmatpush.msra.mxu0 %v8592
        %8657 = vmatpush.msra.mxu0 %v8591
        %8658 = vmatpush.msra.mxu0 %v8590
        %8659 = vmatpush.msra.mxu0 %v8589
        %8660 = vmatpush.msra.mxu0 %v8588
        %8661 = vmatpush.msra.mxu0 %v8587
        %8662 = vmatpush.msra.mxu0 %v8586
        %8663 = vmatmul.f32.gmra.mxu0 %v820
        %v8664 = vpop.f32.mrf.mxu0
        %v8665 = vadd.f32 %v8636, %v8664
        %8666 = vmatmul.f32.gmra.mxu0 %v821
        %v8667 = vpop.f32.mrf.mxu0
        %v8668 = vadd.f32 %v8639, %v8667
        %8669 = vmatmul.f32.gmra.mxu0 %v822
        %v8670 = vpop.f32.mrf.mxu0
        %v8671 = vadd.f32 %v8642, %v8670
        %8672 = vmatmul.f32.gmra.mxu0 %v823
        %v8673 = vpop.f32.mrf.mxu0
        %v8674 = vadd.f32 %v8645, %v8673
        %8675 = vdwg.mxu0
        %v8676 = vld [vmem:[%s750] sm:$0x1]
        %v8678 = vperm.slane %v8676, 0
        %v8680 = vadd.f32 %v8665, %v8678
        %v8681 = vadd.f32 %v8668, %v8678
        %v8682 = vadd.f32 %v8671, %v8678
        %v8683 = vadd.f32 %v8674, %v8678
        %v8684 = vxor.u32 %v8680, 2147483648
        %v8685 = vxor.u32 %v8681, 2147483648
        %v8686 = vxor.u32 %v8682, 2147483648
        %v8687 = vxor.u32 %v8683, 2147483648
        %v8688 = vmul.f32 %v8684, 1.442695
        %v8689 = vpow.pop %v8688
        %v8690 = vmul.f32 %v8685, 1.442695
        %v8691 = vpow.pop %v8690
        %v8692 = vmul.f32 %v8686, 1.442695
        %v8693 = vpow.pop %v8692
        %v8694 = vmul.f32 %v8687, 1.442695
        %v8695 = vpow.pop %v8694
        %v8696 = vadd.f32 %v8689, 1.0
        %v8697 = vadd.f32 %v8691, 1.0
        %v8698 = vadd.f32 %v8693, 1.0
        %v8699 = vadd.f32 %v8695, 1.0
        %v8700 = vrcp.pop %v8696
        %v8701 = vmul.f32 %v8696, %v8700
        %v8702 = vsub.f32 1.0, %v8701
        %v8703 = vmul.f32 %v8700, %v8702
        %v8704 = vadd.f32 %v8700, %v8703
        %vm8705 = vweird.f32 %v8696
        %vm8706 = vweird.f32 %v8700
        %vm8707 = vmor %vm8705, %vm8706
        %v8708 = vsel %vm8707, %v8700, %v8704
        %v8709 = vand.u32 2147483647, %v8696
        %vm8710 = vcmp.eq.f32.partialorder %v8709, 8.507059e+37
        %v8711 = vand.u32 %v8696, 2147483648
        %v8712 = vor.u32 1.1754944e-38, %v8711
        %v8713 = vsel %vm8710, %v8712, %v8708
        %v8714 = vmul.f32 1.0, %v8713
        %v8715 = vrcp.pop %v8697
        %v8716 = vmul.f32 %v8697, %v8715
        %v8717 = vsub.f32 1.0, %v8716
        %v8718 = vmul.f32 %v8715, %v8717
        %v8719 = vadd.f32 %v8715, %v8718
        %vm8720 = vweird.f32 %v8697
        %vm8721 = vweird.f32 %v8715
        %vm8722 = vmor %vm8720, %vm8721
        %v8723 = vsel %vm8722, %v8715, %v8719
        %v8724 = vand.u32 2147483647, %v8697
        %vm8725 = vcmp.eq.f32.partialorder %v8724, 8.507059e+37
        %v8726 = vand.u32 %v8697, 2147483648
        %v8727 = vor.u32 1.1754944e-38, %v8726
        %v8728 = vsel %vm8725, %v8727, %v8723
        %v8729 = vmul.f32 1.0, %v8728
        %v8730 = vrcp.pop %v8698
        %v8731 = vmul.f32 %v8698, %v8730
        %v8732 = vsub.f32 1.0, %v8731
        %v8733 = vmul.f32 %v8730, %v8732
        %v8734 = vadd.f32 %v8730, %v8733
        %vm8735 = vweird.f32 %v8698
        %vm8736 = vweird.f32 %v8730
        %vm8737 = vmor %vm8735, %vm8736
        %v8738 = vsel %vm8737, %v8730, %v8734
        %v8739 = vand.u32 2147483647, %v8698
        %vm8740 = vcmp.eq.f32.partialorder %v8739, 8.507059e+37
        %v8741 = vand.u32 %v8698, 2147483648
        %v8742 = vor.u32 1.1754944e-38, %v8741
        %v8743 = vsel %vm8740, %v8742, %v8738
        %v8744 = vmul.f32 1.0, %v8743
        %v8745 = vrcp.pop %v8699
        %v8746 = vmul.f32 %v8699, %v8745
        %v8747 = vsub.f32 1.0, %v8746
        %v8748 = vmul.f32 %v8745, %v8747
        %v8749 = vadd.f32 %v8745, %v8748
        %vm8750 = vweird.f32 %v8699
        %vm8751 = vweird.f32 %v8745
        %vm8752 = vmor %vm8750, %vm8751
        %v8753 = vsel %vm8752, %v8745, %v8749
        %v8754 = vand.u32 2147483647, %v8699
        %vm8755 = vcmp.eq.f32.partialorder %v8754, 8.507059e+37
        %v8756 = vand.u32 %v8699, 2147483648
        %v8757 = vor.u32 1.1754944e-38, %v8756
        %v8758 = vsel %vm8755, %v8757, %v8753
        %v8759 = vmul.f32 1.0, %v8758
        %v8760 = vmul.f32 %v8680, %v8714
        %v8761 = vmul.f32 %v8681, %v8729
        %v8762 = vmul.f32 %v8682, %v8744
        %v8763 = vmul.f32 %v8683, %v8759
        %v8764 = vld [vmem:[%s755] sm:$0xff]
        %v8765 = vld [vmem:[%s755 + $0x8] sm:$0xff]
        %v8766 = vld [vmem:[%s755 + $0x10] sm:$0xff]
        %v8767 = vld [vmem:[%s755 + $0x18] sm:$0xff]
        %v8768 = vld [vmem:[%s755 + $0x20] sm:$0xff]
        %v8769 = vld [vmem:[%s755 + $0x28] sm:$0xff]
        %v8770 = vld [vmem:[%s755 + $0x30] sm:$0xff]
        %v8771 = vld [vmem:[%s755 + $0x38] sm:$0xff]
        %v8772 = vld [vmem:[%s755 + $0x40] sm:$0xff]
        %v8773 = vld [vmem:[%s755 + $0x48] sm:$0xff]
        %v8774 = vld [vmem:[%s755 + $0x50] sm:$0xff]
        %v8775 = vld [vmem:[%s755 + $0x58] sm:$0xff]
        %v8776 = vld [vmem:[%s755 + $0x60] sm:$0xff]
        %v8777 = vld [vmem:[%s755 + $0x68] sm:$0xff]
        %v8778 = vld [vmem:[%s755 + $0x70] sm:$0xff]
        %v8779 = vld [vmem:[%s755 + $0x78] sm:$0xff]
        %v8780 = vld [vmem:[%s758] sm:$0x1]
        %v8782 = vperm.slane %v8780, 0
        %8784 = vmatpush.msra.mxu0 %v8779
        %8785 = vmatpush.msra.mxu0 %v8778
        %8786 = vmatpush.msra.mxu0 %v8777
        %8787 = vmatpush.msra.mxu0 %v8776
        %8788 = vmatpush.msra.mxu0 %v8775
        %8789 = vmatpush.msra.mxu0 %v8774
        %8790 = vmatpush.msra.mxu0 %v8773
        %8791 = vmatpush.msra.mxu0 %v8772
        %8792 = vmatpush.msra.mxu0 %v8771
        %8793 = vmatpush.msra.mxu0 %v8770
        %8794 = vmatpush.msra.mxu0 %v8769
        %8795 = vmatpush.msra.mxu0 %v8768
        %8796 = vmatpush.msra.mxu0 %v8767
        %8797 = vmatpush.msra.mxu0 %v8766
        %8798 = vmatpush.msra.mxu0 %v8765
        %8799 = vmatpush.msra.mxu0 %v8764
        %8800 = vmatmul.f32.gmra.mxu0 %v8760
        %v8801 = vpop.f32.mrf.mxu0
        %v8802 = vadd.f32 %v8782, %v8801
        %8803 = vmatmul.f32.gmra.mxu0 %v8761
        %v8804 = vpop.f32.mrf.mxu0
        %v8805 = vadd.f32 %v8782, %v8804
        %8806 = vmatmul.f32.gmra.mxu0 %v8762
        %v8807 = vpop.f32.mrf.mxu0
        %v8808 = vadd.f32 %v8782, %v8807
        %8809 = vmatmul.f32.gmra.mxu0 %v8763
        %v8810 = vpop.f32.mrf.mxu0
        %v8811 = vadd.f32 %v8782, %v8810
        %8812 = vdwg.mxu0
        %v8813 = vadd.f32 %v820, %v8802
        %v8814 = vadd.f32 %v821, %v8805
        %v8815 = vadd.f32 %v822, %v8808
        %v8816 = vadd.f32 %v823, %v8811
        %8817 = vst [vmem:[#allocation2] sm:$0xff] %v8813
        %8818 = vst [vmem:[#allocation2 + $0x8] sm:$0xff] %v8814
        %8819 = vst [vmem:[#allocation2 + $0x10] sm:$0xff] %v8815
        %8820 = vst [vmem:[#allocation2 + $0x18] sm:$0xff] %v8816
        %p8821 = scmp.eq.s32.totalorder %s31, 3
        // Predicated region
        $region101: #{egnn_forward.1} parent=95 // pred_check
          %p8822 = pneg %p8821
        $region102: #{egnn_forward.1} parent=95 // pred_check_branch
          %8824 = sbr.rel (%p8822) target = $region104
        $region103: #{egnn_forward.1} parent=95 // pred_region
          %v8825 = vld [vmem:[#allocation2] sm:$0xff]
          %v8826 = vld [vmem:[#allocation2 + $0x8] sm:$0xff]
          %v8827 = vld [vmem:[#allocation2 + $0x10] sm:$0xff]
          %v8828 = vld [vmem:[#allocation2 + $0x18] sm:$0xff]
          %v8829 = vld [vmem:[%s6] sm:$0xff]
          %v8830 = vld [vmem:[%s6 + $0x8] sm:$0xff]
          %v8831 = vld [vmem:[%s6 + $0x10] sm:$0xff]
          %v8832 = vld [vmem:[%s6 + $0x18] sm:$0xff]
          %v8833 = vld [vmem:[%s6 + $0x20] sm:$0xff]
          %v8834 = vld [vmem:[%s6 + $0x28] sm:$0xff]
          %v8835 = vld [vmem:[%s6 + $0x30] sm:$0xff]
          %v8836 = vld [vmem:[%s6 + $0x38] sm:$0xff]
          %v8837 = vld [vmem:[%s6 + $0x40] sm:$0xff]
          %v8838 = vld [vmem:[%s6 + $0x48] sm:$0xff]
          %v8839 = vld [vmem:[%s6 + $0x50] sm:$0xff]
          %v8840 = vld [vmem:[%s6 + $0x58] sm:$0xff]
          %v8841 = vld [vmem:[%s6 + $0x60] sm:$0xff]
          %v8842 = vld [vmem:[%s6 + $0x68] sm:$0xff]
          %v8843 = vld [vmem:[%s6 + $0x70] sm:$0xff]
          %v8844 = vld [vmem:[%s6 + $0x78] sm:$0xff]
          %v8845 = vld [vmem:[%s7] sm:$0x1]
          %v8847 = vperm.slane %v8845, 0
          %8849 = vmatpush.msra.mxu0 %v8844
          %8850 = vmatpush.msra.mxu0 %v8843
          %8851 = vmatpush.msra.mxu0 %v8842
          %8852 = vmatpush.msra.mxu0 %v8841
          %8853 = vmatpush.msra.mxu0 %v8840
          %8854 = vmatpush.msra.mxu0 %v8839
          %8855 = vmatpush.msra.mxu0 %v8838
          %8856 = vmatpush.msra.mxu0 %v8837
          %8857 = vmatpush.msra.mxu0 %v8836
          %8858 = vmatpush.msra.mxu0 %v8835
          %8859 = vmatpush.msra.mxu0 %v8834
          %8860 = vmatpush.msra.mxu0 %v8833
          %8861 = vmatpush.msra.mxu0 %v8832
          %8862 = vmatpush.msra.mxu0 %v8831
          %8863 = vmatpush.msra.mxu0 %v8830
          %8864 = vmatpush.msra.mxu0 %v8829
          %8865 = vmatmul.f32.gmra.mxu0 %v8825
          %v8866 = vpop.f32.mrf.mxu0
          %v8867 = vadd.f32 %v8847, %v8866
          %8868 = vmatmul.f32.gmra.mxu0 %v8826
          %v8869 = vpop.f32.mrf.mxu0
          %v8870 = vadd.f32 %v8847, %v8869
          %8871 = vmatmul.f32.gmra.mxu0 %v8827
          %v8872 = vpop.f32.mrf.mxu0
          %v8873 = vadd.f32 %v8847, %v8872
          %8874 = vmatmul.f32.gmra.mxu0 %v8828
          %v8875 = vpop.f32.mrf.mxu0
          %v8876 = vadd.f32 %v8847, %v8875
          %8877 = vdwg.mxu0
          %8878 = vst [vmem:[#allocation4] sm:$0xff] %v8867
          %8879 = vst [vmem:[#allocation4 + $0x8] sm:$0xff] %v8870
          %8880 = vst [vmem:[#allocation4 + $0x10] sm:$0xff] %v8873
          %8881 = vst [vmem:[#allocation4 + $0x18] sm:$0xff] %v8876
        $region104: #{egnn_forward.1} parent=95 // pred_fallthru
          _
        // Predicated region
        $region105: #{egnn_forward.1} parent=95 // pred_check
          %p8882 = pneg %p498
        $region106: #{egnn_forward.1} parent=95 // pred_check_branch
          %8884 = sbr.rel (%p8882) target = $region108
        $region107: #{egnn_forward.1} parent=95 // pred_region
          %8886 = vsyncadd [#allocation5], 0
          %s8887 = sshll.u32 [#allocation4], 4
          %s8888 = int_to_ptr.vmem [resolvable:$true] %s8887
          %s8889 = sshll.u32 %s19, 4
          %s8890 = int_to_ptr.hbm [resolvable:$true] %s8889
          %8895 = dma.vmem_to_hbm [thread:$0]  %s8888, 512, %s8890, [#allocation5], 128, 128, 8
        $region108: #{egnn_forward.1} parent=95 // pred_fallthru
          _
        // Predicated region
        $region109: #{egnn_forward.1} parent=95 // pred_check
          %p8896 = pneg %p498
        $region110: #{egnn_forward.1} parent=95 // pred_check_branch
          %8898 = sbr.rel (%p8896) target = $region112
        $region111: #{egnn_forward.1} parent=95 // pred_region
          %8900 = dma.done [#allocation5], 512
        $region112: #{egnn_forward.1} parent=95 // pred_fallthru
          _
      $region96: #{egnn_forward.1} parent=5 // pred_fallthru
        _
      %p8901 = scmp.le.s32.totalorder 2, %s26
      // Predicated region
      $region113: #{egnn_forward.1} parent=5 // pred_check
        %p8902 = pneg %p8901
      $region114: #{egnn_forward.1} parent=5 // pred_check_branch
        %8904 = sbr.rel (%p8902) target = $region116
      $region115: #{egnn_forward.1} parent=5 // pred_region
        %s8905 = ssub.s32 %s26, 2
      $region116: #{egnn_forward.1} parent=5 // pred_fallthru
        _
    $region6: #{egnn_forward.1} parent=1 // loop_footer
      %s30 = sadd.s32 1, %s26
    $region7: #{egnn_forward.1} parent=1 // loop_footer_branch
      %25 = sbr.rel target = $region3
    $region8: #{egnn_forward.1} parent=1 // loop_exit
      _
    %8906 = vsyncpa [#allocation5], 1
    %s8907 = scalar_lea.sflag [#allocation5], 1
    %8908 = vsyncpa %s8907, 1

</llo_original>
